<compile_context>
chip_gen: v7x
topology: tpu7x:2x2x1
jax: 0.10.0
libtpu: 0.0.40
codegen_flags: <defaults>
</compile_context>

<pallas_src>
import jax
import jax.numpy as jnp
from jax.experimental import pallas as pl
from jax.experimental.pallas import tpu as pltpu

EPS = 1e-5
_COL0 = 8  # interior column offset in the padded scratch (sublane aligned)
_VSPEC = pl.BlockSpec(memory_space=pltpu.MemorySpace.VMEM)


# ----------------------------------------------------------------------------
# The fused kernel.
# ----------------------------------------------------------------------------
def _alphago_fused_kernel(
    x_ref,          # (N, H, W, F)   f32  input, channels zero-padded to F
    w_init_ref,     # (9F, F)        bf16 im2col weights (zero rows for pad ch)
    bn_init_ref,    # (2, F)         f32  [gamma; beta]
    res_w_ref,      # (2B, 9F, F)    bf16 [b0.c1, b0.c2, b1.c1, ...]
    res_bn_ref,     # (2B, 2, F)     f32  [gamma; beta] per conv
    head_w_ref,     # (F, 3)         bf16 fused 1x1 conv weights [pol0,pol1,val]
    head_cbn_ref,   # (3, 3)         f32  rows [conv bias; gamma; beta]
    pol_fwt_ref,    # (2, M, P)      f32  per-channel FC weights tiled over batch
    pol_fb_ref,     # (1, P)         f32
    val_f1wt_ref,   # (M, 256)       f32  FC1 weights tiled over batch
    val_f1b_ref,    # (1, 256)       f32
    val_f2w_ref,    # (256, V)       bf16
    val_f2b_ref,    # (1, V)         f32
    esel_ref,       # (N, M)         f32  esel[n,m]=1 iff row m belongs to sample n
    policy_ref,     # out (N, P)     f32
    value_ref,      # out (N, V)     f32
    xpad_scr,       # scratch (N, H+2, W+_COL0+1, F) f32  padded activation
    patch_scr,      # scratch (M, 9F)                bf16 im2col staging
):
    N, H, W, F = x_ref.shape
    M = N * H * W
    inv_m = 1.0 / M
    n_blocks = res_w_ref.shape[0] // 2
    X0 = _COL0

    # Zero the padded buffer once; every layer only rewrites the interior so
    # the 1-pixel halo (and the unused left columns) stay zero forever.
    xpad_scr[...] = jnp.zeros_like(xpad_scr)
    xpad_scr[:, 1:H + 1, X0:X0 + W, :] = x_ref[...]

    def conv3x3_bn_relu(w_bf16, gamma, beta, residual=None, writeback=True):
        # im2col: stage the 9 shifted views into one (M, 9F) bf16 VMEM slab,
        # then run a single K=9F matmul on the MXU.
        for k in range(9):
            dy, dx = divmod(k, 3)
            piece = xpad_scr[:, dy:dy + H, X0 - 1 + dx:X0 - 1 + dx + W, :]
            patch_scr[:, k * F:(k + 1) * F] = (
                piece.reshape(M, F).astype(jnp.bfloat16))
        acc = jnp.dot(patch_scr[...], w_bf16,
                      preferred_element_type=jnp.float32)          # (M, F)

        # Training-mode BatchNorm (batch stats, biased variance), one pass,
        # folded into a single scale/shift broadcast over (M, F).
        mean = jnp.sum(acc, axis=0, keepdims=True) * inv_m
        var = jnp.sum(acc * acc, axis=0, keepdims=True) * inv_m - mean * mean
        scale = gamma * jax.lax.rsqrt(var + EPS)
        shift = beta - mean * scale
        y = acc * scale + shift
        if residual is not None:
            y = y + residual
        y = jnp.maximum(y, 0.0)
        if writeback:
            # Write back for the next layer (sublane-aligned interior store).
            xpad_scr[:, 1:H + 1, X0:X0 + W, :] = y.reshape(N, H, W, F)
        return y

    # Initial conv + residual tower (small static trip count -> unrolled).
    bn0 = bn_init_ref[...]
    x = conv3x3_bn_relu(w_init_ref[...], bn0[0:1, :], bn0[1:2, :])
    for b in range(n_blocks):
        last = b == n_blocks - 1
        bn1 = res_bn_ref[2 * b]
        bn2 = res_bn_ref[2 * b + 1]
        conv3x3_bn_relu(res_w_ref[2 * b], bn1[0:1, :], bn1[1:2, :])
        x = conv3x3_bn_relu(res_w_ref[2 * b + 1], bn2[0:1, :], bn2[1:2, :],
                            residual=x, writeback=not last)

    xres_bf = x.astype(jnp.bfloat16)
    esel = esel_ref[...]

    # ----- fused policy/value 1x1 conv + bias + BN + ReLU (3 channels) -------
    cbn = head_cbn_ref[...]
    pv = jnp.dot(xres_bf, head_w_ref[...],
                 preferred_element_type=jnp.float32)                # (M, 3)
    pv = pv + cbn[0:1, :]
    mean = jnp.sum(pv, axis=0, keepdims=True) * inv_m
    var = jnp.sum(pv * pv, axis=0, keepdims=True) * inv_m - mean * mean
    scale = cbn[1:2, :] * jax.lax.rsqrt(var + EPS)
    shift = cbn[2:3, :] - mean * scale
    pv = jnp.maximum(pv * scale + shift, 0.0)
    p = pv[:, 0:2]   # policy head activation (M, 2)
    v = pv[:, 2:3]   # value head activation  (M, 1)

    # ---------------- policy head: Flatten(NCHW) + FC ------------------------
    # Channel-major Flatten + Linear folded into per-channel tiled weights:
    #   policy[n] = sum_m esel[n, m] * sum_c p[m, c] * fwt[c, m, :]
    scaled = p[:, 0:1] * pol_fwt_ref[0] + p[:, 1:2] * pol_fwt_ref[1]  # (M, P)
    policy = jnp.dot(esel, scaled, preferred_element_type=jnp.float32)
    policy_ref[...] = policy + pol_fb_ref[...]

    # ---------------- value head: Flatten + FC1 + ReLU + FC2 + tanh ----------
    h1 = jnp.dot(esel, v * val_f1wt_ref[...],
                 preferred_element_type=jnp.float32) + val_f1b_ref[...]
    h1 = jnp.maximum(h1, 0.0)
    value = jnp.dot(h1.astype(jnp.bfloat16), val_f2w_ref[...],
                    preferred_element_type=jnp.float32) + val_f2b_ref[...]
    value_ref[...] = jnp.tanh(value)


# ----------------------------------------------------------------------------
# Wrapper: one pallas_call for the whole forward pass.
# ----------------------------------------------------------------------------
def alphago_net_forward(x_nchw, kp):
    n, c, h, w = x_nchw.shape
    f = kp["w_init"].shape[-1]
    p_dim = kp["pol_fb"].shape[-1]
    v_dim = kp["val_f2b"].shape[-1]
    m = n * h * w

    # Layout: NCHW -> NHWC once; pad input channels up to `filters` so every
    # conv in the fused kernel shares the same (M, 9F) im2col shape (the extra
    # channels are zero and the matching weight rows are zero).
    x = jnp.transpose(x_nchw, (0, 2, 3, 1)).astype(jnp.float32)
    if f > c:
        x = jnp.pad(x, ((0, 0), (0, 0), (0, 0), (0, f - c)))

    inputs = (x, kp["w_init"], kp["bn_init"], kp["res_w"], kp["res_bn"],
              kp["head_w"], kp["head_cbn"], kp["pol_fwt"], kp["pol_fb"],
              kp["val_f1wt"], kp["val_f1b"], kp["val_f2w"], kp["val_f2b"],
              kp["esel"])

    return pl.pallas_call(
        _alphago_fused_kernel,
        out_shape=(jax.ShapeDtypeStruct((n, p_dim), jnp.float32),
                   jax.ShapeDtypeStruct((n, v_dim), jnp.float32)),
        in_specs=[_VSPEC] * len(inputs),
        out_specs=(_VSPEC, _VSPEC),
        scratch_shapes=[
            pltpu.VMEM((n, h + 2, w + _COL0 + 1, f), jnp.float32),  # padded act
            pltpu.VMEM((m, 9 * f), jnp.bfloat16),                   # im2col slab
        ],
    )(*inputs)


# ----------------------------------------------------------------------------
# Parameter construction (deterministic, synthetic) + kernel-layout folding.
# ----------------------------------------------------------------------------
def _init_params(key, c, h, w, filters, n_res_blocks, policy_dim, value_dim):
    def nxt():
        nonlocal key
        key, sub = jax.random.split(key)
        return sub

    def conv3x3_w(cin, cout):
        scale = 1.0 / jnp.sqrt(9.0 * cin)
        return scale * jax.random.normal(nxt(), (3, 3, cin, cout), jnp.float32)

    def bn(cout):
        gamma = 1.0 + 0.1 * jax.random.normal(nxt(), (cout,), jnp.float32)
        beta = 0.1 * jax.random.normal(nxt(), (cout,), jnp.float32)
        return gamma, beta

    def dense(din, dout):
        scale = 1.0 / jnp.sqrt(float(din))
        wm = scale * jax.random.normal(nxt(), (din, dout), jnp.float32)
        bv = 0.1 * jax.random.normal(nxt(), (dout,), jnp.float32)
        return wm, bv

    params = {}
    g, b = bn(filters)
    params["init"] = {"w": conv3x3_w(c, filters), "gamma": g, "beta": b}

    blocks = []
    for _ in range(n_res_blocks):
        g1, b1 = bn(filters)
        g2, b2 = bn(filters)
        blocks.append({
            "w1": conv3x3_w(filters, filters), "g1": g1, "b1": b1,
            "w2": conv3x3_w(filters, filters), "g2": g2, "b2": b2,
        })
    params["res"] = blocks

    pw, pcb = dense(filters, 2)
    pg, pb = bn(2)
    pfw, pfb = dense(2 * h * w, policy_dim)
    params["pol"] = {"w": pw, "cb": pcb, "gamma": pg, "beta": pb,
                     "fw": pfw, "fb": pfb}

    vw, vcb = dense(filters, 1)
    vg, vb = bn(1)
    f1w, f1b = dense(h * w, 256)
    f2w, f2b = dense(256, value_dim)
    params["val"] = {"w": vw, "cb": vcb, "gamma": vg, "beta": vb,
                     "f1w": f1w, "f1b": f1b, "f2w": f2w, "f2b": f2b}
    return params


def _prepare_kernel_params(params, n, h, w):
    """One-time folding of layouts into the weights: im2col conv weights
    (bf16), packed BN params, fused policy/value 1x1 conv weights, and the
    NCHW channel-major Flatten + Linear of the heads folded into per-channel,
    batch-tiled FC weights + a sample selector matrix."""
    w_init = params["init"]["w"]
    f = w_init.shape[-1]
    hw = h * w
    m = n * hw

    def conv_im2col(wk, cin_pad):
        cin, cout = wk.shape[2], wk.shape[3]
        w9 = wk.reshape(9, cin, cout)
        if cin_pad > cin:
            w9 = jnp.pad(w9, ((0, 0), (0, cin_pad - cin), (0, 0)))
        return w9.reshape(9 * cin_pad, cout).astype(jnp.bfloat16)

    pol, val = params["pol"], params["val"]
    p_dim = pol["fw"].shape[-1]

    kp = {
        "w_init": conv_im2col(w_init, f),
        "bn_init": jnp.stack([params["init"]["gamma"], params["init"]["beta"]]),
        "res_w": jnp.stack([conv_im2col(blk[k], f)
                            for blk in params["res"] for k in ("w1", "w2")]),
        "res_bn": jnp.stack([jnp.stack([blk[g], blk[b]])
                             for blk in params["res"]
                             for g, b in (("g1", "b1"), ("g2", "b2"))]),
        # Fused 1x1 conv weights / bias / BN for both heads (3 channels).
        "head_w": jnp.concatenate([pol["w"], val["w"]],
                                  axis=1).astype(jnp.bfloat16),
        "head_cbn": jnp.stack([
            jnp.concatenate([pol["cb"], val["cb"]]),
            jnp.concatenate([pol["gamma"], val["gamma"]]),
            jnp.concatenate([pol["beta"], val["beta"]]),
        ]),
        # PyTorch Flatten on NCHW => FC row index is c*H*W + h*W + w.  Split the
        # FC weight by channel and tile it over the batch; the kernel contracts
        # it against the (N*H*W, C)-ordered activations with `esel`.
        "pol_fwt": jnp.stack([jnp.tile(pol["fw"][ch * hw:(ch + 1) * hw, :], (n, 1))
                              for ch in range(2)]),
        "pol_fb": pol["fb"].reshape(1, p_dim),
        "val_f1wt": jnp.tile(val["f1w"], (n, 1)),
        "val_f1b": val["f1b"].reshape(1, -1),
        "val_f2w": val["f2w"].astype(jnp.bfloat16),
        "val_f2b": val["f2b"].reshape(1, -1),
        "esel": (jnp.arange(n)[:, None] ==
                 (jnp.arange(m)[None, :] // hw)).astype(jnp.float32),
    }
    return kp


# ----------------------------------------------------------------------------
# Pure-JAX f32 reference (for a numerical cross-check).
# ----------------------------------------------------------------------------
def _reference_forward(x_nchw, params):
    x = jnp.transpose(x_nchw, (0, 2, 3, 1)).astype(jnp.float32)

    def conv3x3(x, w):
        return jax.lax.conv_general_dilated(
            x, w, window_strides=(1, 1), padding="SAME",
            dimension_numbers=("NHWC", "HWIO", "NHWC"))

    def bn(x, gamma, beta):
        mean = jnp.mean(x, axis=(0, 1, 2), keepdims=True)
        var = jnp.mean((x - mean) ** 2, axis=(0, 1, 2), keepdims=True)
        return (x - mean) * jax.lax.rsqrt(var + EPS) * gamma + beta

    x = jax.nn.relu(bn(conv3x3(x, params["init"]["w"]),
                       params["init"]["gamma"], params["init"]["beta"]))
    for blk in params["res"]:
        y = jax.nn.relu(bn(conv3x3(x, blk["w1"]), blk["g1"], blk["b1"]))
        y = bn(conv3x3(y, blk["w2"]), blk["g2"], blk["b2"])
        x = jax.nn.relu(y + x)

    n = x.shape[0]
    p = jnp.einsum("nhwc,cd->nhwd", x, params["pol"]["w"]) + params["pol"]["cb"]
    p = jax.nn.relu(bn(p, params["pol"]["gamma"], params["pol"]["beta"]))
    p_flat = jnp.transpose(p, (0, 3, 1, 2)).reshape(n, -1)
    policy = p_flat @ params["pol"]["fw"] + params["pol"]["fb"]

    v = jnp.einsum("nhwc,cd->nhwd", x, params["val"]["w"]) + params["val"]["cb"]
    v = jax.nn.relu(bn(v, params["val"]["gamma"], params["val"]["beta"]))
    v_flat = jnp.transpose(v, (0, 3, 1, 2)).reshape(n, -1)
    v1 = jax.nn.relu(v_flat @ params["val"]["f1w"] + params["val"]["f1b"])
    value = jnp.tanh(v1 @ params["val"]["f2w"] + params["val"]["f2b"])
    return policy, value


if __name__ == "__main__":
    # Small shapes consistent with the module:
    #   input_shape=(c,h,w)=(4,8,8), filters=32, n_res_blocks=2,
    #   output_shape=(policy_dim, value_dim)=(65, 1), batch=2.
    N, C, H, W = 2, 4, 8, 8
    FILTERS, N_RES = 32, 2
    POLICY_DIM, VALUE_DIM = H * W + 1, 1

    key = jax.random.PRNGKey(0)
    key, pkey, xkey = jax.random.split(key, 3)
    params = _init_params(pkey, C, H, W, FILTERS, N_RES, POLICY_DIM, VALUE_DIM)
    kparams = _prepare_kernel_params(params, N, H, W)
    x = jax.random.normal(xkey, (N, C, H, W), jnp.float32)

    policy, value = jax.jit(alphago_net_forward)(x, kparams)
    jax.block_until_ready((policy, value))

    assert policy.shape == (N, POLICY_DIM), policy.shape
    assert value.shape == (N, VALUE_DIM), value.shape
    assert bool(jnp.all(jnp.isfinite(policy))) and bool(jnp.all(jnp.isfinite(value)))

    # Numerical cross-check vs a pure-JAX f32 reference (tolerance covers the
    # bf16 MXU operands used inside the fused kernel).
    ref_policy, ref_value = jax.jit(_reference_forward)(x, params)
    pol_err = float(jnp.max(jnp.abs(policy - ref_policy)))
    val_err = float(jnp.max(jnp.abs(value - ref_value)))
    assert pol_err < 0.1 and val_err < 0.1, (pol_err, val_err)

    print("KERNEL_OK")
</pallas_src>

<mosaic_0001>
module attributes {stable_mosaic.version = 11 : i64} {
  func.func @_alphago_fused_kernel(%arg0: memref<2x8x8x32xf32, #tpu.memory_space<vmem>>, %arg1: memref<288x32xbf16, #tpu.memory_space<vmem>>, %arg2: memref<2x32xf32, #tpu.memory_space<vmem>>, %arg3: memref<4x288x32xbf16, #tpu.memory_space<vmem>>, %arg4: memref<4x2x32xf32, #tpu.memory_space<vmem>>, %arg5: memref<32x3xbf16, #tpu.memory_space<vmem>>, %arg6: memref<3x3xf32, #tpu.memory_space<vmem>>, %arg7: memref<2x128x65xf32, #tpu.memory_space<vmem>>, %arg8: memref<1x65xf32, #tpu.memory_space<vmem>>, %arg9: memref<128x256xf32, #tpu.memory_space<vmem>>, %arg10: memref<1x256xf32, #tpu.memory_space<vmem>>, %arg11: memref<256x1xbf16, #tpu.memory_space<vmem>>, %arg12: memref<1x1xf32, #tpu.memory_space<vmem>>, %arg13: memref<2x128xf32, #tpu.memory_space<vmem>>, %arg14: memref<2x65xf32, #tpu.memory_space<vmem>>, %arg15: memref<2x1xf32, #tpu.memory_space<vmem>>, %arg16: memref<2x10x17x32xf32, #tpu.memory_space<vmem>>, %arg17: memref<128x288xbf16, #tpu.memory_space<vmem>>) attributes {dimension_semantics = [], scalar_prefetch = 0 : i64, scratch_operands = 2 : i64, tpu.core_type = #tpu.core_type<tc>} {
    %cst = arith.constant 0.000000e+00 : f32
    %0 = vector.broadcast %cst : f32 to vector<2x10x17x32xf32>
    %c0 = arith.constant 0 : index
    %c0_0 = arith.constant 0 : index
    %c0_1 = arith.constant 0 : index
    %c0_2 = arith.constant 0 : index
    %1 = vector.load %arg16[%c0, %c0_0, %c0_1, %c0_2] : memref<2x10x17x32xf32, #tpu.memory_space<vmem>>, vector<2x10x17x32xf32>
    tpu.vector_store %arg16[%c0, %c0_0, %c0_1, %c0_2], %0 {strides = array<i32>} : memref<2x10x17x32xf32, #tpu.memory_space<vmem>>, vector<2x10x17x32xf32>,
    %c0_3 = arith.constant 0 : index
    %c0_4 = arith.constant 0 : index
    %c0_5 = arith.constant 0 : index
    %c0_6 = arith.constant 0 : index
    %2 = vector.load %arg0[%c0_3, %c0_4, %c0_5, %c0_6] : memref<2x8x8x32xf32, #tpu.memory_space<vmem>>, vector<2x8x8x32xf32>
    %c0_7 = arith.constant 0 : index
    %c1 = arith.constant 1 : index
    %c8 = arith.constant 8 : index
    %c0_8 = arith.constant 0 : index
    %3 = vector.load %arg16[%c0_7, %c1, %c8, %c0_8] : memref<2x10x17x32xf32, #tpu.memory_space<vmem>>, vector<2x8x8x32xf32>
    tpu.vector_store %arg16[%c0_7, %c1, %c8, %c0_8], %2 {strides = array<i32>} : memref<2x10x17x32xf32, #tpu.memory_space<vmem>>, vector<2x8x8x32xf32>,
    %c0_9 = arith.constant 0 : index
    %c0_10 = arith.constant 0 : index
    %4 = vector.load %arg2[%c0_9, %c0_10] : memref<2x32xf32, #tpu.memory_space<vmem>>, vector<2x32xf32>
    %c0_11 = arith.constant 0 : index
    %c0_12 = arith.constant 0 : index
    %5 = vector.load %arg1[%c0_11, %c0_12] : memref<288x32xbf16, #tpu.memory_space<vmem>>, vector<288x32xbf16>
    %6 = vector.extract_strided_slice %4 {offsets = [0, 0], sizes = [1, 32], strides = [1, 1]} : vector<2x32xf32> to vector<1x32xf32>
    %7 = vector.extract_strided_slice %4 {offsets = [1, 0], sizes = [1, 32], strides = [1, 1]} : vector<2x32xf32> to vector<1x32xf32>
    %c0_13 = arith.constant 0 : index
    %c0_14 = arith.constant 0 : index
    %c7 = arith.constant 7 : index
    %c0_15 = arith.constant 0 : index
    %8 = vector.load %arg16[%c0_13, %c0_14, %c7, %c0_15] : memref<2x10x17x32xf32, #tpu.memory_space<vmem>>, vector<2x8x8x32xf32>
    %9 = vector.shape_cast %8 : vector<2x8x8x32xf32> to vector<128x32xf32>
    %10 = arith.truncf %9 : vector<128x32xf32> to vector<128x32xbf16>
    %c0_16 = arith.constant 0 : index
    %c0_17 = arith.constant 0 : index
    %11 = vector.load %arg17[%c0_16, %c0_17] : memref<128x288xbf16, #tpu.memory_space<vmem>>, vector<128x32xbf16>
    tpu.vector_store %arg17[%c0_16, %c0_17], %10 {strides = array<i32>} : memref<128x288xbf16, #tpu.memory_space<vmem>>, vector<128x32xbf16>,
    %c0_18 = arith.constant 0 : index
    %c0_19 = arith.constant 0 : index
    %c8_20 = arith.constant 8 : index
    %c0_21 = arith.constant 0 : index
    %12 = vector.load %arg16[%c0_18, %c0_19, %c8_20, %c0_21] : memref<2x10x17x32xf32, #tpu.memory_space<vmem>>, vector<2x8x8x32xf32>
    %13 = vector.shape_cast %12 : vector<2x8x8x32xf32> to vector<128x32xf32>
    %14 = arith.truncf %13 : vector<128x32xf32> to vector<128x32xbf16>
    %c0_22 = arith.constant 0 : index
    %c32 = arith.constant 32 : index
    %15 = vector.load %arg17[%c0_22, %c32] : memref<128x288xbf16, #tpu.memory_space<vmem>>, vector<128x32xbf16>
    tpu.vector_store %arg17[%c0_22, %c32], %14 {strides = array<i32>} : memref<128x288xbf16, #tpu.memory_space<vmem>>, vector<128x32xbf16>,
    %c0_23 = arith.constant 0 : index
    %c0_24 = arith.constant 0 : index
    %c9 = arith.constant 9 : index
    %c0_25 = arith.constant 0 : index
    %16 = vector.load %arg16[%c0_23, %c0_24, %c9, %c0_25] : memref<2x10x17x32xf32, #tpu.memory_space<vmem>>, vector<2x8x8x32xf32>
    %17 = vector.shape_cast %16 : vector<2x8x8x32xf32> to vector<128x32xf32>
    %18 = arith.truncf %17 : vector<128x32xf32> to vector<128x32xbf16>
    %c0_26 = arith.constant 0 : index
    %c64 = arith.constant 64 : index
    %19 = vector.load %arg17[%c0_26, %c64] : memref<128x288xbf16, #tpu.memory_space<vmem>>, vector<128x32xbf16>
    tpu.vector_store %arg17[%c0_26, %c64], %18 {strides = array<i32>} : memref<128x288xbf16, #tpu.memory_space<vmem>>, vector<128x32xbf16>,
    %c0_27 = arith.constant 0 : index
    %c1_28 = arith.constant 1 : index
    %c7_29 = arith.constant 7 : index
    %c0_30 = arith.constant 0 : index
    %20 = vector.load %arg16[%c0_27, %c1_28, %c7_29, %c0_30] : memref<2x10x17x32xf32, #tpu.memory_space<vmem>>, vector<2x8x8x32xf32>
    %21 = vector.shape_cast %20 : vector<2x8x8x32xf32> to vector<128x32xf32>
    %22 = arith.truncf %21 : vector<128x32xf32> to vector<128x32xbf16>
    %c0_31 = arith.constant 0 : index
    %c96 = arith.constant 96 : index
    %23 = vector.load %arg17[%c0_31, %c96] : memref<128x288xbf16, #tpu.memory_space<vmem>>, vector<128x32xbf16>
    tpu.vector_store %arg17[%c0_31, %c96], %22 {strides = array<i32>} : memref<128x288xbf16, #tpu.memory_space<vmem>>, vector<128x32xbf16>,
    %c0_32 = arith.constant 0 : index
    %c1_33 = arith.constant 1 : index
    %c8_34 = arith.constant 8 : index
    %c0_35 = arith.constant 0 : index
    %24 = vector.load %arg16[%c0_32, %c1_33, %c8_34, %c0_35] : memref<2x10x17x32xf32, #tpu.memory_space<vmem>>, vector<2x8x8x32xf32>
    %25 = vector.shape_cast %24 : vector<2x8x8x32xf32> to vector<128x32xf32>
    %26 = arith.truncf %25 : vector<128x32xf32> to vector<128x32xbf16>
    %c0_36 = arith.constant 0 : index
    %c128 = arith.constant 128 : index
    %27 = vector.load %arg17[%c0_36, %c128] : memref<128x288xbf16, #tpu.memory_space<vmem>>, vector<128x32xbf16>
    tpu.vector_store %arg17[%c0_36, %c128], %26 {strides = array<i32>} : memref<128x288xbf16, #tpu.memory_space<vmem>>, vector<128x32xbf16>,
    %c0_37 = arith.constant 0 : index
    %c1_38 = arith.constant 1 : index
    %c9_39 = arith.constant 9 : index
    %c0_40 = arith.constant 0 : index
    %28 = vector.load %arg16[%c0_37, %c1_38, %c9_39, %c0_40] : memref<2x10x17x32xf32, #tpu.memory_space<vmem>>, vector<2x8x8x32xf32>
    %29 = vector.shape_cast %28 : vector<2x8x8x32xf32> to vector<128x32xf32>
    %30 = arith.truncf %29 : vector<128x32xf32> to vector<128x32xbf16>
    %c0_41 = arith.constant 0 : index
    %c160 = arith.constant 160 : index
    %31 = vector.load %arg17[%c0_41, %c160] : memref<128x288xbf16, #tpu.memory_space<vmem>>, vector<128x32xbf16>
    tpu.vector_store %arg17[%c0_41, %c160], %30 {strides = array<i32>} : memref<128x288xbf16, #tpu.memory_space<vmem>>, vector<128x32xbf16>,
    %c0_42 = arith.constant 0 : index
    %c2 = arith.constant 2 : index
    %c7_43 = arith.constant 7 : index
    %c0_44 = arith.constant 0 : index
    %32 = vector.load %arg16[%c0_42, %c2, %c7_43, %c0_44] : memref<2x10x17x32xf32, #tpu.memory_space<vmem>>, vector<2x8x8x32xf32>
    %33 = vector.shape_cast %32 : vector<2x8x8x32xf32> to vector<128x32xf32>
    %34 = arith.truncf %33 : vector<128x32xf32> to vector<128x32xbf16>
    %c0_45 = arith.constant 0 : index
    %c192 = arith.constant 192 : index
    %35 = vector.load %arg17[%c0_45, %c192] : memref<128x288xbf16, #tpu.memory_space<vmem>>, vector<128x32xbf16>
    tpu.vector_store %arg17[%c0_45, %c192], %34 {strides = array<i32>} : memref<128x288xbf16, #tpu.memory_space<vmem>>, vector<128x32xbf16>,
    %c0_46 = arith.constant 0 : index
    %c2_47 = arith.constant 2 : index
    %c8_48 = arith.constant 8 : index
    %c0_49 = arith.constant 0 : index
    %36 = vector.load %arg16[%c0_46, %c2_47, %c8_48, %c0_49] : memref<2x10x17x32xf32, #tpu.memory_space<vmem>>, vector<2x8x8x32xf32>
    %37 = vector.shape_cast %36 : vector<2x8x8x32xf32> to vector<128x32xf32>
    %38 = arith.truncf %37 : vector<128x32xf32> to vector<128x32xbf16>
    %c0_50 = arith.constant 0 : index
    %c224 = arith.constant 224 : index
    %39 = vector.load %arg17[%c0_50, %c224] : memref<128x288xbf16, #tpu.memory_space<vmem>>, vector<128x32xbf16>
    tpu.vector_store %arg17[%c0_50, %c224], %38 {strides = array<i32>} : memref<128x288xbf16, #tpu.memory_space<vmem>>, vector<128x32xbf16>,
    %c0_51 = arith.constant 0 : index
    %c2_52 = arith.constant 2 : index
    %c9_53 = arith.constant 9 : index
    %c0_54 = arith.constant 0 : index
    %40 = vector.load %arg16[%c0_51, %c2_52, %c9_53, %c0_54] : memref<2x10x17x32xf32, #tpu.memory_space<vmem>>, vector<2x8x8x32xf32>
    %41 = vector.shape_cast %40 : vector<2x8x8x32xf32> to vector<128x32xf32>
    %42 = arith.truncf %41 : vector<128x32xf32> to vector<128x32xbf16>
    %c0_55 = arith.constant 0 : index
    %c256 = arith.constant 256 : index
    %43 = vector.load %arg17[%c0_55, %c256] : memref<128x288xbf16, #tpu.memory_space<vmem>>, vector<128x32xbf16>
    tpu.vector_store %arg17[%c0_55, %c256], %42 {strides = array<i32>} : memref<128x288xbf16, #tpu.memory_space<vmem>>, vector<128x32xbf16>,
    %c0_56 = arith.constant 0 : index
    %c0_57 = arith.constant 0 : index
    %44 = vector.load %arg17[%c0_56, %c0_57] : memref<128x288xbf16, #tpu.memory_space<vmem>>, vector<128x288xbf16>
    %cst_58 = arith.constant dense<0.000000e+00> : vector<128x32xf32>
    %45 = tpu.matmul %44, %5, %cst_58 {dimension_numbers = #tpu.dot_dimension_numbers<[1], [0], [0], [1], [0, 0, 1, 1], [], []>} : vector<128x288xbf16>, vector<288x32xbf16>, vector<128x32xf32> -> vector<128x32xf32>
    %cst_59 = arith.constant dense<0.000000e+00> : vector<32xf32>
    %46 = vector.multi_reduction <add>, %45, %cst_59 [0] : vector<128x32xf32> to vector<32xf32>
    %47 = vector.shape_cast %46 : vector<32xf32> to vector<1x32xf32>
    %cst_60 = arith.constant 7.812500e-03 : f32
    %48 = vector.broadcast %cst_60 : f32 to vector<1x32xf32>
    %49 = arith.mulf %47, %48 : vector<1x32xf32>
    %50 = arith.mulf %45, %45 : vector<128x32xf32>
    %cst_61 = arith.constant dense<0.000000e+00> : vector<32xf32>
    %51 = vector.multi_reduction <add>, %50, %cst_61 [0] : vector<128x32xf32> to vector<32xf32>
    %52 = vector.shape_cast %51 : vector<32xf32> to vector<1x32xf32>
    %cst_62 = arith.constant 7.812500e-03 : f32
    %53 = vector.broadcast %cst_62 : f32 to vector<1x32xf32>
    %54 = arith.mulf %52, %53 : vector<1x32xf32>
    %55 = arith.mulf %49, %49 : vector<1x32xf32>
    %56 = arith.subf %54, %55 : vector<1x32xf32>
    %cst_63 = arith.constant 9.99999974E-6 : f32
    %57 = vector.broadcast %cst_63 : f32 to vector<1x32xf32>
    %58 = arith.addf %56, %57 : vector<1x32xf32>
    %59 = math.rsqrt %58 : vector<1x32xf32>
    %60 = arith.mulf %6, %59 : vector<1x32xf32>
    %61 = arith.mulf %49, %60 : vector<1x32xf32>
    %62 = arith.subf %7, %61 : vector<1x32xf32>
    %63 = vector.broadcast %60 : vector<1x32xf32> to vector<128x32xf32>
    %64 = arith.mulf %45, %63 : vector<128x32xf32>
    %65 = vector.broadcast %62 : vector<1x32xf32> to vector<128x32xf32>
    %66 = arith.addf %64, %65 : vector<128x32xf32>
    %cst_64 = arith.constant 0.000000e+00 : f32
    %67 = vector.broadcast %cst_64 : f32 to vector<128x32xf32>
    %68 = arith.maximumf %66, %67 : vector<128x32xf32>
    %69 = vector.shape_cast %68 : vector<128x32xf32> to vector<2x8x8x32xf32>
    %c0_65 = arith.constant 0 : index
    %c1_66 = arith.constant 1 : index
    %c8_67 = arith.constant 8 : index
    %c0_68 = arith.constant 0 : index
    %70 = vector.load %arg16[%c0_65, %c1_66, %c8_67, %c0_68] : memref<2x10x17x32xf32, #tpu.memory_space<vmem>>, vector<2x8x8x32xf32>
    tpu.vector_store %arg16[%c0_65, %c1_66, %c8_67, %c0_68], %69 {strides = array<i32>} : memref<2x10x17x32xf32, #tpu.memory_space<vmem>>, vector<2x8x8x32xf32>,
    %c0_69 = arith.constant 0 : index
    %c0_70 = arith.constant 0 : index
    %c0_71 = arith.constant 0 : index
    %71 = vector.load %arg4[%c0_69, %c0_70, %c0_71] : memref<4x2x32xf32, #tpu.memory_space<vmem>>, vector<1x2x32xf32>
    %72 = vector.shape_cast %71 : vector<1x2x32xf32> to vector<2x32xf32>
    %c1_72 = arith.constant 1 : index
    %c0_73 = arith.constant 0 : index
    %c0_74 = arith.constant 0 : index
    %73 = vector.load %arg4[%c1_72, %c0_73, %c0_74] : memref<4x2x32xf32, #tpu.memory_space<vmem>>, vector<1x2x32xf32>
    %74 = vector.shape_cast %73 : vector<1x2x32xf32> to vector<2x32xf32>
    %c0_75 = arith.constant 0 : index
    %c0_76 = arith.constant 0 : index
    %c0_77 = arith.constant 0 : index
    %75 = vector.load %arg3[%c0_75, %c0_76, %c0_77] : memref<4x288x32xbf16, #tpu.memory_space<vmem>>, vector<1x288x32xbf16>
    %76 = vector.shape_cast %75 : vector<1x288x32xbf16> to vector<288x32xbf16>
    %77 = vector.extract_strided_slice %72 {offsets = [0, 0], sizes = [1, 32], strides = [1, 1]} : vector<2x32xf32> to vector<1x32xf32>
    %78 = vector.extract_strided_slice %72 {offsets = [1, 0], sizes = [1, 32], strides = [1, 1]} : vector<2x32xf32> to vector<1x32xf32>
    %c0_78 = arith.constant 0 : index
    %c0_79 = arith.constant 0 : index
    %c7_80 = arith.constant 7 : index
    %c0_81 = arith.constant 0 : index
    %79 = vector.load %arg16[%c0_78, %c0_79, %c7_80, %c0_81] : memref<2x10x17x32xf32, #tpu.memory_space<vmem>>, vector<2x8x8x32xf32>
    %80 = vector.shape_cast %79 : vector<2x8x8x32xf32> to vector<128x32xf32>
    %81 = arith.truncf %80 : vector<128x32xf32> to vector<128x32xbf16>
    %c0_82 = arith.constant 0 : index
    %c0_83 = arith.constant 0 : index
    %82 = vector.load %arg17[%c0_82, %c0_83] : memref<128x288xbf16, #tpu.memory_space<vmem>>, vector<128x32xbf16>
    tpu.vector_store %arg17[%c0_82, %c0_83], %81 {strides = array<i32>} : memref<128x288xbf16, #tpu.memory_space<vmem>>, vector<128x32xbf16>,
    %c0_84 = arith.constant 0 : index
    %c0_85 = arith.constant 0 : index
    %c8_86 = arith.constant 8 : index
    %c0_87 = arith.constant 0 : index
    %83 = vector.load %arg16[%c0_84, %c0_85, %c8_86, %c0_87] : memref<2x10x17x32xf32, #tpu.memory_space<vmem>>, vector<2x8x8x32xf32>
    %84 = vector.shape_cast %83 : vector<2x8x8x32xf32> to vector<128x32xf32>
    %85 = arith.truncf %84 : vector<128x32xf32> to vector<128x32xbf16>
    %c0_88 = arith.constant 0 : index
    %c32_89 = arith.constant 32 : index
    %86 = vector.load %arg17[%c0_88, %c32_89] : memref<128x288xbf16, #tpu.memory_space<vmem>>, vector<128x32xbf16>
    tpu.vector_store %arg17[%c0_88, %c32_89], %85 {strides = array<i32>} : memref<128x288xbf16, #tpu.memory_space<vmem>>, vector<128x32xbf16>,
    %c0_90 = arith.constant 0 : index
    %c0_91 = arith.constant 0 : index
    %c9_92 = arith.constant 9 : index
    %c0_93 = arith.constant 0 : index
    %87 = vector.load %arg16[%c0_90, %c0_91, %c9_92, %c0_93] : memref<2x10x17x32xf32, #tpu.memory_space<vmem>>, vector<2x8x8x32xf32>
    %88 = vector.shape_cast %87 : vector<2x8x8x32xf32> to vector<128x32xf32>
    %89 = arith.truncf %88 : vector<128x32xf32> to vector<128x32xbf16>
    %c0_94 = arith.constant 0 : index
    %c64_95 = arith.constant 64 : index
    %90 = vector.load %arg17[%c0_94, %c64_95] : memref<128x288xbf16, #tpu.memory_space<vmem>>, vector<128x32xbf16>
    tpu.vector_store %arg17[%c0_94, %c64_95], %89 {strides = array<i32>} : memref<128x288xbf16, #tpu.memory_space<vmem>>, vector<128x32xbf16>,
    %c0_96 = arith.constant 0 : index
    %c1_97 = arith.constant 1 : index
    %c7_98 = arith.constant 7 : index
    %c0_99 = arith.constant 0 : index
    %91 = vector.load %arg16[%c0_96, %c1_97, %c7_98, %c0_99] : memref<2x10x17x32xf32, #tpu.memory_space<vmem>>, vector<2x8x8x32xf32>
    %92 = vector.shape_cast %91 : vector<2x8x8x32xf32> to vector<128x32xf32>
    %93 = arith.truncf %92 : vector<128x32xf32> to vector<128x32xbf16>
    %c0_100 = arith.constant 0 : index
    %c96_101 = arith.constant 96 : index
    %94 = vector.load %arg17[%c0_100, %c96_101] : memref<128x288xbf16, #tpu.memory_space<vmem>>, vector<128x32xbf16>
    tpu.vector_store %arg17[%c0_100, %c96_101], %93 {strides = array<i32>} : memref<128x288xbf16, #tpu.memory_space<vmem>>, vector<128x32xbf16>,
    %c0_102 = arith.constant 0 : index
    %c1_103 = arith.constant 1 : index
    %c8_104 = arith.constant 8 : index
    %c0_105 = arith.constant 0 : index
    %95 = vector.load %arg16[%c0_102, %c1_103, %c8_104, %c0_105] : memref<2x10x17x32xf32, #tpu.memory_space<vmem>>, vector<2x8x8x32xf32>
    %96 = vector.shape_cast %95 : vector<2x8x8x32xf32> to vector<128x32xf32>
    %97 = arith.truncf %96 : vector<128x32xf32> to vector<128x32xbf16>
    %c0_106 = arith.constant 0 : index
    %c128_107 = arith.constant 128 : index
    %98 = vector.load %arg17[%c0_106, %c128_107] : memref<128x288xbf16, #tpu.memory_space<vmem>>, vector<128x32xbf16>
    tpu.vector_store %arg17[%c0_106, %c128_107], %97 {strides = array<i32>} : memref<128x288xbf16, #tpu.memory_space<vmem>>, vector<128x32xbf16>,
    %c0_108 = arith.constant 0 : index
    %c1_109 = arith.constant 1 : index
    %c9_110 = arith.constant 9 : index
    %c0_111 = arith.constant 0 : index
    %99 = vector.load %arg16[%c0_108, %c1_109, %c9_110, %c0_111] : memref<2x10x17x32xf32, #tpu.memory_space<vmem>>, vector<2x8x8x32xf32>
    %100 = vector.shape_cast %99 : vector<2x8x8x32xf32> to vector<128x32xf32>
    %101 = arith.truncf %100 : vector<128x32xf32> to vector<128x32xbf16>
    %c0_112 = arith.constant 0 : index
    %c160_113 = arith.constant 160 : index
    %102 = vector.load %arg17[%c0_112, %c160_113] : memref<128x288xbf16, #tpu.memory_space<vmem>>, vector<128x32xbf16>
    tpu.vector_store %arg17[%c0_112, %c160_113], %101 {strides = array<i32>} : memref<128x288xbf16, #tpu.memory_space<vmem>>, vector<128x32xbf16>,
    %c0_114 = arith.constant 0 : index
    %c2_115 = arith.constant 2 : index
    %c7_116 = arith.constant 7 : index
    %c0_117 = arith.constant 0 : index
    %103 = vector.load %arg16[%c0_114, %c2_115, %c7_116, %c0_117] : memref<2x10x17x32xf32, #tpu.memory_space<vmem>>, vector<2x8x8x32xf32>
    %104 = vector.shape_cast %103 : vector<2x8x8x32xf32> to vector<128x32xf32>
    %105 = arith.truncf %104 : vector<128x32xf32> to vector<128x32xbf16>
    %c0_118 = arith.constant 0 : index
    %c192_119 = arith.constant 192 : index
    %106 = vector.load %arg17[%c0_118, %c192_119] : memref<128x288xbf16, #tpu.memory_space<vmem>>, vector<128x32xbf16>
    tpu.vector_store %arg17[%c0_118, %c192_119], %105 {strides = array<i32>} : memref<128x288xbf16, #tpu.memory_space<vmem>>, vector<128x32xbf16>,
    %c0_120 = arith.constant 0 : index
    %c2_121 = arith.constant 2 : index
    %c8_122 = arith.constant 8 : index
    %c0_123 = arith.constant 0 : index
    %107 = vector.load %arg16[%c0_120, %c2_121, %c8_122, %c0_123] : memref<2x10x17x32xf32, #tpu.memory_space<vmem>>, vector<2x8x8x32xf32>
    %108 = vector.shape_cast %107 : vector<2x8x8x32xf32> to vector<128x32xf32>
    %109 = arith.truncf %108 : vector<128x32xf32> to vector<128x32xbf16>
    %c0_124 = arith.constant 0 : index
    %c224_125 = arith.constant 224 : index
    %110 = vector.load %arg17[%c0_124, %c224_125] : memref<128x288xbf16, #tpu.memory_space<vmem>>, vector<128x32xbf16>
    tpu.vector_store %arg17[%c0_124, %c224_125], %109 {strides = array<i32>} : memref<128x288xbf16, #tpu.memory_space<vmem>>, vector<128x32xbf16>,
    %c0_126 = arith.constant 0 : index
    %c2_127 = arith.constant 2 : index
    %c9_128 = arith.constant 9 : index
    %c0_129 = arith.constant 0 : index
    %111 = vector.load %arg16[%c0_126, %c2_127, %c9_128, %c0_129] : memref<2x10x17x32xf32, #tpu.memory_space<vmem>>, vector<2x8x8x32xf32>
    %112 = vector.shape_cast %111 : vector<2x8x8x32xf32> to vector<128x32xf32>
    %113 = arith.truncf %112 : vector<128x32xf32> to vector<128x32xbf16>
    %c0_130 = arith.constant 0 : index
    %c256_131 = arith.constant 256 : index
    %114 = vector.load %arg17[%c0_130, %c256_131] : memref<128x288xbf16, #tpu.memory_space<vmem>>, vector<128x32xbf16>
    tpu.vector_store %arg17[%c0_130, %c256_131], %113 {strides = array<i32>} : memref<128x288xbf16, #tpu.memory_space<vmem>>, vector<128x32xbf16>,
    %c0_132 = arith.constant 0 : index
    %c0_133 = arith.constant 0 : index
    %115 = vector.load %arg17[%c0_132, %c0_133] : memref<128x288xbf16, #tpu.memory_space<vmem>>, vector<128x288xbf16>
    %cst_134 = arith.constant dense<0.000000e+00> : vector<128x32xf32>
    %116 = tpu.matmul %115, %76, %cst_134 {dimension_numbers = #tpu.dot_dimension_numbers<[1], [0], [0], [1], [0, 0, 1, 1], [], []>} : vector<128x288xbf16>, vector<288x32xbf16>, vector<128x32xf32> -> vector<128x32xf32>
    %cst_135 = arith.constant dense<0.000000e+00> : vector<32xf32>
    %117 = vector.multi_reduction <add>, %116, %cst_135 [0] : vector<128x32xf32> to vector<32xf32>
    %118 = vector.shape_cast %117 : vector<32xf32> to vector<1x32xf32>
    %cst_136 = arith.constant 7.812500e-03 : f32
    %119 = vector.broadcast %cst_136 : f32 to vector<1x32xf32>
    %120 = arith.mulf %118, %119 : vector<1x32xf32>
    %121 = arith.mulf %116, %116 : vector<128x32xf32>
    %cst_137 = arith.constant dense<0.000000e+00> : vector<32xf32>
    %122 = vector.multi_reduction <add>, %121, %cst_137 [0] : vector<128x32xf32> to vector<32xf32>
    %123 = vector.shape_cast %122 : vector<32xf32> to vector<1x32xf32>
    %cst_138 = arith.constant 7.812500e-03 : f32
    %124 = vector.broadcast %cst_138 : f32 to vector<1x32xf32>
    %125 = arith.mulf %123, %124 : vector<1x32xf32>
    %126 = arith.mulf %120, %120 : vector<1x32xf32>
    %127 = arith.subf %125, %126 : vector<1x32xf32>
    %cst_139 = arith.constant 9.99999974E-6 : f32
    %128 = vector.broadcast %cst_139 : f32 to vector<1x32xf32>
    %129 = arith.addf %127, %128 : vector<1x32xf32>
    %130 = math.rsqrt %129 : vector<1x32xf32>
    %131 = arith.mulf %77, %130 : vector<1x32xf32>
    %132 = arith.mulf %120, %131 : vector<1x32xf32>
    %133 = arith.subf %78, %132 : vector<1x32xf32>
    %134 = vector.broadcast %131 : vector<1x32xf32> to vector<128x32xf32>
    %135 = arith.mulf %116, %134 : vector<128x32xf32>
    %136 = vector.broadcast %133 : vector<1x32xf32> to vector<128x32xf32>
    %137 = arith.addf %135, %136 : vector<128x32xf32>
    %cst_140 = arith.constant 0.000000e+00 : f32
    %138 = vector.broadcast %cst_140 : f32 to vector<128x32xf32>
    %139 = arith.maximumf %137, %138 : vector<128x32xf32>
    %140 = vector.shape_cast %139 : vector<128x32xf32> to vector<2x8x8x32xf32>
    %c0_141 = arith.constant 0 : index
    %c1_142 = arith.constant 1 : index
    %c8_143 = arith.constant 8 : index
    %c0_144 = arith.constant 0 : index
    %141 = vector.load %arg16[%c0_141, %c1_142, %c8_143, %c0_144] : memref<2x10x17x32xf32, #tpu.memory_space<vmem>>, vector<2x8x8x32xf32>
    tpu.vector_store %arg16[%c0_141, %c1_142, %c8_143, %c0_144], %140 {strides = array<i32>} : memref<2x10x17x32xf32, #tpu.memory_space<vmem>>, vector<2x8x8x32xf32>,
    %c1_145 = arith.constant 1 : index
    %c0_146 = arith.constant 0 : index
    %c0_147 = arith.constant 0 : index
    %142 = vector.load %arg3[%c1_145, %c0_146, %c0_147] : memref<4x288x32xbf16, #tpu.memory_space<vmem>>, vector<1x288x32xbf16>
    %143 = vector.shape_cast %142 : vector<1x288x32xbf16> to vector<288x32xbf16>
    %144 = vector.extract_strided_slice %74 {offsets = [0, 0], sizes = [1, 32], strides = [1, 1]} : vector<2x32xf32> to vector<1x32xf32>
    %145 = vector.extract_strided_slice %74 {offsets = [1, 0], sizes = [1, 32], strides = [1, 1]} : vector<2x32xf32> to vector<1x32xf32>
    %c0_148 = arith.constant 0 : index
    %c0_149 = arith.constant 0 : index
    %c7_150 = arith.constant 7 : index
    %c0_151 = arith.constant 0 : index
    %146 = vector.load %arg16[%c0_148, %c0_149, %c7_150, %c0_151] : memref<2x10x17x32xf32, #tpu.memory_space<vmem>>, vector<2x8x8x32xf32>
    %147 = vector.shape_cast %146 : vector<2x8x8x32xf32> to vector<128x32xf32>
    %148 = arith.truncf %147 : vector<128x32xf32> to vector<128x32xbf16>
    %c0_152 = arith.constant 0 : index
    %c0_153 = arith.constant 0 : index
    %149 = vector.load %arg17[%c0_152, %c0_153] : memref<128x288xbf16, #tpu.memory_space<vmem>>, vector<128x32xbf16>
    tpu.vector_store %arg17[%c0_152, %c0_153], %148 {strides = array<i32>} : memref<128x288xbf16, #tpu.memory_space<vmem>>, vector<128x32xbf16>,
    %c0_154 = arith.constant 0 : index
    %c0_155 = arith.constant 0 : index
    %c8_156 = arith.constant 8 : index
    %c0_157 = arith.constant 0 : index
    %150 = vector.load %arg16[%c0_154, %c0_155, %c8_156, %c0_157] : memref<2x10x17x32xf32, #tpu.memory_space<vmem>>, vector<2x8x8x32xf32>
    %151 = vector.shape_cast %150 : vector<2x8x8x32xf32> to vector<128x32xf32>
    %152 = arith.truncf %151 : vector<128x32xf32> to vector<128x32xbf16>
    %c0_158 = arith.constant 0 : index
    %c32_159 = arith.constant 32 : index
    %153 = vector.load %arg17[%c0_158, %c32_159] : memref<128x288xbf16, #tpu.memory_space<vmem>>, vector<128x32xbf16>
    tpu.vector_store %arg17[%c0_158, %c32_159], %152 {strides = array<i32>} : memref<128x288xbf16, #tpu.memory_space<vmem>>, vector<128x32xbf16>,
    %c0_160 = arith.constant 0 : index
    %c0_161 = arith.constant 0 : index
    %c9_162 = arith.constant 9 : index
    %c0_163 = arith.constant 0 : index
    %154 = vector.load %arg16[%c0_160, %c0_161, %c9_162, %c0_163] : memref<2x10x17x32xf32, #tpu.memory_space<vmem>>, vector<2x8x8x32xf32>
    %155 = vector.shape_cast %154 : vector<2x8x8x32xf32> to vector<128x32xf32>
    %156 = arith.truncf %155 : vector<128x32xf32> to vector<128x32xbf16>
    %c0_164 = arith.constant 0 : index
    %c64_165 = arith.constant 64 : index
    %157 = vector.load %arg17[%c0_164, %c64_165] : memref<128x288xbf16, #tpu.memory_space<vmem>>, vector<128x32xbf16>
    tpu.vector_store %arg17[%c0_164, %c64_165], %156 {strides = array<i32>} : memref<128x288xbf16, #tpu.memory_space<vmem>>, vector<128x32xbf16>,
    %c0_166 = arith.constant 0 : index
    %c1_167 = arith.constant 1 : index
    %c7_168 = arith.constant 7 : index
    %c0_169 = arith.constant 0 : index
    %158 = vector.load %arg16[%c0_166, %c1_167, %c7_168, %c0_169] : memref<2x10x17x32xf32, #tpu.memory_space<vmem>>, vector<2x8x8x32xf32>
    %159 = vector.shape_cast %158 : vector<2x8x8x32xf32> to vector<128x32xf32>
    %160 = arith.truncf %159 : vector<128x32xf32> to vector<128x32xbf16>
    %c0_170 = arith.constant 0 : index
    %c96_171 = arith.constant 96 : index
    %161 = vector.load %arg17[%c0_170, %c96_171] : memref<128x288xbf16, #tpu.memory_space<vmem>>, vector<128x32xbf16>
    tpu.vector_store %arg17[%c0_170, %c96_171], %160 {strides = array<i32>} : memref<128x288xbf16, #tpu.memory_space<vmem>>, vector<128x32xbf16>,
    %c0_172 = arith.constant 0 : index
    %c1_173 = arith.constant 1 : index
    %c8_174 = arith.constant 8 : index
    %c0_175 = arith.constant 0 : index
    %162 = vector.load %arg16[%c0_172, %c1_173, %c8_174, %c0_175] : memref<2x10x17x32xf32, #tpu.memory_space<vmem>>, vector<2x8x8x32xf32>
    %163 = vector.shape_cast %162 : vector<2x8x8x32xf32> to vector<128x32xf32>
    %164 = arith.truncf %163 : vector<128x32xf32> to vector<128x32xbf16>
    %c0_176 = arith.constant 0 : index
    %c128_177 = arith.constant 128 : index
    %165 = vector.load %arg17[%c0_176, %c128_177] : memref<128x288xbf16, #tpu.memory_space<vmem>>, vector<128x32xbf16>
    tpu.vector_store %arg17[%c0_176, %c128_177], %164 {strides = array<i32>} : memref<128x288xbf16, #tpu.memory_space<vmem>>, vector<128x32xbf16>,
    %c0_178 = arith.constant 0 : index
    %c1_179 = arith.constant 1 : index
    %c9_180 = arith.constant 9 : index
    %c0_181 = arith.constant 0 : index
    %166 = vector.load %arg16[%c0_178, %c1_179, %c9_180, %c0_181] : memref<2x10x17x32xf32, #tpu.memory_space<vmem>>, vector<2x8x8x32xf32>
    %167 = vector.shape_cast %166 : vector<2x8x8x32xf32> to vector<128x32xf32>
    %168 = arith.truncf %167 : vector<128x32xf32> to vector<128x32xbf16>
    %c0_182 = arith.constant 0 : index
    %c160_183 = arith.constant 160 : index
    %169 = vector.load %arg17[%c0_182, %c160_183] : memref<128x288xbf16, #tpu.memory_space<vmem>>, vector<128x32xbf16>
    tpu.vector_store %arg17[%c0_182, %c160_183], %168 {strides = array<i32>} : memref<128x288xbf16, #tpu.memory_space<vmem>>, vector<128x32xbf16>,
    %c0_184 = arith.constant 0 : index
    %c2_185 = arith.constant 2 : index
    %c7_186 = arith.constant 7 : index
    %c0_187 = arith.constant 0 : index
    %170 = vector.load %arg16[%c0_184, %c2_185, %c7_186, %c0_187] : memref<2x10x17x32xf32, #tpu.memory_space<vmem>>, vector<2x8x8x32xf32>
    %171 = vector.shape_cast %170 : vector<2x8x8x32xf32> to vector<128x32xf32>
    %172 = arith.truncf %171 : vector<128x32xf32> to vector<128x32xbf16>
    %c0_188 = arith.constant 0 : index
    %c192_189 = arith.constant 192 : index
    %173 = vector.load %arg17[%c0_188, %c192_189] : memref<128x288xbf16, #tpu.memory_space<vmem>>, vector<128x32xbf16>
    tpu.vector_store %arg17[%c0_188, %c192_189], %172 {strides = array<i32>} : memref<128x288xbf16, #tpu.memory_space<vmem>>, vector<128x32xbf16>,
    %c0_190 = arith.constant 0 : index
    %c2_191 = arith.constant 2 : index
    %c8_192 = arith.constant 8 : index
    %c0_193 = arith.constant 0 : index
    %174 = vector.load %arg16[%c0_190, %c2_191, %c8_192, %c0_193] : memref<2x10x17x32xf32, #tpu.memory_space<vmem>>, vector<2x8x8x32xf32>
    %175 = vector.shape_cast %174 : vector<2x8x8x32xf32> to vector<128x32xf32>
    %176 = arith.truncf %175 : vector<128x32xf32> to vector<128x32xbf16>
    %c0_194 = arith.constant 0 : index
    %c224_195 = arith.constant 224 : index
    %177 = vector.load %arg17[%c0_194, %c224_195] : memref<128x288xbf16, #tpu.memory_space<vmem>>, vector<128x32xbf16>
    tpu.vector_store %arg17[%c0_194, %c224_195], %176 {strides = array<i32>} : memref<128x288xbf16, #tpu.memory_space<vmem>>, vector<128x32xbf16>,
    %c0_196 = arith.constant 0 : index
    %c2_197 = arith.constant 2 : index
    %c9_198 = arith.constant 9 : index
    %c0_199 = arith.constant 0 : index
    %178 = vector.load %arg16[%c0_196, %c2_197, %c9_198, %c0_199] : memref<2x10x17x32xf32, #tpu.memory_space<vmem>>, vector<2x8x8x32xf32>
    %179 = vector.shape_cast %178 : vector<2x8x8x32xf32> to vector<128x32xf32>
    %180 = arith.truncf %179 : vector<128x32xf32> to vector<128x32xbf16>
    %c0_200 = arith.constant 0 : index
    %c256_201 = arith.constant 256 : index
    %181 = vector.load %arg17[%c0_200, %c256_201] : memref<128x288xbf16, #tpu.memory_space<vmem>>, vector<128x32xbf16>
    tpu.vector_store %arg17[%c0_200, %c256_201], %180 {strides = array<i32>} : memref<128x288xbf16, #tpu.memory_space<vmem>>, vector<128x32xbf16>,
    %c0_202 = arith.constant 0 : index
    %c0_203 = arith.constant 0 : index
    %182 = vector.load %arg17[%c0_202, %c0_203] : memref<128x288xbf16, #tpu.memory_space<vmem>>, vector<128x288xbf16>
    %cst_204 = arith.constant dense<0.000000e+00> : vector<128x32xf32>
    %183 = tpu.matmul %182, %143, %cst_204 {dimension_numbers = #tpu.dot_dimension_numbers<[1], [0], [0], [1], [0, 0, 1, 1], [], []>} : vector<128x288xbf16>, vector<288x32xbf16>, vector<128x32xf32> -> vector<128x32xf32>
    %cst_205 = arith.constant dense<0.000000e+00> : vector<32xf32>
    %184 = vector.multi_reduction <add>, %183, %cst_205 [0] : vector<128x32xf32> to vector<32xf32>
    %185 = vector.shape_cast %184 : vector<32xf32> to vector<1x32xf32>
    %cst_206 = arith.constant 7.812500e-03 : f32
    %186 = vector.broadcast %cst_206 : f32 to vector<1x32xf32>
    %187 = arith.mulf %185, %186 : vector<1x32xf32>
    %188 = arith.mulf %183, %183 : vector<128x32xf32>
    %cst_207 = arith.constant dense<0.000000e+00> : vector<32xf32>
    %189 = vector.multi_reduction <add>, %188, %cst_207 [0] : vector<128x32xf32> to vector<32xf32>
    %190 = vector.shape_cast %189 : vector<32xf32> to vector<1x32xf32>
    %cst_208 = arith.constant 7.812500e-03 : f32
    %191 = vector.broadcast %cst_208 : f32 to vector<1x32xf32>
    %192 = arith.mulf %190, %191 : vector<1x32xf32>
    %193 = arith.mulf %187, %187 : vector<1x32xf32>
    %194 = arith.subf %192, %193 : vector<1x32xf32>
    %cst_209 = arith.constant 9.99999974E-6 : f32
    %195 = vector.broadcast %cst_209 : f32 to vector<1x32xf32>
    %196 = arith.addf %194, %195 : vector<1x32xf32>
    %197 = math.rsqrt %196 : vector<1x32xf32>
    %198 = arith.mulf %144, %197 : vector<1x32xf32>
    %199 = arith.mulf %187, %198 : vector<1x32xf32>
    %200 = arith.subf %145, %199 : vector<1x32xf32>
    %201 = vector.broadcast %198 : vector<1x32xf32> to vector<128x32xf32>
    %202 = arith.mulf %183, %201 : vector<128x32xf32>
    %203 = vector.broadcast %200 : vector<1x32xf32> to vector<128x32xf32>
    %204 = arith.addf %202, %203 : vector<128x32xf32>
    %205 = arith.addf %204, %68 : vector<128x32xf32>
    %cst_210 = arith.constant 0.000000e+00 : f32
    %206 = vector.broadcast %cst_210 : f32 to vector<128x32xf32>
    %207 = arith.maximumf %205, %206 : vector<128x32xf32>
    %208 = vector.shape_cast %207 : vector<128x32xf32> to vector<2x8x8x32xf32>
    %c0_211 = arith.constant 0 : index
    %c1_212 = arith.constant 1 : index
    %c8_213 = arith.constant 8 : index
    %c0_214 = arith.constant 0 : index
    %209 = vector.load %arg16[%c0_211, %c1_212, %c8_213, %c0_214] : memref<2x10x17x32xf32, #tpu.memory_space<vmem>>, vector<2x8x8x32xf32>
    tpu.vector_store %arg16[%c0_211, %c1_212, %c8_213, %c0_214], %208 {strides = array<i32>} : memref<2x10x17x32xf32, #tpu.memory_space<vmem>>, vector<2x8x8x32xf32>,
    %c2_215 = arith.constant 2 : index
    %c0_216 = arith.constant 0 : index
    %c0_217 = arith.constant 0 : index
    %210 = vector.load %arg4[%c2_215, %c0_216, %c0_217] : memref<4x2x32xf32, #tpu.memory_space<vmem>>, vector<1x2x32xf32>
    %211 = vector.shape_cast %210 : vector<1x2x32xf32> to vector<2x32xf32>
    %c3 = arith.constant 3 : index
    %c0_218 = arith.constant 0 : index
    %c0_219 = arith.constant 0 : index
    %212 = vector.load %arg4[%c3, %c0_218, %c0_219] : memref<4x2x32xf32, #tpu.memory_space<vmem>>, vector<1x2x32xf32>
    %213 = vector.shape_cast %212 : vector<1x2x32xf32> to vector<2x32xf32>
    %c2_220 = arith.constant 2 : index
    %c0_221 = arith.constant 0 : index
    %c0_222 = arith.constant 0 : index
    %214 = vector.load %arg3[%c2_220, %c0_221, %c0_222] : memref<4x288x32xbf16, #tpu.memory_space<vmem>>, vector<1x288x32xbf16>
    %215 = vector.shape_cast %214 : vector<1x288x32xbf16> to vector<288x32xbf16>
    %216 = vector.extract_strided_slice %211 {offsets = [0, 0], sizes = [1, 32], strides = [1, 1]} : vector<2x32xf32> to vector<1x32xf32>
    %217 = vector.extract_strided_slice %211 {offsets = [1, 0], sizes = [1, 32], strides = [1, 1]} : vector<2x32xf32> to vector<1x32xf32>
    %c0_223 = arith.constant 0 : index
    %c0_224 = arith.constant 0 : index
    %c7_225 = arith.constant 7 : index
    %c0_226 = arith.constant 0 : index
    %218 = vector.load %arg16[%c0_223, %c0_224, %c7_225, %c0_226] : memref<2x10x17x32xf32, #tpu.memory_space<vmem>>, vector<2x8x8x32xf32>
    %219 = vector.shape_cast %218 : vector<2x8x8x32xf32> to vector<128x32xf32>
    %220 = arith.truncf %219 : vector<128x32xf32> to vector<128x32xbf16>
    %c0_227 = arith.constant 0 : index
    %c0_228 = arith.constant 0 : index
    %221 = vector.load %arg17[%c0_227, %c0_228] : memref<128x288xbf16, #tpu.memory_space<vmem>>, vector<128x32xbf16>
    tpu.vector_store %arg17[%c0_227, %c0_228], %220 {strides = array<i32>} : memref<128x288xbf16, #tpu.memory_space<vmem>>, vector<128x32xbf16>,
    %c0_229 = arith.constant 0 : index
    %c0_230 = arith.constant 0 : index
    %c8_231 = arith.constant 8 : index
    %c0_232 = arith.constant 0 : index
    %222 = vector.load %arg16[%c0_229, %c0_230, %c8_231, %c0_232] : memref<2x10x17x32xf32, #tpu.memory_space<vmem>>, vector<2x8x8x32xf32>
    %223 = vector.shape_cast %222 : vector<2x8x8x32xf32> to vector<128x32xf32>
    %224 = arith.truncf %223 : vector<128x32xf32> to vector<128x32xbf16>
    %c0_233 = arith.constant 0 : index
    %c32_234 = arith.constant 32 : index
    %225 = vector.load %arg17[%c0_233, %c32_234] : memref<128x288xbf16, #tpu.memory_space<vmem>>, vector<128x32xbf16>
    tpu.vector_store %arg17[%c0_233, %c32_234], %224 {strides = array<i32>} : memref<128x288xbf16, #tpu.memory_space<vmem>>, vector<128x32xbf16>,
    %c0_235 = arith.constant 0 : index
    %c0_236 = arith.constant 0 : index
    %c9_237 = arith.constant 9 : index
    %c0_238 = arith.constant 0 : index
    %226 = vector.load %arg16[%c0_235, %c0_236, %c9_237, %c0_238] : memref<2x10x17x32xf32, #tpu.memory_space<vmem>>, vector<2x8x8x32xf32>
    %227 = vector.shape_cast %226 : vector<2x8x8x32xf32> to vector<128x32xf32>
    %228 = arith.truncf %227 : vector<128x32xf32> to vector<128x32xbf16>
    %c0_239 = arith.constant 0 : index
    %c64_240 = arith.constant 64 : index
    %229 = vector.load %arg17[%c0_239, %c64_240] : memref<128x288xbf16, #tpu.memory_space<vmem>>, vector<128x32xbf16>
    tpu.vector_store %arg17[%c0_239, %c64_240], %228 {strides = array<i32>} : memref<128x288xbf16, #tpu.memory_space<vmem>>, vector<128x32xbf16>,
    %c0_241 = arith.constant 0 : index
    %c1_242 = arith.constant 1 : index
    %c7_243 = arith.constant 7 : index
    %c0_244 = arith.constant 0 : index
    %230 = vector.load %arg16[%c0_241, %c1_242, %c7_243, %c0_244] : memref<2x10x17x32xf32, #tpu.memory_space<vmem>>, vector<2x8x8x32xf32>
    %231 = vector.shape_cast %230 : vector<2x8x8x32xf32> to vector<128x32xf32>
    %232 = arith.truncf %231 : vector<128x32xf32> to vector<128x32xbf16>
    %c0_245 = arith.constant 0 : index
    %c96_246 = arith.constant 96 : index
    %233 = vector.load %arg17[%c0_245, %c96_246] : memref<128x288xbf16, #tpu.memory_space<vmem>>, vector<128x32xbf16>
    tpu.vector_store %arg17[%c0_245, %c96_246], %232 {strides = array<i32>} : memref<128x288xbf16, #tpu.memory_space<vmem>>, vector<128x32xbf16>,
    %c0_247 = arith.constant 0 : index
    %c1_248 = arith.constant 1 : index
    %c8_249 = arith.constant 8 : index
    %c0_250 = arith.constant 0 : index
    %234 = vector.load %arg16[%c0_247, %c1_248, %c8_249, %c0_250] : memref<2x10x17x32xf32, #tpu.memory_space<vmem>>, vector<2x8x8x32xf32>
    %235 = vector.shape_cast %234 : vector<2x8x8x32xf32> to vector<128x32xf32>
    %236 = arith.truncf %235 : vector<128x32xf32> to vector<128x32xbf16>
    %c0_251 = arith.constant 0 : index
    %c128_252 = arith.constant 128 : index
    %237 = vector.load %arg17[%c0_251, %c128_252] : memref<128x288xbf16, #tpu.memory_space<vmem>>, vector<128x32xbf16>
    tpu.vector_store %arg17[%c0_251, %c128_252], %236 {strides = array<i32>} : memref<128x288xbf16, #tpu.memory_space<vmem>>, vector<128x32xbf16>,
    %c0_253 = arith.constant 0 : index
    %c1_254 = arith.constant 1 : index
    %c9_255 = arith.constant 9 : index
    %c0_256 = arith.constant 0 : index
    %238 = vector.load %arg16[%c0_253, %c1_254, %c9_255, %c0_256] : memref<2x10x17x32xf32, #tpu.memory_space<vmem>>, vector<2x8x8x32xf32>
    %239 = vector.shape_cast %238 : vector<2x8x8x32xf32> to vector<128x32xf32>
    %240 = arith.truncf %239 : vector<128x32xf32> to vector<128x32xbf16>
    %c0_257 = arith.constant 0 : index
    %c160_258 = arith.constant 160 : index
    %241 = vector.load %arg17[%c0_257, %c160_258] : memref<128x288xbf16, #tpu.memory_space<vmem>>, vector<128x32xbf16>
    tpu.vector_store %arg17[%c0_257, %c160_258], %240 {strides = array<i32>} : memref<128x288xbf16, #tpu.memory_space<vmem>>, vector<128x32xbf16>,
    %c0_259 = arith.constant 0 : index
    %c2_260 = arith.constant 2 : index
    %c7_261 = arith.constant 7 : index
    %c0_262 = arith.constant 0 : index
    %242 = vector.load %arg16[%c0_259, %c2_260, %c7_261, %c0_262] : memref<2x10x17x32xf32, #tpu.memory_space<vmem>>, vector<2x8x8x32xf32>
    %243 = vector.shape_cast %242 : vector<2x8x8x32xf32> to vector<128x32xf32>
    %244 = arith.truncf %243 : vector<128x32xf32> to vector<128x32xbf16>
    %c0_263 = arith.constant 0 : index
    %c192_264 = arith.constant 192 : index
    %245 = vector.load %arg17[%c0_263, %c192_264] : memref<128x288xbf16, #tpu.memory_space<vmem>>, vector<128x32xbf16>
    tpu.vector_store %arg17[%c0_263, %c192_264], %244 {strides = array<i32>} : memref<128x288xbf16, #tpu.memory_space<vmem>>, vector<128x32xbf16>,
    %c0_265 = arith.constant 0 : index
    %c2_266 = arith.constant 2 : index
    %c8_267 = arith.constant 8 : index
    %c0_268 = arith.constant 0 : index
    %246 = vector.load %arg16[%c0_265, %c2_266, %c8_267, %c0_268] : memref<2x10x17x32xf32, #tpu.memory_space<vmem>>, vector<2x8x8x32xf32>
    %247 = vector.shape_cast %246 : vector<2x8x8x32xf32> to vector<128x32xf32>
    %248 = arith.truncf %247 : vector<128x32xf32> to vector<128x32xbf16>
    %c0_269 = arith.constant 0 : index
    %c224_270 = arith.constant 224 : index
    %249 = vector.load %arg17[%c0_269, %c224_270] : memref<128x288xbf16, #tpu.memory_space<vmem>>, vector<128x32xbf16>
    tpu.vector_store %arg17[%c0_269, %c224_270], %248 {strides = array<i32>} : memref<128x288xbf16, #tpu.memory_space<vmem>>, vector<128x32xbf16>,
    %c0_271 = arith.constant 0 : index
    %c2_272 = arith.constant 2 : index
    %c9_273 = arith.constant 9 : index
    %c0_274 = arith.constant 0 : index
    %250 = vector.load %arg16[%c0_271, %c2_272, %c9_273, %c0_274] : memref<2x10x17x32xf32, #tpu.memory_space<vmem>>, vector<2x8x8x32xf32>
    %251 = vector.shape_cast %250 : vector<2x8x8x32xf32> to vector<128x32xf32>
    %252 = arith.truncf %251 : vector<128x32xf32> to vector<128x32xbf16>
    %c0_275 = arith.constant 0 : index
    %c256_276 = arith.constant 256 : index
    %253 = vector.load %arg17[%c0_275, %c256_276] : memref<128x288xbf16, #tpu.memory_space<vmem>>, vector<128x32xbf16>
    tpu.vector_store %arg17[%c0_275, %c256_276], %252 {strides = array<i32>} : memref<128x288xbf16, #tpu.memory_space<vmem>>, vector<128x32xbf16>,
    %c0_277 = arith.constant 0 : index
    %c0_278 = arith.constant 0 : index
    %254 = vector.load %arg17[%c0_277, %c0_278] : memref<128x288xbf16, #tpu.memory_space<vmem>>, vector<128x288xbf16>
    %cst_279 = arith.constant dense<0.000000e+00> : vector<128x32xf32>
    %255 = tpu.matmul %254, %215, %cst_279 {dimension_numbers = #tpu.dot_dimension_numbers<[1], [0], [0], [1], [0, 0, 1, 1], [], []>} : vector<128x288xbf16>, vector<288x32xbf16>, vector<128x32xf32> -> vector<128x32xf32>
    %cst_280 = arith.constant dense<0.000000e+00> : vector<32xf32>
    %256 = vector.multi_reduction <add>, %255, %cst_280 [0] : vector<128x32xf32> to vector<32xf32>
    %257 = vector.shape_cast %256 : vector<32xf32> to vector<1x32xf32>
    %cst_281 = arith.constant 7.812500e-03 : f32
    %258 = vector.broadcast %cst_281 : f32 to vector<1x32xf32>
    %259 = arith.mulf %257, %258 : vector<1x32xf32>
    %260 = arith.mulf %255, %255 : vector<128x32xf32>
    %cst_282 = arith.constant dense<0.000000e+00> : vector<32xf32>
    %261 = vector.multi_reduction <add>, %260, %cst_282 [0] : vector<128x32xf32> to vector<32xf32>
    %262 = vector.shape_cast %261 : vector<32xf32> to vector<1x32xf32>
    %cst_283 = arith.constant 7.812500e-03 : f32
    %263 = vector.broadcast %cst_283 : f32 to vector<1x32xf32>
    %264 = arith.mulf %262, %263 : vector<1x32xf32>
    %265 = arith.mulf %259, %259 : vector<1x32xf32>
    %266 = arith.subf %264, %265 : vector<1x32xf32>
    %cst_284 = arith.constant 9.99999974E-6 : f32
    %267 = vector.broadcast %cst_284 : f32 to vector<1x32xf32>
    %268 = arith.addf %266, %267 : vector<1x32xf32>
    %269 = math.rsqrt %268 : vector<1x32xf32>
    %270 = arith.mulf %216, %269 : vector<1x32xf32>
    %271 = arith.mulf %259, %270 : vector<1x32xf32>
    %272 = arith.subf %217, %271 : vector<1x32xf32>
    %273 = vector.broadcast %270 : vector<1x32xf32> to vector<128x32xf32>
    %274 = arith.mulf %255, %273 : vector<128x32xf32>
    %275 = vector.broadcast %272 : vector<1x32xf32> to vector<128x32xf32>
    %276 = arith.addf %274, %275 : vector<128x32xf32>
    %cst_285 = arith.constant 0.000000e+00 : f32
    %277 = vector.broadcast %cst_285 : f32 to vector<128x32xf32>
    %278 = arith.maximumf %276, %277 : vector<128x32xf32>
    %279 = vector.shape_cast %278 : vector<128x32xf32> to vector<2x8x8x32xf32>
    %c0_286 = arith.constant 0 : index
    %c1_287 = arith.constant 1 : index
    %c8_288 = arith.constant 8 : index
    %c0_289 = arith.constant 0 : index
    %280 = vector.load %arg16[%c0_286, %c1_287, %c8_288, %c0_289] : memref<2x10x17x32xf32, #tpu.memory_space<vmem>>, vector<2x8x8x32xf32>
    tpu.vector_store %arg16[%c0_286, %c1_287, %c8_288, %c0_289], %279 {strides = array<i32>} : memref<2x10x17x32xf32, #tpu.memory_space<vmem>>, vector<2x8x8x32xf32>,
    %c3_290 = arith.constant 3 : index
    %c0_291 = arith.constant 0 : index
    %c0_292 = arith.constant 0 : index
    %281 = vector.load %arg3[%c3_290, %c0_291, %c0_292] : memref<4x288x32xbf16, #tpu.memory_space<vmem>>, vector<1x288x32xbf16>
    %282 = vector.shape_cast %281 : vector<1x288x32xbf16> to vector<288x32xbf16>
    %283 = vector.extract_strided_slice %213 {offsets = [0, 0], sizes = [1, 32], strides = [1, 1]} : vector<2x32xf32> to vector<1x32xf32>
    %284 = vector.extract_strided_slice %213 {offsets = [1, 0], sizes = [1, 32], strides = [1, 1]} : vector<2x32xf32> to vector<1x32xf32>
    %c0_293 = arith.constant 0 : index
    %c0_294 = arith.constant 0 : index
    %c7_295 = arith.constant 7 : index
    %c0_296 = arith.constant 0 : index
    %285 = vector.load %arg16[%c0_293, %c0_294, %c7_295, %c0_296] : memref<2x10x17x32xf32, #tpu.memory_space<vmem>>, vector<2x8x8x32xf32>
    %286 = vector.shape_cast %285 : vector<2x8x8x32xf32> to vector<128x32xf32>
    %287 = arith.truncf %286 : vector<128x32xf32> to vector<128x32xbf16>
    %c0_297 = arith.constant 0 : index
    %c0_298 = arith.constant 0 : index
    %288 = vector.load %arg17[%c0_297, %c0_298] : memref<128x288xbf16, #tpu.memory_space<vmem>>, vector<128x32xbf16>
    tpu.vector_store %arg17[%c0_297, %c0_298], %287 {strides = array<i32>} : memref<128x288xbf16, #tpu.memory_space<vmem>>, vector<128x32xbf16>,
    %c0_299 = arith.constant 0 : index
    %c0_300 = arith.constant 0 : index
    %c8_301 = arith.constant 8 : index
    %c0_302 = arith.constant 0 : index
    %289 = vector.load %arg16[%c0_299, %c0_300, %c8_301, %c0_302] : memref<2x10x17x32xf32, #tpu.memory_space<vmem>>, vector<2x8x8x32xf32>
    %290 = vector.shape_cast %289 : vector<2x8x8x32xf32> to vector<128x32xf32>
    %291 = arith.truncf %290 : vector<128x32xf32> to vector<128x32xbf16>
    %c0_303 = arith.constant 0 : index
    %c32_304 = arith.constant 32 : index
    %292 = vector.load %arg17[%c0_303, %c32_304] : memref<128x288xbf16, #tpu.memory_space<vmem>>, vector<128x32xbf16>
    tpu.vector_store %arg17[%c0_303, %c32_304], %291 {strides = array<i32>} : memref<128x288xbf16, #tpu.memory_space<vmem>>, vector<128x32xbf16>,
    %c0_305 = arith.constant 0 : index
    %c0_306 = arith.constant 0 : index
    %c9_307 = arith.constant 9 : index
    %c0_308 = arith.constant 0 : index
    %293 = vector.load %arg16[%c0_305, %c0_306, %c9_307, %c0_308] : memref<2x10x17x32xf32, #tpu.memory_space<vmem>>, vector<2x8x8x32xf32>
    %294 = vector.shape_cast %293 : vector<2x8x8x32xf32> to vector<128x32xf32>
    %295 = arith.truncf %294 : vector<128x32xf32> to vector<128x32xbf16>
    %c0_309 = arith.constant 0 : index
    %c64_310 = arith.constant 64 : index
    %296 = vector.load %arg17[%c0_309, %c64_310] : memref<128x288xbf16, #tpu.memory_space<vmem>>, vector<128x32xbf16>
    tpu.vector_store %arg17[%c0_309, %c64_310], %295 {strides = array<i32>} : memref<128x288xbf16, #tpu.memory_space<vmem>>, vector<128x32xbf16>,
    %c0_311 = arith.constant 0 : index
    %c1_312 = arith.constant 1 : index
    %c7_313 = arith.constant 7 : index
    %c0_314 = arith.constant 0 : index
    %297 = vector.load %arg16[%c0_311, %c1_312, %c7_313, %c0_314] : memref<2x10x17x32xf32, #tpu.memory_space<vmem>>, vector<2x8x8x32xf32>
    %298 = vector.shape_cast %297 : vector<2x8x8x32xf32> to vector<128x32xf32>
    %299 = arith.truncf %298 : vector<128x32xf32> to vector<128x32xbf16>
    %c0_315 = arith.constant 0 : index
    %c96_316 = arith.constant 96 : index
    %300 = vector.load %arg17[%c0_315, %c96_316] : memref<128x288xbf16, #tpu.memory_space<vmem>>, vector<128x32xbf16>
    tpu.vector_store %arg17[%c0_315, %c96_316], %299 {strides = array<i32>} : memref<128x288xbf16, #tpu.memory_space<vmem>>, vector<128x32xbf16>,
    %c0_317 = arith.constant 0 : index
    %c1_318 = arith.constant 1 : index
    %c8_319 = arith.constant 8 : index
    %c0_320 = arith.constant 0 : index
    %301 = vector.load %arg16[%c0_317, %c1_318, %c8_319, %c0_320] : memref<2x10x17x32xf32, #tpu.memory_space<vmem>>, vector<2x8x8x32xf32>
    %302 = vector.shape_cast %301 : vector<2x8x8x32xf32> to vector<128x32xf32>
    %303 = arith.truncf %302 : vector<128x32xf32> to vector<128x32xbf16>
    %c0_321 = arith.constant 0 : index
    %c128_322 = arith.constant 128 : index
    %304 = vector.load %arg17[%c0_321, %c128_322] : memref<128x288xbf16, #tpu.memory_space<vmem>>, vector<128x32xbf16>
    tpu.vector_store %arg17[%c0_321, %c128_322], %303 {strides = array<i32>} : memref<128x288xbf16, #tpu.memory_space<vmem>>, vector<128x32xbf16>,
    %c0_323 = arith.constant 0 : index
    %c1_324 = arith.constant 1 : index
    %c9_325 = arith.constant 9 : index
    %c0_326 = arith.constant 0 : index
    %305 = vector.load %arg16[%c0_323, %c1_324, %c9_325, %c0_326] : memref<2x10x17x32xf32, #tpu.memory_space<vmem>>, vector<2x8x8x32xf32>
    %306 = vector.shape_cast %305 : vector<2x8x8x32xf32> to vector<128x32xf32>
    %307 = arith.truncf %306 : vector<128x32xf32> to vector<128x32xbf16>
    %c0_327 = arith.constant 0 : index
    %c160_328 = arith.constant 160 : index
    %308 = vector.load %arg17[%c0_327, %c160_328] : memref<128x288xbf16, #tpu.memory_space<vmem>>, vector<128x32xbf16>
    tpu.vector_store %arg17[%c0_327, %c160_328], %307 {strides = array<i32>} : memref<128x288xbf16, #tpu.memory_space<vmem>>, vector<128x32xbf16>,
    %c0_329 = arith.constant 0 : index
    %c2_330 = arith.constant 2 : index
    %c7_331 = arith.constant 7 : index
    %c0_332 = arith.constant 0 : index
    %309 = vector.load %arg16[%c0_329, %c2_330, %c7_331, %c0_332] : memref<2x10x17x32xf32, #tpu.memory_space<vmem>>, vector<2x8x8x32xf32>
    %310 = vector.shape_cast %309 : vector<2x8x8x32xf32> to vector<128x32xf32>
    %311 = arith.truncf %310 : vector<128x32xf32> to vector<128x32xbf16>
    %c0_333 = arith.constant 0 : index
    %c192_334 = arith.constant 192 : index
    %312 = vector.load %arg17[%c0_333, %c192_334] : memref<128x288xbf16, #tpu.memory_space<vmem>>, vector<128x32xbf16>
    tpu.vector_store %arg17[%c0_333, %c192_334], %311 {strides = array<i32>} : memref<128x288xbf16, #tpu.memory_space<vmem>>, vector<128x32xbf16>,
    %c0_335 = arith.constant 0 : index
    %c2_336 = arith.constant 2 : index
    %c8_337 = arith.constant 8 : index
    %c0_338 = arith.constant 0 : index
    %313 = vector.load %arg16[%c0_335, %c2_336, %c8_337, %c0_338] : memref<2x10x17x32xf32, #tpu.memory_space<vmem>>, vector<2x8x8x32xf32>
    %314 = vector.shape_cast %313 : vector<2x8x8x32xf32> to vector<128x32xf32>
    %315 = arith.truncf %314 : vector<128x32xf32> to vector<128x32xbf16>
    %c0_339 = arith.constant 0 : index
    %c224_340 = arith.constant 224 : index
    %316 = vector.load %arg17[%c0_339, %c224_340] : memref<128x288xbf16, #tpu.memory_space<vmem>>, vector<128x32xbf16>
    tpu.vector_store %arg17[%c0_339, %c224_340], %315 {strides = array<i32>} : memref<128x288xbf16, #tpu.memory_space<vmem>>, vector<128x32xbf16>,
    %c0_341 = arith.constant 0 : index
    %c2_342 = arith.constant 2 : index
    %c9_343 = arith.constant 9 : index
    %c0_344 = arith.constant 0 : index
    %317 = vector.load %arg16[%c0_341, %c2_342, %c9_343, %c0_344] : memref<2x10x17x32xf32, #tpu.memory_space<vmem>>, vector<2x8x8x32xf32>
    %318 = vector.shape_cast %317 : vector<2x8x8x32xf32> to vector<128x32xf32>
    %319 = arith.truncf %318 : vector<128x32xf32> to vector<128x32xbf16>
    %c0_345 = arith.constant 0 : index
    %c256_346 = arith.constant 256 : index
    %320 = vector.load %arg17[%c0_345, %c256_346] : memref<128x288xbf16, #tpu.memory_space<vmem>>, vector<128x32xbf16>
    tpu.vector_store %arg17[%c0_345, %c256_346], %319 {strides = array<i32>} : memref<128x288xbf16, #tpu.memory_space<vmem>>, vector<128x32xbf16>,
    %c0_347 = arith.constant 0 : index
    %c0_348 = arith.constant 0 : index
    %321 = vector.load %arg17[%c0_347, %c0_348] : memref<128x288xbf16, #tpu.memory_space<vmem>>, vector<128x288xbf16>
    %cst_349 = arith.constant dense<0.000000e+00> : vector<128x32xf32>
    %322 = tpu.matmul %321, %282, %cst_349 {dimension_numbers = #tpu.dot_dimension_numbers<[1], [0], [0], [1], [0, 0, 1, 1], [], []>} : vector<128x288xbf16>, vector<288x32xbf16>, vector<128x32xf32> -> vector<128x32xf32>
    %cst_350 = arith.constant dense<0.000000e+00> : vector<32xf32>
    %323 = vector.multi_reduction <add>, %322, %cst_350 [0] : vector<128x32xf32> to vector<32xf32>
    %324 = vector.shape_cast %323 : vector<32xf32> to vector<1x32xf32>
    %cst_351 = arith.constant 7.812500e-03 : f32
    %325 = vector.broadcast %cst_351 : f32 to vector<1x32xf32>
    %326 = arith.mulf %324, %325 : vector<1x32xf32>
    %327 = arith.mulf %322, %322 : vector<128x32xf32>
    %cst_352 = arith.constant dense<0.000000e+00> : vector<32xf32>
    %328 = vector.multi_reduction <add>, %327, %cst_352 [0] : vector<128x32xf32> to vector<32xf32>
    %329 = vector.shape_cast %328 : vector<32xf32> to vector<1x32xf32>
    %cst_353 = arith.constant 7.812500e-03 : f32
    %330 = vector.broadcast %cst_353 : f32 to vector<1x32xf32>
    %331 = arith.mulf %329, %330 : vector<1x32xf32>
    %332 = arith.mulf %326, %326 : vector<1x32xf32>
    %333 = arith.subf %331, %332 : vector<1x32xf32>
    %cst_354 = arith.constant 9.99999974E-6 : f32
    %334 = vector.broadcast %cst_354 : f32 to vector<1x32xf32>
    %335 = arith.addf %333, %334 : vector<1x32xf32>
    %336 = math.rsqrt %335 : vector<1x32xf32>
    %337 = arith.mulf %283, %336 : vector<1x32xf32>
    %338 = arith.mulf %326, %337 : vector<1x32xf32>
    %339 = arith.subf %284, %338 : vector<1x32xf32>
    %340 = vector.broadcast %337 : vector<1x32xf32> to vector<128x32xf32>
    %341 = arith.mulf %322, %340 : vector<128x32xf32>
    %342 = vector.broadcast %339 : vector<1x32xf32> to vector<128x32xf32>
    %343 = arith.addf %341, %342 : vector<128x32xf32>
    %344 = arith.addf %343, %207 : vector<128x32xf32>
    %cst_355 = arith.constant 0.000000e+00 : f32
    %345 = vector.broadcast %cst_355 : f32 to vector<128x32xf32>
    %346 = arith.maximumf %344, %345 : vector<128x32xf32>
    %347 = arith.truncf %346 : vector<128x32xf32> to vector<128x32xbf16>
    %c0_356 = arith.constant 0 : index
    %c0_357 = arith.constant 0 : index
    %348 = vector.load %arg13[%c0_356, %c0_357] : memref<2x128xf32, #tpu.memory_space<vmem>>, vector<2x128xf32>
    %c0_358 = arith.constant 0 : index
    %c0_359 = arith.constant 0 : index
    %349 = vector.load %arg6[%c0_358, %c0_359] : memref<3x3xf32, #tpu.memory_space<vmem>>, vector<3x3xf32>
    %c0_360 = arith.constant 0 : index
    %c0_361 = arith.constant 0 : index
    %350 = vector.load %arg5[%c0_360, %c0_361] : memref<32x3xbf16, #tpu.memory_space<vmem>>, vector<32x3xbf16>
    %cst_362 = arith.constant dense<0.000000e+00> : vector<128x3xf32>
    %351 = tpu.matmul %347, %350, %cst_362 {dimension_numbers = #tpu.dot_dimension_numbers<[1], [0], [0], [1], [0, 0, 1, 1], [], []>} : vector<128x32xbf16>, vector<32x3xbf16>, vector<128x3xf32> -> vector<128x3xf32>
    %352 = vector.extract_strided_slice %349 {offsets = [0, 0], sizes = [1, 3], strides = [1, 1]} : vector<3x3xf32> to vector<1x3xf32>
    %353 = vector.broadcast %352 : vector<1x3xf32> to vector<128x3xf32>
    %354 = arith.addf %351, %353 : vector<128x3xf32>
    %cst_363 = arith.constant dense<0.000000e+00> : vector<3xf32>
    %355 = vector.multi_reduction <add>, %354, %cst_363 [0] : vector<128x3xf32> to vector<3xf32>
    %356 = vector.shape_cast %355 : vector<3xf32> to vector<1x3xf32>
    %cst_364 = arith.constant 7.812500e-03 : f32
    %357 = vector.broadcast %cst_364 : f32 to vector<1x3xf32>
    %358 = arith.mulf %356, %357 : vector<1x3xf32>
    %359 = arith.mulf %354, %354 : vector<128x3xf32>
    %cst_365 = arith.constant dense<0.000000e+00> : vector<3xf32>
    %360 = vector.multi_reduction <add>, %359, %cst_365 [0] : vector<128x3xf32> to vector<3xf32>
    %361 = vector.shape_cast %360 : vector<3xf32> to vector<1x3xf32>
    %cst_366 = arith.constant 7.812500e-03 : f32
    %362 = vector.broadcast %cst_366 : f32 to vector<1x3xf32>
    %363 = arith.mulf %361, %362 : vector<1x3xf32>
    %364 = arith.mulf %358, %358 : vector<1x3xf32>
    %365 = arith.subf %363, %364 : vector<1x3xf32>
    %366 = vector.extract_strided_slice %349 {offsets = [1, 0], sizes = [1, 3], strides = [1, 1]} : vector<3x3xf32> to vector<1x3xf32>
    %cst_367 = arith.constant 9.99999974E-6 : f32
    %367 = vector.broadcast %cst_367 : f32 to vector<1x3xf32>
    %368 = arith.addf %365, %367 : vector<1x3xf32>
    %369 = math.rsqrt %368 : vector<1x3xf32>
    %370 = arith.mulf %366, %369 : vector<1x3xf32>
    %371 = vector.extract_strided_slice %349 {offsets = [2, 0], sizes = [1, 3], strides = [1, 1]} : vector<3x3xf32> to vector<1x3xf32>
    %372 = arith.mulf %358, %370 : vector<1x3xf32>
    %373 = arith.subf %371, %372 : vector<1x3xf32>
    %374 = vector.broadcast %370 : vector<1x3xf32> to vector<128x3xf32>
    %375 = arith.mulf %354, %374 : vector<128x3xf32>
    %376 = vector.broadcast %373 : vector<1x3xf32> to vector<128x3xf32>
    %377 = arith.addf %375, %376 : vector<128x3xf32>
    %cst_368 = arith.constant 0.000000e+00 : f32
    %378 = vector.broadcast %cst_368 : f32 to vector<128x3xf32>
    %379 = arith.maximumf %377, %378 : vector<128x3xf32>
    %380 = vector.extract_strided_slice %379 {offsets = [0, 0], sizes = [128, 2], strides = [1, 1]} : vector<128x3xf32> to vector<128x2xf32>
    %381 = vector.extract_strided_slice %379 {offsets = [0, 2], sizes = [128, 1], strides = [1, 1]} : vector<128x3xf32> to vector<128x1xf32>
    %382 = vector.extract_strided_slice %380 {offsets = [0, 0], sizes = [128, 1], strides = [1, 1]} : vector<128x2xf32> to vector<128x1xf32>
    %c0_369 = arith.constant 0 : index
    %c0_370 = arith.constant 0 : index
    %c0_371 = arith.constant 0 : index
    %383 = vector.load %arg7[%c0_369, %c0_370, %c0_371] : memref<2x128x65xf32, #tpu.memory_space<vmem>>, vector<1x128x65xf32>
    %384 = vector.shape_cast %383 : vector<1x128x65xf32> to vector<128x65xf32>
    %385 = vector.broadcast %382 : vector<128x1xf32> to vector<128x65xf32>
    %386 = arith.mulf %385, %384 : vector<128x65xf32>
    %387 = vector.extract_strided_slice %380 {offsets = [0, 1], sizes = [128, 1], strides = [1, 1]} : vector<128x2xf32> to vector<128x1xf32>
    %c1_372 = arith.constant 1 : index
    %c0_373 = arith.constant 0 : index
    %c0_374 = arith.constant 0 : index
    %388 = vector.load %arg7[%c1_372, %c0_373, %c0_374] : memref<2x128x65xf32, #tpu.memory_space<vmem>>, vector<1x128x65xf32>
    %389 = vector.shape_cast %388 : vector<1x128x65xf32> to vector<128x65xf32>
    %390 = vector.broadcast %387 : vector<128x1xf32> to vector<128x65xf32>
    %391 = arith.mulf %390, %389 : vector<128x65xf32>
    %392 = arith.addf %386, %391 : vector<128x65xf32>
    %cst_375 = arith.constant dense<0.000000e+00> : vector<2x65xf32>
    %393 = tpu.matmul %348, %392, %cst_375 {dimension_numbers = #tpu.dot_dimension_numbers<[1], [0], [0], [1], [0, 0, 1, 1], [], []>} : vector<2x128xf32>, vector<128x65xf32>, vector<2x65xf32> -> vector<2x65xf32>
    %c0_376 = arith.constant 0 : index
    %c0_377 = arith.constant 0 : index
    %394 = vector.load %arg8[%c0_376, %c0_377] : memref<1x65xf32, #tpu.memory_space<vmem>>, vector<1x65xf32>
    %395 = vector.broadcast %394 : vector<1x65xf32> to vector<2x65xf32>
    %396 = arith.addf %393, %395 : vector<2x65xf32>
    %c0_378 = arith.constant 0 : index
    %c0_379 = arith.constant 0 : index
    %397 = vector.load %arg14[%c0_378, %c0_379] : memref<2x65xf32, #tpu.memory_space<vmem>>, vector<2x65xf32>
    tpu.vector_store %arg14[%c0_378, %c0_379], %396 {strides = array<i32>} : memref<2x65xf32, #tpu.memory_space<vmem>>, vector<2x65xf32>,
    %c0_380 = arith.constant 0 : index
    %c0_381 = arith.constant 0 : index
    %398 = vector.load %arg9[%c0_380, %c0_381] : memref<128x256xf32, #tpu.memory_space<vmem>>, vector<128x256xf32>
    %399 = vector.broadcast %381 : vector<128x1xf32> to vector<128x256xf32>
    %400 = arith.mulf %399, %398 : vector<128x256xf32>
    %cst_382 = arith.constant dense<0.000000e+00> : vector<2x256xf32>
    %401 = tpu.matmul %348, %400, %cst_382 {dimension_numbers = #tpu.dot_dimension_numbers<[1], [0], [0], [1], [0, 0, 1, 1], [], []>} : vector<2x128xf32>, vector<128x256xf32>, vector<2x256xf32> -> vector<2x256xf32>
    %c0_383 = arith.constant 0 : index
    %c0_384 = arith.constant 0 : index
    %402 = vector.load %arg10[%c0_383, %c0_384] : memref<1x256xf32, #tpu.memory_space<vmem>>, vector<1x256xf32>
    %403 = vector.broadcast %402 : vector<1x256xf32> to vector<2x256xf32>
    %404 = arith.addf %401, %403 : vector<2x256xf32>
    %cst_385 = arith.constant 0.000000e+00 : f32
    %405 = vector.broadcast %cst_385 : f32 to vector<2x256xf32>
    %406 = arith.maximumf %404, %405 : vector<2x256xf32>
    %407 = arith.truncf %406 : vector<2x256xf32> to vector<2x256xbf16>
    %c0_386 = arith.constant 0 : index
    %c0_387 = arith.constant 0 : index
    %408 = vector.load %arg11[%c0_386, %c0_387] : memref<256x1xbf16, #tpu.memory_space<vmem>>, vector<256x1xbf16>
    %cst_388 = arith.constant dense<0.000000e+00> : vector<2x1xf32>
    %409 = tpu.matmul %407, %408, %cst_388 {dimension_numbers = #tpu.dot_dimension_numbers<[1], [0], [0], [1], [0, 0, 1, 1], [], []>} : vector<2x256xbf16>, vector<256x1xbf16>, vector<2x1xf32> -> vector<2x1xf32>
    %c0_389 = arith.constant 0 : index
    %c0_390 = arith.constant 0 : index
    %410 = vector.load %arg12[%c0_389, %c0_390] : memref<1x1xf32, #tpu.memory_space<vmem>>, vector<1x1xf32>
    %411 = vector.broadcast %410 : vector<1x1xf32> to vector<2x1xf32>
    %412 = arith.addf %409, %411 : vector<2x1xf32>
    %413 = math.tanh %412 : vector<2x1xf32>
    %c0_391 = arith.constant 0 : index
    %c0_392 = arith.constant 0 : index
    %414 = vector.load %arg15[%c0_391, %c0_392] : memref<2x1xf32, #tpu.memory_space<vmem>>, vector<2x1xf32>
    tpu.vector_store %arg15[%c0_391, %c0_392], %413 {strides = array<i32>} : memref<2x1xf32, #tpu.memory_space<vmem>>, vector<2x1xf32>,
    return
  }
}

</mosaic_0001>

<llo_original>
// kernel: alphago_net_forward.1
$region0: #{alphago_net_forward.1}
  #allocation0 [shape = 'u32[]', space=smem, size = 0x4, offset = 0x4, fixed_abs, tag = 'smem constant byte address 0x4 - core index']
  #allocation1 [shape = 'u32[144,128]{1,0:T(1,128)}', space=vmem, size = 0x12000, scoped, tag = 'internal scratch']
  #allocation2 [shape = 'f32[2,10,17,32]{3,2,1,0:T(8,128)}', space=vmem, size = 0x3c000, scoped, tag = 'scratch operand']
  #allocation3 [shape = 'bf16[128,288]{1,0:T(16,128)(2,1)}', space=vmem, size = 0x18000, scoped, tag = 'scratch operand']
  #allocation4 [shape = 'f32[1,1]{1,0:T(1,128)S(1)}', space=vmem, size = 0x200, scoped, tag = 'scoped memory for alphago_net_forward.1']
  %s0 = inlined_call_operand.vmem [shape: f32[2,8,8,32], index: 0, kind: input, shape index: {}]
  %s1 = inlined_call_operand.vmem [shape: bf16[288,32], index: 1, kind: input, shape index: {}]
  %s2 = inlined_call_operand.vmem [shape: f32[2,32], index: 2, kind: input, shape index: {}]
  %s3 = inlined_call_operand.vmem [shape: bf16[4,288,32], index: 3, kind: input, shape index: {}]
  %s4 = inlined_call_operand.vmem [shape: f32[4,2,32], index: 4, kind: input, shape index: {}]
  %s5 = inlined_call_operand.vmem [shape: bf16[32,3], index: 5, kind: input, shape index: {}]
  %s6 = inlined_call_operand.vmem [shape: f32[3,3], index: 6, kind: input, shape index: {}]
  %s7 = inlined_call_operand.vmem [shape: f32[2,128,65], index: 7, kind: input, shape index: {}]
  %s8 = inlined_call_operand.vmem [shape: f32[1,65], index: 8, kind: input, shape index: {}]
  %s9 = inlined_call_operand.vmem [shape: f32[128,256], index: 9, kind: input, shape index: {}]
  %s10 = inlined_call_operand.vmem [shape: f32[1,256], index: 10, kind: input, shape index: {}]
  %s11 = inlined_call_operand.vmem [shape: bf16[256,1], index: 11, kind: input, shape index: {}]
  %s12 = inlined_call_operand.<no memory space> [shape: f32[1,1], index: 12, kind: input, shape index: {}]
  %s13 = inlined_call_operand.vmem [shape: f32[2,128], index: 13, kind: input, shape index: {}]
  %s14 = inlined_call_operand.hbm [shape: f32[2,65], index: 14, kind: output, shape index: {0}]
  %s15 = inlined_call_operand.vmem [shape: f32[2,1], index: 15, kind: output, shape index: {1}]
  %16 = xla_tuple %s14, %s15
  %s17 = sld [smem:[#allocation0]]
  $region74: #{alphago_net_forward.1} parent=0
    _
  %s19 = ssub.s32 1, %s17
  %s20 = scalar_select 0, %s19, %s17
  %v21 = vstv %s12
  %22 = vst [vmem:[#allocation4] sm:$0x1] %v21
  $region1: #{alphago_net_forward.1} parent=0
    #allocation5 [shape = 'u8[1024]{0}', space=vmem, size = 0x400, scoped, tag = 'output window, operand 0, single buffered']
    #allocation6 [shape = 's32[1]{0}', space=sflag, size = 0x4, scoped, tag = 'scoped memory for alphago_net_forward.1']
    %23 = vsyncpa [#allocation6], 0
    // Predicated region
    $region2: #{alphago_net_forward.1} parent=1 // pred_check
      _
    $region3: #{alphago_net_forward.1} parent=1 // pred_check_branch
      %25 = sbr.rel (0) target = $region5
    $region4: #{alphago_net_forward.1} parent=1 // pred_region
      _
    $region5: #{alphago_net_forward.1} parent=1 // pred_fallthru
      _
    // Predicated region
    $region6: #{alphago_net_forward.1} parent=1 // pred_check
      _
    $region7: #{alphago_net_forward.1} parent=1 // pred_check_branch
      %27 = sbr.rel (0) target = $region9
    $region8: #{alphago_net_forward.1} parent=1 // pred_region
      _
    $region9: #{alphago_net_forward.1} parent=1 // pred_fallthru
      _
    // Predicated region
    $region10: #{alphago_net_forward.1} parent=1 // pred_check
      _
    $region11: #{alphago_net_forward.1} parent=1 // pred_check_branch
      %29 = sbr.rel (0) target = $region13
    $region12: #{alphago_net_forward.1} parent=1 // pred_region
      _
    $region13: #{alphago_net_forward.1} parent=1 // pred_fallthru
      _
    // Predicated region
    $region14: #{alphago_net_forward.1} parent=1 // pred_check
      _
    $region15: #{alphago_net_forward.1} parent=1 // pred_check_branch
      %31 = sbr.rel (0) target = $region17
    $region16: #{alphago_net_forward.1} parent=1 // pred_region
      _
    $region17: #{alphago_net_forward.1} parent=1 // pred_fallthru
      _
    // Predicated region
    $region18: #{alphago_net_forward.1} parent=1 // pred_check
      _
    $region19: #{alphago_net_forward.1} parent=1 // pred_check_branch
      %33 = sbr.rel (0) target = $region21
    $region20: #{alphago_net_forward.1} parent=1 // pred_region
      _
    $region21: #{alphago_net_forward.1} parent=1 // pred_fallthru
      _
    // Predicated region
    $region22: #{alphago_net_forward.1} parent=1 // pred_check
      _
    $region23: #{alphago_net_forward.1} parent=1 // pred_check_branch
      %35 = sbr.rel (0) target = $region25
    $region24: #{alphago_net_forward.1} parent=1 // pred_region
      _
    $region25: #{alphago_net_forward.1} parent=1 // pred_fallthru
      _
    // Predicated region
    $region26: #{alphago_net_forward.1} parent=1 // pred_check
      _
    $region27: #{alphago_net_forward.1} parent=1 // pred_check_branch
      %37 = sbr.rel (0) target = $region29
    $region28: #{alphago_net_forward.1} parent=1 // pred_region
      _
    $region29: #{alphago_net_forward.1} parent=1 // pred_fallthru
      _
    // Predicated region
    $region30: #{alphago_net_forward.1} parent=1 // pred_check
      _
    $region31: #{alphago_net_forward.1} parent=1 // pred_check_branch
      %39 = sbr.rel (0) target = $region33
    $region32: #{alphago_net_forward.1} parent=1 // pred_region
      _
    $region33: #{alphago_net_forward.1} parent=1 // pred_fallthru
      _
    // Predicated region
    $region34: #{alphago_net_forward.1} parent=1 // pred_check
      _
    $region35: #{alphago_net_forward.1} parent=1 // pred_check_branch
      %41 = sbr.rel (0) target = $region37
    $region36: #{alphago_net_forward.1} parent=1 // pred_region
      _
    $region37: #{alphago_net_forward.1} parent=1 // pred_fallthru
      _
    // Predicated region
    $region38: #{alphago_net_forward.1} parent=1 // pred_check
      _
    $region39: #{alphago_net_forward.1} parent=1 // pred_check_branch
      %43 = sbr.rel (0) target = $region41
    $region40: #{alphago_net_forward.1} parent=1 // pred_region
      _
    $region41: #{alphago_net_forward.1} parent=1 // pred_fallthru
      _
    // Predicated region
    $region42: #{alphago_net_forward.1} parent=1 // pred_check
      _
    $region43: #{alphago_net_forward.1} parent=1 // pred_check_branch
      %45 = sbr.rel (0) target = $region45
    $region44: #{alphago_net_forward.1} parent=1 // pred_region
      _
    $region45: #{alphago_net_forward.1} parent=1 // pred_fallthru
      _
    // Predicated region
    $region46: #{alphago_net_forward.1} parent=1 // pred_check
      _
    $region47: #{alphago_net_forward.1} parent=1 // pred_check_branch
      %47 = sbr.rel (0) target = $region49
    $region48: #{alphago_net_forward.1} parent=1 // pred_region
      _
    $region49: #{alphago_net_forward.1} parent=1 // pred_fallthru
      _
    // Predicated region
    $region50: #{alphago_net_forward.1} parent=1 // pred_check
      _
    $region51: #{alphago_net_forward.1} parent=1 // pred_check_branch
      %49 = sbr.rel (0) target = $region53
    $region52: #{alphago_net_forward.1} parent=1 // pred_region
      _
    $region53: #{alphago_net_forward.1} parent=1 // pred_fallthru
      _
    // Predicated region
    $region54: #{alphago_net_forward.1} parent=1 // pred_check
      _
    $region55: #{alphago_net_forward.1} parent=1 // pred_check_branch
      %51 = sbr.rel (0) target = $region57
    $region56: #{alphago_net_forward.1} parent=1 // pred_region
      _
    $region57: #{alphago_net_forward.1} parent=1 // pred_fallthru
      _
    %vm53 = vcmask 261120
    %54 = vst.msk [vmem:[#allocation2] sm:$0xff] %vm53, 0.0
    %55 = vst.msk [vmem:[#allocation2 + $0x8] sm:$0xff] %vm53, 0.0
    %vm56 = vcmask 253952
    %57 = vst.msk [vmem:[#allocation2 + $0x10] sm:$0x1] %vm56, 0.0
    %58 = vst.msk [vmem:[#allocation2 + $0x18] sm:$0xff] %vm53, 0.0
    %59 = vst.msk [vmem:[#allocation2 + $0x20] sm:$0xff] %vm53, 0.0
    %60 = vst.msk [vmem:[#allocation2 + $0x28] sm:$0x1] %vm56, 0.0
    %61 = vst.msk [vmem:[#allocation2 + $0x30] sm:$0xff] %vm53, 0.0
    %62 = vst.msk [vmem:[#allocation2 + $0x38] sm:$0xff] %vm53, 0.0
    %63 = vst.msk [vmem:[#allocation2 + $0x40] sm:$0x1] %vm56, 0.0
    %64 = vst.msk [vmem:[#allocation2 + $0x48] sm:$0xff] %vm53, 0.0
    %65 = vst.msk [vmem:[#allocation2 + $0x50] sm:$0xff] %vm53, 0.0
    %66 = vst.msk [vmem:[#allocation2 + $0x58] sm:$0x1] %vm56, 0.0
    %67 = vst.msk [vmem:[#allocation2 + $0x60] sm:$0xff] %vm53, 0.0
    %68 = vst.msk [vmem:[#allocation2 + $0x68] sm:$0xff] %vm53, 0.0
    %69 = vst.msk [vmem:[#allocation2 + $0x70] sm:$0x1] %vm56, 0.0
    %70 = vst.msk [vmem:[#allocation2 + $0x78] sm:$0xff] %vm53, 0.0
    %71 = vst.msk [vmem:[#allocation2 + $0x80] sm:$0xff] %vm53, 0.0
    %72 = vst.msk [vmem:[#allocation2 + $0x88] sm:$0x1] %vm56, 0.0
    %73 = vst.msk [vmem:[#allocation2 + $0x90] sm:$0xff] %vm53, 0.0
    %74 = vst.msk [vmem:[#allocation2 + $0x98] sm:$0xff] %vm53, 0.0
    %75 = vst.msk [vmem:[#allocation2 + $0xa0] sm:$0x1] %vm56, 0.0
    %76 = vst.msk [vmem:[#allocation2 + $0xa8] sm:$0xff] %vm53, 0.0
    %77 = vst.msk [vmem:[#allocation2 + $0xb0] sm:$0xff] %vm53, 0.0
    %78 = vst.msk [vmem:[#allocation2 + $0xb8] sm:$0x1] %vm56, 0.0
    %79 = vst.msk [vmem:[#allocation2 + $0xc0] sm:$0xff] %vm53, 0.0
    %80 = vst.msk [vmem:[#allocation2 + $0xc8] sm:$0xff] %vm53, 0.0
    %81 = vst.msk [vmem:[#allocation2 + $0xd0] sm:$0x1] %vm56, 0.0
    %82 = vst.msk [vmem:[#allocation2 + $0xd8] sm:$0xff] %vm53, 0.0
    %83 = vst.msk [vmem:[#allocation2 + $0xe0] sm:$0xff] %vm53, 0.0
    %84 = vst.msk [vmem:[#allocation2 + $0xe8] sm:$0x1] %vm56, 0.0
    %85 = vst.msk [vmem:[#allocation2 + $0xf0] sm:$0xff] %vm53, 0.0
    %86 = vst.msk [vmem:[#allocation2 + $0xf8] sm:$0xff] %vm53, 0.0
    %87 = vst.msk [vmem:[#allocation2 + $0x100] sm:$0x1] %vm56, 0.0
    %88 = vst.msk [vmem:[#allocation2 + $0x108] sm:$0xff] %vm53, 0.0
    %89 = vst.msk [vmem:[#allocation2 + $0x110] sm:$0xff] %vm53, 0.0
    %90 = vst.msk [vmem:[#allocation2 + $0x118] sm:$0x1] %vm56, 0.0
    %91 = vst.msk [vmem:[#allocation2 + $0x120] sm:$0xff] %vm53, 0.0
    %92 = vst.msk [vmem:[#allocation2 + $0x128] sm:$0xff] %vm53, 0.0
    %93 = vst.msk [vmem:[#allocation2 + $0x130] sm:$0x1] %vm56, 0.0
    %94 = vst.msk [vmem:[#allocation2 + $0x138] sm:$0xff] %vm53, 0.0
    %95 = vst.msk [vmem:[#allocation2 + $0x140] sm:$0xff] %vm53, 0.0
    %96 = vst.msk [vmem:[#allocation2 + $0x148] sm:$0x1] %vm56, 0.0
    %97 = vst.msk [vmem:[#allocation2 + $0x150] sm:$0xff] %vm53, 0.0
    %98 = vst.msk [vmem:[#allocation2 + $0x158] sm:$0xff] %vm53, 0.0
    %99 = vst.msk [vmem:[#allocation2 + $0x160] sm:$0x1] %vm56, 0.0
    %100 = vst.msk [vmem:[#allocation2 + $0x168] sm:$0xff] %vm53, 0.0
    %101 = vst.msk [vmem:[#allocation2 + $0x170] sm:$0xff] %vm53, 0.0
    %102 = vst.msk [vmem:[#allocation2 + $0x178] sm:$0x1] %vm56, 0.0
    %103 = vst.msk [vmem:[#allocation2 + $0x180] sm:$0xff] %vm53, 0.0
    %104 = vst.msk [vmem:[#allocation2 + $0x188] sm:$0xff] %vm53, 0.0
    %105 = vst.msk [vmem:[#allocation2 + $0x190] sm:$0x1] %vm56, 0.0
    %106 = vst.msk [vmem:[#allocation2 + $0x198] sm:$0xff] %vm53, 0.0
    %107 = vst.msk [vmem:[#allocation2 + $0x1a0] sm:$0xff] %vm53, 0.0
    %108 = vst.msk [vmem:[#allocation2 + $0x1a8] sm:$0x1] %vm56, 0.0
    %109 = vst.msk [vmem:[#allocation2 + $0x1b0] sm:$0xff] %vm53, 0.0
    %110 = vst.msk [vmem:[#allocation2 + $0x1b8] sm:$0xff] %vm53, 0.0
    %111 = vst.msk [vmem:[#allocation2 + $0x1c0] sm:$0x1] %vm56, 0.0
    %112 = vst.msk [vmem:[#allocation2 + $0x1c8] sm:$0xff] %vm53, 0.0
    %113 = vst.msk [vmem:[#allocation2 + $0x1d0] sm:$0xff] %vm53, 0.0
    %114 = vst.msk [vmem:[#allocation2 + $0x1d8] sm:$0x1] %vm56, 0.0
    %v115 = vld [vmem:[%s0] sm:$0xff]
    %v116 = vld [vmem:[%s0 + $0x8] sm:$0xff]
    %v117 = vld [vmem:[%s0 + $0x10] sm:$0xff]
    %v118 = vld [vmem:[%s0 + $0x18] sm:$0xff]
    %v119 = vld [vmem:[%s0 + $0x20] sm:$0xff]
    %v120 = vld [vmem:[%s0 + $0x28] sm:$0xff]
    %v121 = vld [vmem:[%s0 + $0x30] sm:$0xff]
    %v122 = vld [vmem:[%s0 + $0x38] sm:$0xff]
    %v123 = vld [vmem:[%s0 + $0x40] sm:$0xff]
    %v124 = vld [vmem:[%s0 + $0x48] sm:$0xff]
    %v125 = vld [vmem:[%s0 + $0x50] sm:$0xff]
    %v126 = vld [vmem:[%s0 + $0x58] sm:$0xff]
    %v127 = vld [vmem:[%s0 + $0x60] sm:$0xff]
    %v128 = vld [vmem:[%s0 + $0x68] sm:$0xff]
    %v129 = vld [vmem:[%s0 + $0x70] sm:$0xff]
    %v130 = vld [vmem:[%s0 + $0x78] sm:$0xff]
    %s131 = scalar_lea.vmem [#allocation2], 24
    %132 = vst.msk [vmem:[%s131 + $0x8] sm:$0xff] %vm53, %v115
    %133 = vst.msk [vmem:[%s131 + $0x20] sm:$0xff] %vm53, %v116
    %134 = vst.msk [vmem:[%s131 + $0x38] sm:$0xff] %vm53, %v117
    %135 = vst.msk [vmem:[%s131 + $0x50] sm:$0xff] %vm53, %v118
    %136 = vst.msk [vmem:[%s131 + $0x68] sm:$0xff] %vm53, %v119
    %137 = vst.msk [vmem:[%s131 + $0x80] sm:$0xff] %vm53, %v120
    %138 = vst.msk [vmem:[%s131 + $0x98] sm:$0xff] %vm53, %v121
    %139 = vst.msk [vmem:[%s131 + $0xb0] sm:$0xff] %vm53, %v122
    %140 = vst.msk [vmem:[%s131 + $0xf8] sm:$0xff] %vm53, %v123
    %141 = vst.msk [vmem:[%s131 + $0x110] sm:$0xff] %vm53, %v124
    %142 = vst.msk [vmem:[%s131 + $0x128] sm:$0xff] %vm53, %v125
    %143 = vst.msk [vmem:[%s131 + $0x140] sm:$0xff] %vm53, %v126
    %144 = vst.msk [vmem:[%s131 + $0x158] sm:$0xff] %vm53, %v127
    %145 = vst.msk [vmem:[%s131 + $0x170] sm:$0xff] %vm53, %v128
    %146 = vst.msk [vmem:[%s131 + $0x188] sm:$0xff] %vm53, %v129
    %147 = vst.msk [vmem:[%s131 + $0x1a0] sm:$0xff] %vm53, %v130
    %v148 = vld [vmem:[%s2] sm:$0x3]
    %v149 = vld [vmem:[%s1] sm:$0xf]
    %v150 = vld [vmem:[%s1 + $0x4] sm:$0xf]
    %v151 = vld [vmem:[%s1 + $0x8] sm:$0xf]
    %v152 = vld [vmem:[%s1 + $0xc] sm:$0xf]
    %v153 = vld [vmem:[%s1 + $0x10] sm:$0xf]
    %v154 = vld [vmem:[%s1 + $0x14] sm:$0xf]
    %v155 = vld [vmem:[%s1 + $0x18] sm:$0xf]
    %v156 = vld [vmem:[%s1 + $0x1c] sm:$0xf]
    %v157 = vld [vmem:[%s1 + $0x20] sm:$0xf]
    %v158 = vld [vmem:[%s1 + $0x24] sm:$0xf]
    %v159 = vld [vmem:[%s1 + $0x28] sm:$0xf]
    %v160 = vld [vmem:[%s1 + $0x2c] sm:$0xf]
    %v161 = vld [vmem:[%s1 + $0x30] sm:$0xf]
    %v162 = vld [vmem:[%s1 + $0x34] sm:$0xf]
    %v163 = vld [vmem:[%s1 + $0x38] sm:$0xf]
    %v164 = vld [vmem:[%s1 + $0x3c] sm:$0xf]
    %v165 = vld [vmem:[%s1 + $0x40] sm:$0xf]
    %v166 = vld [vmem:[%s1 + $0x44] sm:$0xf]
    %v167 = vld [vmem:[%s1 + $0x48] sm:$0xf]
    %v168 = vld [vmem:[%s1 + $0x4c] sm:$0xf]
    %v169 = vld [vmem:[%s1 + $0x50] sm:$0xf]
    %v170 = vld [vmem:[%s1 + $0x54] sm:$0xf]
    %v171 = vld [vmem:[%s1 + $0x58] sm:$0xf]
    %v172 = vld [vmem:[%s1 + $0x5c] sm:$0xf]
    %v173 = vld [vmem:[%s1 + $0x60] sm:$0xf]
    %v174 = vld [vmem:[%s1 + $0x64] sm:$0xf]
    %v175 = vld [vmem:[%s1 + $0x68] sm:$0xf]
    %v176 = vld [vmem:[%s1 + $0x6c] sm:$0xf]
    %v177 = vld [vmem:[%s1 + $0x70] sm:$0xf]
    %v178 = vld [vmem:[%s1 + $0x74] sm:$0xf]
    %v179 = vld [vmem:[%s1 + $0x78] sm:$0xf]
    %v180 = vld [vmem:[%s1 + $0x7c] sm:$0xf]
    %v181 = vld [vmem:[%s1 + $0x80] sm:$0xf]
    %v182 = vld [vmem:[%s1 + $0x84] sm:$0xf]
    %v183 = vld [vmem:[%s1 + $0x88] sm:$0xf]
    %v184 = vld [vmem:[%s1 + $0x8c] sm:$0xf]
    %v185 = vld [vmem:[#allocation2 + $0x7] sm:$0xff]
    %v186 = vld [vmem:[#allocation2 + $0x1f] sm:$0xff]
    %v187 = vld [vmem:[#allocation2 + $0x37] sm:$0xff]
    %v188 = vld [vmem:[#allocation2 + $0x4f] sm:$0xff]
    %v189 = vld [vmem:[#allocation2 + $0x67] sm:$0xff]
    %v190 = vld [vmem:[#allocation2 + $0x7f] sm:$0xff]
    %v191 = vld [vmem:[#allocation2 + $0x97] sm:$0xff]
    %v192 = vld [vmem:[#allocation2 + $0xaf] sm:$0xff]
    %v193 = vld [vmem:[#allocation2 + $0xf7] sm:$0xff]
    %v194 = vld [vmem:[#allocation2 + $0x10f] sm:$0xff]
    %v195 = vld [vmem:[#allocation2 + $0x127] sm:$0xff]
    %v196 = vld [vmem:[#allocation2 + $0x13f] sm:$0xff]
    %v197 = vld [vmem:[#allocation2 + $0x157] sm:$0xff]
    %v198 = vld [vmem:[#allocation2 + $0x16f] sm:$0xff]
    %v199 = vld [vmem:[#allocation2 + $0x187] sm:$0xff]
    %v200 = vld [vmem:[#allocation2 + $0x19f] sm:$0xff]
    %v201 = vpack.c.bf16 %v186, %v185
    %v202 = vpack.c.bf16 %v188, %v187
    %v203 = vpack.c.bf16 %v190, %v189
    %v204 = vpack.c.bf16 %v192, %v191
    %v205 = vpack.c.bf16 %v194, %v193
    %v206 = vpack.c.bf16 %v196, %v195
    %v207 = vpack.c.bf16 %v198, %v197
    %v208 = vpack.c.bf16 %v200, %v199
    %209 = vst.msk [vmem:[#allocation3] sm:$0xff] %vm53, %v201
    %210 = vst.msk [vmem:[#allocation3 + $0x18] sm:$0xff] %vm53, %v202
    %211 = vst.msk [vmem:[#allocation3 + $0x30] sm:$0xff] %vm53, %v203
    %212 = vst.msk [vmem:[#allocation3 + $0x48] sm:$0xff] %vm53, %v204
    %213 = vst.msk [vmem:[#allocation3 + $0x60] sm:$0xff] %vm53, %v205
    %214 = vst.msk [vmem:[#allocation3 + $0x78] sm:$0xff] %vm53, %v206
    %215 = vst.msk [vmem:[#allocation3 + $0x90] sm:$0xff] %vm53, %v207
    %216 = vst.msk [vmem:[#allocation3 + $0xa8] sm:$0xff] %vm53, %v208
    %v217 = vld [vmem:[#allocation2 + $0x8] sm:$0xff]
    %v218 = vld [vmem:[#allocation2 + $0x20] sm:$0xff]
    %v219 = vld [vmem:[#allocation2 + $0x38] sm:$0xff]
    %v220 = vld [vmem:[#allocation2 + $0x50] sm:$0xff]
    %v221 = vld [vmem:[#allocation2 + $0x68] sm:$0xff]
    %v222 = vld [vmem:[#allocation2 + $0x80] sm:$0xff]
    %v223 = vld [vmem:[#allocation2 + $0x98] sm:$0xff]
    %v224 = vld [vmem:[#allocation2 + $0xb0] sm:$0xff]
    %v225 = vld [vmem:[#allocation2 + $0xf8] sm:$0xff]
    %v226 = vld [vmem:[#allocation2 + $0x110] sm:$0xff]
    %v227 = vld [vmem:[#allocation2 + $0x128] sm:$0xff]
    %v228 = vld [vmem:[#allocation2 + $0x140] sm:$0xff]
    %v229 = vld [vmem:[#allocation2 + $0x158] sm:$0xff]
    %v230 = vld [vmem:[#allocation2 + $0x170] sm:$0xff]
    %v231 = vld [vmem:[#allocation2 + $0x188] sm:$0xff]
    %v232 = vld [vmem:[#allocation2 + $0x1a0] sm:$0xff]
    %v233 = vpack.c.bf16 %v218, %v217
    %v234 = vpack.c.bf16 %v220, %v219
    %v235 = vpack.c.bf16 %v222, %v221
    %v236 = vpack.c.bf16 %v224, %v223
    %v237 = vpack.c.bf16 %v226, %v225
    %v238 = vpack.c.bf16 %v228, %v227
    %v239 = vpack.c.bf16 %v230, %v229
    %v240 = vpack.c.bf16 %v232, %v231
    %249 = vrot.lane.b32.xlu0 %v233, 32
    %v250 = vpop.permute.xlu0 %249
    %251 = vrot.lane.b32.xlu0 %v234, 32
    %v252 = vpop.permute.xlu0 %251
    %253 = vrot.lane.b32.xlu0 %v235, 32
    %v254 = vpop.permute.xlu0 %253
    %255 = vrot.lane.b32.xlu0 %v236, 32
    %v256 = vpop.permute.xlu0 %255
    %257 = vrot.lane.b32.xlu0 %v237, 32
    %v258 = vpop.permute.xlu0 %257
    %259 = vrot.lane.b32.xlu0 %v238, 32
    %v260 = vpop.permute.xlu0 %259
    %261 = vrot.lane.b32.xlu0 %v239, 32
    %v262 = vpop.permute.xlu0 %261
    %263 = vrot.lane.b32.xlu0 %v240, 32
    %v264 = vpop.permute.xlu0 %263
    %vm273 = vcmask 523520
    %274 = vst.msk [vmem:[#allocation3] sm:$0xff] %vm273, %v250
    %275 = vst.msk [vmem:[#allocation3 + $0x18] sm:$0xff] %vm273, %v252
    %276 = vst.msk [vmem:[#allocation3 + $0x30] sm:$0xff] %vm273, %v254
    %277 = vst.msk [vmem:[#allocation3 + $0x48] sm:$0xff] %vm273, %v256
    %278 = vst.msk [vmem:[#allocation3 + $0x60] sm:$0xff] %vm273, %v258
    %279 = vst.msk [vmem:[#allocation3 + $0x78] sm:$0xff] %vm273, %v260
    %280 = vst.msk [vmem:[#allocation3 + $0x90] sm:$0xff] %vm273, %v262
    %281 = vst.msk [vmem:[#allocation3 + $0xa8] sm:$0xff] %vm273, %v264
    %v282 = vld [vmem:[#allocation2 + $0x9] sm:$0xff]
    %v283 = vld [vmem:[#allocation2 + $0x21] sm:$0xff]
    %v284 = vld [vmem:[#allocation2 + $0x39] sm:$0xff]
    %v285 = vld [vmem:[#allocation2 + $0x51] sm:$0xff]
    %v286 = vld [vmem:[#allocation2 + $0x69] sm:$0xff]
    %v287 = vld [vmem:[#allocation2 + $0x81] sm:$0xff]
    %v288 = vld [vmem:[#allocation2 + $0x99] sm:$0xff]
    %v289 = vld [vmem:[#allocation2 + $0xb1] sm:$0xff]
    %v290 = vld [vmem:[#allocation2 + $0xf9] sm:$0xff]
    %v291 = vld [vmem:[#allocation2 + $0x111] sm:$0xff]
    %v292 = vld [vmem:[#allocation2 + $0x129] sm:$0xff]
    %v293 = vld [vmem:[#allocation2 + $0x141] sm:$0xff]
    %v294 = vld [vmem:[#allocation2 + $0x159] sm:$0xff]
    %v295 = vld [vmem:[#allocation2 + $0x171] sm:$0xff]
    %v296 = vld [vmem:[#allocation2 + $0x189] sm:$0xff]
    %v297 = vld [vmem:[#allocation2 + $0x1a1] sm:$0xff]
    %v298 = vpack.c.bf16 %v283, %v282
    %v299 = vpack.c.bf16 %v285, %v284
    %v300 = vpack.c.bf16 %v287, %v286
    %v301 = vpack.c.bf16 %v289, %v288
    %v302 = vpack.c.bf16 %v291, %v290
    %v303 = vpack.c.bf16 %v293, %v292
    %v304 = vpack.c.bf16 %v295, %v294
    %v305 = vpack.c.bf16 %v297, %v296
    %314 = vrot.lane.b32.xlu0 %v298, 64
    %v315 = vpop.permute.xlu0 %314
    %316 = vrot.lane.b32.xlu0 %v299, 64
    %v317 = vpop.permute.xlu0 %316
    %318 = vrot.lane.b32.xlu0 %v300, 64
    %v319 = vpop.permute.xlu0 %318
    %320 = vrot.lane.b32.xlu0 %v301, 64
    %v321 = vpop.permute.xlu0 %320
    %322 = vrot.lane.b32.xlu0 %v302, 64
    %v323 = vpop.permute.xlu0 %322
    %324 = vrot.lane.b32.xlu0 %v303, 64
    %v325 = vpop.permute.xlu0 %324
    %326 = vrot.lane.b32.xlu0 %v304, 64
    %v327 = vpop.permute.xlu0 %326
    %328 = vrot.lane.b32.xlu0 %v305, 64
    %v329 = vpop.permute.xlu0 %328
    %vm338 = vcmask 785920
    %339 = vst.msk [vmem:[#allocation3] sm:$0xff] %vm338, %v315
    %340 = vst.msk [vmem:[#allocation3 + $0x18] sm:$0xff] %vm338, %v317
    %341 = vst.msk [vmem:[#allocation3 + $0x30] sm:$0xff] %vm338, %v319
    %342 = vst.msk [vmem:[#allocation3 + $0x48] sm:$0xff] %vm338, %v321
    %343 = vst.msk [vmem:[#allocation3 + $0x60] sm:$0xff] %vm338, %v323
    %344 = vst.msk [vmem:[#allocation3 + $0x78] sm:$0xff] %vm338, %v325
    %345 = vst.msk [vmem:[#allocation3 + $0x90] sm:$0xff] %vm338, %v327
    %346 = vst.msk [vmem:[#allocation3 + $0xa8] sm:$0xff] %vm338, %v329
    %v347 = vld [vmem:[%s131 + $0x7] sm:$0xff]
    %v348 = vld [vmem:[%s131 + $0x1f] sm:$0xff]
    %v349 = vld [vmem:[%s131 + $0x37] sm:$0xff]
    %v350 = vld [vmem:[%s131 + $0x4f] sm:$0xff]
    %v351 = vld [vmem:[%s131 + $0x67] sm:$0xff]
    %v352 = vld [vmem:[%s131 + $0x7f] sm:$0xff]
    %v353 = vld [vmem:[%s131 + $0x97] sm:$0xff]
    %v354 = vld [vmem:[%s131 + $0xaf] sm:$0xff]
    %v355 = vld [vmem:[%s131 + $0xf7] sm:$0xff]
    %v356 = vld [vmem:[%s131 + $0x10f] sm:$0xff]
    %v357 = vld [vmem:[%s131 + $0x127] sm:$0xff]
    %v358 = vld [vmem:[%s131 + $0x13f] sm:$0xff]
    %v359 = vld [vmem:[%s131 + $0x157] sm:$0xff]
    %v360 = vld [vmem:[%s131 + $0x16f] sm:$0xff]
    %v361 = vld [vmem:[%s131 + $0x187] sm:$0xff]
    %v362 = vld [vmem:[%s131 + $0x19f] sm:$0xff]
    %v363 = vpack.c.bf16 %v348, %v347
    %v364 = vpack.c.bf16 %v350, %v349
    %v365 = vpack.c.bf16 %v352, %v351
    %v366 = vpack.c.bf16 %v354, %v353
    %v367 = vpack.c.bf16 %v356, %v355
    %v368 = vpack.c.bf16 %v358, %v357
    %v369 = vpack.c.bf16 %v360, %v359
    %v370 = vpack.c.bf16 %v362, %v361
    %379 = vrot.lane.b32.xlu0 %v363, 96
    %v380 = vpop.permute.xlu0 %379
    %381 = vrot.lane.b32.xlu0 %v364, 96
    %v382 = vpop.permute.xlu0 %381
    %383 = vrot.lane.b32.xlu0 %v365, 96
    %v384 = vpop.permute.xlu0 %383
    %385 = vrot.lane.b32.xlu0 %v366, 96
    %v386 = vpop.permute.xlu0 %385
    %387 = vrot.lane.b32.xlu0 %v367, 96
    %v388 = vpop.permute.xlu0 %387
    %389 = vrot.lane.b32.xlu0 %v368, 96
    %v390 = vpop.permute.xlu0 %389
    %391 = vrot.lane.b32.xlu0 %v369, 96
    %v392 = vpop.permute.xlu0 %391
    %393 = vrot.lane.b32.xlu0 %v370, 96
    %v394 = vpop.permute.xlu0 %393
    %vm403 = vcmask 1048320
    %404 = vst.msk [vmem:[#allocation3] sm:$0xff] %vm403, %v380
    %405 = vst.msk [vmem:[#allocation3 + $0x18] sm:$0xff] %vm403, %v382
    %406 = vst.msk [vmem:[#allocation3 + $0x30] sm:$0xff] %vm403, %v384
    %407 = vst.msk [vmem:[#allocation3 + $0x48] sm:$0xff] %vm403, %v386
    %408 = vst.msk [vmem:[#allocation3 + $0x60] sm:$0xff] %vm403, %v388
    %409 = vst.msk [vmem:[#allocation3 + $0x78] sm:$0xff] %vm403, %v390
    %410 = vst.msk [vmem:[#allocation3 + $0x90] sm:$0xff] %vm403, %v392
    %411 = vst.msk [vmem:[#allocation3 + $0xa8] sm:$0xff] %vm403, %v394
    %v412 = vld [vmem:[%s131 + $0x8] sm:$0xff]
    %v413 = vld [vmem:[%s131 + $0x20] sm:$0xff]
    %v414 = vld [vmem:[%s131 + $0x38] sm:$0xff]
    %v415 = vld [vmem:[%s131 + $0x50] sm:$0xff]
    %v416 = vld [vmem:[%s131 + $0x68] sm:$0xff]
    %v417 = vld [vmem:[%s131 + $0x80] sm:$0xff]
    %v418 = vld [vmem:[%s131 + $0x98] sm:$0xff]
    %v419 = vld [vmem:[%s131 + $0xb0] sm:$0xff]
    %v420 = vld [vmem:[%s131 + $0xf8] sm:$0xff]
    %v421 = vld [vmem:[%s131 + $0x110] sm:$0xff]
    %v422 = vld [vmem:[%s131 + $0x128] sm:$0xff]
    %v423 = vld [vmem:[%s131 + $0x140] sm:$0xff]
    %v424 = vld [vmem:[%s131 + $0x158] sm:$0xff]
    %v425 = vld [vmem:[%s131 + $0x170] sm:$0xff]
    %v426 = vld [vmem:[%s131 + $0x188] sm:$0xff]
    %v427 = vld [vmem:[%s131 + $0x1a0] sm:$0xff]
    %v428 = vpack.c.bf16 %v413, %v412
    %v429 = vpack.c.bf16 %v415, %v414
    %v430 = vpack.c.bf16 %v417, %v416
    %v431 = vpack.c.bf16 %v419, %v418
    %v432 = vpack.c.bf16 %v421, %v420
    %v433 = vpack.c.bf16 %v423, %v422
    %v434 = vpack.c.bf16 %v425, %v424
    %v435 = vpack.c.bf16 %v427, %v426
    %436 = vst.msk [vmem:[#allocation3 + $0x8] sm:$0xff] %vm53, %v428
    %437 = vst.msk [vmem:[#allocation3 + $0x20] sm:$0xff] %vm53, %v429
    %438 = vst.msk [vmem:[#allocation3 + $0x38] sm:$0xff] %vm53, %v430
    %439 = vst.msk [vmem:[#allocation3 + $0x50] sm:$0xff] %vm53, %v431
    %440 = vst.msk [vmem:[#allocation3 + $0x68] sm:$0xff] %vm53, %v432
    %441 = vst.msk [vmem:[#allocation3 + $0x80] sm:$0xff] %vm53, %v433
    %442 = vst.msk [vmem:[#allocation3 + $0x98] sm:$0xff] %vm53, %v434
    %443 = vst.msk [vmem:[#allocation3 + $0xb0] sm:$0xff] %vm53, %v435
    %v444 = vld [vmem:[%s131 + $0x9] sm:$0xff]
    %v445 = vld [vmem:[%s131 + $0x21] sm:$0xff]
    %v446 = vld [vmem:[%s131 + $0x39] sm:$0xff]
    %v447 = vld [vmem:[%s131 + $0x51] sm:$0xff]
    %v448 = vld [vmem:[%s131 + $0x69] sm:$0xff]
    %v449 = vld [vmem:[%s131 + $0x81] sm:$0xff]
    %v450 = vld [vmem:[%s131 + $0x99] sm:$0xff]
    %v451 = vld [vmem:[%s131 + $0xb1] sm:$0xff]
    %v452 = vld [vmem:[%s131 + $0xf9] sm:$0xff]
    %v453 = vld [vmem:[%s131 + $0x111] sm:$0xff]
    %v454 = vld [vmem:[%s131 + $0x129] sm:$0xff]
    %v455 = vld [vmem:[%s131 + $0x141] sm:$0xff]
    %v456 = vld [vmem:[%s131 + $0x159] sm:$0xff]
    %v457 = vld [vmem:[%s131 + $0x171] sm:$0xff]
    %v458 = vld [vmem:[%s131 + $0x189] sm:$0xff]
    %v459 = vld [vmem:[%s131 + $0x1a1] sm:$0xff]
    %v460 = vpack.c.bf16 %v445, %v444
    %v461 = vpack.c.bf16 %v447, %v446
    %v462 = vpack.c.bf16 %v449, %v448
    %v463 = vpack.c.bf16 %v451, %v450
    %v464 = vpack.c.bf16 %v453, %v452
    %v465 = vpack.c.bf16 %v455, %v454
    %v466 = vpack.c.bf16 %v457, %v456
    %v467 = vpack.c.bf16 %v459, %v458
    %476 = vrot.lane.b32.xlu0 %v460, 32
    %v477 = vpop.permute.xlu0 %476
    %478 = vrot.lane.b32.xlu0 %v461, 32
    %v479 = vpop.permute.xlu0 %478
    %480 = vrot.lane.b32.xlu0 %v462, 32
    %v481 = vpop.permute.xlu0 %480
    %482 = vrot.lane.b32.xlu0 %v463, 32
    %v483 = vpop.permute.xlu0 %482
    %484 = vrot.lane.b32.xlu0 %v464, 32
    %v485 = vpop.permute.xlu0 %484
    %486 = vrot.lane.b32.xlu0 %v465, 32
    %v487 = vpop.permute.xlu0 %486
    %488 = vrot.lane.b32.xlu0 %v466, 32
    %v489 = vpop.permute.xlu0 %488
    %490 = vrot.lane.b32.xlu0 %v467, 32
    %v491 = vpop.permute.xlu0 %490
    %500 = vst.msk [vmem:[#allocation3 + $0x8] sm:$0xff] %vm273, %v477
    %501 = vst.msk [vmem:[#allocation3 + $0x20] sm:$0xff] %vm273, %v479
    %502 = vst.msk [vmem:[#allocation3 + $0x38] sm:$0xff] %vm273, %v481
    %503 = vst.msk [vmem:[#allocation3 + $0x50] sm:$0xff] %vm273, %v483
    %504 = vst.msk [vmem:[#allocation3 + $0x68] sm:$0xff] %vm273, %v485
    %505 = vst.msk [vmem:[#allocation3 + $0x80] sm:$0xff] %vm273, %v487
    %506 = vst.msk [vmem:[#allocation3 + $0x98] sm:$0xff] %vm273, %v489
    %507 = vst.msk [vmem:[#allocation3 + $0xb0] sm:$0xff] %vm273, %v491
    %s508 = scalar_lea.vmem [#allocation2], 48
    %v509 = vld [vmem:[%s508 + $0x7] sm:$0xff]
    %v510 = vld [vmem:[%s508 + $0x1f] sm:$0xff]
    %v511 = vld [vmem:[%s508 + $0x37] sm:$0xff]
    %v512 = vld [vmem:[%s508 + $0x4f] sm:$0xff]
    %v513 = vld [vmem:[%s508 + $0x67] sm:$0xff]
    %v514 = vld [vmem:[%s508 + $0x7f] sm:$0xff]
    %v515 = vld [vmem:[%s508 + $0x97] sm:$0xff]
    %v516 = vld [vmem:[%s508 + $0xaf] sm:$0xff]
    %v517 = vld [vmem:[%s508 + $0xf7] sm:$0xff]
    %v518 = vld [vmem:[%s508 + $0x10f] sm:$0xff]
    %v519 = vld [vmem:[%s508 + $0x127] sm:$0xff]
    %v520 = vld [vmem:[%s508 + $0x13f] sm:$0xff]
    %v521 = vld [vmem:[%s508 + $0x157] sm:$0xff]
    %v522 = vld [vmem:[%s508 + $0x16f] sm:$0xff]
    %v523 = vld [vmem:[%s508 + $0x187] sm:$0xff]
    %v524 = vld [vmem:[%s508 + $0x19f] sm:$0xff]
    %v525 = vpack.c.bf16 %v510, %v509
    %v526 = vpack.c.bf16 %v512, %v511
    %v527 = vpack.c.bf16 %v514, %v513
    %v528 = vpack.c.bf16 %v516, %v515
    %v529 = vpack.c.bf16 %v518, %v517
    %v530 = vpack.c.bf16 %v520, %v519
    %v531 = vpack.c.bf16 %v522, %v521
    %v532 = vpack.c.bf16 %v524, %v523
    %541 = vrot.lane.b32.xlu0 %v525, 64
    %v542 = vpop.permute.xlu0 %541
    %543 = vrot.lane.b32.xlu0 %v526, 64
    %v544 = vpop.permute.xlu0 %543
    %545 = vrot.lane.b32.xlu0 %v527, 64
    %v546 = vpop.permute.xlu0 %545
    %547 = vrot.lane.b32.xlu0 %v528, 64
    %v548 = vpop.permute.xlu0 %547
    %549 = vrot.lane.b32.xlu0 %v529, 64
    %v550 = vpop.permute.xlu0 %549
    %551 = vrot.lane.b32.xlu0 %v530, 64
    %v552 = vpop.permute.xlu0 %551
    %553 = vrot.lane.b32.xlu0 %v531, 64
    %v554 = vpop.permute.xlu0 %553
    %555 = vrot.lane.b32.xlu0 %v532, 64
    %v556 = vpop.permute.xlu0 %555
    %565 = vst.msk [vmem:[#allocation3 + $0x8] sm:$0xff] %vm338, %v542
    %566 = vst.msk [vmem:[#allocation3 + $0x20] sm:$0xff] %vm338, %v544
    %567 = vst.msk [vmem:[#allocation3 + $0x38] sm:$0xff] %vm338, %v546
    %568 = vst.msk [vmem:[#allocation3 + $0x50] sm:$0xff] %vm338, %v548
    %569 = vst.msk [vmem:[#allocation3 + $0x68] sm:$0xff] %vm338, %v550
    %570 = vst.msk [vmem:[#allocation3 + $0x80] sm:$0xff] %vm338, %v552
    %571 = vst.msk [vmem:[#allocation3 + $0x98] sm:$0xff] %vm338, %v554
    %572 = vst.msk [vmem:[#allocation3 + $0xb0] sm:$0xff] %vm338, %v556
    %v573 = vld [vmem:[%s508 + $0x8] sm:$0xff]
    %v574 = vld [vmem:[%s508 + $0x20] sm:$0xff]
    %v575 = vld [vmem:[%s508 + $0x38] sm:$0xff]
    %v576 = vld [vmem:[%s508 + $0x50] sm:$0xff]
    %v577 = vld [vmem:[%s508 + $0x68] sm:$0xff]
    %v578 = vld [vmem:[%s508 + $0x80] sm:$0xff]
    %v579 = vld [vmem:[%s508 + $0x98] sm:$0xff]
    %v580 = vld [vmem:[%s508 + $0xb0] sm:$0xff]
    %v581 = vld [vmem:[%s508 + $0xf8] sm:$0xff]
    %v582 = vld [vmem:[%s508 + $0x110] sm:$0xff]
    %v583 = vld [vmem:[%s508 + $0x128] sm:$0xff]
    %v584 = vld [vmem:[%s508 + $0x140] sm:$0xff]
    %v585 = vld [vmem:[%s508 + $0x158] sm:$0xff]
    %v586 = vld [vmem:[%s508 + $0x170] sm:$0xff]
    %v587 = vld [vmem:[%s508 + $0x188] sm:$0xff]
    %v588 = vld [vmem:[%s508 + $0x1a0] sm:$0xff]
    %v589 = vpack.c.bf16 %v574, %v573
    %v590 = vpack.c.bf16 %v576, %v575
    %v591 = vpack.c.bf16 %v578, %v577
    %v592 = vpack.c.bf16 %v580, %v579
    %v593 = vpack.c.bf16 %v582, %v581
    %v594 = vpack.c.bf16 %v584, %v583
    %v595 = vpack.c.bf16 %v586, %v585
    %v596 = vpack.c.bf16 %v588, %v587
    %605 = vrot.lane.b32.xlu0 %v589, 96
    %v606 = vpop.permute.xlu0 %605
    %607 = vrot.lane.b32.xlu0 %v590, 96
    %v608 = vpop.permute.xlu0 %607
    %609 = vrot.lane.b32.xlu0 %v591, 96
    %v610 = vpop.permute.xlu0 %609
    %611 = vrot.lane.b32.xlu0 %v592, 96
    %v612 = vpop.permute.xlu0 %611
    %613 = vrot.lane.b32.xlu0 %v593, 96
    %v614 = vpop.permute.xlu0 %613
    %615 = vrot.lane.b32.xlu0 %v594, 96
    %v616 = vpop.permute.xlu0 %615
    %617 = vrot.lane.b32.xlu0 %v595, 96
    %v618 = vpop.permute.xlu0 %617
    %619 = vrot.lane.b32.xlu0 %v596, 96
    %v620 = vpop.permute.xlu0 %619
    %629 = vst.msk [vmem:[#allocation3 + $0x8] sm:$0xff] %vm403, %v606
    %630 = vst.msk [vmem:[#allocation3 + $0x20] sm:$0xff] %vm403, %v608
    %631 = vst.msk [vmem:[#allocation3 + $0x38] sm:$0xff] %vm403, %v610
    %632 = vst.msk [vmem:[#allocation3 + $0x50] sm:$0xff] %vm403, %v612
    %633 = vst.msk [vmem:[#allocation3 + $0x68] sm:$0xff] %vm403, %v614
    %634 = vst.msk [vmem:[#allocation3 + $0x80] sm:$0xff] %vm403, %v616
    %635 = vst.msk [vmem:[#allocation3 + $0x98] sm:$0xff] %vm403, %v618
    %636 = vst.msk [vmem:[#allocation3 + $0xb0] sm:$0xff] %vm403, %v620
    %v637 = vld [vmem:[%s508 + $0x9] sm:$0xff]
    %v638 = vld [vmem:[%s508 + $0x21] sm:$0xff]
    %v639 = vld [vmem:[%s508 + $0x39] sm:$0xff]
    %v640 = vld [vmem:[%s508 + $0x51] sm:$0xff]
    %v641 = vld [vmem:[%s508 + $0x69] sm:$0xff]
    %v642 = vld [vmem:[%s508 + $0x81] sm:$0xff]
    %v643 = vld [vmem:[%s508 + $0x99] sm:$0xff]
    %v644 = vld [vmem:[%s508 + $0xb1] sm:$0xff]
    %v645 = vld [vmem:[%s508 + $0xf9] sm:$0xff]
    %v646 = vld [vmem:[%s508 + $0x111] sm:$0xff]
    %v647 = vld [vmem:[%s508 + $0x129] sm:$0xff]
    %v648 = vld [vmem:[%s508 + $0x141] sm:$0xff]
    %v649 = vld [vmem:[%s508 + $0x159] sm:$0xff]
    %v650 = vld [vmem:[%s508 + $0x171] sm:$0xff]
    %v651 = vld [vmem:[%s508 + $0x189] sm:$0xff]
    %v652 = vld [vmem:[%s508 + $0x1a1] sm:$0xff]
    %v653 = vpack.c.bf16 %v638, %v637
    %v654 = vpack.c.bf16 %v640, %v639
    %v655 = vpack.c.bf16 %v642, %v641
    %v656 = vpack.c.bf16 %v644, %v643
    %v657 = vpack.c.bf16 %v646, %v645
    %v658 = vpack.c.bf16 %v648, %v647
    %v659 = vpack.c.bf16 %v650, %v649
    %v660 = vpack.c.bf16 %v652, %v651
    %661 = vst.msk [vmem:[#allocation3 + $0x10] sm:$0xff] %vm53, %v653
    %662 = vst.msk [vmem:[#allocation3 + $0x28] sm:$0xff] %vm53, %v654
    %663 = vst.msk [vmem:[#allocation3 + $0x40] sm:$0xff] %vm53, %v655
    %664 = vst.msk [vmem:[#allocation3 + $0x58] sm:$0xff] %vm53, %v656
    %665 = vst.msk [vmem:[#allocation3 + $0x70] sm:$0xff] %vm53, %v657
    %666 = vst.msk [vmem:[#allocation3 + $0x88] sm:$0xff] %vm53, %v658
    %667 = vst.msk [vmem:[#allocation3 + $0xa0] sm:$0xff] %vm53, %v659
    %668 = vst.msk [vmem:[#allocation3 + $0xb8] sm:$0xff] %vm53, %v660
    %v669 = vld [vmem:[#allocation3] sm:$0xff]
    %v670 = vld [vmem:[#allocation3 + $0x8] sm:$0xff]
    %v671 = vld [vmem:[#allocation3 + $0x10] sm:$0xff]
    %v672 = vld [vmem:[#allocation3 + $0x18] sm:$0xff]
    %v673 = vld [vmem:[#allocation3 + $0x20] sm:$0xff]
    %v674 = vld [vmem:[#allocation3 + $0x28] sm:$0xff]
    %v675 = vld [vmem:[#allocation3 + $0x30] sm:$0xff]
    %v676 = vld [vmem:[#allocation3 + $0x38] sm:$0xff]
    %v677 = vld [vmem:[#allocation3 + $0x40] sm:$0xff]
    %v678 = vld [vmem:[#allocation3 + $0x48] sm:$0xff]
    %v679 = vld [vmem:[#allocation3 + $0x50] sm:$0xff]
    %v680 = vld [vmem:[#allocation3 + $0x58] sm:$0xff]
    %v681 = vld [vmem:[#allocation3 + $0x60] sm:$0xff]
    %v682 = vld [vmem:[#allocation3 + $0x68] sm:$0xff]
    %v683 = vld [vmem:[#allocation3 + $0x70] sm:$0xff]
    %v684 = vld [vmem:[#allocation3 + $0x78] sm:$0xff]
    %v685 = vld [vmem:[#allocation3 + $0x80] sm:$0xff]
    %v686 = vld [vmem:[#allocation3 + $0x88] sm:$0xff]
    %v687 = vld [vmem:[#allocation3 + $0x90] sm:$0xff]
    %v688 = vld [vmem:[#allocation3 + $0x98] sm:$0xff]
    %v689 = vld [vmem:[#allocation3 + $0xa0] sm:$0xff]
    %v690 = vld [vmem:[#allocation3 + $0xa8] sm:$0xff]
    %v691 = vld [vmem:[#allocation3 + $0xb0] sm:$0xff]
    %v692 = vld [vmem:[#allocation3 + $0xb8] sm:$0xff]
    %v729 = vunpack.c.l.b16 %v149
    %v730 = vunpack.c.l.b16 %v150
    %v731 = vunpack.c.l.b16 %v151
    %v732 = vunpack.c.l.b16 %v152
    %v733 = vunpack.c.l.b16 %v153
    %v734 = vunpack.c.l.b16 %v154
    %v735 = vunpack.c.l.b16 %v155
    %v736 = vunpack.c.l.b16 %v156
    %v737 = vunpack.c.l.b16 %v157
    %v738 = vunpack.c.l.b16 %v158
    %v739 = vunpack.c.l.b16 %v159
    %v740 = vunpack.c.l.b16 %v160
    %v741 = vunpack.c.l.b16 %v161
    %v742 = vunpack.c.l.b16 %v162
    %v743 = vunpack.c.l.b16 %v163
    %v744 = vunpack.c.l.b16 %v164
    %v745 = vunpack.c.l.b16 %v165
    %v746 = vunpack.c.l.b16 %v166
    %v747 = vunpack.c.l.b16 %v167
    %v748 = vunpack.c.l.b16 %v168
    %v749 = vunpack.c.l.b16 %v169
    %v750 = vunpack.c.l.b16 %v170
    %v751 = vunpack.c.l.b16 %v171
    %v752 = vunpack.c.l.b16 %v172
    %v753 = vunpack.c.l.b16 %v173
    %v754 = vunpack.c.l.b16 %v174
    %v755 = vunpack.c.l.b16 %v175
    %v756 = vunpack.c.l.b16 %v176
    %v757 = vunpack.c.l.b16 %v177
    %v758 = vunpack.c.l.b16 %v178
    %v759 = vunpack.c.l.b16 %v179
    %v760 = vunpack.c.l.b16 %v180
    %v761 = vunpack.c.l.b16 %v181
    %v762 = vunpack.c.l.b16 %v182
    %v763 = vunpack.c.l.b16 %v183
    %v764 = vunpack.c.l.b16 %v184
    %v765 = vpack.c.b16 %v730, %v729
    %v766 = vpack.c.b16 %v732, %v731
    %v767 = vpack.c.b16 %v734, %v733
    %v768 = vpack.c.b16 %v736, %v735
    %v769 = vpack.c.b16 %v738, %v737
    %v770 = vpack.c.b16 %v740, %v739
    %v771 = vpack.c.b16 %v742, %v741
    %v772 = vpack.c.b16 %v744, %v743
    %v773 = vpack.c.b16 %v746, %v745
    %v774 = vpack.c.b16 %v748, %v747
    %v775 = vpack.c.b16 %v750, %v749
    %v776 = vpack.c.b16 %v752, %v751
    %v777 = vpack.c.b16 %v754, %v753
    %v778 = vpack.c.b16 %v756, %v755
    %v779 = vpack.c.b16 %v758, %v757
    %v780 = vpack.c.b16 %v760, %v759
    %v781 = vpack.c.b16 %v762, %v761
    %v782 = vpack.c.b16 %v764, %v763
    %v802 = vsel %vm53, %v671, 0
    %v805 = vsel %vm53, %v674, 0
    %v808 = vsel %vm53, %v677, 0
    %v811 = vsel %vm53, %v680, 0
    %v814 = vsel %vm53, %v683, 0
    %v817 = vsel %vm53, %v686, 0
    %v820 = vsel %vm53, %v689, 0
    %v823 = vsel %vm53, %v692, 0
    %825 = vmatprep.subr.bf16.mxu0 0
    %826 = vmatpush1.bf16.msra.mxu0 %v765
    %827 = vmatprep.subr.bf16.mxu0 0
    %828 = vmatpush1.bf16.msra.mxu0 %v766
    %829 = vmatprep.subr.bf16.mxu0 0
    %830 = vmatpush1.bf16.msra.mxu0 %v767
    %831 = vmatprep.subr.bf16.mxu0 0
    %832 = vmatpush1.bf16.msra.mxu0 %v768
    %833 = vmatprep.subr.bf16.mxu0 0
    %834 = vmatpush1.bf16.msra.mxu0 %v769
    %835 = vmatprep.subr.bf16.mxu0 0
    %836 = vmatpush1.bf16.msra.mxu0 %v770
    %837 = vmatprep.subr.bf16.mxu0 0
    %838 = vmatpush1.bf16.msra.mxu0 %v771
    %839 = vmatprep.subr.bf16.mxu0 0
    %840 = vmatpush1.bf16.msra.mxu0 %v772
    %841 = vmatprep.subr.bf16.mxu0 0
    %842 = vmatpush1.bf16.msra.mxu0 %v773
    %843 = vmatprep.subr.bf16.mxu0 0
    %844 = vmatpush1.bf16.msra.mxu0 %v774
    %845 = vmatprep.subr.bf16.mxu0 0
    %846 = vmatpush1.bf16.msra.mxu0 %v775
    %847 = vmatprep.subr.bf16.mxu0 0
    %848 = vmatpush1.bf16.msra.mxu0 %v776
    %849 = vmatprep.subr.bf16.mxu0 0
    %850 = vmatpush1.bf16.msra.mxu0 %v777
    %851 = vmatprep.subr.bf16.mxu0 0
    %852 = vmatpush1.bf16.msra.mxu0 %v778
    %853 = vmatprep.subr.bf16.mxu0 0
    %854 = vmatpush1.bf16.msra.mxu0 %v779
    %855 = vmatprep.subr.bf16.mxu0 0
    %856 = vmatpush1.bf16.msra.mxu0 %v780
    %857 = vmatprep.mubr.bf16.mxu0 %v670
    %858 = vmatmul.mubr.bf16.gmra.mrb[0].mxu0 %v669
    %v859 = vpop.f32.mrb[0].mxu0
    %v860 = vadd.f32 0.0, %v859
    %v861 = vpop.f32.mrb[0].mxu0
    %v862 = vpop.f32.mrb[0].mxu0
    %v863 = vadd.f32 0.0, %v862
    %v864 = vpop.f32.mrb[0].mxu0
    %865 = vmatprep.mubr.bf16.mxu0 %v673
    %866 = vmatmul.mubr.bf16.gmra.mrb[0].mxu0 %v672
    %v867 = vpop.f32.mrb[0].mxu0
    %v868 = vadd.f32 0.0, %v867
    %v869 = vpop.f32.mrb[0].mxu0
    %v870 = vpop.f32.mrb[0].mxu0
    %v871 = vadd.f32 0.0, %v870
    %v872 = vpop.f32.mrb[0].mxu0
    %873 = vmatprep.mubr.bf16.mxu0 %v676
    %874 = vmatmul.mubr.bf16.gmra.mrb[0].mxu0 %v675
    %v875 = vpop.f32.mrb[0].mxu0
    %v876 = vadd.f32 0.0, %v875
    %v877 = vpop.f32.mrb[0].mxu0
    %v878 = vpop.f32.mrb[0].mxu0
    %v879 = vadd.f32 0.0, %v878
    %v880 = vpop.f32.mrb[0].mxu0
    %881 = vmatprep.mubr.bf16.mxu0 %v679
    %882 = vmatmul.mubr.bf16.gmra.mrb[0].mxu0 %v678
    %v883 = vpop.f32.mrb[0].mxu0
    %v884 = vadd.f32 0.0, %v883
    %v885 = vpop.f32.mrb[0].mxu0
    %v886 = vpop.f32.mrb[0].mxu0
    %v887 = vadd.f32 0.0, %v886
    %v888 = vpop.f32.mrb[0].mxu0
    %889 = vmatprep.mubr.bf16.mxu0 %v682
    %890 = vmatmul.mubr.bf16.gmra.mrb[0].mxu0 %v681
    %v891 = vpop.f32.mrb[0].mxu0
    %v892 = vadd.f32 0.0, %v891
    %v893 = vpop.f32.mrb[0].mxu0
    %v894 = vpop.f32.mrb[0].mxu0
    %v895 = vadd.f32 0.0, %v894
    %v896 = vpop.f32.mrb[0].mxu0
    %897 = vmatprep.mubr.bf16.mxu0 %v685
    %898 = vmatmul.mubr.bf16.gmra.mrb[0].mxu0 %v684
    %v899 = vpop.f32.mrb[0].mxu0
    %v900 = vadd.f32 0.0, %v899
    %v901 = vpop.f32.mrb[0].mxu0
    %v902 = vpop.f32.mrb[0].mxu0
    %v903 = vadd.f32 0.0, %v902
    %v904 = vpop.f32.mrb[0].mxu0
    %905 = vmatprep.mubr.bf16.mxu0 %v688
    %906 = vmatmul.mubr.bf16.gmra.mrb[0].mxu0 %v687
    %v907 = vpop.f32.mrb[0].mxu0
    %v908 = vadd.f32 0.0, %v907
    %v909 = vpop.f32.mrb[0].mxu0
    %v910 = vpop.f32.mrb[0].mxu0
    %v911 = vadd.f32 0.0, %v910
    %v912 = vpop.f32.mrb[0].mxu0
    %913 = vmatprep.mubr.bf16.mxu0 %v691
    %914 = vmatmul.mubr.bf16.gmra.mrb[0].mxu0 %v690
    %v915 = vpop.f32.mrb[0].mxu0
    %v916 = vadd.f32 0.0, %v915
    %v917 = vpop.f32.mrb[0].mxu0
    %v918 = vpop.f32.mrb[0].mxu0
    %v919 = vadd.f32 0.0, %v918
    %v920 = vpop.f32.mrb[0].mxu0
    %921 = vdwg.mxu0
    %922 = vmatprep.subr.bf16.mxu0 0
    %923 = vmatpush1.bf16.msra.mxu0 %v781
    %924 = vmatprep.subr.bf16.mxu0 0
    %925 = vmatpush1.bf16.msra.mxu0 %v782
    %926 = vmatprep.subr.bf16.mxu0 0
    %927 = vmatpush1.bf16.msra.mxu0 0
    %928 = vmatprep.subr.bf16.mxu0 0
    %929 = vmatpush1.bf16.msra.mxu0 0
    %930 = vmatprep.subr.bf16.mxu0 0
    %931 = vmatpush1.bf16.msra.mxu0 0
    %932 = vmatprep.subr.bf16.mxu0 0
    %933 = vmatpush1.bf16.msra.mxu0 0
    %934 = vmatprep.subr.bf16.mxu0 0
    %935 = vmatpush1.bf16.msra.mxu0 0
    %936 = vmatprep.subr.bf16.mxu0 0
    %937 = vmatpush1.bf16.msra.mxu0 0
    %938 = vmatprep.subr.bf16.mxu0 0
    %939 = vmatpush1.bf16.msra.mxu0 0
    %940 = vmatprep.subr.bf16.mxu0 0
    %941 = vmatpush1.bf16.msra.mxu0 0
    %942 = vmatprep.subr.bf16.mxu0 0
    %943 = vmatpush1.bf16.msra.mxu0 0
    %944 = vmatprep.subr.bf16.mxu0 0
    %945 = vmatpush1.bf16.msra.mxu0 0
    %946 = vmatprep.subr.bf16.mxu0 0
    %947 = vmatpush1.bf16.msra.mxu0 0
    %948 = vmatprep.subr.bf16.mxu0 0
    %949 = vmatpush1.bf16.msra.mxu0 0
    %950 = vmatprep.subr.bf16.mxu0 0
    %951 = vmatpush1.bf16.msra.mxu0 0
    %952 = vmatprep.subr.bf16.mxu0 0
    %953 = vmatpush1.bf16.msra.mxu0 0
    %954 = vmatprep.mubr.bf16.mxu0 0
    %955 = vmatmul.mubr.bf16.gmra.mrb[0].mxu0 %v802
    %v956 = vpop.f32.mrb[0].mxu0
    %v957 = vadd.f32 %v860, %v956
    %v958 = vpop.f32.mrb[0].mxu0
    %v959 = vpop.f32.mrb[0].mxu0
    %v960 = vadd.f32 %v863, %v959
    %v961 = vpop.f32.mrb[0].mxu0
    %962 = vmatprep.mubr.bf16.mxu0 0
    %963 = vmatmul.mubr.bf16.gmra.mrb[0].mxu0 %v805
    %v964 = vpop.f32.mrb[0].mxu0
    %v965 = vadd.f32 %v868, %v964
    %v966 = vpop.f32.mrb[0].mxu0
    %v967 = vpop.f32.mrb[0].mxu0
    %v968 = vadd.f32 %v871, %v967
    %v969 = vpop.f32.mrb[0].mxu0
    %970 = vmatprep.mubr.bf16.mxu0 0
    %971 = vmatmul.mubr.bf16.gmra.mrb[0].mxu0 %v808
    %v972 = vpop.f32.mrb[0].mxu0
    %v973 = vadd.f32 %v876, %v972
    %v974 = vpop.f32.mrb[0].mxu0
    %v975 = vpop.f32.mrb[0].mxu0
    %v976 = vadd.f32 %v879, %v975
    %v977 = vpop.f32.mrb[0].mxu0
    %978 = vmatprep.mubr.bf16.mxu0 0
    %979 = vmatmul.mubr.bf16.gmra.mrb[0].mxu0 %v811
    %v980 = vpop.f32.mrb[0].mxu0
    %v981 = vadd.f32 %v884, %v980
    %v982 = vpop.f32.mrb[0].mxu0
    %v983 = vpop.f32.mrb[0].mxu0
    %v984 = vadd.f32 %v887, %v983
    %v985 = vpop.f32.mrb[0].mxu0
    %986 = vmatprep.mubr.bf16.mxu0 0
    %987 = vmatmul.mubr.bf16.gmra.mrb[0].mxu0 %v814
    %v988 = vpop.f32.mrb[0].mxu0
    %v989 = vadd.f32 %v892, %v988
    %v990 = vpop.f32.mrb[0].mxu0
    %v991 = vpop.f32.mrb[0].mxu0
    %v992 = vadd.f32 %v895, %v991
    %v993 = vpop.f32.mrb[0].mxu0
    %994 = vmatprep.mubr.bf16.mxu0 0
    %995 = vmatmul.mubr.bf16.gmra.mrb[0].mxu0 %v817
    %v996 = vpop.f32.mrb[0].mxu0
    %v997 = vadd.f32 %v900, %v996
    %v998 = vpop.f32.mrb[0].mxu0
    %v999 = vpop.f32.mrb[0].mxu0
    %v1000 = vadd.f32 %v903, %v999
    %v1001 = vpop.f32.mrb[0].mxu0
    %1002 = vmatprep.mubr.bf16.mxu0 0
    %1003 = vmatmul.mubr.bf16.gmra.mrb[0].mxu0 %v820
    %v1004 = vpop.f32.mrb[0].mxu0
    %v1005 = vadd.f32 %v908, %v1004
    %v1006 = vpop.f32.mrb[0].mxu0
    %v1007 = vpop.f32.mrb[0].mxu0
    %v1008 = vadd.f32 %v911, %v1007
    %v1009 = vpop.f32.mrb[0].mxu0
    %1010 = vmatprep.mubr.bf16.mxu0 0
    %1011 = vmatmul.mubr.bf16.gmra.mrb[0].mxu0 %v823
    %v1012 = vpop.f32.mrb[0].mxu0
    %v1013 = vadd.f32 %v916, %v1012
    %v1014 = vpop.f32.mrb[0].mxu0
    %v1015 = vpop.f32.mrb[0].mxu0
    %v1016 = vadd.f32 %v919, %v1015
    %v1017 = vpop.f32.mrb[0].mxu0
    %1018 = vdwg.mxu0
    %v1019 = vsel %vm53, %v957, 0.0
    %v1020 = vsel %vm53, %v960, 0.0
    %v1021 = vadd.f32 %v1019, %v1020
    %v1022 = vsel %vm53, %v965, 0.0
    %v1023 = vadd.f32 %v1021, %v1022
    %v1024 = vsel %vm53, %v968, 0.0
    %v1025 = vadd.f32 %v1023, %v1024
    %v1026 = vsel %vm53, %v973, 0.0
    %v1027 = vadd.f32 %v1025, %v1026
    %v1028 = vsel %vm53, %v976, 0.0
    %v1029 = vadd.f32 %v1027, %v1028
    %v1030 = vsel %vm53, %v981, 0.0
    %v1031 = vadd.f32 %v1029, %v1030
    %v1032 = vsel %vm53, %v984, 0.0
    %v1033 = vadd.f32 %v1031, %v1032
    %v1034 = vsel %vm53, %v989, 0.0
    %v1035 = vadd.f32 %v1033, %v1034
    %v1036 = vsel %vm53, %v992, 0.0
    %v1037 = vadd.f32 %v1035, %v1036
    %v1038 = vsel %vm53, %v997, 0.0
    %v1039 = vadd.f32 %v1037, %v1038
    %v1040 = vsel %vm53, %v1000, 0.0
    %v1041 = vadd.f32 %v1039, %v1040
    %v1042 = vsel %vm53, %v1005, 0.0
    %v1043 = vadd.f32 %v1041, %v1042
    %v1044 = vsel %vm53, %v1008, 0.0
    %v1045 = vadd.f32 %v1043, %v1044
    %v1046 = vsel %vm53, %v1013, 0.0
    %v1047 = vadd.f32 %v1045, %v1046
    %v1048 = vsel %vm53, %v1016, 0.0
    %v1049 = vadd.f32 %v1047, %v1048
    %v1050 = vrot.slane %v1049, 4
    %v1051 = vadd.f32 %v1049, %v1050
    %v1052 = vrot.slane %v1051, 2
    %v1053 = vadd.f32 %v1051, %v1052
    %v1054 = vrot.slane %v1053, 1
    %v1055 = vadd.f32 %v1053, %v1054
    %v1056 = vmul.f32 %v1055, 0.0078125
    %v1057 = vmul.f32 %v957, %v957
    %v1058 = vmul.f32 %v960, %v960
    %v1059 = vmul.f32 %v965, %v965
    %v1060 = vmul.f32 %v968, %v968
    %v1061 = vmul.f32 %v973, %v973
    %v1062 = vmul.f32 %v976, %v976
    %v1063 = vmul.f32 %v981, %v981
    %v1064 = vmul.f32 %v984, %v984
    %v1065 = vmul.f32 %v989, %v989
    %v1066 = vmul.f32 %v992, %v992
    %v1067 = vmul.f32 %v997, %v997
    %v1068 = vmul.f32 %v1000, %v1000
    %v1069 = vmul.f32 %v1005, %v1005
    %v1070 = vmul.f32 %v1008, %v1008
    %v1071 = vmul.f32 %v1013, %v1013
    %v1072 = vmul.f32 %v1016, %v1016
    %v1073 = vsel %vm53, %v1057, 0.0
    %v1074 = vsel %vm53, %v1058, 0.0
    %v1075 = vadd.f32 %v1073, %v1074
    %v1076 = vsel %vm53, %v1059, 0.0
    %v1077 = vadd.f32 %v1075, %v1076
    %v1078 = vsel %vm53, %v1060, 0.0
    %v1079 = vadd.f32 %v1077, %v1078
    %v1080 = vsel %vm53, %v1061, 0.0
    %v1081 = vadd.f32 %v1079, %v1080
    %v1082 = vsel %vm53, %v1062, 0.0
    %v1083 = vadd.f32 %v1081, %v1082
    %v1084 = vsel %vm53, %v1063, 0.0
    %v1085 = vadd.f32 %v1083, %v1084
    %v1086 = vsel %vm53, %v1064, 0.0
    %v1087 = vadd.f32 %v1085, %v1086
    %v1088 = vsel %vm53, %v1065, 0.0
    %v1089 = vadd.f32 %v1087, %v1088
    %v1090 = vsel %vm53, %v1066, 0.0
    %v1091 = vadd.f32 %v1089, %v1090
    %v1092 = vsel %vm53, %v1067, 0.0
    %v1093 = vadd.f32 %v1091, %v1092
    %v1094 = vsel %vm53, %v1068, 0.0
    %v1095 = vadd.f32 %v1093, %v1094
    %v1096 = vsel %vm53, %v1069, 0.0
    %v1097 = vadd.f32 %v1095, %v1096
    %v1098 = vsel %vm53, %v1070, 0.0
    %v1099 = vadd.f32 %v1097, %v1098
    %v1100 = vsel %vm53, %v1071, 0.0
    %v1101 = vadd.f32 %v1099, %v1100
    %v1102 = vsel %vm53, %v1072, 0.0
    %v1103 = vadd.f32 %v1101, %v1102
    %v1104 = vrot.slane %v1103, 4
    %v1105 = vadd.f32 %v1103, %v1104
    %v1106 = vrot.slane %v1105, 2
    %v1107 = vadd.f32 %v1105, %v1106
    %v1108 = vrot.slane %v1107, 1
    %v1109 = vadd.f32 %v1107, %v1108
    %v1110 = vmul.f32 %v1109, 0.0078125
    %v1111 = vmul.f32 %v1056, %v1056
    %v1112 = vsub.f32 %v1110, %v1111
    %v1113 = vadd.f32 %v1112, 1e-05
    %v1114 = vrsqrt.pop %v1113
    %v1115 = vmul.f32 %v148, %v1114
    %v1116 = vmul.f32 %v1056, %v1115
    %v1118 = vrot.slane %v1116, 7
    %v1120 = vsub.f32 %v148, %v1118
    %v1121 = vlaneseq
    %v1122 = vshrl.u32 %v1121, 7
    %v1123 = vsub.s32 0, %v1122
    %v1124 = vrot.slane %v1115, %v1123
    %v1125 = vmul.f32 %v957, %v1124
    %v1126 = vmul.f32 %v960, %v1124
    %v1127 = vmul.f32 %v965, %v1124
    %v1128 = vmul.f32 %v968, %v1124
    %v1129 = vmul.f32 %v973, %v1124
    %v1130 = vmul.f32 %v976, %v1124
    %v1131 = vmul.f32 %v981, %v1124
    %v1132 = vmul.f32 %v984, %v1124
    %v1133 = vmul.f32 %v989, %v1124
    %v1134 = vmul.f32 %v992, %v1124
    %v1135 = vmul.f32 %v997, %v1124
    %v1136 = vmul.f32 %v1000, %v1124
    %v1137 = vmul.f32 %v1005, %v1124
    %v1138 = vmul.f32 %v1008, %v1124
    %v1139 = vmul.f32 %v1013, %v1124
    %v1140 = vmul.f32 %v1016, %v1124
    %v1141 = vlaneseq
    %v1142 = vshrl.u32 %v1141, 7
    %v1143 = vsub.s32 1, %v1142
    %v1144 = vrot.slane %v1120, %v1143
    %v1145 = vadd.f32 %v1125, %v1144
    %v1146 = vadd.f32 %v1126, %v1144
    %v1147 = vadd.f32 %v1127, %v1144
    %v1148 = vadd.f32 %v1128, %v1144
    %v1149 = vadd.f32 %v1129, %v1144
    %v1150 = vadd.f32 %v1130, %v1144
    %v1151 = vadd.f32 %v1131, %v1144
    %v1152 = vadd.f32 %v1132, %v1144
    %v1153 = vadd.f32 %v1133, %v1144
    %v1154 = vadd.f32 %v1134, %v1144
    %v1155 = vadd.f32 %v1135, %v1144
    %v1156 = vadd.f32 %v1136, %v1144
    %v1157 = vadd.f32 %v1137, %v1144
    %v1158 = vadd.f32 %v1138, %v1144
    %v1159 = vadd.f32 %v1139, %v1144
    %v1160 = vadd.f32 %v1140, %v1144
    %v1161 = vmax.f32 %v1145, 0.0
    %v1162 = vmax.f32 %v1146, 0.0
    %v1163 = vmax.f32 %v1147, 0.0
    %v1164 = vmax.f32 %v1148, 0.0
    %v1165 = vmax.f32 %v1149, 0.0
    %v1166 = vmax.f32 %v1150, 0.0
    %v1167 = vmax.f32 %v1151, 0.0
    %v1168 = vmax.f32 %v1152, 0.0
    %v1169 = vmax.f32 %v1153, 0.0
    %v1170 = vmax.f32 %v1154, 0.0
    %v1171 = vmax.f32 %v1155, 0.0
    %v1172 = vmax.f32 %v1156, 0.0
    %v1173 = vmax.f32 %v1157, 0.0
    %v1174 = vmax.f32 %v1158, 0.0
    %v1175 = vmax.f32 %v1159, 0.0
    %v1176 = vmax.f32 %v1160, 0.0
    %1177 = vst.msk [vmem:[%s131 + $0x8] sm:$0xff] %vm53, %v1161
    %1178 = vst.msk [vmem:[%s131 + $0x20] sm:$0xff] %vm53, %v1162
    %1179 = vst.msk [vmem:[%s131 + $0x38] sm:$0xff] %vm53, %v1163
    %1180 = vst.msk [vmem:[%s131 + $0x50] sm:$0xff] %vm53, %v1164
    %1181 = vst.msk [vmem:[%s131 + $0x68] sm:$0xff] %vm53, %v1165
    %1182 = vst.msk [vmem:[%s131 + $0x80] sm:$0xff] %vm53, %v1166
    %1183 = vst.msk [vmem:[%s131 + $0x98] sm:$0xff] %vm53, %v1167
    %1184 = vst.msk [vmem:[%s131 + $0xb0] sm:$0xff] %vm53, %v1168
    %1185 = vst.msk [vmem:[%s131 + $0xf8] sm:$0xff] %vm53, %v1169
    %1186 = vst.msk [vmem:[%s131 + $0x110] sm:$0xff] %vm53, %v1170
    %1187 = vst.msk [vmem:[%s131 + $0x128] sm:$0xff] %vm53, %v1171
    %1188 = vst.msk [vmem:[%s131 + $0x140] sm:$0xff] %vm53, %v1172
    %1189 = vst.msk [vmem:[%s131 + $0x158] sm:$0xff] %vm53, %v1173
    %1190 = vst.msk [vmem:[%s131 + $0x170] sm:$0xff] %vm53, %v1174
    %1191 = vst.msk [vmem:[%s131 + $0x188] sm:$0xff] %vm53, %v1175
    %1192 = vst.msk [vmem:[%s131 + $0x1a0] sm:$0xff] %vm53, %v1176
    %v1193 = vld [vmem:[%s4] sm:$0x3]
    %s1194 = scalar_lea.vmem %s4, 2
    %v1195 = vld [vmem:[%s1194] sm:$0x3]
    %v1196 = vld [vmem:[%s3] sm:$0xf]
    %v1197 = vld [vmem:[%s3 + $0x4] sm:$0xf]
    %v1198 = vld [vmem:[%s3 + $0x8] sm:$0xf]
    %v1199 = vld [vmem:[%s3 + $0xc] sm:$0xf]
    %v1200 = vld [vmem:[%s3 + $0x10] sm:$0xf]
    %v1201 = vld [vmem:[%s3 + $0x14] sm:$0xf]
    %v1202 = vld [vmem:[%s3 + $0x18] sm:$0xf]
    %v1203 = vld [vmem:[%s3 + $0x1c] sm:$0xf]
    %v1204 = vld [vmem:[%s3 + $0x20] sm:$0xf]
    %v1205 = vld [vmem:[%s3 + $0x24] sm:$0xf]
    %v1206 = vld [vmem:[%s3 + $0x28] sm:$0xf]
    %v1207 = vld [vmem:[%s3 + $0x2c] sm:$0xf]
    %v1208 = vld [vmem:[%s3 + $0x30] sm:$0xf]
    %v1209 = vld [vmem:[%s3 + $0x34] sm:$0xf]
    %v1210 = vld [vmem:[%s3 + $0x38] sm:$0xf]
    %v1211 = vld [vmem:[%s3 + $0x3c] sm:$0xf]
    %v1212 = vld [vmem:[%s3 + $0x40] sm:$0xf]
    %v1213 = vld [vmem:[%s3 + $0x44] sm:$0xf]
    %v1214 = vld [vmem:[%s3 + $0x48] sm:$0xf]
    %v1215 = vld [vmem:[%s3 + $0x4c] sm:$0xf]
    %v1216 = vld [vmem:[%s3 + $0x50] sm:$0xf]
    %v1217 = vld [vmem:[%s3 + $0x54] sm:$0xf]
    %v1218 = vld [vmem:[%s3 + $0x58] sm:$0xf]
    %v1219 = vld [vmem:[%s3 + $0x5c] sm:$0xf]
    %v1220 = vld [vmem:[%s3 + $0x60] sm:$0xf]
    %v1221 = vld [vmem:[%s3 + $0x64] sm:$0xf]
    %v1222 = vld [vmem:[%s3 + $0x68] sm:$0xf]
    %v1223 = vld [vmem:[%s3 + $0x6c] sm:$0xf]
    %v1224 = vld [vmem:[%s3 + $0x70] sm:$0xf]
    %v1225 = vld [vmem:[%s3 + $0x74] sm:$0xf]
    %v1226 = vld [vmem:[%s3 + $0x78] sm:$0xf]
    %v1227 = vld [vmem:[%s3 + $0x7c] sm:$0xf]
    %v1228 = vld [vmem:[%s3 + $0x80] sm:$0xf]
    %v1229 = vld [vmem:[%s3 + $0x84] sm:$0xf]
    %v1230 = vld [vmem:[%s3 + $0x88] sm:$0xf]
    %v1231 = vld [vmem:[%s3 + $0x8c] sm:$0xf]
    %v1232 = vld [vmem:[#allocation2 + $0x7] sm:$0xff]
    %v1233 = vld [vmem:[#allocation2 + $0x1f] sm:$0xff]
    %v1234 = vld [vmem:[#allocation2 + $0x37] sm:$0xff]
    %v1235 = vld [vmem:[#allocation2 + $0x4f] sm:$0xff]
    %v1236 = vld [vmem:[#allocation2 + $0x67] sm:$0xff]
    %v1237 = vld [vmem:[#allocation2 + $0x7f] sm:$0xff]
    %v1238 = vld [vmem:[#allocation2 + $0x97] sm:$0xff]
    %v1239 = vld [vmem:[#allocation2 + $0xaf] sm:$0xff]
    %v1240 = vld [vmem:[#allocation2 + $0xf7] sm:$0xff]
    %v1241 = vld [vmem:[#allocation2 + $0x10f] sm:$0xff]
    %v1242 = vld [vmem:[#allocation2 + $0x127] sm:$0xff]
    %v1243 = vld [vmem:[#allocation2 + $0x13f] sm:$0xff]
    %v1244 = vld [vmem:[#allocation2 + $0x157] sm:$0xff]
    %v1245 = vld [vmem:[#allocation2 + $0x16f] sm:$0xff]
    %v1246 = vld [vmem:[#allocation2 + $0x187] sm:$0xff]
    %v1247 = vld [vmem:[#allocation2 + $0x19f] sm:$0xff]
    %v1248 = vpack.c.bf16 %v1233, %v1232
    %v1249 = vpack.c.bf16 %v1235, %v1234
    %v1250 = vpack.c.bf16 %v1237, %v1236
    %v1251 = vpack.c.bf16 %v1239, %v1238
    %v1252 = vpack.c.bf16 %v1241, %v1240
    %v1253 = vpack.c.bf16 %v1243, %v1242
    %v1254 = vpack.c.bf16 %v1245, %v1244
    %v1255 = vpack.c.bf16 %v1247, %v1246
    %1256 = vst.msk [vmem:[#allocation3] sm:$0xff] %vm53, %v1248
    %1257 = vst.msk [vmem:[#allocation3 + $0x18] sm:$0xff] %vm53, %v1249
    %1258 = vst.msk [vmem:[#allocation3 + $0x30] sm:$0xff] %vm53, %v1250
    %1259 = vst.msk [vmem:[#allocation3 + $0x48] sm:$0xff] %vm53, %v1251
    %1260 = vst.msk [vmem:[#allocation3 + $0x60] sm:$0xff] %vm53, %v1252
    %1261 = vst.msk [vmem:[#allocation3 + $0x78] sm:$0xff] %vm53, %v1253
    %1262 = vst.msk [vmem:[#allocation3 + $0x90] sm:$0xff] %vm53, %v1254
    %1263 = vst.msk [vmem:[#allocation3 + $0xa8] sm:$0xff] %vm53, %v1255
    %v1264 = vld [vmem:[#allocation2 + $0x8] sm:$0xff]
    %v1265 = vld [vmem:[#allocation2 + $0x20] sm:$0xff]
    %v1266 = vld [vmem:[#allocation2 + $0x38] sm:$0xff]
    %v1267 = vld [vmem:[#allocation2 + $0x50] sm:$0xff]
    %v1268 = vld [vmem:[#allocation2 + $0x68] sm:$0xff]
    %v1269 = vld [vmem:[#allocation2 + $0x80] sm:$0xff]
    %v1270 = vld [vmem:[#allocation2 + $0x98] sm:$0xff]
    %v1271 = vld [vmem:[#allocation2 + $0xb0] sm:$0xff]
    %v1272 = vld [vmem:[#allocation2 + $0xf8] sm:$0xff]
    %v1273 = vld [vmem:[#allocation2 + $0x110] sm:$0xff]
    %v1274 = vld [vmem:[#allocation2 + $0x128] sm:$0xff]
    %v1275 = vld [vmem:[#allocation2 + $0x140] sm:$0xff]
    %v1276 = vld [vmem:[#allocation2 + $0x158] sm:$0xff]
    %v1277 = vld [vmem:[#allocation2 + $0x170] sm:$0xff]
    %v1278 = vld [vmem:[#allocation2 + $0x188] sm:$0xff]
    %v1279 = vld [vmem:[#allocation2 + $0x1a0] sm:$0xff]
    %v1280 = vpack.c.bf16 %v1265, %v1264
    %v1281 = vpack.c.bf16 %v1267, %v1266
    %v1282 = vpack.c.bf16 %v1269, %v1268
    %v1283 = vpack.c.bf16 %v1271, %v1270
    %v1284 = vpack.c.bf16 %v1273, %v1272
    %v1285 = vpack.c.bf16 %v1275, %v1274
    %v1286 = vpack.c.bf16 %v1277, %v1276
    %v1287 = vpack.c.bf16 %v1279, %v1278
    %1296 = vrot.lane.b32.xlu0 %v1280, 32
    %v1297 = vpop.permute.xlu0 %1296
    %1298 = vrot.lane.b32.xlu0 %v1281, 32
    %v1299 = vpop.permute.xlu0 %1298
    %1300 = vrot.lane.b32.xlu0 %v1282, 32
    %v1301 = vpop.permute.xlu0 %1300
    %1302 = vrot.lane.b32.xlu0 %v1283, 32
    %v1303 = vpop.permute.xlu0 %1302
    %1304 = vrot.lane.b32.xlu0 %v1284, 32
    %v1305 = vpop.permute.xlu0 %1304
    %1306 = vrot.lane.b32.xlu0 %v1285, 32
    %v1307 = vpop.permute.xlu0 %1306
    %1308 = vrot.lane.b32.xlu0 %v1286, 32
    %v1309 = vpop.permute.xlu0 %1308
    %1310 = vrot.lane.b32.xlu0 %v1287, 32
    %v1311 = vpop.permute.xlu0 %1310
    %1320 = vst.msk [vmem:[#allocation3] sm:$0xff] %vm273, %v1297
    %1321 = vst.msk [vmem:[#allocation3 + $0x18] sm:$0xff] %vm273, %v1299
    %1322 = vst.msk [vmem:[#allocation3 + $0x30] sm:$0xff] %vm273, %v1301
    %1323 = vst.msk [vmem:[#allocation3 + $0x48] sm:$0xff] %vm273, %v1303
    %1324 = vst.msk [vmem:[#allocation3 + $0x60] sm:$0xff] %vm273, %v1305
    %1325 = vst.msk [vmem:[#allocation3 + $0x78] sm:$0xff] %vm273, %v1307
    %1326 = vst.msk [vmem:[#allocation3 + $0x90] sm:$0xff] %vm273, %v1309
    %1327 = vst.msk [vmem:[#allocation3 + $0xa8] sm:$0xff] %vm273, %v1311
    %v1328 = vld [vmem:[#allocation2 + $0x9] sm:$0xff]
    %v1329 = vld [vmem:[#allocation2 + $0x21] sm:$0xff]
    %v1330 = vld [vmem:[#allocation2 + $0x39] sm:$0xff]
    %v1331 = vld [vmem:[#allocation2 + $0x51] sm:$0xff]
    %v1332 = vld [vmem:[#allocation2 + $0x69] sm:$0xff]
    %v1333 = vld [vmem:[#allocation2 + $0x81] sm:$0xff]
    %v1334 = vld [vmem:[#allocation2 + $0x99] sm:$0xff]
    %v1335 = vld [vmem:[#allocation2 + $0xb1] sm:$0xff]
    %v1336 = vld [vmem:[#allocation2 + $0xf9] sm:$0xff]
    %v1337 = vld [vmem:[#allocation2 + $0x111] sm:$0xff]
    %v1338 = vld [vmem:[#allocation2 + $0x129] sm:$0xff]
    %v1339 = vld [vmem:[#allocation2 + $0x141] sm:$0xff]
    %v1340 = vld [vmem:[#allocation2 + $0x159] sm:$0xff]
    %v1341 = vld [vmem:[#allocation2 + $0x171] sm:$0xff]
    %v1342 = vld [vmem:[#allocation2 + $0x189] sm:$0xff]
    %v1343 = vld [vmem:[#allocation2 + $0x1a1] sm:$0xff]
    %v1344 = vpack.c.bf16 %v1329, %v1328
    %v1345 = vpack.c.bf16 %v1331, %v1330
    %v1346 = vpack.c.bf16 %v1333, %v1332
    %v1347 = vpack.c.bf16 %v1335, %v1334
    %v1348 = vpack.c.bf16 %v1337, %v1336
    %v1349 = vpack.c.bf16 %v1339, %v1338
    %v1350 = vpack.c.bf16 %v1341, %v1340
    %v1351 = vpack.c.bf16 %v1343, %v1342
    %1360 = vrot.lane.b32.xlu0 %v1344, 64
    %v1361 = vpop.permute.xlu0 %1360
    %1362 = vrot.lane.b32.xlu0 %v1345, 64
    %v1363 = vpop.permute.xlu0 %1362
    %1364 = vrot.lane.b32.xlu0 %v1346, 64
    %v1365 = vpop.permute.xlu0 %1364
    %1366 = vrot.lane.b32.xlu0 %v1347, 64
    %v1367 = vpop.permute.xlu0 %1366
    %1368 = vrot.lane.b32.xlu0 %v1348, 64
    %v1369 = vpop.permute.xlu0 %1368
    %1370 = vrot.lane.b32.xlu0 %v1349, 64
    %v1371 = vpop.permute.xlu0 %1370
    %1372 = vrot.lane.b32.xlu0 %v1350, 64
    %v1373 = vpop.permute.xlu0 %1372
    %1374 = vrot.lane.b32.xlu0 %v1351, 64
    %v1375 = vpop.permute.xlu0 %1374
    %1384 = vst.msk [vmem:[#allocation3] sm:$0xff] %vm338, %v1361
    %1385 = vst.msk [vmem:[#allocation3 + $0x18] sm:$0xff] %vm338, %v1363
    %1386 = vst.msk [vmem:[#allocation3 + $0x30] sm:$0xff] %vm338, %v1365
    %1387 = vst.msk [vmem:[#allocation3 + $0x48] sm:$0xff] %vm338, %v1367
    %1388 = vst.msk [vmem:[#allocation3 + $0x60] sm:$0xff] %vm338, %v1369
    %1389 = vst.msk [vmem:[#allocation3 + $0x78] sm:$0xff] %vm338, %v1371
    %1390 = vst.msk [vmem:[#allocation3 + $0x90] sm:$0xff] %vm338, %v1373
    %1391 = vst.msk [vmem:[#allocation3 + $0xa8] sm:$0xff] %vm338, %v1375
    %v1392 = vld [vmem:[%s131 + $0x7] sm:$0xff]
    %v1393 = vld [vmem:[%s131 + $0x1f] sm:$0xff]
    %v1394 = vld [vmem:[%s131 + $0x37] sm:$0xff]
    %v1395 = vld [vmem:[%s131 + $0x4f] sm:$0xff]
    %v1396 = vld [vmem:[%s131 + $0x67] sm:$0xff]
    %v1397 = vld [vmem:[%s131 + $0x7f] sm:$0xff]
    %v1398 = vld [vmem:[%s131 + $0x97] sm:$0xff]
    %v1399 = vld [vmem:[%s131 + $0xaf] sm:$0xff]
    %v1400 = vld [vmem:[%s131 + $0xf7] sm:$0xff]
    %v1401 = vld [vmem:[%s131 + $0x10f] sm:$0xff]
    %v1402 = vld [vmem:[%s131 + $0x127] sm:$0xff]
    %v1403 = vld [vmem:[%s131 + $0x13f] sm:$0xff]
    %v1404 = vld [vmem:[%s131 + $0x157] sm:$0xff]
    %v1405 = vld [vmem:[%s131 + $0x16f] sm:$0xff]
    %v1406 = vld [vmem:[%s131 + $0x187] sm:$0xff]
    %v1407 = vld [vmem:[%s131 + $0x19f] sm:$0xff]
    %v1408 = vpack.c.bf16 %v1393, %v1392
    %v1409 = vpack.c.bf16 %v1395, %v1394
    %v1410 = vpack.c.bf16 %v1397, %v1396
    %v1411 = vpack.c.bf16 %v1399, %v1398
    %v1412 = vpack.c.bf16 %v1401, %v1400
    %v1413 = vpack.c.bf16 %v1403, %v1402
    %v1414 = vpack.c.bf16 %v1405, %v1404
    %v1415 = vpack.c.bf16 %v1407, %v1406
    %1424 = vrot.lane.b32.xlu0 %v1408, 96
    %v1425 = vpop.permute.xlu0 %1424
    %1426 = vrot.lane.b32.xlu0 %v1409, 96
    %v1427 = vpop.permute.xlu0 %1426
    %1428 = vrot.lane.b32.xlu0 %v1410, 96
    %v1429 = vpop.permute.xlu0 %1428
    %1430 = vrot.lane.b32.xlu0 %v1411, 96
    %v1431 = vpop.permute.xlu0 %1430
    %1432 = vrot.lane.b32.xlu0 %v1412, 96
    %v1433 = vpop.permute.xlu0 %1432
    %1434 = vrot.lane.b32.xlu0 %v1413, 96
    %v1435 = vpop.permute.xlu0 %1434
    %1436 = vrot.lane.b32.xlu0 %v1414, 96
    %v1437 = vpop.permute.xlu0 %1436
    %1438 = vrot.lane.b32.xlu0 %v1415, 96
    %v1439 = vpop.permute.xlu0 %1438
    %1448 = vst.msk [vmem:[#allocation3] sm:$0xff] %vm403, %v1425
    %1449 = vst.msk [vmem:[#allocation3 + $0x18] sm:$0xff] %vm403, %v1427
    %1450 = vst.msk [vmem:[#allocation3 + $0x30] sm:$0xff] %vm403, %v1429
    %1451 = vst.msk [vmem:[#allocation3 + $0x48] sm:$0xff] %vm403, %v1431
    %1452 = vst.msk [vmem:[#allocation3 + $0x60] sm:$0xff] %vm403, %v1433
    %1453 = vst.msk [vmem:[#allocation3 + $0x78] sm:$0xff] %vm403, %v1435
    %1454 = vst.msk [vmem:[#allocation3 + $0x90] sm:$0xff] %vm403, %v1437
    %1455 = vst.msk [vmem:[#allocation3 + $0xa8] sm:$0xff] %vm403, %v1439
    %v1456 = vld [vmem:[%s131 + $0x8] sm:$0xff]
    %v1457 = vld [vmem:[%s131 + $0x20] sm:$0xff]
    %v1458 = vld [vmem:[%s131 + $0x38] sm:$0xff]
    %v1459 = vld [vmem:[%s131 + $0x50] sm:$0xff]
    %v1460 = vld [vmem:[%s131 + $0x68] sm:$0xff]
    %v1461 = vld [vmem:[%s131 + $0x80] sm:$0xff]
    %v1462 = vld [vmem:[%s131 + $0x98] sm:$0xff]
    %v1463 = vld [vmem:[%s131 + $0xb0] sm:$0xff]
    %v1464 = vld [vmem:[%s131 + $0xf8] sm:$0xff]
    %v1465 = vld [vmem:[%s131 + $0x110] sm:$0xff]
    %v1466 = vld [vmem:[%s131 + $0x128] sm:$0xff]
    %v1467 = vld [vmem:[%s131 + $0x140] sm:$0xff]
    %v1468 = vld [vmem:[%s131 + $0x158] sm:$0xff]
    %v1469 = vld [vmem:[%s131 + $0x170] sm:$0xff]
    %v1470 = vld [vmem:[%s131 + $0x188] sm:$0xff]
    %v1471 = vld [vmem:[%s131 + $0x1a0] sm:$0xff]
    %v1472 = vpack.c.bf16 %v1457, %v1456
    %v1473 = vpack.c.bf16 %v1459, %v1458
    %v1474 = vpack.c.bf16 %v1461, %v1460
    %v1475 = vpack.c.bf16 %v1463, %v1462
    %v1476 = vpack.c.bf16 %v1465, %v1464
    %v1477 = vpack.c.bf16 %v1467, %v1466
    %v1478 = vpack.c.bf16 %v1469, %v1468
    %v1479 = vpack.c.bf16 %v1471, %v1470
    %1480 = vst.msk [vmem:[#allocation3 + $0x8] sm:$0xff] %vm53, %v1472
    %1481 = vst.msk [vmem:[#allocation3 + $0x20] sm:$0xff] %vm53, %v1473
    %1482 = vst.msk [vmem:[#allocation3 + $0x38] sm:$0xff] %vm53, %v1474
    %1483 = vst.msk [vmem:[#allocation3 + $0x50] sm:$0xff] %vm53, %v1475
    %1484 = vst.msk [vmem:[#allocation3 + $0x68] sm:$0xff] %vm53, %v1476
    %1485 = vst.msk [vmem:[#allocation3 + $0x80] sm:$0xff] %vm53, %v1477
    %1486 = vst.msk [vmem:[#allocation3 + $0x98] sm:$0xff] %vm53, %v1478
    %1487 = vst.msk [vmem:[#allocation3 + $0xb0] sm:$0xff] %vm53, %v1479
    %v1488 = vld [vmem:[%s131 + $0x9] sm:$0xff]
    %v1489 = vld [vmem:[%s131 + $0x21] sm:$0xff]
    %v1490 = vld [vmem:[%s131 + $0x39] sm:$0xff]
    %v1491 = vld [vmem:[%s131 + $0x51] sm:$0xff]
    %v1492 = vld [vmem:[%s131 + $0x69] sm:$0xff]
    %v1493 = vld [vmem:[%s131 + $0x81] sm:$0xff]
    %v1494 = vld [vmem:[%s131 + $0x99] sm:$0xff]
    %v1495 = vld [vmem:[%s131 + $0xb1] sm:$0xff]
    %v1496 = vld [vmem:[%s131 + $0xf9] sm:$0xff]
    %v1497 = vld [vmem:[%s131 + $0x111] sm:$0xff]
    %v1498 = vld [vmem:[%s131 + $0x129] sm:$0xff]
    %v1499 = vld [vmem:[%s131 + $0x141] sm:$0xff]
    %v1500 = vld [vmem:[%s131 + $0x159] sm:$0xff]
    %v1501 = vld [vmem:[%s131 + $0x171] sm:$0xff]
    %v1502 = vld [vmem:[%s131 + $0x189] sm:$0xff]
    %v1503 = vld [vmem:[%s131 + $0x1a1] sm:$0xff]
    %v1504 = vpack.c.bf16 %v1489, %v1488
    %v1505 = vpack.c.bf16 %v1491, %v1490
    %v1506 = vpack.c.bf16 %v1493, %v1492
    %v1507 = vpack.c.bf16 %v1495, %v1494
    %v1508 = vpack.c.bf16 %v1497, %v1496
    %v1509 = vpack.c.bf16 %v1499, %v1498
    %v1510 = vpack.c.bf16 %v1501, %v1500
    %v1511 = vpack.c.bf16 %v1503, %v1502
    %1520 = vrot.lane.b32.xlu0 %v1504, 32
    %v1521 = vpop.permute.xlu0 %1520
    %1522 = vrot.lane.b32.xlu0 %v1505, 32
    %v1523 = vpop.permute.xlu0 %1522
    %1524 = vrot.lane.b32.xlu0 %v1506, 32
    %v1525 = vpop.permute.xlu0 %1524
    %1526 = vrot.lane.b32.xlu0 %v1507, 32
    %v1527 = vpop.permute.xlu0 %1526
    %1528 = vrot.lane.b32.xlu0 %v1508, 32
    %v1529 = vpop.permute.xlu0 %1528
    %1530 = vrot.lane.b32.xlu0 %v1509, 32
    %v1531 = vpop.permute.xlu0 %1530
    %1532 = vrot.lane.b32.xlu0 %v1510, 32
    %v1533 = vpop.permute.xlu0 %1532
    %1534 = vrot.lane.b32.xlu0 %v1511, 32
    %v1535 = vpop.permute.xlu0 %1534
    %1544 = vst.msk [vmem:[#allocation3 + $0x8] sm:$0xff] %vm273, %v1521
    %1545 = vst.msk [vmem:[#allocation3 + $0x20] sm:$0xff] %vm273, %v1523
    %1546 = vst.msk [vmem:[#allocation3 + $0x38] sm:$0xff] %vm273, %v1525
    %1547 = vst.msk [vmem:[#allocation3 + $0x50] sm:$0xff] %vm273, %v1527
    %1548 = vst.msk [vmem:[#allocation3 + $0x68] sm:$0xff] %vm273, %v1529
    %1549 = vst.msk [vmem:[#allocation3 + $0x80] sm:$0xff] %vm273, %v1531
    %1550 = vst.msk [vmem:[#allocation3 + $0x98] sm:$0xff] %vm273, %v1533
    %1551 = vst.msk [vmem:[#allocation3 + $0xb0] sm:$0xff] %vm273, %v1535
    %v1552 = vld [vmem:[%s508 + $0x7] sm:$0xff]
    %v1553 = vld [vmem:[%s508 + $0x1f] sm:$0xff]
    %v1554 = vld [vmem:[%s508 + $0x37] sm:$0xff]
    %v1555 = vld [vmem:[%s508 + $0x4f] sm:$0xff]
    %v1556 = vld [vmem:[%s508 + $0x67] sm:$0xff]
    %v1557 = vld [vmem:[%s508 + $0x7f] sm:$0xff]
    %v1558 = vld [vmem:[%s508 + $0x97] sm:$0xff]
    %v1559 = vld [vmem:[%s508 + $0xaf] sm:$0xff]
    %v1560 = vld [vmem:[%s508 + $0xf7] sm:$0xff]
    %v1561 = vld [vmem:[%s508 + $0x10f] sm:$0xff]
    %v1562 = vld [vmem:[%s508 + $0x127] sm:$0xff]
    %v1563 = vld [vmem:[%s508 + $0x13f] sm:$0xff]
    %v1564 = vld [vmem:[%s508 + $0x157] sm:$0xff]
    %v1565 = vld [vmem:[%s508 + $0x16f] sm:$0xff]
    %v1566 = vld [vmem:[%s508 + $0x187] sm:$0xff]
    %v1567 = vld [vmem:[%s508 + $0x19f] sm:$0xff]
    %v1568 = vpack.c.bf16 %v1553, %v1552
    %v1569 = vpack.c.bf16 %v1555, %v1554
    %v1570 = vpack.c.bf16 %v1557, %v1556
    %v1571 = vpack.c.bf16 %v1559, %v1558
    %v1572 = vpack.c.bf16 %v1561, %v1560
    %v1573 = vpack.c.bf16 %v1563, %v1562
    %v1574 = vpack.c.bf16 %v1565, %v1564
    %v1575 = vpack.c.bf16 %v1567, %v1566
    %1584 = vrot.lane.b32.xlu0 %v1568, 64
    %v1585 = vpop.permute.xlu0 %1584
    %1586 = vrot.lane.b32.xlu0 %v1569, 64
    %v1587 = vpop.permute.xlu0 %1586
    %1588 = vrot.lane.b32.xlu0 %v1570, 64
    %v1589 = vpop.permute.xlu0 %1588
    %1590 = vrot.lane.b32.xlu0 %v1571, 64
    %v1591 = vpop.permute.xlu0 %1590
    %1592 = vrot.lane.b32.xlu0 %v1572, 64
    %v1593 = vpop.permute.xlu0 %1592
    %1594 = vrot.lane.b32.xlu0 %v1573, 64
    %v1595 = vpop.permute.xlu0 %1594
    %1596 = vrot.lane.b32.xlu0 %v1574, 64
    %v1597 = vpop.permute.xlu0 %1596
    %1598 = vrot.lane.b32.xlu0 %v1575, 64
    %v1599 = vpop.permute.xlu0 %1598
    %1608 = vst.msk [vmem:[#allocation3 + $0x8] sm:$0xff] %vm338, %v1585
    %1609 = vst.msk [vmem:[#allocation3 + $0x20] sm:$0xff] %vm338, %v1587
    %1610 = vst.msk [vmem:[#allocation3 + $0x38] sm:$0xff] %vm338, %v1589
    %1611 = vst.msk [vmem:[#allocation3 + $0x50] sm:$0xff] %vm338, %v1591
    %1612 = vst.msk [vmem:[#allocation3 + $0x68] sm:$0xff] %vm338, %v1593
    %1613 = vst.msk [vmem:[#allocation3 + $0x80] sm:$0xff] %vm338, %v1595
    %1614 = vst.msk [vmem:[#allocation3 + $0x98] sm:$0xff] %vm338, %v1597
    %1615 = vst.msk [vmem:[#allocation3 + $0xb0] sm:$0xff] %vm338, %v1599
    %v1616 = vld [vmem:[%s508 + $0x8] sm:$0xff]
    %v1617 = vld [vmem:[%s508 + $0x20] sm:$0xff]
    %v1618 = vld [vmem:[%s508 + $0x38] sm:$0xff]
    %v1619 = vld [vmem:[%s508 + $0x50] sm:$0xff]
    %v1620 = vld [vmem:[%s508 + $0x68] sm:$0xff]
    %v1621 = vld [vmem:[%s508 + $0x80] sm:$0xff]
    %v1622 = vld [vmem:[%s508 + $0x98] sm:$0xff]
    %v1623 = vld [vmem:[%s508 + $0xb0] sm:$0xff]
    %v1624 = vld [vmem:[%s508 + $0xf8] sm:$0xff]
    %v1625 = vld [vmem:[%s508 + $0x110] sm:$0xff]
    %v1626 = vld [vmem:[%s508 + $0x128] sm:$0xff]
    %v1627 = vld [vmem:[%s508 + $0x140] sm:$0xff]
    %v1628 = vld [vmem:[%s508 + $0x158] sm:$0xff]
    %v1629 = vld [vmem:[%s508 + $0x170] sm:$0xff]
    %v1630 = vld [vmem:[%s508 + $0x188] sm:$0xff]
    %v1631 = vld [vmem:[%s508 + $0x1a0] sm:$0xff]
    %v1632 = vpack.c.bf16 %v1617, %v1616
    %v1633 = vpack.c.bf16 %v1619, %v1618
    %v1634 = vpack.c.bf16 %v1621, %v1620
    %v1635 = vpack.c.bf16 %v1623, %v1622
    %v1636 = vpack.c.bf16 %v1625, %v1624
    %v1637 = vpack.c.bf16 %v1627, %v1626
    %v1638 = vpack.c.bf16 %v1629, %v1628
    %v1639 = vpack.c.bf16 %v1631, %v1630
    %1648 = vrot.lane.b32.xlu0 %v1632, 96
    %v1649 = vpop.permute.xlu0 %1648
    %1650 = vrot.lane.b32.xlu0 %v1633, 96
    %v1651 = vpop.permute.xlu0 %1650
    %1652 = vrot.lane.b32.xlu0 %v1634, 96
    %v1653 = vpop.permute.xlu0 %1652
    %1654 = vrot.lane.b32.xlu0 %v1635, 96
    %v1655 = vpop.permute.xlu0 %1654
    %1656 = vrot.lane.b32.xlu0 %v1636, 96
    %v1657 = vpop.permute.xlu0 %1656
    %1658 = vrot.lane.b32.xlu0 %v1637, 96
    %v1659 = vpop.permute.xlu0 %1658
    %1660 = vrot.lane.b32.xlu0 %v1638, 96
    %v1661 = vpop.permute.xlu0 %1660
    %1662 = vrot.lane.b32.xlu0 %v1639, 96
    %v1663 = vpop.permute.xlu0 %1662
    %1672 = vst.msk [vmem:[#allocation3 + $0x8] sm:$0xff] %vm403, %v1649
    %1673 = vst.msk [vmem:[#allocation3 + $0x20] sm:$0xff] %vm403, %v1651
    %1674 = vst.msk [vmem:[#allocation3 + $0x38] sm:$0xff] %vm403, %v1653
    %1675 = vst.msk [vmem:[#allocation3 + $0x50] sm:$0xff] %vm403, %v1655
    %1676 = vst.msk [vmem:[#allocation3 + $0x68] sm:$0xff] %vm403, %v1657
    %1677 = vst.msk [vmem:[#allocation3 + $0x80] sm:$0xff] %vm403, %v1659
    %1678 = vst.msk [vmem:[#allocation3 + $0x98] sm:$0xff] %vm403, %v1661
    %1679 = vst.msk [vmem:[#allocation3 + $0xb0] sm:$0xff] %vm403, %v1663
    %v1680 = vld [vmem:[%s508 + $0x9] sm:$0xff]
    %v1681 = vld [vmem:[%s508 + $0x21] sm:$0xff]
    %v1682 = vld [vmem:[%s508 + $0x39] sm:$0xff]
    %v1683 = vld [vmem:[%s508 + $0x51] sm:$0xff]
    %v1684 = vld [vmem:[%s508 + $0x69] sm:$0xff]
    %v1685 = vld [vmem:[%s508 + $0x81] sm:$0xff]
    %v1686 = vld [vmem:[%s508 + $0x99] sm:$0xff]
    %v1687 = vld [vmem:[%s508 + $0xb1] sm:$0xff]
    %v1688 = vld [vmem:[%s508 + $0xf9] sm:$0xff]
    %v1689 = vld [vmem:[%s508 + $0x111] sm:$0xff]
    %v1690 = vld [vmem:[%s508 + $0x129] sm:$0xff]
    %v1691 = vld [vmem:[%s508 + $0x141] sm:$0xff]
    %v1692 = vld [vmem:[%s508 + $0x159] sm:$0xff]
    %v1693 = vld [vmem:[%s508 + $0x171] sm:$0xff]
    %v1694 = vld [vmem:[%s508 + $0x189] sm:$0xff]
    %v1695 = vld [vmem:[%s508 + $0x1a1] sm:$0xff]
    %v1696 = vpack.c.bf16 %v1681, %v1680
    %v1697 = vpack.c.bf16 %v1683, %v1682
    %v1698 = vpack.c.bf16 %v1685, %v1684
    %v1699 = vpack.c.bf16 %v1687, %v1686
    %v1700 = vpack.c.bf16 %v1689, %v1688
    %v1701 = vpack.c.bf16 %v1691, %v1690
    %v1702 = vpack.c.bf16 %v1693, %v1692
    %v1703 = vpack.c.bf16 %v1695, %v1694
    %1704 = vst.msk [vmem:[#allocation3 + $0x10] sm:$0xff] %vm53, %v1696
    %1705 = vst.msk [vmem:[#allocation3 + $0x28] sm:$0xff] %vm53, %v1697
    %1706 = vst.msk [vmem:[#allocation3 + $0x40] sm:$0xff] %vm53, %v1698
    %1707 = vst.msk [vmem:[#allocation3 + $0x58] sm:$0xff] %vm53, %v1699
    %1708 = vst.msk [vmem:[#allocation3 + $0x70] sm:$0xff] %vm53, %v1700
    %1709 = vst.msk [vmem:[#allocation3 + $0x88] sm:$0xff] %vm53, %v1701
    %1710 = vst.msk [vmem:[#allocation3 + $0xa0] sm:$0xff] %vm53, %v1702
    %1711 = vst.msk [vmem:[#allocation3 + $0xb8] sm:$0xff] %vm53, %v1703
    %v1712 = vld [vmem:[#allocation3] sm:$0xff]
    %v1713 = vld [vmem:[#allocation3 + $0x8] sm:$0xff]
    %v1714 = vld [vmem:[#allocation3 + $0x10] sm:$0xff]
    %v1715 = vld [vmem:[#allocation3 + $0x18] sm:$0xff]
    %v1716 = vld [vmem:[#allocation3 + $0x20] sm:$0xff]
    %v1717 = vld [vmem:[#allocation3 + $0x28] sm:$0xff]
    %v1718 = vld [vmem:[#allocation3 + $0x30] sm:$0xff]
    %v1719 = vld [vmem:[#allocation3 + $0x38] sm:$0xff]
    %v1720 = vld [vmem:[#allocation3 + $0x40] sm:$0xff]
    %v1721 = vld [vmem:[#allocation3 + $0x48] sm:$0xff]
    %v1722 = vld [vmem:[#allocation3 + $0x50] sm:$0xff]
    %v1723 = vld [vmem:[#allocation3 + $0x58] sm:$0xff]
    %v1724 = vld [vmem:[#allocation3 + $0x60] sm:$0xff]
    %v1725 = vld [vmem:[#allocation3 + $0x68] sm:$0xff]
    %v1726 = vld [vmem:[#allocation3 + $0x70] sm:$0xff]
    %v1727 = vld [vmem:[#allocation3 + $0x78] sm:$0xff]
    %v1728 = vld [vmem:[#allocation3 + $0x80] sm:$0xff]
    %v1729 = vld [vmem:[#allocation3 + $0x88] sm:$0xff]
    %v1730 = vld [vmem:[#allocation3 + $0x90] sm:$0xff]
    %v1731 = vld [vmem:[#allocation3 + $0x98] sm:$0xff]
    %v1732 = vld [vmem:[#allocation3 + $0xa0] sm:$0xff]
    %v1733 = vld [vmem:[#allocation3 + $0xa8] sm:$0xff]
    %v1734 = vld [vmem:[#allocation3 + $0xb0] sm:$0xff]
    %v1735 = vld [vmem:[#allocation3 + $0xb8] sm:$0xff]
    %v1772 = vunpack.c.l.b16 %v1196
    %v1773 = vunpack.c.l.b16 %v1197
    %v1774 = vunpack.c.l.b16 %v1198
    %v1775 = vunpack.c.l.b16 %v1199
    %v1776 = vunpack.c.l.b16 %v1200
    %v1777 = vunpack.c.l.b16 %v1201
    %v1778 = vunpack.c.l.b16 %v1202
    %v1779 = vunpack.c.l.b16 %v1203
    %v1780 = vunpack.c.l.b16 %v1204
    %v1781 = vunpack.c.l.b16 %v1205
    %v1782 = vunpack.c.l.b16 %v1206
    %v1783 = vunpack.c.l.b16 %v1207
    %v1784 = vunpack.c.l.b16 %v1208
    %v1785 = vunpack.c.l.b16 %v1209
    %v1786 = vunpack.c.l.b16 %v1210
    %v1787 = vunpack.c.l.b16 %v1211
    %v1788 = vunpack.c.l.b16 %v1212
    %v1789 = vunpack.c.l.b16 %v1213
    %v1790 = vunpack.c.l.b16 %v1214
    %v1791 = vunpack.c.l.b16 %v1215
    %v1792 = vunpack.c.l.b16 %v1216
    %v1793 = vunpack.c.l.b16 %v1217
    %v1794 = vunpack.c.l.b16 %v1218
    %v1795 = vunpack.c.l.b16 %v1219
    %v1796 = vunpack.c.l.b16 %v1220
    %v1797 = vunpack.c.l.b16 %v1221
    %v1798 = vunpack.c.l.b16 %v1222
    %v1799 = vunpack.c.l.b16 %v1223
    %v1800 = vunpack.c.l.b16 %v1224
    %v1801 = vunpack.c.l.b16 %v1225
    %v1802 = vunpack.c.l.b16 %v1226
    %v1803 = vunpack.c.l.b16 %v1227
    %v1804 = vunpack.c.l.b16 %v1228
    %v1805 = vunpack.c.l.b16 %v1229
    %v1806 = vunpack.c.l.b16 %v1230
    %v1807 = vunpack.c.l.b16 %v1231
    %v1808 = vpack.c.b16 %v1773, %v1772
    %v1809 = vpack.c.b16 %v1775, %v1774
    %v1810 = vpack.c.b16 %v1777, %v1776
    %v1811 = vpack.c.b16 %v1779, %v1778
    %v1812 = vpack.c.b16 %v1781, %v1780
    %v1813 = vpack.c.b16 %v1783, %v1782
    %v1814 = vpack.c.b16 %v1785, %v1784
    %v1815 = vpack.c.b16 %v1787, %v1786
    %v1816 = vpack.c.b16 %v1789, %v1788
    %v1817 = vpack.c.b16 %v1791, %v1790
    %v1818 = vpack.c.b16 %v1793, %v1792
    %v1819 = vpack.c.b16 %v1795, %v1794
    %v1820 = vpack.c.b16 %v1797, %v1796
    %v1821 = vpack.c.b16 %v1799, %v1798
    %v1822 = vpack.c.b16 %v1801, %v1800
    %v1823 = vpack.c.b16 %v1803, %v1802
    %v1824 = vpack.c.b16 %v1805, %v1804
    %v1825 = vpack.c.b16 %v1807, %v1806
    %v1845 = vsel %vm53, %v1714, 0
    %v1848 = vsel %vm53, %v1717, 0
    %v1851 = vsel %vm53, %v1720, 0
    %v1854 = vsel %vm53, %v1723, 0
    %v1857 = vsel %vm53, %v1726, 0
    %v1860 = vsel %vm53, %v1729, 0
    %v1863 = vsel %vm53, %v1732, 0
    %v1866 = vsel %vm53, %v1735, 0
    %1868 = vmatprep.subr.bf16.mxu0 0
    %1869 = vmatpush1.bf16.msra.mxu0 %v1808
    %1870 = vmatprep.subr.bf16.mxu0 0
    %1871 = vmatpush1.bf16.msra.mxu0 %v1809
    %1872 = vmatprep.subr.bf16.mxu0 0
    %1873 = vmatpush1.bf16.msra.mxu0 %v1810
    %1874 = vmatprep.subr.bf16.mxu0 0
    %1875 = vmatpush1.bf16.msra.mxu0 %v1811
    %1876 = vmatprep.subr.bf16.mxu0 0
    %1877 = vmatpush1.bf16.msra.mxu0 %v1812
    %1878 = vmatprep.subr.bf16.mxu0 0
    %1879 = vmatpush1.bf16.msra.mxu0 %v1813
    %1880 = vmatprep.subr.bf16.mxu0 0
    %1881 = vmatpush1.bf16.msra.mxu0 %v1814
    %1882 = vmatprep.subr.bf16.mxu0 0
    %1883 = vmatpush1.bf16.msra.mxu0 %v1815
    %1884 = vmatprep.subr.bf16.mxu0 0
    %1885 = vmatpush1.bf16.msra.mxu0 %v1816
    %1886 = vmatprep.subr.bf16.mxu0 0
    %1887 = vmatpush1.bf16.msra.mxu0 %v1817
    %1888 = vmatprep.subr.bf16.mxu0 0
    %1889 = vmatpush1.bf16.msra.mxu0 %v1818
    %1890 = vmatprep.subr.bf16.mxu0 0
    %1891 = vmatpush1.bf16.msra.mxu0 %v1819
    %1892 = vmatprep.subr.bf16.mxu0 0
    %1893 = vmatpush1.bf16.msra.mxu0 %v1820
    %1894 = vmatprep.subr.bf16.mxu0 0
    %1895 = vmatpush1.bf16.msra.mxu0 %v1821
    %1896 = vmatprep.subr.bf16.mxu0 0
    %1897 = vmatpush1.bf16.msra.mxu0 %v1822
    %1898 = vmatprep.subr.bf16.mxu0 0
    %1899 = vmatpush1.bf16.msra.mxu0 %v1823
    %1900 = vmatprep.mubr.bf16.mxu0 %v1713
    %1901 = vmatmul.mubr.bf16.gmra.mrb[0].mxu0 %v1712
    %v1902 = vpop.f32.mrb[0].mxu0
    %v1903 = vadd.f32 0.0, %v1902
    %v1904 = vpop.f32.mrb[0].mxu0
    %v1905 = vpop.f32.mrb[0].mxu0
    %v1906 = vadd.f32 0.0, %v1905
    %v1907 = vpop.f32.mrb[0].mxu0
    %1908 = vmatprep.mubr.bf16.mxu0 %v1716
    %1909 = vmatmul.mubr.bf16.gmra.mrb[0].mxu0 %v1715
    %v1910 = vpop.f32.mrb[0].mxu0
    %v1911 = vadd.f32 0.0, %v1910
    %v1912 = vpop.f32.mrb[0].mxu0
    %v1913 = vpop.f32.mrb[0].mxu0
    %v1914 = vadd.f32 0.0, %v1913
    %v1915 = vpop.f32.mrb[0].mxu0
    %1916 = vmatprep.mubr.bf16.mxu0 %v1719
    %1917 = vmatmul.mubr.bf16.gmra.mrb[0].mxu0 %v1718
    %v1918 = vpop.f32.mrb[0].mxu0
    %v1919 = vadd.f32 0.0, %v1918
    %v1920 = vpop.f32.mrb[0].mxu0
    %v1921 = vpop.f32.mrb[0].mxu0
    %v1922 = vadd.f32 0.0, %v1921
    %v1923 = vpop.f32.mrb[0].mxu0
    %1924 = vmatprep.mubr.bf16.mxu0 %v1722
    %1925 = vmatmul.mubr.bf16.gmra.mrb[0].mxu0 %v1721
    %v1926 = vpop.f32.mrb[0].mxu0
    %v1927 = vadd.f32 0.0, %v1926
    %v1928 = vpop.f32.mrb[0].mxu0
    %v1929 = vpop.f32.mrb[0].mxu0
    %v1930 = vadd.f32 0.0, %v1929
    %v1931 = vpop.f32.mrb[0].mxu0
    %1932 = vmatprep.mubr.bf16.mxu0 %v1725
    %1933 = vmatmul.mubr.bf16.gmra.mrb[0].mxu0 %v1724
    %v1934 = vpop.f32.mrb[0].mxu0
    %v1935 = vadd.f32 0.0, %v1934
    %v1936 = vpop.f32.mrb[0].mxu0
    %v1937 = vpop.f32.mrb[0].mxu0
    %v1938 = vadd.f32 0.0, %v1937
    %v1939 = vpop.f32.mrb[0].mxu0
    %1940 = vmatprep.mubr.bf16.mxu0 %v1728
    %1941 = vmatmul.mubr.bf16.gmra.mrb[0].mxu0 %v1727
    %v1942 = vpop.f32.mrb[0].mxu0
    %v1943 = vadd.f32 0.0, %v1942
    %v1944 = vpop.f32.mrb[0].mxu0
    %v1945 = vpop.f32.mrb[0].mxu0
    %v1946 = vadd.f32 0.0, %v1945
    %v1947 = vpop.f32.mrb[0].mxu0
    %1948 = vmatprep.mubr.bf16.mxu0 %v1731
    %1949 = vmatmul.mubr.bf16.gmra.mrb[0].mxu0 %v1730
    %v1950 = vpop.f32.mrb[0].mxu0
    %v1951 = vadd.f32 0.0, %v1950
    %v1952 = vpop.f32.mrb[0].mxu0
    %v1953 = vpop.f32.mrb[0].mxu0
    %v1954 = vadd.f32 0.0, %v1953
    %v1955 = vpop.f32.mrb[0].mxu0
    %1956 = vmatprep.mubr.bf16.mxu0 %v1734
    %1957 = vmatmul.mubr.bf16.gmra.mrb[0].mxu0 %v1733
    %v1958 = vpop.f32.mrb[0].mxu0
    %v1959 = vadd.f32 0.0, %v1958
    %v1960 = vpop.f32.mrb[0].mxu0
    %v1961 = vpop.f32.mrb[0].mxu0
    %v1962 = vadd.f32 0.0, %v1961
    %v1963 = vpop.f32.mrb[0].mxu0
    %1964 = vdwg.mxu0
    %1965 = vmatprep.subr.bf16.mxu0 0
    %1966 = vmatpush1.bf16.msra.mxu0 %v1824
    %1967 = vmatprep.subr.bf16.mxu0 0
    %1968 = vmatpush1.bf16.msra.mxu0 %v1825
    %1969 = vmatprep.subr.bf16.mxu0 0
    %1970 = vmatpush1.bf16.msra.mxu0 0
    %1971 = vmatprep.subr.bf16.mxu0 0
    %1972 = vmatpush1.bf16.msra.mxu0 0
    %1973 = vmatprep.subr.bf16.mxu0 0
    %1974 = vmatpush1.bf16.msra.mxu0 0
    %1975 = vmatprep.subr.bf16.mxu0 0
    %1976 = vmatpush1.bf16.msra.mxu0 0
    %1977 = vmatprep.subr.bf16.mxu0 0
    %1978 = vmatpush1.bf16.msra.mxu0 0
    %1979 = vmatprep.subr.bf16.mxu0 0
    %1980 = vmatpush1.bf16.msra.mxu0 0
    %1981 = vmatprep.subr.bf16.mxu0 0
    %1982 = vmatpush1.bf16.msra.mxu0 0
    %1983 = vmatprep.subr.bf16.mxu0 0
    %1984 = vmatpush1.bf16.msra.mxu0 0
    %1985 = vmatprep.subr.bf16.mxu0 0
    %1986 = vmatpush1.bf16.msra.mxu0 0
    %1987 = vmatprep.subr.bf16.mxu0 0
    %1988 = vmatpush1.bf16.msra.mxu0 0
    %1989 = vmatprep.subr.bf16.mxu0 0
    %1990 = vmatpush1.bf16.msra.mxu0 0
    %1991 = vmatprep.subr.bf16.mxu0 0
    %1992 = vmatpush1.bf16.msra.mxu0 0
    %1993 = vmatprep.subr.bf16.mxu0 0
    %1994 = vmatpush1.bf16.msra.mxu0 0
    %1995 = vmatprep.subr.bf16.mxu0 0
    %1996 = vmatpush1.bf16.msra.mxu0 0
    %1997 = vmatprep.mubr.bf16.mxu0 0
    %1998 = vmatmul.mubr.bf16.gmra.mrb[0].mxu0 %v1845
    %v1999 = vpop.f32.mrb[0].mxu0
    %v2000 = vadd.f32 %v1903, %v1999
    %v2001 = vpop.f32.mrb[0].mxu0
    %v2002 = vpop.f32.mrb[0].mxu0
    %v2003 = vadd.f32 %v1906, %v2002
    %v2004 = vpop.f32.mrb[0].mxu0
    %2005 = vmatprep.mubr.bf16.mxu0 0
    %2006 = vmatmul.mubr.bf16.gmra.mrb[0].mxu0 %v1848
    %v2007 = vpop.f32.mrb[0].mxu0
    %v2008 = vadd.f32 %v1911, %v2007
    %v2009 = vpop.f32.mrb[0].mxu0
    %v2010 = vpop.f32.mrb[0].mxu0
    %v2011 = vadd.f32 %v1914, %v2010
    %v2012 = vpop.f32.mrb[0].mxu0
    %2013 = vmatprep.mubr.bf16.mxu0 0
    %2014 = vmatmul.mubr.bf16.gmra.mrb[0].mxu0 %v1851
    %v2015 = vpop.f32.mrb[0].mxu0
    %v2016 = vadd.f32 %v1919, %v2015
    %v2017 = vpop.f32.mrb[0].mxu0
    %v2018 = vpop.f32.mrb[0].mxu0
    %v2019 = vadd.f32 %v1922, %v2018
    %v2020 = vpop.f32.mrb[0].mxu0
    %2021 = vmatprep.mubr.bf16.mxu0 0
    %2022 = vmatmul.mubr.bf16.gmra.mrb[0].mxu0 %v1854
    %v2023 = vpop.f32.mrb[0].mxu0
    %v2024 = vadd.f32 %v1927, %v2023
    %v2025 = vpop.f32.mrb[0].mxu0
    %v2026 = vpop.f32.mrb[0].mxu0
    %v2027 = vadd.f32 %v1930, %v2026
    %v2028 = vpop.f32.mrb[0].mxu0
    %2029 = vmatprep.mubr.bf16.mxu0 0
    %2030 = vmatmul.mubr.bf16.gmra.mrb[0].mxu0 %v1857
    %v2031 = vpop.f32.mrb[0].mxu0
    %v2032 = vadd.f32 %v1935, %v2031
    %v2033 = vpop.f32.mrb[0].mxu0
    %v2034 = vpop.f32.mrb[0].mxu0
    %v2035 = vadd.f32 %v1938, %v2034
    %v2036 = vpop.f32.mrb[0].mxu0
    %2037 = vmatprep.mubr.bf16.mxu0 0
    %2038 = vmatmul.mubr.bf16.gmra.mrb[0].mxu0 %v1860
    %v2039 = vpop.f32.mrb[0].mxu0
    %v2040 = vadd.f32 %v1943, %v2039
    %v2041 = vpop.f32.mrb[0].mxu0
    %v2042 = vpop.f32.mrb[0].mxu0
    %v2043 = vadd.f32 %v1946, %v2042
    %v2044 = vpop.f32.mrb[0].mxu0
    %2045 = vmatprep.mubr.bf16.mxu0 0
    %2046 = vmatmul.mubr.bf16.gmra.mrb[0].mxu0 %v1863
    %v2047 = vpop.f32.mrb[0].mxu0
    %v2048 = vadd.f32 %v1951, %v2047
    %v2049 = vpop.f32.mrb[0].mxu0
    %v2050 = vpop.f32.mrb[0].mxu0
    %v2051 = vadd.f32 %v1954, %v2050
    %v2052 = vpop.f32.mrb[0].mxu0
    %2053 = vmatprep.mubr.bf16.mxu0 0
    %2054 = vmatmul.mubr.bf16.gmra.mrb[0].mxu0 %v1866
    %v2055 = vpop.f32.mrb[0].mxu0
    %v2056 = vadd.f32 %v1959, %v2055
    %v2057 = vpop.f32.mrb[0].mxu0
    %v2058 = vpop.f32.mrb[0].mxu0
    %v2059 = vadd.f32 %v1962, %v2058
    %v2060 = vpop.f32.mrb[0].mxu0
    %2061 = vdwg.mxu0
    %v2062 = vsel %vm53, %v2000, 0.0
    %v2063 = vsel %vm53, %v2003, 0.0
    %v2064 = vadd.f32 %v2062, %v2063
    %v2065 = vsel %vm53, %v2008, 0.0
    %v2066 = vadd.f32 %v2064, %v2065
    %v2067 = vsel %vm53, %v2011, 0.0
    %v2068 = vadd.f32 %v2066, %v2067
    %v2069 = vsel %vm53, %v2016, 0.0
    %v2070 = vadd.f32 %v2068, %v2069
    %v2071 = vsel %vm53, %v2019, 0.0
    %v2072 = vadd.f32 %v2070, %v2071
    %v2073 = vsel %vm53, %v2024, 0.0
    %v2074 = vadd.f32 %v2072, %v2073
    %v2075 = vsel %vm53, %v2027, 0.0
    %v2076 = vadd.f32 %v2074, %v2075
    %v2077 = vsel %vm53, %v2032, 0.0
    %v2078 = vadd.f32 %v2076, %v2077
    %v2079 = vsel %vm53, %v2035, 0.0
    %v2080 = vadd.f32 %v2078, %v2079
    %v2081 = vsel %vm53, %v2040, 0.0
    %v2082 = vadd.f32 %v2080, %v2081
    %v2083 = vsel %vm53, %v2043, 0.0
    %v2084 = vadd.f32 %v2082, %v2083
    %v2085 = vsel %vm53, %v2048, 0.0
    %v2086 = vadd.f32 %v2084, %v2085
    %v2087 = vsel %vm53, %v2051, 0.0
    %v2088 = vadd.f32 %v2086, %v2087
    %v2089 = vsel %vm53, %v2056, 0.0
    %v2090 = vadd.f32 %v2088, %v2089
    %v2091 = vsel %vm53, %v2059, 0.0
    %v2092 = vadd.f32 %v2090, %v2091
    %v2093 = vrot.slane %v2092, 4
    %v2094 = vadd.f32 %v2092, %v2093
    %v2095 = vrot.slane %v2094, 2
    %v2096 = vadd.f32 %v2094, %v2095
    %v2097 = vrot.slane %v2096, 1
    %v2098 = vadd.f32 %v2096, %v2097
    %v2099 = vmul.f32 %v2098, 0.0078125
    %v2100 = vmul.f32 %v2000, %v2000
    %v2101 = vmul.f32 %v2003, %v2003
    %v2102 = vmul.f32 %v2008, %v2008
    %v2103 = vmul.f32 %v2011, %v2011
    %v2104 = vmul.f32 %v2016, %v2016
    %v2105 = vmul.f32 %v2019, %v2019
    %v2106 = vmul.f32 %v2024, %v2024
    %v2107 = vmul.f32 %v2027, %v2027
    %v2108 = vmul.f32 %v2032, %v2032
    %v2109 = vmul.f32 %v2035, %v2035
    %v2110 = vmul.f32 %v2040, %v2040
    %v2111 = vmul.f32 %v2043, %v2043
    %v2112 = vmul.f32 %v2048, %v2048
    %v2113 = vmul.f32 %v2051, %v2051
    %v2114 = vmul.f32 %v2056, %v2056
    %v2115 = vmul.f32 %v2059, %v2059
    %v2116 = vsel %vm53, %v2100, 0.0
    %v2117 = vsel %vm53, %v2101, 0.0
    %v2118 = vadd.f32 %v2116, %v2117
    %v2119 = vsel %vm53, %v2102, 0.0
    %v2120 = vadd.f32 %v2118, %v2119
    %v2121 = vsel %vm53, %v2103, 0.0
    %v2122 = vadd.f32 %v2120, %v2121
    %v2123 = vsel %vm53, %v2104, 0.0
    %v2124 = vadd.f32 %v2122, %v2123
    %v2125 = vsel %vm53, %v2105, 0.0
    %v2126 = vadd.f32 %v2124, %v2125
    %v2127 = vsel %vm53, %v2106, 0.0
    %v2128 = vadd.f32 %v2126, %v2127
    %v2129 = vsel %vm53, %v2107, 0.0
    %v2130 = vadd.f32 %v2128, %v2129
    %v2131 = vsel %vm53, %v2108, 0.0
    %v2132 = vadd.f32 %v2130, %v2131
    %v2133 = vsel %vm53, %v2109, 0.0
    %v2134 = vadd.f32 %v2132, %v2133
    %v2135 = vsel %vm53, %v2110, 0.0
    %v2136 = vadd.f32 %v2134, %v2135
    %v2137 = vsel %vm53, %v2111, 0.0
    %v2138 = vadd.f32 %v2136, %v2137
    %v2139 = vsel %vm53, %v2112, 0.0
    %v2140 = vadd.f32 %v2138, %v2139
    %v2141 = vsel %vm53, %v2113, 0.0
    %v2142 = vadd.f32 %v2140, %v2141
    %v2143 = vsel %vm53, %v2114, 0.0
    %v2144 = vadd.f32 %v2142, %v2143
    %v2145 = vsel %vm53, %v2115, 0.0
    %v2146 = vadd.f32 %v2144, %v2145
    %v2147 = vrot.slane %v2146, 4
    %v2148 = vadd.f32 %v2146, %v2147
    %v2149 = vrot.slane %v2148, 2
    %v2150 = vadd.f32 %v2148, %v2149
    %v2151 = vrot.slane %v2150, 1
    %v2152 = vadd.f32 %v2150, %v2151
    %v2153 = vmul.f32 %v2152, 0.0078125
    %v2154 = vmul.f32 %v2099, %v2099
    %v2155 = vsub.f32 %v2153, %v2154
    %v2156 = vadd.f32 %v2155, 1e-05
    %v2157 = vrsqrt.pop %v2156
    %v2158 = vmul.f32 %v1193, %v2157
    %v2159 = vmul.f32 %v2099, %v2158
    %v2161 = vrot.slane %v2159, 7
    %v2163 = vsub.f32 %v1193, %v2161
    %v2164 = vlaneseq
    %v2165 = vshrl.u32 %v2164, 7
    %v2166 = vsub.s32 0, %v2165
    %v2167 = vrot.slane %v2158, %v2166
    %v2168 = vmul.f32 %v2000, %v2167
    %v2169 = vmul.f32 %v2003, %v2167
    %v2170 = vmul.f32 %v2008, %v2167
    %v2171 = vmul.f32 %v2011, %v2167
    %v2172 = vmul.f32 %v2016, %v2167
    %v2173 = vmul.f32 %v2019, %v2167
    %v2174 = vmul.f32 %v2024, %v2167
    %v2175 = vmul.f32 %v2027, %v2167
    %v2176 = vmul.f32 %v2032, %v2167
    %v2177 = vmul.f32 %v2035, %v2167
    %v2178 = vmul.f32 %v2040, %v2167
    %v2179 = vmul.f32 %v2043, %v2167
    %v2180 = vmul.f32 %v2048, %v2167
    %v2181 = vmul.f32 %v2051, %v2167
    %v2182 = vmul.f32 %v2056, %v2167
    %v2183 = vmul.f32 %v2059, %v2167
    %v2184 = vlaneseq
    %v2185 = vshrl.u32 %v2184, 7
    %v2186 = vsub.s32 1, %v2185
    %v2187 = vrot.slane %v2163, %v2186
    %v2188 = vadd.f32 %v2168, %v2187
    %v2189 = vadd.f32 %v2169, %v2187
    %v2190 = vadd.f32 %v2170, %v2187
    %v2191 = vadd.f32 %v2171, %v2187
    %v2192 = vadd.f32 %v2172, %v2187
    %v2193 = vadd.f32 %v2173, %v2187
    %v2194 = vadd.f32 %v2174, %v2187
    %v2195 = vadd.f32 %v2175, %v2187
    %v2196 = vadd.f32 %v2176, %v2187
    %v2197 = vadd.f32 %v2177, %v2187
    %v2198 = vadd.f32 %v2178, %v2187
    %v2199 = vadd.f32 %v2179, %v2187
    %v2200 = vadd.f32 %v2180, %v2187
    %v2201 = vadd.f32 %v2181, %v2187
    %v2202 = vadd.f32 %v2182, %v2187
    %v2203 = vadd.f32 %v2183, %v2187
    %v2204 = vmax.f32 %v2188, 0.0
    %v2205 = vmax.f32 %v2189, 0.0
    %v2206 = vmax.f32 %v2190, 0.0
    %v2207 = vmax.f32 %v2191, 0.0
    %v2208 = vmax.f32 %v2192, 0.0
    %v2209 = vmax.f32 %v2193, 0.0
    %v2210 = vmax.f32 %v2194, 0.0
    %v2211 = vmax.f32 %v2195, 0.0
    %v2212 = vmax.f32 %v2196, 0.0
    %v2213 = vmax.f32 %v2197, 0.0
    %v2214 = vmax.f32 %v2198, 0.0
    %v2215 = vmax.f32 %v2199, 0.0
    %v2216 = vmax.f32 %v2200, 0.0
    %v2217 = vmax.f32 %v2201, 0.0
    %v2218 = vmax.f32 %v2202, 0.0
    %v2219 = vmax.f32 %v2203, 0.0
    %2220 = vst.msk [vmem:[%s131 + $0x8] sm:$0xff] %vm53, %v2204
    %2221 = vst.msk [vmem:[%s131 + $0x20] sm:$0xff] %vm53, %v2205
    %2222 = vst.msk [vmem:[%s131 + $0x38] sm:$0xff] %vm53, %v2206
    %2223 = vst.msk [vmem:[%s131 + $0x50] sm:$0xff] %vm53, %v2207
    %2224 = vst.msk [vmem:[%s131 + $0x68] sm:$0xff] %vm53, %v2208
    %2225 = vst.msk [vmem:[%s131 + $0x80] sm:$0xff] %vm53, %v2209
    %2226 = vst.msk [vmem:[%s131 + $0x98] sm:$0xff] %vm53, %v2210
    %2227 = vst.msk [vmem:[%s131 + $0xb0] sm:$0xff] %vm53, %v2211
    %2228 = vst.msk [vmem:[%s131 + $0xf8] sm:$0xff] %vm53, %v2212
    %2229 = vst.msk [vmem:[%s131 + $0x110] sm:$0xff] %vm53, %v2213
    %2230 = vst.msk [vmem:[%s131 + $0x128] sm:$0xff] %vm53, %v2214
    %2231 = vst.msk [vmem:[%s131 + $0x140] sm:$0xff] %vm53, %v2215
    %2232 = vst.msk [vmem:[%s131 + $0x158] sm:$0xff] %vm53, %v2216
    %2233 = vst.msk [vmem:[%s131 + $0x170] sm:$0xff] %vm53, %v2217
    %2234 = vst.msk [vmem:[%s131 + $0x188] sm:$0xff] %vm53, %v2218
    %2235 = vst.msk [vmem:[%s131 + $0x1a0] sm:$0xff] %vm53, %v2219
    %s2236 = scalar_lea.vmem %s3, 144
    %v2237 = vld [vmem:[%s2236] sm:$0xf]
    %v2238 = vld [vmem:[%s2236 + $0x4] sm:$0xf]
    %v2239 = vld [vmem:[%s2236 + $0x8] sm:$0xf]
    %v2240 = vld [vmem:[%s2236 + $0xc] sm:$0xf]
    %v2241 = vld [vmem:[%s2236 + $0x10] sm:$0xf]
    %v2242 = vld [vmem:[%s2236 + $0x14] sm:$0xf]
    %v2243 = vld [vmem:[%s2236 + $0x18] sm:$0xf]
    %v2244 = vld [vmem:[%s2236 + $0x1c] sm:$0xf]
    %v2245 = vld [vmem:[%s2236 + $0x20] sm:$0xf]
    %v2246 = vld [vmem:[%s2236 + $0x24] sm:$0xf]
    %v2247 = vld [vmem:[%s2236 + $0x28] sm:$0xf]
    %v2248 = vld [vmem:[%s2236 + $0x2c] sm:$0xf]
    %v2249 = vld [vmem:[%s2236 + $0x30] sm:$0xf]
    %v2250 = vld [vmem:[%s2236 + $0x34] sm:$0xf]
    %v2251 = vld [vmem:[%s2236 + $0x38] sm:$0xf]
    %v2252 = vld [vmem:[%s2236 + $0x3c] sm:$0xf]
    %v2253 = vld [vmem:[%s2236 + $0x40] sm:$0xf]
    %v2254 = vld [vmem:[%s2236 + $0x44] sm:$0xf]
    %v2255 = vld [vmem:[%s2236 + $0x48] sm:$0xf]
    %v2256 = vld [vmem:[%s2236 + $0x4c] sm:$0xf]
    %v2257 = vld [vmem:[%s2236 + $0x50] sm:$0xf]
    %v2258 = vld [vmem:[%s2236 + $0x54] sm:$0xf]
    %v2259 = vld [vmem:[%s2236 + $0x58] sm:$0xf]
    %v2260 = vld [vmem:[%s2236 + $0x5c] sm:$0xf]
    %v2261 = vld [vmem:[%s2236 + $0x60] sm:$0xf]
    %v2262 = vld [vmem:[%s2236 + $0x64] sm:$0xf]
    %v2263 = vld [vmem:[%s2236 + $0x68] sm:$0xf]
    %v2264 = vld [vmem:[%s2236 + $0x6c] sm:$0xf]
    %v2265 = vld [vmem:[%s2236 + $0x70] sm:$0xf]
    %v2266 = vld [vmem:[%s2236 + $0x74] sm:$0xf]
    %v2267 = vld [vmem:[%s2236 + $0x78] sm:$0xf]
    %v2268 = vld [vmem:[%s2236 + $0x7c] sm:$0xf]
    %v2269 = vld [vmem:[%s2236 + $0x80] sm:$0xf]
    %v2270 = vld [vmem:[%s2236 + $0x84] sm:$0xf]
    %v2271 = vld [vmem:[%s2236 + $0x88] sm:$0xf]
    %v2272 = vld [vmem:[%s2236 + $0x8c] sm:$0xf]
    %v2273 = vld [vmem:[#allocation2 + $0x7] sm:$0xff]
    %v2274 = vld [vmem:[#allocation2 + $0x1f] sm:$0xff]
    %v2275 = vld [vmem:[#allocation2 + $0x37] sm:$0xff]
    %v2276 = vld [vmem:[#allocation2 + $0x4f] sm:$0xff]
    %v2277 = vld [vmem:[#allocation2 + $0x67] sm:$0xff]
    %v2278 = vld [vmem:[#allocation2 + $0x7f] sm:$0xff]
    %v2279 = vld [vmem:[#allocation2 + $0x97] sm:$0xff]
    %v2280 = vld [vmem:[#allocation2 + $0xaf] sm:$0xff]
    %v2281 = vld [vmem:[#allocation2 + $0xf7] sm:$0xff]
    %v2282 = vld [vmem:[#allocation2 + $0x10f] sm:$0xff]
    %v2283 = vld [vmem:[#allocation2 + $0x127] sm:$0xff]
    %v2284 = vld [vmem:[#allocation2 + $0x13f] sm:$0xff]
    %v2285 = vld [vmem:[#allocation2 + $0x157] sm:$0xff]
    %v2286 = vld [vmem:[#allocation2 + $0x16f] sm:$0xff]
    %v2287 = vld [vmem:[#allocation2 + $0x187] sm:$0xff]
    %v2288 = vld [vmem:[#allocation2 + $0x19f] sm:$0xff]
    %v2289 = vpack.c.bf16 %v2274, %v2273
    %v2290 = vpack.c.bf16 %v2276, %v2275
    %v2291 = vpack.c.bf16 %v2278, %v2277
    %v2292 = vpack.c.bf16 %v2280, %v2279
    %v2293 = vpack.c.bf16 %v2282, %v2281
    %v2294 = vpack.c.bf16 %v2284, %v2283
    %v2295 = vpack.c.bf16 %v2286, %v2285
    %v2296 = vpack.c.bf16 %v2288, %v2287
    %2297 = vst.msk [vmem:[#allocation3] sm:$0xff] %vm53, %v2289
    %2298 = vst.msk [vmem:[#allocation3 + $0x18] sm:$0xff] %vm53, %v2290
    %2299 = vst.msk [vmem:[#allocation3 + $0x30] sm:$0xff] %vm53, %v2291
    %2300 = vst.msk [vmem:[#allocation3 + $0x48] sm:$0xff] %vm53, %v2292
    %2301 = vst.msk [vmem:[#allocation3 + $0x60] sm:$0xff] %vm53, %v2293
    %2302 = vst.msk [vmem:[#allocation3 + $0x78] sm:$0xff] %vm53, %v2294
    %2303 = vst.msk [vmem:[#allocation3 + $0x90] sm:$0xff] %vm53, %v2295
    %2304 = vst.msk [vmem:[#allocation3 + $0xa8] sm:$0xff] %vm53, %v2296
    %v2305 = vld [vmem:[#allocation2 + $0x8] sm:$0xff]
    %v2306 = vld [vmem:[#allocation2 + $0x20] sm:$0xff]
    %v2307 = vld [vmem:[#allocation2 + $0x38] sm:$0xff]
    %v2308 = vld [vmem:[#allocation2 + $0x50] sm:$0xff]
    %v2309 = vld [vmem:[#allocation2 + $0x68] sm:$0xff]
    %v2310 = vld [vmem:[#allocation2 + $0x80] sm:$0xff]
    %v2311 = vld [vmem:[#allocation2 + $0x98] sm:$0xff]
    %v2312 = vld [vmem:[#allocation2 + $0xb0] sm:$0xff]
    %v2313 = vld [vmem:[#allocation2 + $0xf8] sm:$0xff]
    %v2314 = vld [vmem:[#allocation2 + $0x110] sm:$0xff]
    %v2315 = vld [vmem:[#allocation2 + $0x128] sm:$0xff]
    %v2316 = vld [vmem:[#allocation2 + $0x140] sm:$0xff]
    %v2317 = vld [vmem:[#allocation2 + $0x158] sm:$0xff]
    %v2318 = vld [vmem:[#allocation2 + $0x170] sm:$0xff]
    %v2319 = vld [vmem:[#allocation2 + $0x188] sm:$0xff]
    %v2320 = vld [vmem:[#allocation2 + $0x1a0] sm:$0xff]
    %v2321 = vpack.c.bf16 %v2306, %v2305
    %v2322 = vpack.c.bf16 %v2308, %v2307
    %v2323 = vpack.c.bf16 %v2310, %v2309
    %v2324 = vpack.c.bf16 %v2312, %v2311
    %v2325 = vpack.c.bf16 %v2314, %v2313
    %v2326 = vpack.c.bf16 %v2316, %v2315
    %v2327 = vpack.c.bf16 %v2318, %v2317
    %v2328 = vpack.c.bf16 %v2320, %v2319
    %2337 = vrot.lane.b32.xlu0 %v2321, 32
    %v2338 = vpop.permute.xlu0 %2337
    %2339 = vrot.lane.b32.xlu0 %v2322, 32
    %v2340 = vpop.permute.xlu0 %2339
    %2341 = vrot.lane.b32.xlu0 %v2323, 32
    %v2342 = vpop.permute.xlu0 %2341
    %2343 = vrot.lane.b32.xlu0 %v2324, 32
    %v2344 = vpop.permute.xlu0 %2343
    %2345 = vrot.lane.b32.xlu0 %v2325, 32
    %v2346 = vpop.permute.xlu0 %2345
    %2347 = vrot.lane.b32.xlu0 %v2326, 32
    %v2348 = vpop.permute.xlu0 %2347
    %2349 = vrot.lane.b32.xlu0 %v2327, 32
    %v2350 = vpop.permute.xlu0 %2349
    %2351 = vrot.lane.b32.xlu0 %v2328, 32
    %v2352 = vpop.permute.xlu0 %2351
    %2361 = vst.msk [vmem:[#allocation3] sm:$0xff] %vm273, %v2338
    %2362 = vst.msk [vmem:[#allocation3 + $0x18] sm:$0xff] %vm273, %v2340
    %2363 = vst.msk [vmem:[#allocation3 + $0x30] sm:$0xff] %vm273, %v2342
    %2364 = vst.msk [vmem:[#allocation3 + $0x48] sm:$0xff] %vm273, %v2344
    %2365 = vst.msk [vmem:[#allocation3 + $0x60] sm:$0xff] %vm273, %v2346
    %2366 = vst.msk [vmem:[#allocation3 + $0x78] sm:$0xff] %vm273, %v2348
    %2367 = vst.msk [vmem:[#allocation3 + $0x90] sm:$0xff] %vm273, %v2350
    %2368 = vst.msk [vmem:[#allocation3 + $0xa8] sm:$0xff] %vm273, %v2352
    %v2369 = vld [vmem:[#allocation2 + $0x9] sm:$0xff]
    %v2370 = vld [vmem:[#allocation2 + $0x21] sm:$0xff]
    %v2371 = vld [vmem:[#allocation2 + $0x39] sm:$0xff]
    %v2372 = vld [vmem:[#allocation2 + $0x51] sm:$0xff]
    %v2373 = vld [vmem:[#allocation2 + $0x69] sm:$0xff]
    %v2374 = vld [vmem:[#allocation2 + $0x81] sm:$0xff]
    %v2375 = vld [vmem:[#allocation2 + $0x99] sm:$0xff]
    %v2376 = vld [vmem:[#allocation2 + $0xb1] sm:$0xff]
    %v2377 = vld [vmem:[#allocation2 + $0xf9] sm:$0xff]
    %v2378 = vld [vmem:[#allocation2 + $0x111] sm:$0xff]
    %v2379 = vld [vmem:[#allocation2 + $0x129] sm:$0xff]
    %v2380 = vld [vmem:[#allocation2 + $0x141] sm:$0xff]
    %v2381 = vld [vmem:[#allocation2 + $0x159] sm:$0xff]
    %v2382 = vld [vmem:[#allocation2 + $0x171] sm:$0xff]
    %v2383 = vld [vmem:[#allocation2 + $0x189] sm:$0xff]
    %v2384 = vld [vmem:[#allocation2 + $0x1a1] sm:$0xff]
    %v2385 = vpack.c.bf16 %v2370, %v2369
    %v2386 = vpack.c.bf16 %v2372, %v2371
    %v2387 = vpack.c.bf16 %v2374, %v2373
    %v2388 = vpack.c.bf16 %v2376, %v2375
    %v2389 = vpack.c.bf16 %v2378, %v2377
    %v2390 = vpack.c.bf16 %v2380, %v2379
    %v2391 = vpack.c.bf16 %v2382, %v2381
    %v2392 = vpack.c.bf16 %v2384, %v2383
    %2401 = vrot.lane.b32.xlu0 %v2385, 64
    %v2402 = vpop.permute.xlu0 %2401
    %2403 = vrot.lane.b32.xlu0 %v2386, 64
    %v2404 = vpop.permute.xlu0 %2403
    %2405 = vrot.lane.b32.xlu0 %v2387, 64
    %v2406 = vpop.permute.xlu0 %2405
    %2407 = vrot.lane.b32.xlu0 %v2388, 64
    %v2408 = vpop.permute.xlu0 %2407
    %2409 = vrot.lane.b32.xlu0 %v2389, 64
    %v2410 = vpop.permute.xlu0 %2409
    %2411 = vrot.lane.b32.xlu0 %v2390, 64
    %v2412 = vpop.permute.xlu0 %2411
    %2413 = vrot.lane.b32.xlu0 %v2391, 64
    %v2414 = vpop.permute.xlu0 %2413
    %2415 = vrot.lane.b32.xlu0 %v2392, 64
    %v2416 = vpop.permute.xlu0 %2415
    %2425 = vst.msk [vmem:[#allocation3] sm:$0xff] %vm338, %v2402
    %2426 = vst.msk [vmem:[#allocation3 + $0x18] sm:$0xff] %vm338, %v2404
    %2427 = vst.msk [vmem:[#allocation3 + $0x30] sm:$0xff] %vm338, %v2406
    %2428 = vst.msk [vmem:[#allocation3 + $0x48] sm:$0xff] %vm338, %v2408
    %2429 = vst.msk [vmem:[#allocation3 + $0x60] sm:$0xff] %vm338, %v2410
    %2430 = vst.msk [vmem:[#allocation3 + $0x78] sm:$0xff] %vm338, %v2412
    %2431 = vst.msk [vmem:[#allocation3 + $0x90] sm:$0xff] %vm338, %v2414
    %2432 = vst.msk [vmem:[#allocation3 + $0xa8] sm:$0xff] %vm338, %v2416
    %v2433 = vld [vmem:[%s131 + $0x7] sm:$0xff]
    %v2434 = vld [vmem:[%s131 + $0x1f] sm:$0xff]
    %v2435 = vld [vmem:[%s131 + $0x37] sm:$0xff]
    %v2436 = vld [vmem:[%s131 + $0x4f] sm:$0xff]
    %v2437 = vld [vmem:[%s131 + $0x67] sm:$0xff]
    %v2438 = vld [vmem:[%s131 + $0x7f] sm:$0xff]
    %v2439 = vld [vmem:[%s131 + $0x97] sm:$0xff]
    %v2440 = vld [vmem:[%s131 + $0xaf] sm:$0xff]
    %v2441 = vld [vmem:[%s131 + $0xf7] sm:$0xff]
    %v2442 = vld [vmem:[%s131 + $0x10f] sm:$0xff]
    %v2443 = vld [vmem:[%s131 + $0x127] sm:$0xff]
    %v2444 = vld [vmem:[%s131 + $0x13f] sm:$0xff]
    %v2445 = vld [vmem:[%s131 + $0x157] sm:$0xff]
    %v2446 = vld [vmem:[%s131 + $0x16f] sm:$0xff]
    %v2447 = vld [vmem:[%s131 + $0x187] sm:$0xff]
    %v2448 = vld [vmem:[%s131 + $0x19f] sm:$0xff]
    %v2449 = vpack.c.bf16 %v2434, %v2433
    %v2450 = vpack.c.bf16 %v2436, %v2435
    %v2451 = vpack.c.bf16 %v2438, %v2437
    %v2452 = vpack.c.bf16 %v2440, %v2439
    %v2453 = vpack.c.bf16 %v2442, %v2441
    %v2454 = vpack.c.bf16 %v2444, %v2443
    %v2455 = vpack.c.bf16 %v2446, %v2445
    %v2456 = vpack.c.bf16 %v2448, %v2447
    %2465 = vrot.lane.b32.xlu0 %v2449, 96
    %v2466 = vpop.permute.xlu0 %2465
    %2467 = vrot.lane.b32.xlu0 %v2450, 96
    %v2468 = vpop.permute.xlu0 %2467
    %2469 = vrot.lane.b32.xlu0 %v2451, 96
    %v2470 = vpop.permute.xlu0 %2469
    %2471 = vrot.lane.b32.xlu0 %v2452, 96
    %v2472 = vpop.permute.xlu0 %2471
    %2473 = vrot.lane.b32.xlu0 %v2453, 96
    %v2474 = vpop.permute.xlu0 %2473
    %2475 = vrot.lane.b32.xlu0 %v2454, 96
    %v2476 = vpop.permute.xlu0 %2475
    %2477 = vrot.lane.b32.xlu0 %v2455, 96
    %v2478 = vpop.permute.xlu0 %2477
    %2479 = vrot.lane.b32.xlu0 %v2456, 96
    %v2480 = vpop.permute.xlu0 %2479
    %2489 = vst.msk [vmem:[#allocation3] sm:$0xff] %vm403, %v2466
    %2490 = vst.msk [vmem:[#allocation3 + $0x18] sm:$0xff] %vm403, %v2468
    %2491 = vst.msk [vmem:[#allocation3 + $0x30] sm:$0xff] %vm403, %v2470
    %2492 = vst.msk [vmem:[#allocation3 + $0x48] sm:$0xff] %vm403, %v2472
    %2493 = vst.msk [vmem:[#allocation3 + $0x60] sm:$0xff] %vm403, %v2474
    %2494 = vst.msk [vmem:[#allocation3 + $0x78] sm:$0xff] %vm403, %v2476
    %2495 = vst.msk [vmem:[#allocation3 + $0x90] sm:$0xff] %vm403, %v2478
    %2496 = vst.msk [vmem:[#allocation3 + $0xa8] sm:$0xff] %vm403, %v2480
    %v2497 = vld [vmem:[%s131 + $0x8] sm:$0xff]
    %v2498 = vld [vmem:[%s131 + $0x20] sm:$0xff]
    %v2499 = vld [vmem:[%s131 + $0x38] sm:$0xff]
    %v2500 = vld [vmem:[%s131 + $0x50] sm:$0xff]
    %v2501 = vld [vmem:[%s131 + $0x68] sm:$0xff]
    %v2502 = vld [vmem:[%s131 + $0x80] sm:$0xff]
    %v2503 = vld [vmem:[%s131 + $0x98] sm:$0xff]
    %v2504 = vld [vmem:[%s131 + $0xb0] sm:$0xff]
    %v2505 = vld [vmem:[%s131 + $0xf8] sm:$0xff]
    %v2506 = vld [vmem:[%s131 + $0x110] sm:$0xff]
    %v2507 = vld [vmem:[%s131 + $0x128] sm:$0xff]
    %v2508 = vld [vmem:[%s131 + $0x140] sm:$0xff]
    %v2509 = vld [vmem:[%s131 + $0x158] sm:$0xff]
    %v2510 = vld [vmem:[%s131 + $0x170] sm:$0xff]
    %v2511 = vld [vmem:[%s131 + $0x188] sm:$0xff]
    %v2512 = vld [vmem:[%s131 + $0x1a0] sm:$0xff]
    %v2513 = vpack.c.bf16 %v2498, %v2497
    %v2514 = vpack.c.bf16 %v2500, %v2499
    %v2515 = vpack.c.bf16 %v2502, %v2501
    %v2516 = vpack.c.bf16 %v2504, %v2503
    %v2517 = vpack.c.bf16 %v2506, %v2505
    %v2518 = vpack.c.bf16 %v2508, %v2507
    %v2519 = vpack.c.bf16 %v2510, %v2509
    %v2520 = vpack.c.bf16 %v2512, %v2511
    %2521 = vst.msk [vmem:[#allocation3 + $0x8] sm:$0xff] %vm53, %v2513
    %2522 = vst.msk [vmem:[#allocation3 + $0x20] sm:$0xff] %vm53, %v2514
    %2523 = vst.msk [vmem:[#allocation3 + $0x38] sm:$0xff] %vm53, %v2515
    %2524 = vst.msk [vmem:[#allocation3 + $0x50] sm:$0xff] %vm53, %v2516
    %2525 = vst.msk [vmem:[#allocation3 + $0x68] sm:$0xff] %vm53, %v2517
    %2526 = vst.msk [vmem:[#allocation3 + $0x80] sm:$0xff] %vm53, %v2518
    %2527 = vst.msk [vmem:[#allocation3 + $0x98] sm:$0xff] %vm53, %v2519
    %2528 = vst.msk [vmem:[#allocation3 + $0xb0] sm:$0xff] %vm53, %v2520
    %v2529 = vld [vmem:[%s131 + $0x9] sm:$0xff]
    %v2530 = vld [vmem:[%s131 + $0x21] sm:$0xff]
    %v2531 = vld [vmem:[%s131 + $0x39] sm:$0xff]
    %v2532 = vld [vmem:[%s131 + $0x51] sm:$0xff]
    %v2533 = vld [vmem:[%s131 + $0x69] sm:$0xff]
    %v2534 = vld [vmem:[%s131 + $0x81] sm:$0xff]
    %v2535 = vld [vmem:[%s131 + $0x99] sm:$0xff]
    %v2536 = vld [vmem:[%s131 + $0xb1] sm:$0xff]
    %v2537 = vld [vmem:[%s131 + $0xf9] sm:$0xff]
    %v2538 = vld [vmem:[%s131 + $0x111] sm:$0xff]
    %v2539 = vld [vmem:[%s131 + $0x129] sm:$0xff]
    %v2540 = vld [vmem:[%s131 + $0x141] sm:$0xff]
    %v2541 = vld [vmem:[%s131 + $0x159] sm:$0xff]
    %v2542 = vld [vmem:[%s131 + $0x171] sm:$0xff]
    %v2543 = vld [vmem:[%s131 + $0x189] sm:$0xff]
    %v2544 = vld [vmem:[%s131 + $0x1a1] sm:$0xff]
    %v2545 = vpack.c.bf16 %v2530, %v2529
    %v2546 = vpack.c.bf16 %v2532, %v2531
    %v2547 = vpack.c.bf16 %v2534, %v2533
    %v2548 = vpack.c.bf16 %v2536, %v2535
    %v2549 = vpack.c.bf16 %v2538, %v2537
    %v2550 = vpack.c.bf16 %v2540, %v2539
    %v2551 = vpack.c.bf16 %v2542, %v2541
    %v2552 = vpack.c.bf16 %v2544, %v2543
    %2561 = vrot.lane.b32.xlu0 %v2545, 32
    %v2562 = vpop.permute.xlu0 %2561
    %2563 = vrot.lane.b32.xlu0 %v2546, 32
    %v2564 = vpop.permute.xlu0 %2563
    %2565 = vrot.lane.b32.xlu0 %v2547, 32
    %v2566 = vpop.permute.xlu0 %2565
    %2567 = vrot.lane.b32.xlu0 %v2548, 32
    %v2568 = vpop.permute.xlu0 %2567
    %2569 = vrot.lane.b32.xlu0 %v2549, 32
    %v2570 = vpop.permute.xlu0 %2569
    %2571 = vrot.lane.b32.xlu0 %v2550, 32
    %v2572 = vpop.permute.xlu0 %2571
    %2573 = vrot.lane.b32.xlu0 %v2551, 32
    %v2574 = vpop.permute.xlu0 %2573
    %2575 = vrot.lane.b32.xlu0 %v2552, 32
    %v2576 = vpop.permute.xlu0 %2575
    %2585 = vst.msk [vmem:[#allocation3 + $0x8] sm:$0xff] %vm273, %v2562
    %2586 = vst.msk [vmem:[#allocation3 + $0x20] sm:$0xff] %vm273, %v2564
    %2587 = vst.msk [vmem:[#allocation3 + $0x38] sm:$0xff] %vm273, %v2566
    %2588 = vst.msk [vmem:[#allocation3 + $0x50] sm:$0xff] %vm273, %v2568
    %2589 = vst.msk [vmem:[#allocation3 + $0x68] sm:$0xff] %vm273, %v2570
    %2590 = vst.msk [vmem:[#allocation3 + $0x80] sm:$0xff] %vm273, %v2572
    %2591 = vst.msk [vmem:[#allocation3 + $0x98] sm:$0xff] %vm273, %v2574
    %2592 = vst.msk [vmem:[#allocation3 + $0xb0] sm:$0xff] %vm273, %v2576
    %v2593 = vld [vmem:[%s508 + $0x7] sm:$0xff]
    %v2594 = vld [vmem:[%s508 + $0x1f] sm:$0xff]
    %v2595 = vld [vmem:[%s508 + $0x37] sm:$0xff]
    %v2596 = vld [vmem:[%s508 + $0x4f] sm:$0xff]
    %v2597 = vld [vmem:[%s508 + $0x67] sm:$0xff]
    %v2598 = vld [vmem:[%s508 + $0x7f] sm:$0xff]
    %v2599 = vld [vmem:[%s508 + $0x97] sm:$0xff]
    %v2600 = vld [vmem:[%s508 + $0xaf] sm:$0xff]
    %v2601 = vld [vmem:[%s508 + $0xf7] sm:$0xff]
    %v2602 = vld [vmem:[%s508 + $0x10f] sm:$0xff]
    %v2603 = vld [vmem:[%s508 + $0x127] sm:$0xff]
    %v2604 = vld [vmem:[%s508 + $0x13f] sm:$0xff]
    %v2605 = vld [vmem:[%s508 + $0x157] sm:$0xff]
    %v2606 = vld [vmem:[%s508 + $0x16f] sm:$0xff]
    %v2607 = vld [vmem:[%s508 + $0x187] sm:$0xff]
    %v2608 = vld [vmem:[%s508 + $0x19f] sm:$0xff]
    %v2609 = vpack.c.bf16 %v2594, %v2593
    %v2610 = vpack.c.bf16 %v2596, %v2595
    %v2611 = vpack.c.bf16 %v2598, %v2597
    %v2612 = vpack.c.bf16 %v2600, %v2599
    %v2613 = vpack.c.bf16 %v2602, %v2601
    %v2614 = vpack.c.bf16 %v2604, %v2603
    %v2615 = vpack.c.bf16 %v2606, %v2605
    %v2616 = vpack.c.bf16 %v2608, %v2607
    %2625 = vrot.lane.b32.xlu0 %v2609, 64
    %v2626 = vpop.permute.xlu0 %2625
    %2627 = vrot.lane.b32.xlu0 %v2610, 64
    %v2628 = vpop.permute.xlu0 %2627
    %2629 = vrot.lane.b32.xlu0 %v2611, 64
    %v2630 = vpop.permute.xlu0 %2629
    %2631 = vrot.lane.b32.xlu0 %v2612, 64
    %v2632 = vpop.permute.xlu0 %2631
    %2633 = vrot.lane.b32.xlu0 %v2613, 64
    %v2634 = vpop.permute.xlu0 %2633
    %2635 = vrot.lane.b32.xlu0 %v2614, 64
    %v2636 = vpop.permute.xlu0 %2635
    %2637 = vrot.lane.b32.xlu0 %v2615, 64
    %v2638 = vpop.permute.xlu0 %2637
    %2639 = vrot.lane.b32.xlu0 %v2616, 64
    %v2640 = vpop.permute.xlu0 %2639
    %2649 = vst.msk [vmem:[#allocation3 + $0x8] sm:$0xff] %vm338, %v2626
    %2650 = vst.msk [vmem:[#allocation3 + $0x20] sm:$0xff] %vm338, %v2628
    %2651 = vst.msk [vmem:[#allocation3 + $0x38] sm:$0xff] %vm338, %v2630
    %2652 = vst.msk [vmem:[#allocation3 + $0x50] sm:$0xff] %vm338, %v2632
    %2653 = vst.msk [vmem:[#allocation3 + $0x68] sm:$0xff] %vm338, %v2634
    %2654 = vst.msk [vmem:[#allocation3 + $0x80] sm:$0xff] %vm338, %v2636
    %2655 = vst.msk [vmem:[#allocation3 + $0x98] sm:$0xff] %vm338, %v2638
    %2656 = vst.msk [vmem:[#allocation3 + $0xb0] sm:$0xff] %vm338, %v2640
    %v2657 = vld [vmem:[%s508 + $0x8] sm:$0xff]
    %v2658 = vld [vmem:[%s508 + $0x20] sm:$0xff]
    %v2659 = vld [vmem:[%s508 + $0x38] sm:$0xff]
    %v2660 = vld [vmem:[%s508 + $0x50] sm:$0xff]
    %v2661 = vld [vmem:[%s508 + $0x68] sm:$0xff]
    %v2662 = vld [vmem:[%s508 + $0x80] sm:$0xff]
    %v2663 = vld [vmem:[%s508 + $0x98] sm:$0xff]
    %v2664 = vld [vmem:[%s508 + $0xb0] sm:$0xff]
    %v2665 = vld [vmem:[%s508 + $0xf8] sm:$0xff]
    %v2666 = vld [vmem:[%s508 + $0x110] sm:$0xff]
    %v2667 = vld [vmem:[%s508 + $0x128] sm:$0xff]
    %v2668 = vld [vmem:[%s508 + $0x140] sm:$0xff]
    %v2669 = vld [vmem:[%s508 + $0x158] sm:$0xff]
    %v2670 = vld [vmem:[%s508 + $0x170] sm:$0xff]
    %v2671 = vld [vmem:[%s508 + $0x188] sm:$0xff]
    %v2672 = vld [vmem:[%s508 + $0x1a0] sm:$0xff]
    %v2673 = vpack.c.bf16 %v2658, %v2657
    %v2674 = vpack.c.bf16 %v2660, %v2659
    %v2675 = vpack.c.bf16 %v2662, %v2661
    %v2676 = vpack.c.bf16 %v2664, %v2663
    %v2677 = vpack.c.bf16 %v2666, %v2665
    %v2678 = vpack.c.bf16 %v2668, %v2667
    %v2679 = vpack.c.bf16 %v2670, %v2669
    %v2680 = vpack.c.bf16 %v2672, %v2671
    %2689 = vrot.lane.b32.xlu0 %v2673, 96
    %v2690 = vpop.permute.xlu0 %2689
    %2691 = vrot.lane.b32.xlu0 %v2674, 96
    %v2692 = vpop.permute.xlu0 %2691
    %2693 = vrot.lane.b32.xlu0 %v2675, 96
    %v2694 = vpop.permute.xlu0 %2693
    %2695 = vrot.lane.b32.xlu0 %v2676, 96
    %v2696 = vpop.permute.xlu0 %2695
    %2697 = vrot.lane.b32.xlu0 %v2677, 96
    %v2698 = vpop.permute.xlu0 %2697
    %2699 = vrot.lane.b32.xlu0 %v2678, 96
    %v2700 = vpop.permute.xlu0 %2699
    %2701 = vrot.lane.b32.xlu0 %v2679, 96
    %v2702 = vpop.permute.xlu0 %2701
    %2703 = vrot.lane.b32.xlu0 %v2680, 96
    %v2704 = vpop.permute.xlu0 %2703
    %2713 = vst.msk [vmem:[#allocation3 + $0x8] sm:$0xff] %vm403, %v2690
    %2714 = vst.msk [vmem:[#allocation3 + $0x20] sm:$0xff] %vm403, %v2692
    %2715 = vst.msk [vmem:[#allocation3 + $0x38] sm:$0xff] %vm403, %v2694
    %2716 = vst.msk [vmem:[#allocation3 + $0x50] sm:$0xff] %vm403, %v2696
    %2717 = vst.msk [vmem:[#allocation3 + $0x68] sm:$0xff] %vm403, %v2698
    %2718 = vst.msk [vmem:[#allocation3 + $0x80] sm:$0xff] %vm403, %v2700
    %2719 = vst.msk [vmem:[#allocation3 + $0x98] sm:$0xff] %vm403, %v2702
    %2720 = vst.msk [vmem:[#allocation3 + $0xb0] sm:$0xff] %vm403, %v2704
    %v2721 = vld [vmem:[%s508 + $0x9] sm:$0xff]
    %v2722 = vld [vmem:[%s508 + $0x21] sm:$0xff]
    %v2723 = vld [vmem:[%s508 + $0x39] sm:$0xff]
    %v2724 = vld [vmem:[%s508 + $0x51] sm:$0xff]
    %v2725 = vld [vmem:[%s508 + $0x69] sm:$0xff]
    %v2726 = vld [vmem:[%s508 + $0x81] sm:$0xff]
    %v2727 = vld [vmem:[%s508 + $0x99] sm:$0xff]
    %v2728 = vld [vmem:[%s508 + $0xb1] sm:$0xff]
    %v2729 = vld [vmem:[%s508 + $0xf9] sm:$0xff]
    %v2730 = vld [vmem:[%s508 + $0x111] sm:$0xff]
    %v2731 = vld [vmem:[%s508 + $0x129] sm:$0xff]
    %v2732 = vld [vmem:[%s508 + $0x141] sm:$0xff]
    %v2733 = vld [vmem:[%s508 + $0x159] sm:$0xff]
    %v2734 = vld [vmem:[%s508 + $0x171] sm:$0xff]
    %v2735 = vld [vmem:[%s508 + $0x189] sm:$0xff]
    %v2736 = vld [vmem:[%s508 + $0x1a1] sm:$0xff]
    %v2737 = vpack.c.bf16 %v2722, %v2721
    %v2738 = vpack.c.bf16 %v2724, %v2723
    %v2739 = vpack.c.bf16 %v2726, %v2725
    %v2740 = vpack.c.bf16 %v2728, %v2727
    %v2741 = vpack.c.bf16 %v2730, %v2729
    %v2742 = vpack.c.bf16 %v2732, %v2731
    %v2743 = vpack.c.bf16 %v2734, %v2733
    %v2744 = vpack.c.bf16 %v2736, %v2735
    %2745 = vst.msk [vmem:[#allocation3 + $0x10] sm:$0xff] %vm53, %v2737
    %2746 = vst.msk [vmem:[#allocation3 + $0x28] sm:$0xff] %vm53, %v2738
    %2747 = vst.msk [vmem:[#allocation3 + $0x40] sm:$0xff] %vm53, %v2739
    %2748 = vst.msk [vmem:[#allocation3 + $0x58] sm:$0xff] %vm53, %v2740
    %2749 = vst.msk [vmem:[#allocation3 + $0x70] sm:$0xff] %vm53, %v2741
    %2750 = vst.msk [vmem:[#allocation3 + $0x88] sm:$0xff] %vm53, %v2742
    %2751 = vst.msk [vmem:[#allocation3 + $0xa0] sm:$0xff] %vm53, %v2743
    %2752 = vst.msk [vmem:[#allocation3 + $0xb8] sm:$0xff] %vm53, %v2744
    %v2753 = vld [vmem:[#allocation3] sm:$0xff]
    %v2754 = vld [vmem:[#allocation3 + $0x8] sm:$0xff]
    %v2755 = vld [vmem:[#allocation3 + $0x10] sm:$0xff]
    %v2756 = vld [vmem:[#allocation3 + $0x18] sm:$0xff]
    %v2757 = vld [vmem:[#allocation3 + $0x20] sm:$0xff]
    %v2758 = vld [vmem:[#allocation3 + $0x28] sm:$0xff]
    %v2759 = vld [vmem:[#allocation3 + $0x30] sm:$0xff]
    %v2760 = vld [vmem:[#allocation3 + $0x38] sm:$0xff]
    %v2761 = vld [vmem:[#allocation3 + $0x40] sm:$0xff]
    %v2762 = vld [vmem:[#allocation3 + $0x48] sm:$0xff]
    %v2763 = vld [vmem:[#allocation3 + $0x50] sm:$0xff]
    %v2764 = vld [vmem:[#allocation3 + $0x58] sm:$0xff]
    %v2765 = vld [vmem:[#allocation3 + $0x60] sm:$0xff]
    %v2766 = vld [vmem:[#allocation3 + $0x68] sm:$0xff]
    %v2767 = vld [vmem:[#allocation3 + $0x70] sm:$0xff]
    %v2768 = vld [vmem:[#allocation3 + $0x78] sm:$0xff]
    %v2769 = vld [vmem:[#allocation3 + $0x80] sm:$0xff]
    %v2770 = vld [vmem:[#allocation3 + $0x88] sm:$0xff]
    %v2771 = vld [vmem:[#allocation3 + $0x90] sm:$0xff]
    %v2772 = vld [vmem:[#allocation3 + $0x98] sm:$0xff]
    %v2773 = vld [vmem:[#allocation3 + $0xa0] sm:$0xff]
    %v2774 = vld [vmem:[#allocation3 + $0xa8] sm:$0xff]
    %v2775 = vld [vmem:[#allocation3 + $0xb0] sm:$0xff]
    %v2776 = vld [vmem:[#allocation3 + $0xb8] sm:$0xff]
    %v2813 = vunpack.c.l.b16 %v2237
    %v2814 = vunpack.c.l.b16 %v2238
    %v2815 = vunpack.c.l.b16 %v2239
    %v2816 = vunpack.c.l.b16 %v2240
    %v2817 = vunpack.c.l.b16 %v2241
    %v2818 = vunpack.c.l.b16 %v2242
    %v2819 = vunpack.c.l.b16 %v2243
    %v2820 = vunpack.c.l.b16 %v2244
    %v2821 = vunpack.c.l.b16 %v2245
    %v2822 = vunpack.c.l.b16 %v2246
    %v2823 = vunpack.c.l.b16 %v2247
    %v2824 = vunpack.c.l.b16 %v2248
    %v2825 = vunpack.c.l.b16 %v2249
    %v2826 = vunpack.c.l.b16 %v2250
    %v2827 = vunpack.c.l.b16 %v2251
    %v2828 = vunpack.c.l.b16 %v2252
    %v2829 = vunpack.c.l.b16 %v2253
    %v2830 = vunpack.c.l.b16 %v2254
    %v2831 = vunpack.c.l.b16 %v2255
    %v2832 = vunpack.c.l.b16 %v2256
    %v2833 = vunpack.c.l.b16 %v2257
    %v2834 = vunpack.c.l.b16 %v2258
    %v2835 = vunpack.c.l.b16 %v2259
    %v2836 = vunpack.c.l.b16 %v2260
    %v2837 = vunpack.c.l.b16 %v2261
    %v2838 = vunpack.c.l.b16 %v2262
    %v2839 = vunpack.c.l.b16 %v2263
    %v2840 = vunpack.c.l.b16 %v2264
    %v2841 = vunpack.c.l.b16 %v2265
    %v2842 = vunpack.c.l.b16 %v2266
    %v2843 = vunpack.c.l.b16 %v2267
    %v2844 = vunpack.c.l.b16 %v2268
    %v2845 = vunpack.c.l.b16 %v2269
    %v2846 = vunpack.c.l.b16 %v2270
    %v2847 = vunpack.c.l.b16 %v2271
    %v2848 = vunpack.c.l.b16 %v2272
    %v2849 = vpack.c.b16 %v2814, %v2813
    %v2850 = vpack.c.b16 %v2816, %v2815
    %v2851 = vpack.c.b16 %v2818, %v2817
    %v2852 = vpack.c.b16 %v2820, %v2819
    %v2853 = vpack.c.b16 %v2822, %v2821
    %v2854 = vpack.c.b16 %v2824, %v2823
    %v2855 = vpack.c.b16 %v2826, %v2825
    %v2856 = vpack.c.b16 %v2828, %v2827
    %v2857 = vpack.c.b16 %v2830, %v2829
    %v2858 = vpack.c.b16 %v2832, %v2831
    %v2859 = vpack.c.b16 %v2834, %v2833
    %v2860 = vpack.c.b16 %v2836, %v2835
    %v2861 = vpack.c.b16 %v2838, %v2837
    %v2862 = vpack.c.b16 %v2840, %v2839
    %v2863 = vpack.c.b16 %v2842, %v2841
    %v2864 = vpack.c.b16 %v2844, %v2843
    %v2865 = vpack.c.b16 %v2846, %v2845
    %v2866 = vpack.c.b16 %v2848, %v2847
    %v2886 = vsel %vm53, %v2755, 0
    %v2889 = vsel %vm53, %v2758, 0
    %v2892 = vsel %vm53, %v2761, 0
    %v2895 = vsel %vm53, %v2764, 0
    %v2898 = vsel %vm53, %v2767, 0
    %v2901 = vsel %vm53, %v2770, 0
    %v2904 = vsel %vm53, %v2773, 0
    %v2907 = vsel %vm53, %v2776, 0
    %2909 = vmatprep.subr.bf16.mxu0 0
    %2910 = vmatpush1.bf16.msra.mxu0 %v2849
    %2911 = vmatprep.subr.bf16.mxu0 0
    %2912 = vmatpush1.bf16.msra.mxu0 %v2850
    %2913 = vmatprep.subr.bf16.mxu0 0
    %2914 = vmatpush1.bf16.msra.mxu0 %v2851
    %2915 = vmatprep.subr.bf16.mxu0 0
    %2916 = vmatpush1.bf16.msra.mxu0 %v2852
    %2917 = vmatprep.subr.bf16.mxu0 0
    %2918 = vmatpush1.bf16.msra.mxu0 %v2853
    %2919 = vmatprep.subr.bf16.mxu0 0
    %2920 = vmatpush1.bf16.msra.mxu0 %v2854
    %2921 = vmatprep.subr.bf16.mxu0 0
    %2922 = vmatpush1.bf16.msra.mxu0 %v2855
    %2923 = vmatprep.subr.bf16.mxu0 0
    %2924 = vmatpush1.bf16.msra.mxu0 %v2856
    %2925 = vmatprep.subr.bf16.mxu0 0
    %2926 = vmatpush1.bf16.msra.mxu0 %v2857
    %2927 = vmatprep.subr.bf16.mxu0 0
    %2928 = vmatpush1.bf16.msra.mxu0 %v2858
    %2929 = vmatprep.subr.bf16.mxu0 0
    %2930 = vmatpush1.bf16.msra.mxu0 %v2859
    %2931 = vmatprep.subr.bf16.mxu0 0
    %2932 = vmatpush1.bf16.msra.mxu0 %v2860
    %2933 = vmatprep.subr.bf16.mxu0 0
    %2934 = vmatpush1.bf16.msra.mxu0 %v2861
    %2935 = vmatprep.subr.bf16.mxu0 0
    %2936 = vmatpush1.bf16.msra.mxu0 %v2862
    %2937 = vmatprep.subr.bf16.mxu0 0
    %2938 = vmatpush1.bf16.msra.mxu0 %v2863
    %2939 = vmatprep.subr.bf16.mxu0 0
    %2940 = vmatpush1.bf16.msra.mxu0 %v2864
    %2941 = vmatprep.mubr.bf16.mxu0 %v2754
    %2942 = vmatmul.mubr.bf16.gmra.mrb[0].mxu0 %v2753
    %v2943 = vpop.f32.mrb[0].mxu0
    %v2944 = vadd.f32 0.0, %v2943
    %v2945 = vpop.f32.mrb[0].mxu0
    %v2946 = vpop.f32.mrb[0].mxu0
    %v2947 = vadd.f32 0.0, %v2946
    %v2948 = vpop.f32.mrb[0].mxu0
    %2949 = vmatprep.mubr.bf16.mxu0 %v2757
    %2950 = vmatmul.mubr.bf16.gmra.mrb[0].mxu0 %v2756
    %v2951 = vpop.f32.mrb[0].mxu0
    %v2952 = vadd.f32 0.0, %v2951
    %v2953 = vpop.f32.mrb[0].mxu0
    %v2954 = vpop.f32.mrb[0].mxu0
    %v2955 = vadd.f32 0.0, %v2954
    %v2956 = vpop.f32.mrb[0].mxu0
    %2957 = vmatprep.mubr.bf16.mxu0 %v2760
    %2958 = vmatmul.mubr.bf16.gmra.mrb[0].mxu0 %v2759
    %v2959 = vpop.f32.mrb[0].mxu0
    %v2960 = vadd.f32 0.0, %v2959
    %v2961 = vpop.f32.mrb[0].mxu0
    %v2962 = vpop.f32.mrb[0].mxu0
    %v2963 = vadd.f32 0.0, %v2962
    %v2964 = vpop.f32.mrb[0].mxu0
    %2965 = vmatprep.mubr.bf16.mxu0 %v2763
    %2966 = vmatmul.mubr.bf16.gmra.mrb[0].mxu0 %v2762
    %v2967 = vpop.f32.mrb[0].mxu0
    %v2968 = vadd.f32 0.0, %v2967
    %v2969 = vpop.f32.mrb[0].mxu0
    %v2970 = vpop.f32.mrb[0].mxu0
    %v2971 = vadd.f32 0.0, %v2970
    %v2972 = vpop.f32.mrb[0].mxu0
    %2973 = vmatprep.mubr.bf16.mxu0 %v2766
    %2974 = vmatmul.mubr.bf16.gmra.mrb[0].mxu0 %v2765
    %v2975 = vpop.f32.mrb[0].mxu0
    %v2976 = vadd.f32 0.0, %v2975
    %v2977 = vpop.f32.mrb[0].mxu0
    %v2978 = vpop.f32.mrb[0].mxu0
    %v2979 = vadd.f32 0.0, %v2978
    %v2980 = vpop.f32.mrb[0].mxu0
    %2981 = vmatprep.mubr.bf16.mxu0 %v2769
    %2982 = vmatmul.mubr.bf16.gmra.mrb[0].mxu0 %v2768
    %v2983 = vpop.f32.mrb[0].mxu0
    %v2984 = vadd.f32 0.0, %v2983
    %v2985 = vpop.f32.mrb[0].mxu0
    %v2986 = vpop.f32.mrb[0].mxu0
    %v2987 = vadd.f32 0.0, %v2986
    %v2988 = vpop.f32.mrb[0].mxu0
    %2989 = vmatprep.mubr.bf16.mxu0 %v2772
    %2990 = vmatmul.mubr.bf16.gmra.mrb[0].mxu0 %v2771
    %v2991 = vpop.f32.mrb[0].mxu0
    %v2992 = vadd.f32 0.0, %v2991
    %v2993 = vpop.f32.mrb[0].mxu0
    %v2994 = vpop.f32.mrb[0].mxu0
    %v2995 = vadd.f32 0.0, %v2994
    %v2996 = vpop.f32.mrb[0].mxu0
    %2997 = vmatprep.mubr.bf16.mxu0 %v2775
    %2998 = vmatmul.mubr.bf16.gmra.mrb[0].mxu0 %v2774
    %v2999 = vpop.f32.mrb[0].mxu0
    %v3000 = vadd.f32 0.0, %v2999
    %v3001 = vpop.f32.mrb[0].mxu0
    %v3002 = vpop.f32.mrb[0].mxu0
    %v3003 = vadd.f32 0.0, %v3002
    %v3004 = vpop.f32.mrb[0].mxu0
    %3005 = vdwg.mxu0
    %3006 = vmatprep.subr.bf16.mxu0 0
    %3007 = vmatpush1.bf16.msra.mxu0 %v2865
    %3008 = vmatprep.subr.bf16.mxu0 0
    %3009 = vmatpush1.bf16.msra.mxu0 %v2866
    %3010 = vmatprep.subr.bf16.mxu0 0
    %3011 = vmatpush1.bf16.msra.mxu0 0
    %3012 = vmatprep.subr.bf16.mxu0 0
    %3013 = vmatpush1.bf16.msra.mxu0 0
    %3014 = vmatprep.subr.bf16.mxu0 0
    %3015 = vmatpush1.bf16.msra.mxu0 0
    %3016 = vmatprep.subr.bf16.mxu0 0
    %3017 = vmatpush1.bf16.msra.mxu0 0
    %3018 = vmatprep.subr.bf16.mxu0 0
    %3019 = vmatpush1.bf16.msra.mxu0 0
    %3020 = vmatprep.subr.bf16.mxu0 0
    %3021 = vmatpush1.bf16.msra.mxu0 0
    %3022 = vmatprep.subr.bf16.mxu0 0
    %3023 = vmatpush1.bf16.msra.mxu0 0
    %3024 = vmatprep.subr.bf16.mxu0 0
    %3025 = vmatpush1.bf16.msra.mxu0 0
    %3026 = vmatprep.subr.bf16.mxu0 0
    %3027 = vmatpush1.bf16.msra.mxu0 0
    %3028 = vmatprep.subr.bf16.mxu0 0
    %3029 = vmatpush1.bf16.msra.mxu0 0
    %3030 = vmatprep.subr.bf16.mxu0 0
    %3031 = vmatpush1.bf16.msra.mxu0 0
    %3032 = vmatprep.subr.bf16.mxu0 0
    %3033 = vmatpush1.bf16.msra.mxu0 0
    %3034 = vmatprep.subr.bf16.mxu0 0
    %3035 = vmatpush1.bf16.msra.mxu0 0
    %3036 = vmatprep.subr.bf16.mxu0 0
    %3037 = vmatpush1.bf16.msra.mxu0 0
    %3038 = vmatprep.mubr.bf16.mxu0 0
    %3039 = vmatmul.mubr.bf16.gmra.mrb[0].mxu0 %v2886
    %v3040 = vpop.f32.mrb[0].mxu0
    %v3041 = vadd.f32 %v2944, %v3040
    %v3042 = vpop.f32.mrb[0].mxu0
    %v3043 = vpop.f32.mrb[0].mxu0
    %v3044 = vadd.f32 %v2947, %v3043
    %v3045 = vpop.f32.mrb[0].mxu0
    %3046 = vmatprep.mubr.bf16.mxu0 0
    %3047 = vmatmul.mubr.bf16.gmra.mrb[0].mxu0 %v2889
    %v3048 = vpop.f32.mrb[0].mxu0
    %v3049 = vadd.f32 %v2952, %v3048
    %v3050 = vpop.f32.mrb[0].mxu0
    %v3051 = vpop.f32.mrb[0].mxu0
    %v3052 = vadd.f32 %v2955, %v3051
    %v3053 = vpop.f32.mrb[0].mxu0
    %3054 = vmatprep.mubr.bf16.mxu0 0
    %3055 = vmatmul.mubr.bf16.gmra.mrb[0].mxu0 %v2892
    %v3056 = vpop.f32.mrb[0].mxu0
    %v3057 = vadd.f32 %v2960, %v3056
    %v3058 = vpop.f32.mrb[0].mxu0
    %v3059 = vpop.f32.mrb[0].mxu0
    %v3060 = vadd.f32 %v2963, %v3059
    %v3061 = vpop.f32.mrb[0].mxu0
    %3062 = vmatprep.mubr.bf16.mxu0 0
    %3063 = vmatmul.mubr.bf16.gmra.mrb[0].mxu0 %v2895
    %v3064 = vpop.f32.mrb[0].mxu0
    %v3065 = vadd.f32 %v2968, %v3064
    %v3066 = vpop.f32.mrb[0].mxu0
    %v3067 = vpop.f32.mrb[0].mxu0
    %v3068 = vadd.f32 %v2971, %v3067
    %v3069 = vpop.f32.mrb[0].mxu0
    %3070 = vmatprep.mubr.bf16.mxu0 0
    %3071 = vmatmul.mubr.bf16.gmra.mrb[0].mxu0 %v2898
    %v3072 = vpop.f32.mrb[0].mxu0
    %v3073 = vadd.f32 %v2976, %v3072
    %v3074 = vpop.f32.mrb[0].mxu0
    %v3075 = vpop.f32.mrb[0].mxu0
    %v3076 = vadd.f32 %v2979, %v3075
    %v3077 = vpop.f32.mrb[0].mxu0
    %3078 = vmatprep.mubr.bf16.mxu0 0
    %3079 = vmatmul.mubr.bf16.gmra.mrb[0].mxu0 %v2901
    %v3080 = vpop.f32.mrb[0].mxu0
    %v3081 = vadd.f32 %v2984, %v3080
    %v3082 = vpop.f32.mrb[0].mxu0
    %v3083 = vpop.f32.mrb[0].mxu0
    %v3084 = vadd.f32 %v2987, %v3083
    %v3085 = vpop.f32.mrb[0].mxu0
    %3086 = vmatprep.mubr.bf16.mxu0 0
    %3087 = vmatmul.mubr.bf16.gmra.mrb[0].mxu0 %v2904
    %v3088 = vpop.f32.mrb[0].mxu0
    %v3089 = vadd.f32 %v2992, %v3088
    %v3090 = vpop.f32.mrb[0].mxu0
    %v3091 = vpop.f32.mrb[0].mxu0
    %v3092 = vadd.f32 %v2995, %v3091
    %v3093 = vpop.f32.mrb[0].mxu0
    %3094 = vmatprep.mubr.bf16.mxu0 0
    %3095 = vmatmul.mubr.bf16.gmra.mrb[0].mxu0 %v2907
    %v3096 = vpop.f32.mrb[0].mxu0
    %v3097 = vadd.f32 %v3000, %v3096
    %v3098 = vpop.f32.mrb[0].mxu0
    %v3099 = vpop.f32.mrb[0].mxu0
    %v3100 = vadd.f32 %v3003, %v3099
    %v3101 = vpop.f32.mrb[0].mxu0
    %3102 = vdwg.mxu0
    %v3103 = vsel %vm53, %v3041, 0.0
    %v3104 = vsel %vm53, %v3044, 0.0
    %v3105 = vadd.f32 %v3103, %v3104
    %v3106 = vsel %vm53, %v3049, 0.0
    %v3107 = vadd.f32 %v3105, %v3106
    %v3108 = vsel %vm53, %v3052, 0.0
    %v3109 = vadd.f32 %v3107, %v3108
    %v3110 = vsel %vm53, %v3057, 0.0
    %v3111 = vadd.f32 %v3109, %v3110
    %v3112 = vsel %vm53, %v3060, 0.0
    %v3113 = vadd.f32 %v3111, %v3112
    %v3114 = vsel %vm53, %v3065, 0.0
    %v3115 = vadd.f32 %v3113, %v3114
    %v3116 = vsel %vm53, %v3068, 0.0
    %v3117 = vadd.f32 %v3115, %v3116
    %v3118 = vsel %vm53, %v3073, 0.0
    %v3119 = vadd.f32 %v3117, %v3118
    %v3120 = vsel %vm53, %v3076, 0.0
    %v3121 = vadd.f32 %v3119, %v3120
    %v3122 = vsel %vm53, %v3081, 0.0
    %v3123 = vadd.f32 %v3121, %v3122
    %v3124 = vsel %vm53, %v3084, 0.0
    %v3125 = vadd.f32 %v3123, %v3124
    %v3126 = vsel %vm53, %v3089, 0.0
    %v3127 = vadd.f32 %v3125, %v3126
    %v3128 = vsel %vm53, %v3092, 0.0
    %v3129 = vadd.f32 %v3127, %v3128
    %v3130 = vsel %vm53, %v3097, 0.0
    %v3131 = vadd.f32 %v3129, %v3130
    %v3132 = vsel %vm53, %v3100, 0.0
    %v3133 = vadd.f32 %v3131, %v3132
    %v3134 = vrot.slane %v3133, 4
    %v3135 = vadd.f32 %v3133, %v3134
    %v3136 = vrot.slane %v3135, 2
    %v3137 = vadd.f32 %v3135, %v3136
    %v3138 = vrot.slane %v3137, 1
    %v3139 = vadd.f32 %v3137, %v3138
    %v3140 = vmul.f32 %v3139, 0.0078125
    %v3141 = vmul.f32 %v3041, %v3041
    %v3142 = vmul.f32 %v3044, %v3044
    %v3143 = vmul.f32 %v3049, %v3049
    %v3144 = vmul.f32 %v3052, %v3052
    %v3145 = vmul.f32 %v3057, %v3057
    %v3146 = vmul.f32 %v3060, %v3060
    %v3147 = vmul.f32 %v3065, %v3065
    %v3148 = vmul.f32 %v3068, %v3068
    %v3149 = vmul.f32 %v3073, %v3073
    %v3150 = vmul.f32 %v3076, %v3076
    %v3151 = vmul.f32 %v3081, %v3081
    %v3152 = vmul.f32 %v3084, %v3084
    %v3153 = vmul.f32 %v3089, %v3089
    %v3154 = vmul.f32 %v3092, %v3092
    %v3155 = vmul.f32 %v3097, %v3097
    %v3156 = vmul.f32 %v3100, %v3100
    %v3157 = vsel %vm53, %v3141, 0.0
    %v3158 = vsel %vm53, %v3142, 0.0
    %v3159 = vadd.f32 %v3157, %v3158
    %v3160 = vsel %vm53, %v3143, 0.0
    %v3161 = vadd.f32 %v3159, %v3160
    %v3162 = vsel %vm53, %v3144, 0.0
    %v3163 = vadd.f32 %v3161, %v3162
    %v3164 = vsel %vm53, %v3145, 0.0
    %v3165 = vadd.f32 %v3163, %v3164
    %v3166 = vsel %vm53, %v3146, 0.0
    %v3167 = vadd.f32 %v3165, %v3166
    %v3168 = vsel %vm53, %v3147, 0.0
    %v3169 = vadd.f32 %v3167, %v3168
    %v3170 = vsel %vm53, %v3148, 0.0
    %v3171 = vadd.f32 %v3169, %v3170
    %v3172 = vsel %vm53, %v3149, 0.0
    %v3173 = vadd.f32 %v3171, %v3172
    %v3174 = vsel %vm53, %v3150, 0.0
    %v3175 = vadd.f32 %v3173, %v3174
    %v3176 = vsel %vm53, %v3151, 0.0
    %v3177 = vadd.f32 %v3175, %v3176
    %v3178 = vsel %vm53, %v3152, 0.0
    %v3179 = vadd.f32 %v3177, %v3178
    %v3180 = vsel %vm53, %v3153, 0.0
    %v3181 = vadd.f32 %v3179, %v3180
    %v3182 = vsel %vm53, %v3154, 0.0
    %v3183 = vadd.f32 %v3181, %v3182
    %v3184 = vsel %vm53, %v3155, 0.0
    %v3185 = vadd.f32 %v3183, %v3184
    %v3186 = vsel %vm53, %v3156, 0.0
    %v3187 = vadd.f32 %v3185, %v3186
    %v3188 = vrot.slane %v3187, 4
    %v3189 = vadd.f32 %v3187, %v3188
    %v3190 = vrot.slane %v3189, 2
    %v3191 = vadd.f32 %v3189, %v3190
    %v3192 = vrot.slane %v3191, 1
    %v3193 = vadd.f32 %v3191, %v3192
    %v3194 = vmul.f32 %v3193, 0.0078125
    %v3195 = vmul.f32 %v3140, %v3140
    %v3196 = vsub.f32 %v3194, %v3195
    %v3197 = vadd.f32 %v3196, 1e-05
    %v3198 = vrsqrt.pop %v3197
    %v3199 = vmul.f32 %v1195, %v3198
    %v3200 = vmul.f32 %v3140, %v3199
    %v3202 = vrot.slane %v3200, 7
    %v3204 = vsub.f32 %v1195, %v3202
    %v3205 = vlaneseq
    %v3206 = vshrl.u32 %v3205, 7
    %v3207 = vsub.s32 0, %v3206
    %v3208 = vrot.slane %v3199, %v3207
    %v3209 = vmul.f32 %v3041, %v3208
    %v3210 = vmul.f32 %v3044, %v3208
    %v3211 = vmul.f32 %v3049, %v3208
    %v3212 = vmul.f32 %v3052, %v3208
    %v3213 = vmul.f32 %v3057, %v3208
    %v3214 = vmul.f32 %v3060, %v3208
    %v3215 = vmul.f32 %v3065, %v3208
    %v3216 = vmul.f32 %v3068, %v3208
    %v3217 = vmul.f32 %v3073, %v3208
    %v3218 = vmul.f32 %v3076, %v3208
    %v3219 = vmul.f32 %v3081, %v3208
    %v3220 = vmul.f32 %v3084, %v3208
    %v3221 = vmul.f32 %v3089, %v3208
    %v3222 = vmul.f32 %v3092, %v3208
    %v3223 = vmul.f32 %v3097, %v3208
    %v3224 = vmul.f32 %v3100, %v3208
    %v3225 = vlaneseq
    %v3226 = vshrl.u32 %v3225, 7
    %v3227 = vsub.s32 1, %v3226
    %v3228 = vrot.slane %v3204, %v3227
    %v3229 = vadd.f32 %v3209, %v3228
    %v3230 = vadd.f32 %v3210, %v3228
    %v3231 = vadd.f32 %v3211, %v3228
    %v3232 = vadd.f32 %v3212, %v3228
    %v3233 = vadd.f32 %v3213, %v3228
    %v3234 = vadd.f32 %v3214, %v3228
    %v3235 = vadd.f32 %v3215, %v3228
    %v3236 = vadd.f32 %v3216, %v3228
    %v3237 = vadd.f32 %v3217, %v3228
    %v3238 = vadd.f32 %v3218, %v3228
    %v3239 = vadd.f32 %v3219, %v3228
    %v3240 = vadd.f32 %v3220, %v3228
    %v3241 = vadd.f32 %v3221, %v3228
    %v3242 = vadd.f32 %v3222, %v3228
    %v3243 = vadd.f32 %v3223, %v3228
    %v3244 = vadd.f32 %v3224, %v3228
    %v3245 = vadd.f32 %v3229, %v1161
    %v3246 = vadd.f32 %v3230, %v1162
    %v3247 = vadd.f32 %v3231, %v1163
    %v3248 = vadd.f32 %v3232, %v1164
    %v3249 = vadd.f32 %v3233, %v1165
    %v3250 = vadd.f32 %v3234, %v1166
    %v3251 = vadd.f32 %v3235, %v1167
    %v3252 = vadd.f32 %v3236, %v1168
    %v3253 = vadd.f32 %v3237, %v1169
    %v3254 = vadd.f32 %v3238, %v1170
    %v3255 = vadd.f32 %v3239, %v1171
    %v3256 = vadd.f32 %v3240, %v1172
    %v3257 = vadd.f32 %v3241, %v1173
    %v3258 = vadd.f32 %v3242, %v1174
    %v3259 = vadd.f32 %v3243, %v1175
    %v3260 = vadd.f32 %v3244, %v1176
    %v3261 = vmax.f32 %v3245, 0.0
    %v3262 = vmax.f32 %v3246, 0.0
    %v3263 = vmax.f32 %v3247, 0.0
    %v3264 = vmax.f32 %v3248, 0.0
    %v3265 = vmax.f32 %v3249, 0.0
    %v3266 = vmax.f32 %v3250, 0.0
    %v3267 = vmax.f32 %v3251, 0.0
    %v3268 = vmax.f32 %v3252, 0.0
    %v3269 = vmax.f32 %v3253, 0.0
    %v3270 = vmax.f32 %v3254, 0.0
    %v3271 = vmax.f32 %v3255, 0.0
    %v3272 = vmax.f32 %v3256, 0.0
    %v3273 = vmax.f32 %v3257, 0.0
    %v3274 = vmax.f32 %v3258, 0.0
    %v3275 = vmax.f32 %v3259, 0.0
    %v3276 = vmax.f32 %v3260, 0.0
    %3277 = vst.msk [vmem:[%s131 + $0x8] sm:$0xff] %vm53, %v3261
    %3278 = vst.msk [vmem:[%s131 + $0x20] sm:$0xff] %vm53, %v3262
    %3279 = vst.msk [vmem:[%s131 + $0x38] sm:$0xff] %vm53, %v3263
    %3280 = vst.msk [vmem:[%s131 + $0x50] sm:$0xff] %vm53, %v3264
    %3281 = vst.msk [vmem:[%s131 + $0x68] sm:$0xff] %vm53, %v3265
    %3282 = vst.msk [vmem:[%s131 + $0x80] sm:$0xff] %vm53, %v3266
    %3283 = vst.msk [vmem:[%s131 + $0x98] sm:$0xff] %vm53, %v3267
    %3284 = vst.msk [vmem:[%s131 + $0xb0] sm:$0xff] %vm53, %v3268
    %3285 = vst.msk [vmem:[%s131 + $0xf8] sm:$0xff] %vm53, %v3269
    %3286 = vst.msk [vmem:[%s131 + $0x110] sm:$0xff] %vm53, %v3270
    %3287 = vst.msk [vmem:[%s131 + $0x128] sm:$0xff] %vm53, %v3271
    %3288 = vst.msk [vmem:[%s131 + $0x140] sm:$0xff] %vm53, %v3272
    %3289 = vst.msk [vmem:[%s131 + $0x158] sm:$0xff] %vm53, %v3273
    %3290 = vst.msk [vmem:[%s131 + $0x170] sm:$0xff] %vm53, %v3274
    %3291 = vst.msk [vmem:[%s131 + $0x188] sm:$0xff] %vm53, %v3275
    %3292 = vst.msk [vmem:[%s131 + $0x1a0] sm:$0xff] %vm53, %v3276
    %s3293 = scalar_lea.vmem %s4, 4
    %v3294 = vld [vmem:[%s3293] sm:$0x3]
    %s3295 = scalar_lea.vmem %s4, 6
    %v3296 = vld [vmem:[%s3295] sm:$0x3]
    %s3297 = scalar_lea.vmem %s3, 288
    %v3298 = vld [vmem:[%s3297] sm:$0xf]
    %v3299 = vld [vmem:[%s3297 + $0x4] sm:$0xf]
    %v3300 = vld [vmem:[%s3297 + $0x8] sm:$0xf]
    %v3301 = vld [vmem:[%s3297 + $0xc] sm:$0xf]
    %v3302 = vld [vmem:[%s3297 + $0x10] sm:$0xf]
    %v3303 = vld [vmem:[%s3297 + $0x14] sm:$0xf]
    %v3304 = vld [vmem:[%s3297 + $0x18] sm:$0xf]
    %v3305 = vld [vmem:[%s3297 + $0x1c] sm:$0xf]
    %v3306 = vld [vmem:[%s3297 + $0x20] sm:$0xf]
    %v3307 = vld [vmem:[%s3297 + $0x24] sm:$0xf]
    %v3308 = vld [vmem:[%s3297 + $0x28] sm:$0xf]
    %v3309 = vld [vmem:[%s3297 + $0x2c] sm:$0xf]
    %v3310 = vld [vmem:[%s3297 + $0x30] sm:$0xf]
    %v3311 = vld [vmem:[%s3297 + $0x34] sm:$0xf]
    %v3312 = vld [vmem:[%s3297 + $0x38] sm:$0xf]
    %v3313 = vld [vmem:[%s3297 + $0x3c] sm:$0xf]
    %v3314 = vld [vmem:[%s3297 + $0x40] sm:$0xf]
    %v3315 = vld [vmem:[%s3297 + $0x44] sm:$0xf]
    %v3316 = vld [vmem:[%s3297 + $0x48] sm:$0xf]
    %v3317 = vld [vmem:[%s3297 + $0x4c] sm:$0xf]
    %v3318 = vld [vmem:[%s3297 + $0x50] sm:$0xf]
    %v3319 = vld [vmem:[%s3297 + $0x54] sm:$0xf]
    %v3320 = vld [vmem:[%s3297 + $0x58] sm:$0xf]
    %v3321 = vld [vmem:[%s3297 + $0x5c] sm:$0xf]
    %v3322 = vld [vmem:[%s3297 + $0x60] sm:$0xf]
    %v3323 = vld [vmem:[%s3297 + $0x64] sm:$0xf]
    %v3324 = vld [vmem:[%s3297 + $0x68] sm:$0xf]
    %v3325 = vld [vmem:[%s3297 + $0x6c] sm:$0xf]
    %v3326 = vld [vmem:[%s3297 + $0x70] sm:$0xf]
    %v3327 = vld [vmem:[%s3297 + $0x74] sm:$0xf]
    %v3328 = vld [vmem:[%s3297 + $0x78] sm:$0xf]
    %v3329 = vld [vmem:[%s3297 + $0x7c] sm:$0xf]
    %v3330 = vld [vmem:[%s3297 + $0x80] sm:$0xf]
    %v3331 = vld [vmem:[%s3297 + $0x84] sm:$0xf]
    %v3332 = vld [vmem:[%s3297 + $0x88] sm:$0xf]
    %v3333 = vld [vmem:[%s3297 + $0x8c] sm:$0xf]
    %v3334 = vld [vmem:[#allocation2 + $0x7] sm:$0xff]
    %v3335 = vld [vmem:[#allocation2 + $0x1f] sm:$0xff]
    %v3336 = vld [vmem:[#allocation2 + $0x37] sm:$0xff]
    %v3337 = vld [vmem:[#allocation2 + $0x4f] sm:$0xff]
    %v3338 = vld [vmem:[#allocation2 + $0x67] sm:$0xff]
    %v3339 = vld [vmem:[#allocation2 + $0x7f] sm:$0xff]
    %v3340 = vld [vmem:[#allocation2 + $0x97] sm:$0xff]
    %v3341 = vld [vmem:[#allocation2 + $0xaf] sm:$0xff]
    %v3342 = vld [vmem:[#allocation2 + $0xf7] sm:$0xff]
    %v3343 = vld [vmem:[#allocation2 + $0x10f] sm:$0xff]
    %v3344 = vld [vmem:[#allocation2 + $0x127] sm:$0xff]
    %v3345 = vld [vmem:[#allocation2 + $0x13f] sm:$0xff]
    %v3346 = vld [vmem:[#allocation2 + $0x157] sm:$0xff]
    %v3347 = vld [vmem:[#allocation2 + $0x16f] sm:$0xff]
    %v3348 = vld [vmem:[#allocation2 + $0x187] sm:$0xff]
    %v3349 = vld [vmem:[#allocation2 + $0x19f] sm:$0xff]
    %v3350 = vpack.c.bf16 %v3335, %v3334
    %v3351 = vpack.c.bf16 %v3337, %v3336
    %v3352 = vpack.c.bf16 %v3339, %v3338
    %v3353 = vpack.c.bf16 %v3341, %v3340
    %v3354 = vpack.c.bf16 %v3343, %v3342
    %v3355 = vpack.c.bf16 %v3345, %v3344
    %v3356 = vpack.c.bf16 %v3347, %v3346
    %v3357 = vpack.c.bf16 %v3349, %v3348
    %3358 = vst.msk [vmem:[#allocation3] sm:$0xff] %vm53, %v3350
    %3359 = vst.msk [vmem:[#allocation3 + $0x18] sm:$0xff] %vm53, %v3351
    %3360 = vst.msk [vmem:[#allocation3 + $0x30] sm:$0xff] %vm53, %v3352
    %3361 = vst.msk [vmem:[#allocation3 + $0x48] sm:$0xff] %vm53, %v3353
    %3362 = vst.msk [vmem:[#allocation3 + $0x60] sm:$0xff] %vm53, %v3354
    %3363 = vst.msk [vmem:[#allocation3 + $0x78] sm:$0xff] %vm53, %v3355
    %3364 = vst.msk [vmem:[#allocation3 + $0x90] sm:$0xff] %vm53, %v3356
    %3365 = vst.msk [vmem:[#allocation3 + $0xa8] sm:$0xff] %vm53, %v3357
    %v3366 = vld [vmem:[#allocation2 + $0x8] sm:$0xff]
    %v3367 = vld [vmem:[#allocation2 + $0x20] sm:$0xff]
    %v3368 = vld [vmem:[#allocation2 + $0x38] sm:$0xff]
    %v3369 = vld [vmem:[#allocation2 + $0x50] sm:$0xff]
    %v3370 = vld [vmem:[#allocation2 + $0x68] sm:$0xff]
    %v3371 = vld [vmem:[#allocation2 + $0x80] sm:$0xff]
    %v3372 = vld [vmem:[#allocation2 + $0x98] sm:$0xff]
    %v3373 = vld [vmem:[#allocation2 + $0xb0] sm:$0xff]
    %v3374 = vld [vmem:[#allocation2 + $0xf8] sm:$0xff]
    %v3375 = vld [vmem:[#allocation2 + $0x110] sm:$0xff]
    %v3376 = vld [vmem:[#allocation2 + $0x128] sm:$0xff]
    %v3377 = vld [vmem:[#allocation2 + $0x140] sm:$0xff]
    %v3378 = vld [vmem:[#allocation2 + $0x158] sm:$0xff]
    %v3379 = vld [vmem:[#allocation2 + $0x170] sm:$0xff]
    %v3380 = vld [vmem:[#allocation2 + $0x188] sm:$0xff]
    %v3381 = vld [vmem:[#allocation2 + $0x1a0] sm:$0xff]
    %v3382 = vpack.c.bf16 %v3367, %v3366
    %v3383 = vpack.c.bf16 %v3369, %v3368
    %v3384 = vpack.c.bf16 %v3371, %v3370
    %v3385 = vpack.c.bf16 %v3373, %v3372
    %v3386 = vpack.c.bf16 %v3375, %v3374
    %v3387 = vpack.c.bf16 %v3377, %v3376
    %v3388 = vpack.c.bf16 %v3379, %v3378
    %v3389 = vpack.c.bf16 %v3381, %v3380
    %3398 = vrot.lane.b32.xlu0 %v3382, 32
    %v3399 = vpop.permute.xlu0 %3398
    %3400 = vrot.lane.b32.xlu0 %v3383, 32
    %v3401 = vpop.permute.xlu0 %3400
    %3402 = vrot.lane.b32.xlu0 %v3384, 32
    %v3403 = vpop.permute.xlu0 %3402
    %3404 = vrot.lane.b32.xlu0 %v3385, 32
    %v3405 = vpop.permute.xlu0 %3404
    %3406 = vrot.lane.b32.xlu0 %v3386, 32
    %v3407 = vpop.permute.xlu0 %3406
    %3408 = vrot.lane.b32.xlu0 %v3387, 32
    %v3409 = vpop.permute.xlu0 %3408
    %3410 = vrot.lane.b32.xlu0 %v3388, 32
    %v3411 = vpop.permute.xlu0 %3410
    %3412 = vrot.lane.b32.xlu0 %v3389, 32
    %v3413 = vpop.permute.xlu0 %3412
    %3422 = vst.msk [vmem:[#allocation3] sm:$0xff] %vm273, %v3399
    %3423 = vst.msk [vmem:[#allocation3 + $0x18] sm:$0xff] %vm273, %v3401
    %3424 = vst.msk [vmem:[#allocation3 + $0x30] sm:$0xff] %vm273, %v3403
    %3425 = vst.msk [vmem:[#allocation3 + $0x48] sm:$0xff] %vm273, %v3405
    %3426 = vst.msk [vmem:[#allocation3 + $0x60] sm:$0xff] %vm273, %v3407
    %3427 = vst.msk [vmem:[#allocation3 + $0x78] sm:$0xff] %vm273, %v3409
    %3428 = vst.msk [vmem:[#allocation3 + $0x90] sm:$0xff] %vm273, %v3411
    %3429 = vst.msk [vmem:[#allocation3 + $0xa8] sm:$0xff] %vm273, %v3413
    %v3430 = vld [vmem:[#allocation2 + $0x9] sm:$0xff]
    %v3431 = vld [vmem:[#allocation2 + $0x21] sm:$0xff]
    %v3432 = vld [vmem:[#allocation2 + $0x39] sm:$0xff]
    %v3433 = vld [vmem:[#allocation2 + $0x51] sm:$0xff]
    %v3434 = vld [vmem:[#allocation2 + $0x69] sm:$0xff]
    %v3435 = vld [vmem:[#allocation2 + $0x81] sm:$0xff]
    %v3436 = vld [vmem:[#allocation2 + $0x99] sm:$0xff]
    %v3437 = vld [vmem:[#allocation2 + $0xb1] sm:$0xff]
    %v3438 = vld [vmem:[#allocation2 + $0xf9] sm:$0xff]
    %v3439 = vld [vmem:[#allocation2 + $0x111] sm:$0xff]
    %v3440 = vld [vmem:[#allocation2 + $0x129] sm:$0xff]
    %v3441 = vld [vmem:[#allocation2 + $0x141] sm:$0xff]
    %v3442 = vld [vmem:[#allocation2 + $0x159] sm:$0xff]
    %v3443 = vld [vmem:[#allocation2 + $0x171] sm:$0xff]
    %v3444 = vld [vmem:[#allocation2 + $0x189] sm:$0xff]
    %v3445 = vld [vmem:[#allocation2 + $0x1a1] sm:$0xff]
    %v3446 = vpack.c.bf16 %v3431, %v3430
    %v3447 = vpack.c.bf16 %v3433, %v3432
    %v3448 = vpack.c.bf16 %v3435, %v3434
    %v3449 = vpack.c.bf16 %v3437, %v3436
    %v3450 = vpack.c.bf16 %v3439, %v3438
    %v3451 = vpack.c.bf16 %v3441, %v3440
    %v3452 = vpack.c.bf16 %v3443, %v3442
    %v3453 = vpack.c.bf16 %v3445, %v3444
    %3462 = vrot.lane.b32.xlu0 %v3446, 64
    %v3463 = vpop.permute.xlu0 %3462
    %3464 = vrot.lane.b32.xlu0 %v3447, 64
    %v3465 = vpop.permute.xlu0 %3464
    %3466 = vrot.lane.b32.xlu0 %v3448, 64
    %v3467 = vpop.permute.xlu0 %3466
    %3468 = vrot.lane.b32.xlu0 %v3449, 64
    %v3469 = vpop.permute.xlu0 %3468
    %3470 = vrot.lane.b32.xlu0 %v3450, 64
    %v3471 = vpop.permute.xlu0 %3470
    %3472 = vrot.lane.b32.xlu0 %v3451, 64
    %v3473 = vpop.permute.xlu0 %3472
    %3474 = vrot.lane.b32.xlu0 %v3452, 64
    %v3475 = vpop.permute.xlu0 %3474
    %3476 = vrot.lane.b32.xlu0 %v3453, 64
    %v3477 = vpop.permute.xlu0 %3476
    %3486 = vst.msk [vmem:[#allocation3] sm:$0xff] %vm338, %v3463
    %3487 = vst.msk [vmem:[#allocation3 + $0x18] sm:$0xff] %vm338, %v3465
    %3488 = vst.msk [vmem:[#allocation3 + $0x30] sm:$0xff] %vm338, %v3467
    %3489 = vst.msk [vmem:[#allocation3 + $0x48] sm:$0xff] %vm338, %v3469
    %3490 = vst.msk [vmem:[#allocation3 + $0x60] sm:$0xff] %vm338, %v3471
    %3491 = vst.msk [vmem:[#allocation3 + $0x78] sm:$0xff] %vm338, %v3473
    %3492 = vst.msk [vmem:[#allocation3 + $0x90] sm:$0xff] %vm338, %v3475
    %3493 = vst.msk [vmem:[#allocation3 + $0xa8] sm:$0xff] %vm338, %v3477
    %v3494 = vld [vmem:[%s131 + $0x7] sm:$0xff]
    %v3495 = vld [vmem:[%s131 + $0x1f] sm:$0xff]
    %v3496 = vld [vmem:[%s131 + $0x37] sm:$0xff]
    %v3497 = vld [vmem:[%s131 + $0x4f] sm:$0xff]
    %v3498 = vld [vmem:[%s131 + $0x67] sm:$0xff]
    %v3499 = vld [vmem:[%s131 + $0x7f] sm:$0xff]
    %v3500 = vld [vmem:[%s131 + $0x97] sm:$0xff]
    %v3501 = vld [vmem:[%s131 + $0xaf] sm:$0xff]
    %v3502 = vld [vmem:[%s131 + $0xf7] sm:$0xff]
    %v3503 = vld [vmem:[%s131 + $0x10f] sm:$0xff]
    %v3504 = vld [vmem:[%s131 + $0x127] sm:$0xff]
    %v3505 = vld [vmem:[%s131 + $0x13f] sm:$0xff]
    %v3506 = vld [vmem:[%s131 + $0x157] sm:$0xff]
    %v3507 = vld [vmem:[%s131 + $0x16f] sm:$0xff]
    %v3508 = vld [vmem:[%s131 + $0x187] sm:$0xff]
    %v3509 = vld [vmem:[%s131 + $0x19f] sm:$0xff]
    %v3510 = vpack.c.bf16 %v3495, %v3494
    %v3511 = vpack.c.bf16 %v3497, %v3496
    %v3512 = vpack.c.bf16 %v3499, %v3498
    %v3513 = vpack.c.bf16 %v3501, %v3500
    %v3514 = vpack.c.bf16 %v3503, %v3502
    %v3515 = vpack.c.bf16 %v3505, %v3504
    %v3516 = vpack.c.bf16 %v3507, %v3506
    %v3517 = vpack.c.bf16 %v3509, %v3508
    %3526 = vrot.lane.b32.xlu0 %v3510, 96
    %v3527 = vpop.permute.xlu0 %3526
    %3528 = vrot.lane.b32.xlu0 %v3511, 96
    %v3529 = vpop.permute.xlu0 %3528
    %3530 = vrot.lane.b32.xlu0 %v3512, 96
    %v3531 = vpop.permute.xlu0 %3530
    %3532 = vrot.lane.b32.xlu0 %v3513, 96
    %v3533 = vpop.permute.xlu0 %3532
    %3534 = vrot.lane.b32.xlu0 %v3514, 96
    %v3535 = vpop.permute.xlu0 %3534
    %3536 = vrot.lane.b32.xlu0 %v3515, 96
    %v3537 = vpop.permute.xlu0 %3536
    %3538 = vrot.lane.b32.xlu0 %v3516, 96
    %v3539 = vpop.permute.xlu0 %3538
    %3540 = vrot.lane.b32.xlu0 %v3517, 96
    %v3541 = vpop.permute.xlu0 %3540
    %3550 = vst.msk [vmem:[#allocation3] sm:$0xff] %vm403, %v3527
    %3551 = vst.msk [vmem:[#allocation3 + $0x18] sm:$0xff] %vm403, %v3529
    %3552 = vst.msk [vmem:[#allocation3 + $0x30] sm:$0xff] %vm403, %v3531
    %3553 = vst.msk [vmem:[#allocation3 + $0x48] sm:$0xff] %vm403, %v3533
    %3554 = vst.msk [vmem:[#allocation3 + $0x60] sm:$0xff] %vm403, %v3535
    %3555 = vst.msk [vmem:[#allocation3 + $0x78] sm:$0xff] %vm403, %v3537
    %3556 = vst.msk [vmem:[#allocation3 + $0x90] sm:$0xff] %vm403, %v3539
    %3557 = vst.msk [vmem:[#allocation3 + $0xa8] sm:$0xff] %vm403, %v3541
    %v3558 = vld [vmem:[%s131 + $0x8] sm:$0xff]
    %v3559 = vld [vmem:[%s131 + $0x20] sm:$0xff]
    %v3560 = vld [vmem:[%s131 + $0x38] sm:$0xff]
    %v3561 = vld [vmem:[%s131 + $0x50] sm:$0xff]
    %v3562 = vld [vmem:[%s131 + $0x68] sm:$0xff]
    %v3563 = vld [vmem:[%s131 + $0x80] sm:$0xff]
    %v3564 = vld [vmem:[%s131 + $0x98] sm:$0xff]
    %v3565 = vld [vmem:[%s131 + $0xb0] sm:$0xff]
    %v3566 = vld [vmem:[%s131 + $0xf8] sm:$0xff]
    %v3567 = vld [vmem:[%s131 + $0x110] sm:$0xff]
    %v3568 = vld [vmem:[%s131 + $0x128] sm:$0xff]
    %v3569 = vld [vmem:[%s131 + $0x140] sm:$0xff]
    %v3570 = vld [vmem:[%s131 + $0x158] sm:$0xff]
    %v3571 = vld [vmem:[%s131 + $0x170] sm:$0xff]
    %v3572 = vld [vmem:[%s131 + $0x188] sm:$0xff]
    %v3573 = vld [vmem:[%s131 + $0x1a0] sm:$0xff]
    %v3574 = vpack.c.bf16 %v3559, %v3558
    %v3575 = vpack.c.bf16 %v3561, %v3560
    %v3576 = vpack.c.bf16 %v3563, %v3562
    %v3577 = vpack.c.bf16 %v3565, %v3564
    %v3578 = vpack.c.bf16 %v3567, %v3566
    %v3579 = vpack.c.bf16 %v3569, %v3568
    %v3580 = vpack.c.bf16 %v3571, %v3570
    %v3581 = vpack.c.bf16 %v3573, %v3572
    %3582 = vst.msk [vmem:[#allocation3 + $0x8] sm:$0xff] %vm53, %v3574
    %3583 = vst.msk [vmem:[#allocation3 + $0x20] sm:$0xff] %vm53, %v3575
    %3584 = vst.msk [vmem:[#allocation3 + $0x38] sm:$0xff] %vm53, %v3576
    %3585 = vst.msk [vmem:[#allocation3 + $0x50] sm:$0xff] %vm53, %v3577
    %3586 = vst.msk [vmem:[#allocation3 + $0x68] sm:$0xff] %vm53, %v3578
    %3587 = vst.msk [vmem:[#allocation3 + $0x80] sm:$0xff] %vm53, %v3579
    %3588 = vst.msk [vmem:[#allocation3 + $0x98] sm:$0xff] %vm53, %v3580
    %3589 = vst.msk [vmem:[#allocation3 + $0xb0] sm:$0xff] %vm53, %v3581
    %v3590 = vld [vmem:[%s131 + $0x9] sm:$0xff]
    %v3591 = vld [vmem:[%s131 + $0x21] sm:$0xff]
    %v3592 = vld [vmem:[%s131 + $0x39] sm:$0xff]
    %v3593 = vld [vmem:[%s131 + $0x51] sm:$0xff]
    %v3594 = vld [vmem:[%s131 + $0x69] sm:$0xff]
    %v3595 = vld [vmem:[%s131 + $0x81] sm:$0xff]
    %v3596 = vld [vmem:[%s131 + $0x99] sm:$0xff]
    %v3597 = vld [vmem:[%s131 + $0xb1] sm:$0xff]
    %v3598 = vld [vmem:[%s131 + $0xf9] sm:$0xff]
    %v3599 = vld [vmem:[%s131 + $0x111] sm:$0xff]
    %v3600 = vld [vmem:[%s131 + $0x129] sm:$0xff]
    %v3601 = vld [vmem:[%s131 + $0x141] sm:$0xff]
    %v3602 = vld [vmem:[%s131 + $0x159] sm:$0xff]
    %v3603 = vld [vmem:[%s131 + $0x171] sm:$0xff]
    %v3604 = vld [vmem:[%s131 + $0x189] sm:$0xff]
    %v3605 = vld [vmem:[%s131 + $0x1a1] sm:$0xff]
    %v3606 = vpack.c.bf16 %v3591, %v3590
    %v3607 = vpack.c.bf16 %v3593, %v3592
    %v3608 = vpack.c.bf16 %v3595, %v3594
    %v3609 = vpack.c.bf16 %v3597, %v3596
    %v3610 = vpack.c.bf16 %v3599, %v3598
    %v3611 = vpack.c.bf16 %v3601, %v3600
    %v3612 = vpack.c.bf16 %v3603, %v3602
    %v3613 = vpack.c.bf16 %v3605, %v3604
    %3622 = vrot.lane.b32.xlu0 %v3606, 32
    %v3623 = vpop.permute.xlu0 %3622
    %3624 = vrot.lane.b32.xlu0 %v3607, 32
    %v3625 = vpop.permute.xlu0 %3624
    %3626 = vrot.lane.b32.xlu0 %v3608, 32
    %v3627 = vpop.permute.xlu0 %3626
    %3628 = vrot.lane.b32.xlu0 %v3609, 32
    %v3629 = vpop.permute.xlu0 %3628
    %3630 = vrot.lane.b32.xlu0 %v3610, 32
    %v3631 = vpop.permute.xlu0 %3630
    %3632 = vrot.lane.b32.xlu0 %v3611, 32
    %v3633 = vpop.permute.xlu0 %3632
    %3634 = vrot.lane.b32.xlu0 %v3612, 32
    %v3635 = vpop.permute.xlu0 %3634
    %3636 = vrot.lane.b32.xlu0 %v3613, 32
    %v3637 = vpop.permute.xlu0 %3636
    %3646 = vst.msk [vmem:[#allocation3 + $0x8] sm:$0xff] %vm273, %v3623
    %3647 = vst.msk [vmem:[#allocation3 + $0x20] sm:$0xff] %vm273, %v3625
    %3648 = vst.msk [vmem:[#allocation3 + $0x38] sm:$0xff] %vm273, %v3627
    %3649 = vst.msk [vmem:[#allocation3 + $0x50] sm:$0xff] %vm273, %v3629
    %3650 = vst.msk [vmem:[#allocation3 + $0x68] sm:$0xff] %vm273, %v3631
    %3651 = vst.msk [vmem:[#allocation3 + $0x80] sm:$0xff] %vm273, %v3633
    %3652 = vst.msk [vmem:[#allocation3 + $0x98] sm:$0xff] %vm273, %v3635
    %3653 = vst.msk [vmem:[#allocation3 + $0xb0] sm:$0xff] %vm273, %v3637
    %v3654 = vld [vmem:[%s508 + $0x7] sm:$0xff]
    %v3655 = vld [vmem:[%s508 + $0x1f] sm:$0xff]
    %v3656 = vld [vmem:[%s508 + $0x37] sm:$0xff]
    %v3657 = vld [vmem:[%s508 + $0x4f] sm:$0xff]
    %v3658 = vld [vmem:[%s508 + $0x67] sm:$0xff]
    %v3659 = vld [vmem:[%s508 + $0x7f] sm:$0xff]
    %v3660 = vld [vmem:[%s508 + $0x97] sm:$0xff]
    %v3661 = vld [vmem:[%s508 + $0xaf] sm:$0xff]
    %v3662 = vld [vmem:[%s508 + $0xf7] sm:$0xff]
    %v3663 = vld [vmem:[%s508 + $0x10f] sm:$0xff]
    %v3664 = vld [vmem:[%s508 + $0x127] sm:$0xff]
    %v3665 = vld [vmem:[%s508 + $0x13f] sm:$0xff]
    %v3666 = vld [vmem:[%s508 + $0x157] sm:$0xff]
    %v3667 = vld [vmem:[%s508 + $0x16f] sm:$0xff]
    %v3668 = vld [vmem:[%s508 + $0x187] sm:$0xff]
    %v3669 = vld [vmem:[%s508 + $0x19f] sm:$0xff]
    %v3670 = vpack.c.bf16 %v3655, %v3654
    %v3671 = vpack.c.bf16 %v3657, %v3656
    %v3672 = vpack.c.bf16 %v3659, %v3658
    %v3673 = vpack.c.bf16 %v3661, %v3660
    %v3674 = vpack.c.bf16 %v3663, %v3662
    %v3675 = vpack.c.bf16 %v3665, %v3664
    %v3676 = vpack.c.bf16 %v3667, %v3666
    %v3677 = vpack.c.bf16 %v3669, %v3668
    %3686 = vrot.lane.b32.xlu0 %v3670, 64
    %v3687 = vpop.permute.xlu0 %3686
    %3688 = vrot.lane.b32.xlu0 %v3671, 64
    %v3689 = vpop.permute.xlu0 %3688
    %3690 = vrot.lane.b32.xlu0 %v3672, 64
    %v3691 = vpop.permute.xlu0 %3690
    %3692 = vrot.lane.b32.xlu0 %v3673, 64
    %v3693 = vpop.permute.xlu0 %3692
    %3694 = vrot.lane.b32.xlu0 %v3674, 64
    %v3695 = vpop.permute.xlu0 %3694
    %3696 = vrot.lane.b32.xlu0 %v3675, 64
    %v3697 = vpop.permute.xlu0 %3696
    %3698 = vrot.lane.b32.xlu0 %v3676, 64
    %v3699 = vpop.permute.xlu0 %3698
    %3700 = vrot.lane.b32.xlu0 %v3677, 64
    %v3701 = vpop.permute.xlu0 %3700
    %3710 = vst.msk [vmem:[#allocation3 + $0x8] sm:$0xff] %vm338, %v3687
    %3711 = vst.msk [vmem:[#allocation3 + $0x20] sm:$0xff] %vm338, %v3689
    %3712 = vst.msk [vmem:[#allocation3 + $0x38] sm:$0xff] %vm338, %v3691
    %3713 = vst.msk [vmem:[#allocation3 + $0x50] sm:$0xff] %vm338, %v3693
    %3714 = vst.msk [vmem:[#allocation3 + $0x68] sm:$0xff] %vm338, %v3695
    %3715 = vst.msk [vmem:[#allocation3 + $0x80] sm:$0xff] %vm338, %v3697
    %3716 = vst.msk [vmem:[#allocation3 + $0x98] sm:$0xff] %vm338, %v3699
    %3717 = vst.msk [vmem:[#allocation3 + $0xb0] sm:$0xff] %vm338, %v3701
    %v3718 = vld [vmem:[%s508 + $0x8] sm:$0xff]
    %v3719 = vld [vmem:[%s508 + $0x20] sm:$0xff]
    %v3720 = vld [vmem:[%s508 + $0x38] sm:$0xff]
    %v3721 = vld [vmem:[%s508 + $0x50] sm:$0xff]
    %v3722 = vld [vmem:[%s508 + $0x68] sm:$0xff]
    %v3723 = vld [vmem:[%s508 + $0x80] sm:$0xff]
    %v3724 = vld [vmem:[%s508 + $0x98] sm:$0xff]
    %v3725 = vld [vmem:[%s508 + $0xb0] sm:$0xff]
    %v3726 = vld [vmem:[%s508 + $0xf8] sm:$0xff]
    %v3727 = vld [vmem:[%s508 + $0x110] sm:$0xff]
    %v3728 = vld [vmem:[%s508 + $0x128] sm:$0xff]
    %v3729 = vld [vmem:[%s508 + $0x140] sm:$0xff]
    %v3730 = vld [vmem:[%s508 + $0x158] sm:$0xff]
    %v3731 = vld [vmem:[%s508 + $0x170] sm:$0xff]
    %v3732 = vld [vmem:[%s508 + $0x188] sm:$0xff]
    %v3733 = vld [vmem:[%s508 + $0x1a0] sm:$0xff]
    %v3734 = vpack.c.bf16 %v3719, %v3718
    %v3735 = vpack.c.bf16 %v3721, %v3720
    %v3736 = vpack.c.bf16 %v3723, %v3722
    %v3737 = vpack.c.bf16 %v3725, %v3724
    %v3738 = vpack.c.bf16 %v3727, %v3726
    %v3739 = vpack.c.bf16 %v3729, %v3728
    %v3740 = vpack.c.bf16 %v3731, %v3730
    %v3741 = vpack.c.bf16 %v3733, %v3732
    %3750 = vrot.lane.b32.xlu0 %v3734, 96
    %v3751 = vpop.permute.xlu0 %3750
    %3752 = vrot.lane.b32.xlu0 %v3735, 96
    %v3753 = vpop.permute.xlu0 %3752
    %3754 = vrot.lane.b32.xlu0 %v3736, 96
    %v3755 = vpop.permute.xlu0 %3754
    %3756 = vrot.lane.b32.xlu0 %v3737, 96
    %v3757 = vpop.permute.xlu0 %3756
    %3758 = vrot.lane.b32.xlu0 %v3738, 96
    %v3759 = vpop.permute.xlu0 %3758
    %3760 = vrot.lane.b32.xlu0 %v3739, 96
    %v3761 = vpop.permute.xlu0 %3760
    %3762 = vrot.lane.b32.xlu0 %v3740, 96
    %v3763 = vpop.permute.xlu0 %3762
    %3764 = vrot.lane.b32.xlu0 %v3741, 96
    %v3765 = vpop.permute.xlu0 %3764
    %3774 = vst.msk [vmem:[#allocation3 + $0x8] sm:$0xff] %vm403, %v3751
    %3775 = vst.msk [vmem:[#allocation3 + $0x20] sm:$0xff] %vm403, %v3753
    %3776 = vst.msk [vmem:[#allocation3 + $0x38] sm:$0xff] %vm403, %v3755
    %3777 = vst.msk [vmem:[#allocation3 + $0x50] sm:$0xff] %vm403, %v3757
    %3778 = vst.msk [vmem:[#allocation3 + $0x68] sm:$0xff] %vm403, %v3759
    %3779 = vst.msk [vmem:[#allocation3 + $0x80] sm:$0xff] %vm403, %v3761
    %3780 = vst.msk [vmem:[#allocation3 + $0x98] sm:$0xff] %vm403, %v3763
    %3781 = vst.msk [vmem:[#allocation3 + $0xb0] sm:$0xff] %vm403, %v3765
    %v3782 = vld [vmem:[%s508 + $0x9] sm:$0xff]
    %v3783 = vld [vmem:[%s508 + $0x21] sm:$0xff]
    %v3784 = vld [vmem:[%s508 + $0x39] sm:$0xff]
    %v3785 = vld [vmem:[%s508 + $0x51] sm:$0xff]
    %v3786 = vld [vmem:[%s508 + $0x69] sm:$0xff]
    %v3787 = vld [vmem:[%s508 + $0x81] sm:$0xff]
    %v3788 = vld [vmem:[%s508 + $0x99] sm:$0xff]
    %v3789 = vld [vmem:[%s508 + $0xb1] sm:$0xff]
    %v3790 = vld [vmem:[%s508 + $0xf9] sm:$0xff]
    %v3791 = vld [vmem:[%s508 + $0x111] sm:$0xff]
    %v3792 = vld [vmem:[%s508 + $0x129] sm:$0xff]
    %v3793 = vld [vmem:[%s508 + $0x141] sm:$0xff]
    %v3794 = vld [vmem:[%s508 + $0x159] sm:$0xff]
    %v3795 = vld [vmem:[%s508 + $0x171] sm:$0xff]
    %v3796 = vld [vmem:[%s508 + $0x189] sm:$0xff]
    %v3797 = vld [vmem:[%s508 + $0x1a1] sm:$0xff]
    %v3798 = vpack.c.bf16 %v3783, %v3782
    %v3799 = vpack.c.bf16 %v3785, %v3784
    %v3800 = vpack.c.bf16 %v3787, %v3786
    %v3801 = vpack.c.bf16 %v3789, %v3788
    %v3802 = vpack.c.bf16 %v3791, %v3790
    %v3803 = vpack.c.bf16 %v3793, %v3792
    %v3804 = vpack.c.bf16 %v3795, %v3794
    %v3805 = vpack.c.bf16 %v3797, %v3796
    %3806 = vst.msk [vmem:[#allocation3 + $0x10] sm:$0xff] %vm53, %v3798
    %3807 = vst.msk [vmem:[#allocation3 + $0x28] sm:$0xff] %vm53, %v3799
    %3808 = vst.msk [vmem:[#allocation3 + $0x40] sm:$0xff] %vm53, %v3800
    %3809 = vst.msk [vmem:[#allocation3 + $0x58] sm:$0xff] %vm53, %v3801
    %3810 = vst.msk [vmem:[#allocation3 + $0x70] sm:$0xff] %vm53, %v3802
    %3811 = vst.msk [vmem:[#allocation3 + $0x88] sm:$0xff] %vm53, %v3803
    %3812 = vst.msk [vmem:[#allocation3 + $0xa0] sm:$0xff] %vm53, %v3804
    %3813 = vst.msk [vmem:[#allocation3 + $0xb8] sm:$0xff] %vm53, %v3805
    %v3814 = vld [vmem:[#allocation3] sm:$0xff]
    %v3815 = vld [vmem:[#allocation3 + $0x8] sm:$0xff]
    %v3816 = vld [vmem:[#allocation3 + $0x10] sm:$0xff]
    %v3817 = vld [vmem:[#allocation3 + $0x18] sm:$0xff]
    %v3818 = vld [vmem:[#allocation3 + $0x20] sm:$0xff]
    %v3819 = vld [vmem:[#allocation3 + $0x28] sm:$0xff]
    %v3820 = vld [vmem:[#allocation3 + $0x30] sm:$0xff]
    %v3821 = vld [vmem:[#allocation3 + $0x38] sm:$0xff]
    %v3822 = vld [vmem:[#allocation3 + $0x40] sm:$0xff]
    %v3823 = vld [vmem:[#allocation3 + $0x48] sm:$0xff]
    %v3824 = vld [vmem:[#allocation3 + $0x50] sm:$0xff]
    %v3825 = vld [vmem:[#allocation3 + $0x58] sm:$0xff]
    %v3826 = vld [vmem:[#allocation3 + $0x60] sm:$0xff]
    %v3827 = vld [vmem:[#allocation3 + $0x68] sm:$0xff]
    %v3828 = vld [vmem:[#allocation3 + $0x70] sm:$0xff]
    %v3829 = vld [vmem:[#allocation3 + $0x78] sm:$0xff]
    %v3830 = vld [vmem:[#allocation3 + $0x80] sm:$0xff]
    %v3831 = vld [vmem:[#allocation3 + $0x88] sm:$0xff]
    %v3832 = vld [vmem:[#allocation3 + $0x90] sm:$0xff]
    %v3833 = vld [vmem:[#allocation3 + $0x98] sm:$0xff]
    %v3834 = vld [vmem:[#allocation3 + $0xa0] sm:$0xff]
    %v3835 = vld [vmem:[#allocation3 + $0xa8] sm:$0xff]
    %v3836 = vld [vmem:[#allocation3 + $0xb0] sm:$0xff]
    %v3837 = vld [vmem:[#allocation3 + $0xb8] sm:$0xff]
    %v3874 = vunpack.c.l.b16 %v3298
    %v3875 = vunpack.c.l.b16 %v3299
    %v3876 = vunpack.c.l.b16 %v3300
    %v3877 = vunpack.c.l.b16 %v3301
    %v3878 = vunpack.c.l.b16 %v3302
    %v3879 = vunpack.c.l.b16 %v3303
    %v3880 = vunpack.c.l.b16 %v3304
    %v3881 = vunpack.c.l.b16 %v3305
    %v3882 = vunpack.c.l.b16 %v3306
    %v3883 = vunpack.c.l.b16 %v3307
    %v3884 = vunpack.c.l.b16 %v3308
    %v3885 = vunpack.c.l.b16 %v3309
    %v3886 = vunpack.c.l.b16 %v3310
    %v3887 = vunpack.c.l.b16 %v3311
    %v3888 = vunpack.c.l.b16 %v3312
    %v3889 = vunpack.c.l.b16 %v3313
    %v3890 = vunpack.c.l.b16 %v3314
    %v3891 = vunpack.c.l.b16 %v3315
    %v3892 = vunpack.c.l.b16 %v3316
    %v3893 = vunpack.c.l.b16 %v3317
    %v3894 = vunpack.c.l.b16 %v3318
    %v3895 = vunpack.c.l.b16 %v3319
    %v3896 = vunpack.c.l.b16 %v3320
    %v3897 = vunpack.c.l.b16 %v3321
    %v3898 = vunpack.c.l.b16 %v3322
    %v3899 = vunpack.c.l.b16 %v3323
    %v3900 = vunpack.c.l.b16 %v3324
    %v3901 = vunpack.c.l.b16 %v3325
    %v3902 = vunpack.c.l.b16 %v3326
    %v3903 = vunpack.c.l.b16 %v3327
    %v3904 = vunpack.c.l.b16 %v3328
    %v3905 = vunpack.c.l.b16 %v3329
    %v3906 = vunpack.c.l.b16 %v3330
    %v3907 = vunpack.c.l.b16 %v3331
    %v3908 = vunpack.c.l.b16 %v3332
    %v3909 = vunpack.c.l.b16 %v3333
    %v3910 = vpack.c.b16 %v3875, %v3874
    %v3911 = vpack.c.b16 %v3877, %v3876
    %v3912 = vpack.c.b16 %v3879, %v3878
    %v3913 = vpack.c.b16 %v3881, %v3880
    %v3914 = vpack.c.b16 %v3883, %v3882
    %v3915 = vpack.c.b16 %v3885, %v3884
    %v3916 = vpack.c.b16 %v3887, %v3886
    %v3917 = vpack.c.b16 %v3889, %v3888
    %v3918 = vpack.c.b16 %v3891, %v3890
    %v3919 = vpack.c.b16 %v3893, %v3892
    %v3920 = vpack.c.b16 %v3895, %v3894
    %v3921 = vpack.c.b16 %v3897, %v3896
    %v3922 = vpack.c.b16 %v3899, %v3898
    %v3923 = vpack.c.b16 %v3901, %v3900
    %v3924 = vpack.c.b16 %v3903, %v3902
    %v3925 = vpack.c.b16 %v3905, %v3904
    %v3926 = vpack.c.b16 %v3907, %v3906
    %v3927 = vpack.c.b16 %v3909, %v3908
    %v3947 = vsel %vm53, %v3816, 0
    %v3950 = vsel %vm53, %v3819, 0
    %v3953 = vsel %vm53, %v3822, 0
    %v3956 = vsel %vm53, %v3825, 0
    %v3959 = vsel %vm53, %v3828, 0
    %v3962 = vsel %vm53, %v3831, 0
    %v3965 = vsel %vm53, %v3834, 0
    %v3968 = vsel %vm53, %v3837, 0
    %3970 = vmatprep.subr.bf16.mxu0 0
    %3971 = vmatpush1.bf16.msra.mxu0 %v3910
    %3972 = vmatprep.subr.bf16.mxu0 0
    %3973 = vmatpush1.bf16.msra.mxu0 %v3911
    %3974 = vmatprep.subr.bf16.mxu0 0
    %3975 = vmatpush1.bf16.msra.mxu0 %v3912
    %3976 = vmatprep.subr.bf16.mxu0 0
    %3977 = vmatpush1.bf16.msra.mxu0 %v3913
    %3978 = vmatprep.subr.bf16.mxu0 0
    %3979 = vmatpush1.bf16.msra.mxu0 %v3914
    %3980 = vmatprep.subr.bf16.mxu0 0
    %3981 = vmatpush1.bf16.msra.mxu0 %v3915
    %3982 = vmatprep.subr.bf16.mxu0 0
    %3983 = vmatpush1.bf16.msra.mxu0 %v3916
    %3984 = vmatprep.subr.bf16.mxu0 0
    %3985 = vmatpush1.bf16.msra.mxu0 %v3917
    %3986 = vmatprep.subr.bf16.mxu0 0
    %3987 = vmatpush1.bf16.msra.mxu0 %v3918
    %3988 = vmatprep.subr.bf16.mxu0 0
    %3989 = vmatpush1.bf16.msra.mxu0 %v3919
    %3990 = vmatprep.subr.bf16.mxu0 0
    %3991 = vmatpush1.bf16.msra.mxu0 %v3920
    %3992 = vmatprep.subr.bf16.mxu0 0
    %3993 = vmatpush1.bf16.msra.mxu0 %v3921
    %3994 = vmatprep.subr.bf16.mxu0 0
    %3995 = vmatpush1.bf16.msra.mxu0 %v3922
    %3996 = vmatprep.subr.bf16.mxu0 0
    %3997 = vmatpush1.bf16.msra.mxu0 %v3923
    %3998 = vmatprep.subr.bf16.mxu0 0
    %3999 = vmatpush1.bf16.msra.mxu0 %v3924
    %4000 = vmatprep.subr.bf16.mxu0 0
    %4001 = vmatpush1.bf16.msra.mxu0 %v3925
    %4002 = vmatprep.mubr.bf16.mxu0 %v3815
    %4003 = vmatmul.mubr.bf16.gmra.mrb[0].mxu0 %v3814
    %v4004 = vpop.f32.mrb[0].mxu0
    %v4005 = vadd.f32 0.0, %v4004
    %v4006 = vpop.f32.mrb[0].mxu0
    %v4007 = vpop.f32.mrb[0].mxu0
    %v4008 = vadd.f32 0.0, %v4007
    %v4009 = vpop.f32.mrb[0].mxu0
    %4010 = vmatprep.mubr.bf16.mxu0 %v3818
    %4011 = vmatmul.mubr.bf16.gmra.mrb[0].mxu0 %v3817
    %v4012 = vpop.f32.mrb[0].mxu0
    %v4013 = vadd.f32 0.0, %v4012
    %v4014 = vpop.f32.mrb[0].mxu0
    %v4015 = vpop.f32.mrb[0].mxu0
    %v4016 = vadd.f32 0.0, %v4015
    %v4017 = vpop.f32.mrb[0].mxu0
    %4018 = vmatprep.mubr.bf16.mxu0 %v3821
    %4019 = vmatmul.mubr.bf16.gmra.mrb[0].mxu0 %v3820
    %v4020 = vpop.f32.mrb[0].mxu0
    %v4021 = vadd.f32 0.0, %v4020
    %v4022 = vpop.f32.mrb[0].mxu0
    %v4023 = vpop.f32.mrb[0].mxu0
    %v4024 = vadd.f32 0.0, %v4023
    %v4025 = vpop.f32.mrb[0].mxu0
    %4026 = vmatprep.mubr.bf16.mxu0 %v3824
    %4027 = vmatmul.mubr.bf16.gmra.mrb[0].mxu0 %v3823
    %v4028 = vpop.f32.mrb[0].mxu0
    %v4029 = vadd.f32 0.0, %v4028
    %v4030 = vpop.f32.mrb[0].mxu0
    %v4031 = vpop.f32.mrb[0].mxu0
    %v4032 = vadd.f32 0.0, %v4031
    %v4033 = vpop.f32.mrb[0].mxu0
    %4034 = vmatprep.mubr.bf16.mxu0 %v3827
    %4035 = vmatmul.mubr.bf16.gmra.mrb[0].mxu0 %v3826
    %v4036 = vpop.f32.mrb[0].mxu0
    %v4037 = vadd.f32 0.0, %v4036
    %v4038 = vpop.f32.mrb[0].mxu0
    %v4039 = vpop.f32.mrb[0].mxu0
    %v4040 = vadd.f32 0.0, %v4039
    %v4041 = vpop.f32.mrb[0].mxu0
    %4042 = vmatprep.mubr.bf16.mxu0 %v3830
    %4043 = vmatmul.mubr.bf16.gmra.mrb[0].mxu0 %v3829
    %v4044 = vpop.f32.mrb[0].mxu0
    %v4045 = vadd.f32 0.0, %v4044
    %v4046 = vpop.f32.mrb[0].mxu0
    %v4047 = vpop.f32.mrb[0].mxu0
    %v4048 = vadd.f32 0.0, %v4047
    %v4049 = vpop.f32.mrb[0].mxu0
    %4050 = vmatprep.mubr.bf16.mxu0 %v3833
    %4051 = vmatmul.mubr.bf16.gmra.mrb[0].mxu0 %v3832
    %v4052 = vpop.f32.mrb[0].mxu0
    %v4053 = vadd.f32 0.0, %v4052
    %v4054 = vpop.f32.mrb[0].mxu0
    %v4055 = vpop.f32.mrb[0].mxu0
    %v4056 = vadd.f32 0.0, %v4055
    %v4057 = vpop.f32.mrb[0].mxu0
    %4058 = vmatprep.mubr.bf16.mxu0 %v3836
    %4059 = vmatmul.mubr.bf16.gmra.mrb[0].mxu0 %v3835
    %v4060 = vpop.f32.mrb[0].mxu0
    %v4061 = vadd.f32 0.0, %v4060
    %v4062 = vpop.f32.mrb[0].mxu0
    %v4063 = vpop.f32.mrb[0].mxu0
    %v4064 = vadd.f32 0.0, %v4063
    %v4065 = vpop.f32.mrb[0].mxu0
    %4066 = vdwg.mxu0
    %4067 = vmatprep.subr.bf16.mxu0 0
    %4068 = vmatpush1.bf16.msra.mxu0 %v3926
    %4069 = vmatprep.subr.bf16.mxu0 0
    %4070 = vmatpush1.bf16.msra.mxu0 %v3927
    %4071 = vmatprep.subr.bf16.mxu0 0
    %4072 = vmatpush1.bf16.msra.mxu0 0
    %4073 = vmatprep.subr.bf16.mxu0 0
    %4074 = vmatpush1.bf16.msra.mxu0 0
    %4075 = vmatprep.subr.bf16.mxu0 0
    %4076 = vmatpush1.bf16.msra.mxu0 0
    %4077 = vmatprep.subr.bf16.mxu0 0
    %4078 = vmatpush1.bf16.msra.mxu0 0
    %4079 = vmatprep.subr.bf16.mxu0 0
    %4080 = vmatpush1.bf16.msra.mxu0 0
    %4081 = vmatprep.subr.bf16.mxu0 0
    %4082 = vmatpush1.bf16.msra.mxu0 0
    %4083 = vmatprep.subr.bf16.mxu0 0
    %4084 = vmatpush1.bf16.msra.mxu0 0
    %4085 = vmatprep.subr.bf16.mxu0 0
    %4086 = vmatpush1.bf16.msra.mxu0 0
    %4087 = vmatprep.subr.bf16.mxu0 0
    %4088 = vmatpush1.bf16.msra.mxu0 0
    %4089 = vmatprep.subr.bf16.mxu0 0
    %4090 = vmatpush1.bf16.msra.mxu0 0
    %4091 = vmatprep.subr.bf16.mxu0 0
    %4092 = vmatpush1.bf16.msra.mxu0 0
    %4093 = vmatprep.subr.bf16.mxu0 0
    %4094 = vmatpush1.bf16.msra.mxu0 0
    %4095 = vmatprep.subr.bf16.mxu0 0
    %4096 = vmatpush1.bf16.msra.mxu0 0
    %4097 = vmatprep.subr.bf16.mxu0 0
    %4098 = vmatpush1.bf16.msra.mxu0 0
    %4099 = vmatprep.mubr.bf16.mxu0 0
    %4100 = vmatmul.mubr.bf16.gmra.mrb[0].mxu0 %v3947
    %v4101 = vpop.f32.mrb[0].mxu0
    %v4102 = vadd.f32 %v4005, %v4101
    %v4103 = vpop.f32.mrb[0].mxu0
    %v4104 = vpop.f32.mrb[0].mxu0
    %v4105 = vadd.f32 %v4008, %v4104
    %v4106 = vpop.f32.mrb[0].mxu0
    %4107 = vmatprep.mubr.bf16.mxu0 0
    %4108 = vmatmul.mubr.bf16.gmra.mrb[0].mxu0 %v3950
    %v4109 = vpop.f32.mrb[0].mxu0
    %v4110 = vadd.f32 %v4013, %v4109
    %v4111 = vpop.f32.mrb[0].mxu0
    %v4112 = vpop.f32.mrb[0].mxu0
    %v4113 = vadd.f32 %v4016, %v4112
    %v4114 = vpop.f32.mrb[0].mxu0
    %4115 = vmatprep.mubr.bf16.mxu0 0
    %4116 = vmatmul.mubr.bf16.gmra.mrb[0].mxu0 %v3953
    %v4117 = vpop.f32.mrb[0].mxu0
    %v4118 = vadd.f32 %v4021, %v4117
    %v4119 = vpop.f32.mrb[0].mxu0
    %v4120 = vpop.f32.mrb[0].mxu0
    %v4121 = vadd.f32 %v4024, %v4120
    %v4122 = vpop.f32.mrb[0].mxu0
    %4123 = vmatprep.mubr.bf16.mxu0 0
    %4124 = vmatmul.mubr.bf16.gmra.mrb[0].mxu0 %v3956
    %v4125 = vpop.f32.mrb[0].mxu0
    %v4126 = vadd.f32 %v4029, %v4125
    %v4127 = vpop.f32.mrb[0].mxu0
    %v4128 = vpop.f32.mrb[0].mxu0
    %v4129 = vadd.f32 %v4032, %v4128
    %v4130 = vpop.f32.mrb[0].mxu0
    %4131 = vmatprep.mubr.bf16.mxu0 0
    %4132 = vmatmul.mubr.bf16.gmra.mrb[0].mxu0 %v3959
    %v4133 = vpop.f32.mrb[0].mxu0
    %v4134 = vadd.f32 %v4037, %v4133
    %v4135 = vpop.f32.mrb[0].mxu0
    %v4136 = vpop.f32.mrb[0].mxu0
    %v4137 = vadd.f32 %v4040, %v4136
    %v4138 = vpop.f32.mrb[0].mxu0
    %4139 = vmatprep.mubr.bf16.mxu0 0
    %4140 = vmatmul.mubr.bf16.gmra.mrb[0].mxu0 %v3962
    %v4141 = vpop.f32.mrb[0].mxu0
    %v4142 = vadd.f32 %v4045, %v4141
    %v4143 = vpop.f32.mrb[0].mxu0
    %v4144 = vpop.f32.mrb[0].mxu0
    %v4145 = vadd.f32 %v4048, %v4144
    %v4146 = vpop.f32.mrb[0].mxu0
    %4147 = vmatprep.mubr.bf16.mxu0 0
    %4148 = vmatmul.mubr.bf16.gmra.mrb[0].mxu0 %v3965
    %v4149 = vpop.f32.mrb[0].mxu0
    %v4150 = vadd.f32 %v4053, %v4149
    %v4151 = vpop.f32.mrb[0].mxu0
    %v4152 = vpop.f32.mrb[0].mxu0
    %v4153 = vadd.f32 %v4056, %v4152
    %v4154 = vpop.f32.mrb[0].mxu0
    %4155 = vmatprep.mubr.bf16.mxu0 0
    %4156 = vmatmul.mubr.bf16.gmra.mrb[0].mxu0 %v3968
    %v4157 = vpop.f32.mrb[0].mxu0
    %v4158 = vadd.f32 %v4061, %v4157
    %v4159 = vpop.f32.mrb[0].mxu0
    %v4160 = vpop.f32.mrb[0].mxu0
    %v4161 = vadd.f32 %v4064, %v4160
    %v4162 = vpop.f32.mrb[0].mxu0
    %4163 = vdwg.mxu0
    %v4164 = vsel %vm53, %v4102, 0.0
    %v4165 = vsel %vm53, %v4105, 0.0
    %v4166 = vadd.f32 %v4164, %v4165
    %v4167 = vsel %vm53, %v4110, 0.0
    %v4168 = vadd.f32 %v4166, %v4167
    %v4169 = vsel %vm53, %v4113, 0.0
    %v4170 = vadd.f32 %v4168, %v4169
    %v4171 = vsel %vm53, %v4118, 0.0
    %v4172 = vadd.f32 %v4170, %v4171
    %v4173 = vsel %vm53, %v4121, 0.0
    %v4174 = vadd.f32 %v4172, %v4173
    %v4175 = vsel %vm53, %v4126, 0.0
    %v4176 = vadd.f32 %v4174, %v4175
    %v4177 = vsel %vm53, %v4129, 0.0
    %v4178 = vadd.f32 %v4176, %v4177
    %v4179 = vsel %vm53, %v4134, 0.0
    %v4180 = vadd.f32 %v4178, %v4179
    %v4181 = vsel %vm53, %v4137, 0.0
    %v4182 = vadd.f32 %v4180, %v4181
    %v4183 = vsel %vm53, %v4142, 0.0
    %v4184 = vadd.f32 %v4182, %v4183
    %v4185 = vsel %vm53, %v4145, 0.0
    %v4186 = vadd.f32 %v4184, %v4185
    %v4187 = vsel %vm53, %v4150, 0.0
    %v4188 = vadd.f32 %v4186, %v4187
    %v4189 = vsel %vm53, %v4153, 0.0
    %v4190 = vadd.f32 %v4188, %v4189
    %v4191 = vsel %vm53, %v4158, 0.0
    %v4192 = vadd.f32 %v4190, %v4191
    %v4193 = vsel %vm53, %v4161, 0.0
    %v4194 = vadd.f32 %v4192, %v4193
    %v4195 = vrot.slane %v4194, 4
    %v4196 = vadd.f32 %v4194, %v4195
    %v4197 = vrot.slane %v4196, 2
    %v4198 = vadd.f32 %v4196, %v4197
    %v4199 = vrot.slane %v4198, 1
    %v4200 = vadd.f32 %v4198, %v4199
    %v4201 = vmul.f32 %v4200, 0.0078125
    %v4202 = vmul.f32 %v4102, %v4102
    %v4203 = vmul.f32 %v4105, %v4105
    %v4204 = vmul.f32 %v4110, %v4110
    %v4205 = vmul.f32 %v4113, %v4113
    %v4206 = vmul.f32 %v4118, %v4118
    %v4207 = vmul.f32 %v4121, %v4121
    %v4208 = vmul.f32 %v4126, %v4126
    %v4209 = vmul.f32 %v4129, %v4129
    %v4210 = vmul.f32 %v4134, %v4134
    %v4211 = vmul.f32 %v4137, %v4137
    %v4212 = vmul.f32 %v4142, %v4142
    %v4213 = vmul.f32 %v4145, %v4145
    %v4214 = vmul.f32 %v4150, %v4150
    %v4215 = vmul.f32 %v4153, %v4153
    %v4216 = vmul.f32 %v4158, %v4158
    %v4217 = vmul.f32 %v4161, %v4161
    %v4218 = vsel %vm53, %v4202, 0.0
    %v4219 = vsel %vm53, %v4203, 0.0
    %v4220 = vadd.f32 %v4218, %v4219
    %v4221 = vsel %vm53, %v4204, 0.0
    %v4222 = vadd.f32 %v4220, %v4221
    %v4223 = vsel %vm53, %v4205, 0.0
    %v4224 = vadd.f32 %v4222, %v4223
    %v4225 = vsel %vm53, %v4206, 0.0
    %v4226 = vadd.f32 %v4224, %v4225
    %v4227 = vsel %vm53, %v4207, 0.0
    %v4228 = vadd.f32 %v4226, %v4227
    %v4229 = vsel %vm53, %v4208, 0.0
    %v4230 = vadd.f32 %v4228, %v4229
    %v4231 = vsel %vm53, %v4209, 0.0
    %v4232 = vadd.f32 %v4230, %v4231
    %v4233 = vsel %vm53, %v4210, 0.0
    %v4234 = vadd.f32 %v4232, %v4233
    %v4235 = vsel %vm53, %v4211, 0.0
    %v4236 = vadd.f32 %v4234, %v4235
    %v4237 = vsel %vm53, %v4212, 0.0
    %v4238 = vadd.f32 %v4236, %v4237
    %v4239 = vsel %vm53, %v4213, 0.0
    %v4240 = vadd.f32 %v4238, %v4239
    %v4241 = vsel %vm53, %v4214, 0.0
    %v4242 = vadd.f32 %v4240, %v4241
    %v4243 = vsel %vm53, %v4215, 0.0
    %v4244 = vadd.f32 %v4242, %v4243
    %v4245 = vsel %vm53, %v4216, 0.0
    %v4246 = vadd.f32 %v4244, %v4245
    %v4247 = vsel %vm53, %v4217, 0.0
    %v4248 = vadd.f32 %v4246, %v4247
    %v4249 = vrot.slane %v4248, 4
    %v4250 = vadd.f32 %v4248, %v4249
    %v4251 = vrot.slane %v4250, 2
    %v4252 = vadd.f32 %v4250, %v4251
    %v4253 = vrot.slane %v4252, 1
    %v4254 = vadd.f32 %v4252, %v4253
    %v4255 = vmul.f32 %v4254, 0.0078125
    %v4256 = vmul.f32 %v4201, %v4201
    %v4257 = vsub.f32 %v4255, %v4256
    %v4258 = vadd.f32 %v4257, 1e-05
    %v4259 = vrsqrt.pop %v4258
    %v4260 = vmul.f32 %v3294, %v4259
    %v4261 = vmul.f32 %v4201, %v4260
    %v4263 = vrot.slane %v4261, 7
    %v4265 = vsub.f32 %v3294, %v4263
    %v4266 = vlaneseq
    %v4267 = vshrl.u32 %v4266, 7
    %v4268 = vsub.s32 0, %v4267
    %v4269 = vrot.slane %v4260, %v4268
    %v4270 = vmul.f32 %v4102, %v4269
    %v4271 = vmul.f32 %v4105, %v4269
    %v4272 = vmul.f32 %v4110, %v4269
    %v4273 = vmul.f32 %v4113, %v4269
    %v4274 = vmul.f32 %v4118, %v4269
    %v4275 = vmul.f32 %v4121, %v4269
    %v4276 = vmul.f32 %v4126, %v4269
    %v4277 = vmul.f32 %v4129, %v4269
    %v4278 = vmul.f32 %v4134, %v4269
    %v4279 = vmul.f32 %v4137, %v4269
    %v4280 = vmul.f32 %v4142, %v4269
    %v4281 = vmul.f32 %v4145, %v4269
    %v4282 = vmul.f32 %v4150, %v4269
    %v4283 = vmul.f32 %v4153, %v4269
    %v4284 = vmul.f32 %v4158, %v4269
    %v4285 = vmul.f32 %v4161, %v4269
    %v4286 = vlaneseq
    %v4287 = vshrl.u32 %v4286, 7
    %v4288 = vsub.s32 1, %v4287
    %v4289 = vrot.slane %v4265, %v4288
    %v4290 = vadd.f32 %v4270, %v4289
    %v4291 = vadd.f32 %v4271, %v4289
    %v4292 = vadd.f32 %v4272, %v4289
    %v4293 = vadd.f32 %v4273, %v4289
    %v4294 = vadd.f32 %v4274, %v4289
    %v4295 = vadd.f32 %v4275, %v4289
    %v4296 = vadd.f32 %v4276, %v4289
    %v4297 = vadd.f32 %v4277, %v4289
    %v4298 = vadd.f32 %v4278, %v4289
    %v4299 = vadd.f32 %v4279, %v4289
    %v4300 = vadd.f32 %v4280, %v4289
    %v4301 = vadd.f32 %v4281, %v4289
    %v4302 = vadd.f32 %v4282, %v4289
    %v4303 = vadd.f32 %v4283, %v4289
    %v4304 = vadd.f32 %v4284, %v4289
    %v4305 = vadd.f32 %v4285, %v4289
    %v4306 = vmax.f32 %v4290, 0.0
    %v4307 = vmax.f32 %v4291, 0.0
    %v4308 = vmax.f32 %v4292, 0.0
    %v4309 = vmax.f32 %v4293, 0.0
    %v4310 = vmax.f32 %v4294, 0.0
    %v4311 = vmax.f32 %v4295, 0.0
    %v4312 = vmax.f32 %v4296, 0.0
    %v4313 = vmax.f32 %v4297, 0.0
    %v4314 = vmax.f32 %v4298, 0.0
    %v4315 = vmax.f32 %v4299, 0.0
    %v4316 = vmax.f32 %v4300, 0.0
    %v4317 = vmax.f32 %v4301, 0.0
    %v4318 = vmax.f32 %v4302, 0.0
    %v4319 = vmax.f32 %v4303, 0.0
    %v4320 = vmax.f32 %v4304, 0.0
    %v4321 = vmax.f32 %v4305, 0.0
    %4322 = vst.msk [vmem:[%s131 + $0x8] sm:$0xff] %vm53, %v4306
    %4323 = vst.msk [vmem:[%s131 + $0x20] sm:$0xff] %vm53, %v4307
    %4324 = vst.msk [vmem:[%s131 + $0x38] sm:$0xff] %vm53, %v4308
    %4325 = vst.msk [vmem:[%s131 + $0x50] sm:$0xff] %vm53, %v4309
    %4326 = vst.msk [vmem:[%s131 + $0x68] sm:$0xff] %vm53, %v4310
    %4327 = vst.msk [vmem:[%s131 + $0x80] sm:$0xff] %vm53, %v4311
    %4328 = vst.msk [vmem:[%s131 + $0x98] sm:$0xff] %vm53, %v4312
    %4329 = vst.msk [vmem:[%s131 + $0xb0] sm:$0xff] %vm53, %v4313
    %4330 = vst.msk [vmem:[%s131 + $0xf8] sm:$0xff] %vm53, %v4314
    %4331 = vst.msk [vmem:[%s131 + $0x110] sm:$0xff] %vm53, %v4315
    %4332 = vst.msk [vmem:[%s131 + $0x128] sm:$0xff] %vm53, %v4316
    %4333 = vst.msk [vmem:[%s131 + $0x140] sm:$0xff] %vm53, %v4317
    %4334 = vst.msk [vmem:[%s131 + $0x158] sm:$0xff] %vm53, %v4318
    %4335 = vst.msk [vmem:[%s131 + $0x170] sm:$0xff] %vm53, %v4319
    %4336 = vst.msk [vmem:[%s131 + $0x188] sm:$0xff] %vm53, %v4320
    %4337 = vst.msk [vmem:[%s131 + $0x1a0] sm:$0xff] %vm53, %v4321
    %s4338 = scalar_lea.vmem %s3, 432
    %v4339 = vld [vmem:[%s4338] sm:$0xf]
    %v4340 = vld [vmem:[%s4338 + $0x4] sm:$0xf]
    %v4341 = vld [vmem:[%s4338 + $0x8] sm:$0xf]
    %v4342 = vld [vmem:[%s4338 + $0xc] sm:$0xf]
    %v4343 = vld [vmem:[%s4338 + $0x10] sm:$0xf]
    %v4344 = vld [vmem:[%s4338 + $0x14] sm:$0xf]
    %v4345 = vld [vmem:[%s4338 + $0x18] sm:$0xf]
    %v4346 = vld [vmem:[%s4338 + $0x1c] sm:$0xf]
    %v4347 = vld [vmem:[%s4338 + $0x20] sm:$0xf]
    %v4348 = vld [vmem:[%s4338 + $0x24] sm:$0xf]
    %v4349 = vld [vmem:[%s4338 + $0x28] sm:$0xf]
    %v4350 = vld [vmem:[%s4338 + $0x2c] sm:$0xf]
    %v4351 = vld [vmem:[%s4338 + $0x30] sm:$0xf]
    %v4352 = vld [vmem:[%s4338 + $0x34] sm:$0xf]
    %v4353 = vld [vmem:[%s4338 + $0x38] sm:$0xf]
    %v4354 = vld [vmem:[%s4338 + $0x3c] sm:$0xf]
    %v4355 = vld [vmem:[%s4338 + $0x40] sm:$0xf]
    %v4356 = vld [vmem:[%s4338 + $0x44] sm:$0xf]
    %v4357 = vld [vmem:[%s4338 + $0x48] sm:$0xf]
    %v4358 = vld [vmem:[%s4338 + $0x4c] sm:$0xf]
    %v4359 = vld [vmem:[%s4338 + $0x50] sm:$0xf]
    %v4360 = vld [vmem:[%s4338 + $0x54] sm:$0xf]
    %v4361 = vld [vmem:[%s4338 + $0x58] sm:$0xf]
    %v4362 = vld [vmem:[%s4338 + $0x5c] sm:$0xf]
    %v4363 = vld [vmem:[%s4338 + $0x60] sm:$0xf]
    %v4364 = vld [vmem:[%s4338 + $0x64] sm:$0xf]
    %v4365 = vld [vmem:[%s4338 + $0x68] sm:$0xf]
    %v4366 = vld [vmem:[%s4338 + $0x6c] sm:$0xf]
    %v4367 = vld [vmem:[%s4338 + $0x70] sm:$0xf]
    %v4368 = vld [vmem:[%s4338 + $0x74] sm:$0xf]
    %v4369 = vld [vmem:[%s4338 + $0x78] sm:$0xf]
    %v4370 = vld [vmem:[%s4338 + $0x7c] sm:$0xf]
    %v4371 = vld [vmem:[%s4338 + $0x80] sm:$0xf]
    %v4372 = vld [vmem:[%s4338 + $0x84] sm:$0xf]
    %v4373 = vld [vmem:[%s4338 + $0x88] sm:$0xf]
    %v4374 = vld [vmem:[%s4338 + $0x8c] sm:$0xf]
    %v4375 = vld [vmem:[#allocation2 + $0x7] sm:$0xff]
    %v4376 = vld [vmem:[#allocation2 + $0x1f] sm:$0xff]
    %v4377 = vld [vmem:[#allocation2 + $0x37] sm:$0xff]
    %v4378 = vld [vmem:[#allocation2 + $0x4f] sm:$0xff]
    %v4379 = vld [vmem:[#allocation2 + $0x67] sm:$0xff]
    %v4380 = vld [vmem:[#allocation2 + $0x7f] sm:$0xff]
    %v4381 = vld [vmem:[#allocation2 + $0x97] sm:$0xff]
    %v4382 = vld [vmem:[#allocation2 + $0xaf] sm:$0xff]
    %v4383 = vld [vmem:[#allocation2 + $0xf7] sm:$0xff]
    %v4384 = vld [vmem:[#allocation2 + $0x10f] sm:$0xff]
    %v4385 = vld [vmem:[#allocation2 + $0x127] sm:$0xff]
    %v4386 = vld [vmem:[#allocation2 + $0x13f] sm:$0xff]
    %v4387 = vld [vmem:[#allocation2 + $0x157] sm:$0xff]
    %v4388 = vld [vmem:[#allocation2 + $0x16f] sm:$0xff]
    %v4389 = vld [vmem:[#allocation2 + $0x187] sm:$0xff]
    %v4390 = vld [vmem:[#allocation2 + $0x19f] sm:$0xff]
    %v4391 = vpack.c.bf16 %v4376, %v4375
    %v4392 = vpack.c.bf16 %v4378, %v4377
    %v4393 = vpack.c.bf16 %v4380, %v4379
    %v4394 = vpack.c.bf16 %v4382, %v4381
    %v4395 = vpack.c.bf16 %v4384, %v4383
    %v4396 = vpack.c.bf16 %v4386, %v4385
    %v4397 = vpack.c.bf16 %v4388, %v4387
    %v4398 = vpack.c.bf16 %v4390, %v4389
    %4399 = vst.msk [vmem:[#allocation3] sm:$0xff] %vm53, %v4391
    %4400 = vst.msk [vmem:[#allocation3 + $0x18] sm:$0xff] %vm53, %v4392
    %4401 = vst.msk [vmem:[#allocation3 + $0x30] sm:$0xff] %vm53, %v4393
    %4402 = vst.msk [vmem:[#allocation3 + $0x48] sm:$0xff] %vm53, %v4394
    %4403 = vst.msk [vmem:[#allocation3 + $0x60] sm:$0xff] %vm53, %v4395
    %4404 = vst.msk [vmem:[#allocation3 + $0x78] sm:$0xff] %vm53, %v4396
    %4405 = vst.msk [vmem:[#allocation3 + $0x90] sm:$0xff] %vm53, %v4397
    %4406 = vst.msk [vmem:[#allocation3 + $0xa8] sm:$0xff] %vm53, %v4398
    %v4407 = vld [vmem:[#allocation2 + $0x8] sm:$0xff]
    %v4408 = vld [vmem:[#allocation2 + $0x20] sm:$0xff]
    %v4409 = vld [vmem:[#allocation2 + $0x38] sm:$0xff]
    %v4410 = vld [vmem:[#allocation2 + $0x50] sm:$0xff]
    %v4411 = vld [vmem:[#allocation2 + $0x68] sm:$0xff]
    %v4412 = vld [vmem:[#allocation2 + $0x80] sm:$0xff]
    %v4413 = vld [vmem:[#allocation2 + $0x98] sm:$0xff]
    %v4414 = vld [vmem:[#allocation2 + $0xb0] sm:$0xff]
    %v4415 = vld [vmem:[#allocation2 + $0xf8] sm:$0xff]
    %v4416 = vld [vmem:[#allocation2 + $0x110] sm:$0xff]
    %v4417 = vld [vmem:[#allocation2 + $0x128] sm:$0xff]
    %v4418 = vld [vmem:[#allocation2 + $0x140] sm:$0xff]
    %v4419 = vld [vmem:[#allocation2 + $0x158] sm:$0xff]
    %v4420 = vld [vmem:[#allocation2 + $0x170] sm:$0xff]
    %v4421 = vld [vmem:[#allocation2 + $0x188] sm:$0xff]
    %v4422 = vld [vmem:[#allocation2 + $0x1a0] sm:$0xff]
    %v4423 = vpack.c.bf16 %v4408, %v4407
    %v4424 = vpack.c.bf16 %v4410, %v4409
    %v4425 = vpack.c.bf16 %v4412, %v4411
    %v4426 = vpack.c.bf16 %v4414, %v4413
    %v4427 = vpack.c.bf16 %v4416, %v4415
    %v4428 = vpack.c.bf16 %v4418, %v4417
    %v4429 = vpack.c.bf16 %v4420, %v4419
    %v4430 = vpack.c.bf16 %v4422, %v4421
    %4439 = vrot.lane.b32.xlu0 %v4423, 32
    %v4440 = vpop.permute.xlu0 %4439
    %4441 = vrot.lane.b32.xlu0 %v4424, 32
    %v4442 = vpop.permute.xlu0 %4441
    %4443 = vrot.lane.b32.xlu0 %v4425, 32
    %v4444 = vpop.permute.xlu0 %4443
    %4445 = vrot.lane.b32.xlu0 %v4426, 32
    %v4446 = vpop.permute.xlu0 %4445
    %4447 = vrot.lane.b32.xlu0 %v4427, 32
    %v4448 = vpop.permute.xlu0 %4447
    %4449 = vrot.lane.b32.xlu0 %v4428, 32
    %v4450 = vpop.permute.xlu0 %4449
    %4451 = vrot.lane.b32.xlu0 %v4429, 32
    %v4452 = vpop.permute.xlu0 %4451
    %4453 = vrot.lane.b32.xlu0 %v4430, 32
    %v4454 = vpop.permute.xlu0 %4453
    %4463 = vst.msk [vmem:[#allocation3] sm:$0xff] %vm273, %v4440
    %4464 = vst.msk [vmem:[#allocation3 + $0x18] sm:$0xff] %vm273, %v4442
    %4465 = vst.msk [vmem:[#allocation3 + $0x30] sm:$0xff] %vm273, %v4444
    %4466 = vst.msk [vmem:[#allocation3 + $0x48] sm:$0xff] %vm273, %v4446
    %4467 = vst.msk [vmem:[#allocation3 + $0x60] sm:$0xff] %vm273, %v4448
    %4468 = vst.msk [vmem:[#allocation3 + $0x78] sm:$0xff] %vm273, %v4450
    %4469 = vst.msk [vmem:[#allocation3 + $0x90] sm:$0xff] %vm273, %v4452
    %4470 = vst.msk [vmem:[#allocation3 + $0xa8] sm:$0xff] %vm273, %v4454
    %v4471 = vld [vmem:[#allocation2 + $0x9] sm:$0xff]
    %v4472 = vld [vmem:[#allocation2 + $0x21] sm:$0xff]
    %v4473 = vld [vmem:[#allocation2 + $0x39] sm:$0xff]
    %v4474 = vld [vmem:[#allocation2 + $0x51] sm:$0xff]
    %v4475 = vld [vmem:[#allocation2 + $0x69] sm:$0xff]
    %v4476 = vld [vmem:[#allocation2 + $0x81] sm:$0xff]
    %v4477 = vld [vmem:[#allocation2 + $0x99] sm:$0xff]
    %v4478 = vld [vmem:[#allocation2 + $0xb1] sm:$0xff]
    %v4479 = vld [vmem:[#allocation2 + $0xf9] sm:$0xff]
    %v4480 = vld [vmem:[#allocation2 + $0x111] sm:$0xff]
    %v4481 = vld [vmem:[#allocation2 + $0x129] sm:$0xff]
    %v4482 = vld [vmem:[#allocation2 + $0x141] sm:$0xff]
    %v4483 = vld [vmem:[#allocation2 + $0x159] sm:$0xff]
    %v4484 = vld [vmem:[#allocation2 + $0x171] sm:$0xff]
    %v4485 = vld [vmem:[#allocation2 + $0x189] sm:$0xff]
    %v4486 = vld [vmem:[#allocation2 + $0x1a1] sm:$0xff]
    %v4487 = vpack.c.bf16 %v4472, %v4471
    %v4488 = vpack.c.bf16 %v4474, %v4473
    %v4489 = vpack.c.bf16 %v4476, %v4475
    %v4490 = vpack.c.bf16 %v4478, %v4477
    %v4491 = vpack.c.bf16 %v4480, %v4479
    %v4492 = vpack.c.bf16 %v4482, %v4481
    %v4493 = vpack.c.bf16 %v4484, %v4483
    %v4494 = vpack.c.bf16 %v4486, %v4485
    %4503 = vrot.lane.b32.xlu0 %v4487, 64
    %v4504 = vpop.permute.xlu0 %4503
    %4505 = vrot.lane.b32.xlu0 %v4488, 64
    %v4506 = vpop.permute.xlu0 %4505
    %4507 = vrot.lane.b32.xlu0 %v4489, 64
    %v4508 = vpop.permute.xlu0 %4507
    %4509 = vrot.lane.b32.xlu0 %v4490, 64
    %v4510 = vpop.permute.xlu0 %4509
    %4511 = vrot.lane.b32.xlu0 %v4491, 64
    %v4512 = vpop.permute.xlu0 %4511
    %4513 = vrot.lane.b32.xlu0 %v4492, 64
    %v4514 = vpop.permute.xlu0 %4513
    %4515 = vrot.lane.b32.xlu0 %v4493, 64
    %v4516 = vpop.permute.xlu0 %4515
    %4517 = vrot.lane.b32.xlu0 %v4494, 64
    %v4518 = vpop.permute.xlu0 %4517
    %4527 = vst.msk [vmem:[#allocation3] sm:$0xff] %vm338, %v4504
    %4528 = vst.msk [vmem:[#allocation3 + $0x18] sm:$0xff] %vm338, %v4506
    %4529 = vst.msk [vmem:[#allocation3 + $0x30] sm:$0xff] %vm338, %v4508
    %4530 = vst.msk [vmem:[#allocation3 + $0x48] sm:$0xff] %vm338, %v4510
    %4531 = vst.msk [vmem:[#allocation3 + $0x60] sm:$0xff] %vm338, %v4512
    %4532 = vst.msk [vmem:[#allocation3 + $0x78] sm:$0xff] %vm338, %v4514
    %4533 = vst.msk [vmem:[#allocation3 + $0x90] sm:$0xff] %vm338, %v4516
    %4534 = vst.msk [vmem:[#allocation3 + $0xa8] sm:$0xff] %vm338, %v4518
    %v4535 = vld [vmem:[%s131 + $0x7] sm:$0xff]
    %v4536 = vld [vmem:[%s131 + $0x1f] sm:$0xff]
    %v4537 = vld [vmem:[%s131 + $0x37] sm:$0xff]
    %v4538 = vld [vmem:[%s131 + $0x4f] sm:$0xff]
    %v4539 = vld [vmem:[%s131 + $0x67] sm:$0xff]
    %v4540 = vld [vmem:[%s131 + $0x7f] sm:$0xff]
    %v4541 = vld [vmem:[%s131 + $0x97] sm:$0xff]
    %v4542 = vld [vmem:[%s131 + $0xaf] sm:$0xff]
    %v4543 = vld [vmem:[%s131 + $0xf7] sm:$0xff]
    %v4544 = vld [vmem:[%s131 + $0x10f] sm:$0xff]
    %v4545 = vld [vmem:[%s131 + $0x127] sm:$0xff]
    %v4546 = vld [vmem:[%s131 + $0x13f] sm:$0xff]
    %v4547 = vld [vmem:[%s131 + $0x157] sm:$0xff]
    %v4548 = vld [vmem:[%s131 + $0x16f] sm:$0xff]
    %v4549 = vld [vmem:[%s131 + $0x187] sm:$0xff]
    %v4550 = vld [vmem:[%s131 + $0x19f] sm:$0xff]
    %v4551 = vpack.c.bf16 %v4536, %v4535
    %v4552 = vpack.c.bf16 %v4538, %v4537
    %v4553 = vpack.c.bf16 %v4540, %v4539
    %v4554 = vpack.c.bf16 %v4542, %v4541
    %v4555 = vpack.c.bf16 %v4544, %v4543
    %v4556 = vpack.c.bf16 %v4546, %v4545
    %v4557 = vpack.c.bf16 %v4548, %v4547
    %v4558 = vpack.c.bf16 %v4550, %v4549
    %4567 = vrot.lane.b32.xlu0 %v4551, 96
    %v4568 = vpop.permute.xlu0 %4567
    %4569 = vrot.lane.b32.xlu0 %v4552, 96
    %v4570 = vpop.permute.xlu0 %4569
    %4571 = vrot.lane.b32.xlu0 %v4553, 96
    %v4572 = vpop.permute.xlu0 %4571
    %4573 = vrot.lane.b32.xlu0 %v4554, 96
    %v4574 = vpop.permute.xlu0 %4573
    %4575 = vrot.lane.b32.xlu0 %v4555, 96
    %v4576 = vpop.permute.xlu0 %4575
    %4577 = vrot.lane.b32.xlu0 %v4556, 96
    %v4578 = vpop.permute.xlu0 %4577
    %4579 = vrot.lane.b32.xlu0 %v4557, 96
    %v4580 = vpop.permute.xlu0 %4579
    %4581 = vrot.lane.b32.xlu0 %v4558, 96
    %v4582 = vpop.permute.xlu0 %4581
    %4591 = vst.msk [vmem:[#allocation3] sm:$0xff] %vm403, %v4568
    %4592 = vst.msk [vmem:[#allocation3 + $0x18] sm:$0xff] %vm403, %v4570
    %4593 = vst.msk [vmem:[#allocation3 + $0x30] sm:$0xff] %vm403, %v4572
    %4594 = vst.msk [vmem:[#allocation3 + $0x48] sm:$0xff] %vm403, %v4574
    %4595 = vst.msk [vmem:[#allocation3 + $0x60] sm:$0xff] %vm403, %v4576
    %4596 = vst.msk [vmem:[#allocation3 + $0x78] sm:$0xff] %vm403, %v4578
    %4597 = vst.msk [vmem:[#allocation3 + $0x90] sm:$0xff] %vm403, %v4580
    %4598 = vst.msk [vmem:[#allocation3 + $0xa8] sm:$0xff] %vm403, %v4582
    %v4599 = vld [vmem:[%s131 + $0x8] sm:$0xff]
    %v4600 = vld [vmem:[%s131 + $0x20] sm:$0xff]
    %v4601 = vld [vmem:[%s131 + $0x38] sm:$0xff]
    %v4602 = vld [vmem:[%s131 + $0x50] sm:$0xff]
    %v4603 = vld [vmem:[%s131 + $0x68] sm:$0xff]
    %v4604 = vld [vmem:[%s131 + $0x80] sm:$0xff]
    %v4605 = vld [vmem:[%s131 + $0x98] sm:$0xff]
    %v4606 = vld [vmem:[%s131 + $0xb0] sm:$0xff]
    %v4607 = vld [vmem:[%s131 + $0xf8] sm:$0xff]
    %v4608 = vld [vmem:[%s131 + $0x110] sm:$0xff]
    %v4609 = vld [vmem:[%s131 + $0x128] sm:$0xff]
    %v4610 = vld [vmem:[%s131 + $0x140] sm:$0xff]
    %v4611 = vld [vmem:[%s131 + $0x158] sm:$0xff]
    %v4612 = vld [vmem:[%s131 + $0x170] sm:$0xff]
    %v4613 = vld [vmem:[%s131 + $0x188] sm:$0xff]
    %v4614 = vld [vmem:[%s131 + $0x1a0] sm:$0xff]
    %v4615 = vpack.c.bf16 %v4600, %v4599
    %v4616 = vpack.c.bf16 %v4602, %v4601
    %v4617 = vpack.c.bf16 %v4604, %v4603
    %v4618 = vpack.c.bf16 %v4606, %v4605
    %v4619 = vpack.c.bf16 %v4608, %v4607
    %v4620 = vpack.c.bf16 %v4610, %v4609
    %v4621 = vpack.c.bf16 %v4612, %v4611
    %v4622 = vpack.c.bf16 %v4614, %v4613
    %4623 = vst.msk [vmem:[#allocation3 + $0x8] sm:$0xff] %vm53, %v4615
    %4624 = vst.msk [vmem:[#allocation3 + $0x20] sm:$0xff] %vm53, %v4616
    %4625 = vst.msk [vmem:[#allocation3 + $0x38] sm:$0xff] %vm53, %v4617
    %4626 = vst.msk [vmem:[#allocation3 + $0x50] sm:$0xff] %vm53, %v4618
    %4627 = vst.msk [vmem:[#allocation3 + $0x68] sm:$0xff] %vm53, %v4619
    %4628 = vst.msk [vmem:[#allocation3 + $0x80] sm:$0xff] %vm53, %v4620
    %4629 = vst.msk [vmem:[#allocation3 + $0x98] sm:$0xff] %vm53, %v4621
    %4630 = vst.msk [vmem:[#allocation3 + $0xb0] sm:$0xff] %vm53, %v4622
    %v4631 = vld [vmem:[%s131 + $0x9] sm:$0xff]
    %v4632 = vld [vmem:[%s131 + $0x21] sm:$0xff]
    %v4633 = vld [vmem:[%s131 + $0x39] sm:$0xff]
    %v4634 = vld [vmem:[%s131 + $0x51] sm:$0xff]
    %v4635 = vld [vmem:[%s131 + $0x69] sm:$0xff]
    %v4636 = vld [vmem:[%s131 + $0x81] sm:$0xff]
    %v4637 = vld [vmem:[%s131 + $0x99] sm:$0xff]
    %v4638 = vld [vmem:[%s131 + $0xb1] sm:$0xff]
    %v4639 = vld [vmem:[%s131 + $0xf9] sm:$0xff]
    %v4640 = vld [vmem:[%s131 + $0x111] sm:$0xff]
    %v4641 = vld [vmem:[%s131 + $0x129] sm:$0xff]
    %v4642 = vld [vmem:[%s131 + $0x141] sm:$0xff]
    %v4643 = vld [vmem:[%s131 + $0x159] sm:$0xff]
    %v4644 = vld [vmem:[%s131 + $0x171] sm:$0xff]
    %v4645 = vld [vmem:[%s131 + $0x189] sm:$0xff]
    %v4646 = vld [vmem:[%s131 + $0x1a1] sm:$0xff]
    %v4647 = vpack.c.bf16 %v4632, %v4631
    %v4648 = vpack.c.bf16 %v4634, %v4633
    %v4649 = vpack.c.bf16 %v4636, %v4635
    %v4650 = vpack.c.bf16 %v4638, %v4637
    %v4651 = vpack.c.bf16 %v4640, %v4639
    %v4652 = vpack.c.bf16 %v4642, %v4641
    %v4653 = vpack.c.bf16 %v4644, %v4643
    %v4654 = vpack.c.bf16 %v4646, %v4645
    %4663 = vrot.lane.b32.xlu0 %v4647, 32
    %v4664 = vpop.permute.xlu0 %4663
    %4665 = vrot.lane.b32.xlu0 %v4648, 32
    %v4666 = vpop.permute.xlu0 %4665
    %4667 = vrot.lane.b32.xlu0 %v4649, 32
    %v4668 = vpop.permute.xlu0 %4667
    %4669 = vrot.lane.b32.xlu0 %v4650, 32
    %v4670 = vpop.permute.xlu0 %4669
    %4671 = vrot.lane.b32.xlu0 %v4651, 32
    %v4672 = vpop.permute.xlu0 %4671
    %4673 = vrot.lane.b32.xlu0 %v4652, 32
    %v4674 = vpop.permute.xlu0 %4673
    %4675 = vrot.lane.b32.xlu0 %v4653, 32
    %v4676 = vpop.permute.xlu0 %4675
    %4677 = vrot.lane.b32.xlu0 %v4654, 32
    %v4678 = vpop.permute.xlu0 %4677
    %4687 = vst.msk [vmem:[#allocation3 + $0x8] sm:$0xff] %vm273, %v4664
    %4688 = vst.msk [vmem:[#allocation3 + $0x20] sm:$0xff] %vm273, %v4666
    %4689 = vst.msk [vmem:[#allocation3 + $0x38] sm:$0xff] %vm273, %v4668
    %4690 = vst.msk [vmem:[#allocation3 + $0x50] sm:$0xff] %vm273, %v4670
    %4691 = vst.msk [vmem:[#allocation3 + $0x68] sm:$0xff] %vm273, %v4672
    %4692 = vst.msk [vmem:[#allocation3 + $0x80] sm:$0xff] %vm273, %v4674
    %4693 = vst.msk [vmem:[#allocation3 + $0x98] sm:$0xff] %vm273, %v4676
    %4694 = vst.msk [vmem:[#allocation3 + $0xb0] sm:$0xff] %vm273, %v4678
    %v4695 = vld [vmem:[%s508 + $0x7] sm:$0xff]
    %v4696 = vld [vmem:[%s508 + $0x1f] sm:$0xff]
    %v4697 = vld [vmem:[%s508 + $0x37] sm:$0xff]
    %v4698 = vld [vmem:[%s508 + $0x4f] sm:$0xff]
    %v4699 = vld [vmem:[%s508 + $0x67] sm:$0xff]
    %v4700 = vld [vmem:[%s508 + $0x7f] sm:$0xff]
    %v4701 = vld [vmem:[%s508 + $0x97] sm:$0xff]
    %v4702 = vld [vmem:[%s508 + $0xaf] sm:$0xff]
    %v4703 = vld [vmem:[%s508 + $0xf7] sm:$0xff]
    %v4704 = vld [vmem:[%s508 + $0x10f] sm:$0xff]
    %v4705 = vld [vmem:[%s508 + $0x127] sm:$0xff]
    %v4706 = vld [vmem:[%s508 + $0x13f] sm:$0xff]
    %v4707 = vld [vmem:[%s508 + $0x157] sm:$0xff]
    %v4708 = vld [vmem:[%s508 + $0x16f] sm:$0xff]
    %v4709 = vld [vmem:[%s508 + $0x187] sm:$0xff]
    %v4710 = vld [vmem:[%s508 + $0x19f] sm:$0xff]
    %v4711 = vpack.c.bf16 %v4696, %v4695
    %v4712 = vpack.c.bf16 %v4698, %v4697
    %v4713 = vpack.c.bf16 %v4700, %v4699
    %v4714 = vpack.c.bf16 %v4702, %v4701
    %v4715 = vpack.c.bf16 %v4704, %v4703
    %v4716 = vpack.c.bf16 %v4706, %v4705
    %v4717 = vpack.c.bf16 %v4708, %v4707
    %v4718 = vpack.c.bf16 %v4710, %v4709
    %4727 = vrot.lane.b32.xlu0 %v4711, 64
    %v4728 = vpop.permute.xlu0 %4727
    %4729 = vrot.lane.b32.xlu0 %v4712, 64
    %v4730 = vpop.permute.xlu0 %4729
    %4731 = vrot.lane.b32.xlu0 %v4713, 64
    %v4732 = vpop.permute.xlu0 %4731
    %4733 = vrot.lane.b32.xlu0 %v4714, 64
    %v4734 = vpop.permute.xlu0 %4733
    %4735 = vrot.lane.b32.xlu0 %v4715, 64
    %v4736 = vpop.permute.xlu0 %4735
    %4737 = vrot.lane.b32.xlu0 %v4716, 64
    %v4738 = vpop.permute.xlu0 %4737
    %4739 = vrot.lane.b32.xlu0 %v4717, 64
    %v4740 = vpop.permute.xlu0 %4739
    %4741 = vrot.lane.b32.xlu0 %v4718, 64
    %v4742 = vpop.permute.xlu0 %4741
    %4751 = vst.msk [vmem:[#allocation3 + $0x8] sm:$0xff] %vm338, %v4728
    %4752 = vst.msk [vmem:[#allocation3 + $0x20] sm:$0xff] %vm338, %v4730
    %4753 = vst.msk [vmem:[#allocation3 + $0x38] sm:$0xff] %vm338, %v4732
    %4754 = vst.msk [vmem:[#allocation3 + $0x50] sm:$0xff] %vm338, %v4734
    %4755 = vst.msk [vmem:[#allocation3 + $0x68] sm:$0xff] %vm338, %v4736
    %4756 = vst.msk [vmem:[#allocation3 + $0x80] sm:$0xff] %vm338, %v4738
    %4757 = vst.msk [vmem:[#allocation3 + $0x98] sm:$0xff] %vm338, %v4740
    %4758 = vst.msk [vmem:[#allocation3 + $0xb0] sm:$0xff] %vm338, %v4742
    %v4759 = vld [vmem:[%s508 + $0x8] sm:$0xff]
    %v4760 = vld [vmem:[%s508 + $0x20] sm:$0xff]
    %v4761 = vld [vmem:[%s508 + $0x38] sm:$0xff]
    %v4762 = vld [vmem:[%s508 + $0x50] sm:$0xff]
    %v4763 = vld [vmem:[%s508 + $0x68] sm:$0xff]
    %v4764 = vld [vmem:[%s508 + $0x80] sm:$0xff]
    %v4765 = vld [vmem:[%s508 + $0x98] sm:$0xff]
    %v4766 = vld [vmem:[%s508 + $0xb0] sm:$0xff]
    %v4767 = vld [vmem:[%s508 + $0xf8] sm:$0xff]
    %v4768 = vld [vmem:[%s508 + $0x110] sm:$0xff]
    %v4769 = vld [vmem:[%s508 + $0x128] sm:$0xff]
    %v4770 = vld [vmem:[%s508 + $0x140] sm:$0xff]
    %v4771 = vld [vmem:[%s508 + $0x158] sm:$0xff]
    %v4772 = vld [vmem:[%s508 + $0x170] sm:$0xff]
    %v4773 = vld [vmem:[%s508 + $0x188] sm:$0xff]
    %v4774 = vld [vmem:[%s508 + $0x1a0] sm:$0xff]
    %v4775 = vpack.c.bf16 %v4760, %v4759
    %v4776 = vpack.c.bf16 %v4762, %v4761
    %v4777 = vpack.c.bf16 %v4764, %v4763
    %v4778 = vpack.c.bf16 %v4766, %v4765
    %v4779 = vpack.c.bf16 %v4768, %v4767
    %v4780 = vpack.c.bf16 %v4770, %v4769
    %v4781 = vpack.c.bf16 %v4772, %v4771
    %v4782 = vpack.c.bf16 %v4774, %v4773
    %4791 = vrot.lane.b32.xlu0 %v4775, 96
    %v4792 = vpop.permute.xlu0 %4791
    %4793 = vrot.lane.b32.xlu0 %v4776, 96
    %v4794 = vpop.permute.xlu0 %4793
    %4795 = vrot.lane.b32.xlu0 %v4777, 96
    %v4796 = vpop.permute.xlu0 %4795
    %4797 = vrot.lane.b32.xlu0 %v4778, 96
    %v4798 = vpop.permute.xlu0 %4797
    %4799 = vrot.lane.b32.xlu0 %v4779, 96
    %v4800 = vpop.permute.xlu0 %4799
    %4801 = vrot.lane.b32.xlu0 %v4780, 96
    %v4802 = vpop.permute.xlu0 %4801
    %4803 = vrot.lane.b32.xlu0 %v4781, 96
    %v4804 = vpop.permute.xlu0 %4803
    %4805 = vrot.lane.b32.xlu0 %v4782, 96
    %v4806 = vpop.permute.xlu0 %4805
    %4815 = vst.msk [vmem:[#allocation3 + $0x8] sm:$0xff] %vm403, %v4792
    %4816 = vst.msk [vmem:[#allocation3 + $0x20] sm:$0xff] %vm403, %v4794
    %4817 = vst.msk [vmem:[#allocation3 + $0x38] sm:$0xff] %vm403, %v4796
    %4818 = vst.msk [vmem:[#allocation3 + $0x50] sm:$0xff] %vm403, %v4798
    %4819 = vst.msk [vmem:[#allocation3 + $0x68] sm:$0xff] %vm403, %v4800
    %4820 = vst.msk [vmem:[#allocation3 + $0x80] sm:$0xff] %vm403, %v4802
    %4821 = vst.msk [vmem:[#allocation3 + $0x98] sm:$0xff] %vm403, %v4804
    %4822 = vst.msk [vmem:[#allocation3 + $0xb0] sm:$0xff] %vm403, %v4806
    %v4823 = vld [vmem:[%s508 + $0x9] sm:$0xff]
    %v4824 = vld [vmem:[%s508 + $0x21] sm:$0xff]
    %v4825 = vld [vmem:[%s508 + $0x39] sm:$0xff]
    %v4826 = vld [vmem:[%s508 + $0x51] sm:$0xff]
    %v4827 = vld [vmem:[%s508 + $0x69] sm:$0xff]
    %v4828 = vld [vmem:[%s508 + $0x81] sm:$0xff]
    %v4829 = vld [vmem:[%s508 + $0x99] sm:$0xff]
    %v4830 = vld [vmem:[%s508 + $0xb1] sm:$0xff]
    %v4831 = vld [vmem:[%s508 + $0xf9] sm:$0xff]
    %v4832 = vld [vmem:[%s508 + $0x111] sm:$0xff]
    %v4833 = vld [vmem:[%s508 + $0x129] sm:$0xff]
    %v4834 = vld [vmem:[%s508 + $0x141] sm:$0xff]
    %v4835 = vld [vmem:[%s508 + $0x159] sm:$0xff]
    %v4836 = vld [vmem:[%s508 + $0x171] sm:$0xff]
    %v4837 = vld [vmem:[%s508 + $0x189] sm:$0xff]
    %v4838 = vld [vmem:[%s508 + $0x1a1] sm:$0xff]
    %v4839 = vpack.c.bf16 %v4824, %v4823
    %v4840 = vpack.c.bf16 %v4826, %v4825
    %v4841 = vpack.c.bf16 %v4828, %v4827
    %v4842 = vpack.c.bf16 %v4830, %v4829
    %v4843 = vpack.c.bf16 %v4832, %v4831
    %v4844 = vpack.c.bf16 %v4834, %v4833
    %v4845 = vpack.c.bf16 %v4836, %v4835
    %v4846 = vpack.c.bf16 %v4838, %v4837
    %4847 = vst.msk [vmem:[#allocation3 + $0x10] sm:$0xff] %vm53, %v4839
    %4848 = vst.msk [vmem:[#allocation3 + $0x28] sm:$0xff] %vm53, %v4840
    %4849 = vst.msk [vmem:[#allocation3 + $0x40] sm:$0xff] %vm53, %v4841
    %4850 = vst.msk [vmem:[#allocation3 + $0x58] sm:$0xff] %vm53, %v4842
    %4851 = vst.msk [vmem:[#allocation3 + $0x70] sm:$0xff] %vm53, %v4843
    %4852 = vst.msk [vmem:[#allocation3 + $0x88] sm:$0xff] %vm53, %v4844
    %4853 = vst.msk [vmem:[#allocation3 + $0xa0] sm:$0xff] %vm53, %v4845
    %4854 = vst.msk [vmem:[#allocation3 + $0xb8] sm:$0xff] %vm53, %v4846
    %v4855 = vld [vmem:[#allocation3] sm:$0xff]
    %v4856 = vld [vmem:[#allocation3 + $0x8] sm:$0xff]
    %v4857 = vld [vmem:[#allocation3 + $0x10] sm:$0xff]
    %v4858 = vld [vmem:[#allocation3 + $0x18] sm:$0xff]
    %v4859 = vld [vmem:[#allocation3 + $0x20] sm:$0xff]
    %v4860 = vld [vmem:[#allocation3 + $0x28] sm:$0xff]
    %v4861 = vld [vmem:[#allocation3 + $0x30] sm:$0xff]
    %v4862 = vld [vmem:[#allocation3 + $0x38] sm:$0xff]
    %v4863 = vld [vmem:[#allocation3 + $0x40] sm:$0xff]
    %v4864 = vld [vmem:[#allocation3 + $0x48] sm:$0xff]
    %v4865 = vld [vmem:[#allocation3 + $0x50] sm:$0xff]
    %v4866 = vld [vmem:[#allocation3 + $0x58] sm:$0xff]
    %v4867 = vld [vmem:[#allocation3 + $0x60] sm:$0xff]
    %v4868 = vld [vmem:[#allocation3 + $0x68] sm:$0xff]
    %v4869 = vld [vmem:[#allocation3 + $0x70] sm:$0xff]
    %v4870 = vld [vmem:[#allocation3 + $0x78] sm:$0xff]
    %v4871 = vld [vmem:[#allocation3 + $0x80] sm:$0xff]
    %v4872 = vld [vmem:[#allocation3 + $0x88] sm:$0xff]
    %v4873 = vld [vmem:[#allocation3 + $0x90] sm:$0xff]
    %v4874 = vld [vmem:[#allocation3 + $0x98] sm:$0xff]
    %v4875 = vld [vmem:[#allocation3 + $0xa0] sm:$0xff]
    %v4876 = vld [vmem:[#allocation3 + $0xa8] sm:$0xff]
    %v4877 = vld [vmem:[#allocation3 + $0xb0] sm:$0xff]
    %v4878 = vld [vmem:[#allocation3 + $0xb8] sm:$0xff]
    %v4915 = vunpack.c.l.b16 %v4339
    %v4916 = vunpack.c.l.b16 %v4340
    %v4917 = vunpack.c.l.b16 %v4341
    %v4918 = vunpack.c.l.b16 %v4342
    %v4919 = vunpack.c.l.b16 %v4343
    %v4920 = vunpack.c.l.b16 %v4344
    %v4921 = vunpack.c.l.b16 %v4345
    %v4922 = vunpack.c.l.b16 %v4346
    %v4923 = vunpack.c.l.b16 %v4347
    %v4924 = vunpack.c.l.b16 %v4348
    %v4925 = vunpack.c.l.b16 %v4349
    %v4926 = vunpack.c.l.b16 %v4350
    %v4927 = vunpack.c.l.b16 %v4351
    %v4928 = vunpack.c.l.b16 %v4352
    %v4929 = vunpack.c.l.b16 %v4353
    %v4930 = vunpack.c.l.b16 %v4354
    %v4931 = vunpack.c.l.b16 %v4355
    %v4932 = vunpack.c.l.b16 %v4356
    %v4933 = vunpack.c.l.b16 %v4357
    %v4934 = vunpack.c.l.b16 %v4358
    %v4935 = vunpack.c.l.b16 %v4359
    %v4936 = vunpack.c.l.b16 %v4360
    %v4937 = vunpack.c.l.b16 %v4361
    %v4938 = vunpack.c.l.b16 %v4362
    %v4939 = vunpack.c.l.b16 %v4363
    %v4940 = vunpack.c.l.b16 %v4364
    %v4941 = vunpack.c.l.b16 %v4365
    %v4942 = vunpack.c.l.b16 %v4366
    %v4943 = vunpack.c.l.b16 %v4367
    %v4944 = vunpack.c.l.b16 %v4368
    %v4945 = vunpack.c.l.b16 %v4369
    %v4946 = vunpack.c.l.b16 %v4370
    %v4947 = vunpack.c.l.b16 %v4371
    %v4948 = vunpack.c.l.b16 %v4372
    %v4949 = vunpack.c.l.b16 %v4373
    %v4950 = vunpack.c.l.b16 %v4374
    %v4951 = vpack.c.b16 %v4916, %v4915
    %v4952 = vpack.c.b16 %v4918, %v4917
    %v4953 = vpack.c.b16 %v4920, %v4919
    %v4954 = vpack.c.b16 %v4922, %v4921
    %v4955 = vpack.c.b16 %v4924, %v4923
    %v4956 = vpack.c.b16 %v4926, %v4925
    %v4957 = vpack.c.b16 %v4928, %v4927
    %v4958 = vpack.c.b16 %v4930, %v4929
    %v4959 = vpack.c.b16 %v4932, %v4931
    %v4960 = vpack.c.b16 %v4934, %v4933
    %v4961 = vpack.c.b16 %v4936, %v4935
    %v4962 = vpack.c.b16 %v4938, %v4937
    %v4963 = vpack.c.b16 %v4940, %v4939
    %v4964 = vpack.c.b16 %v4942, %v4941
    %v4965 = vpack.c.b16 %v4944, %v4943
    %v4966 = vpack.c.b16 %v4946, %v4945
    %v4967 = vpack.c.b16 %v4948, %v4947
    %v4968 = vpack.c.b16 %v4950, %v4949
    %v4988 = vsel %vm53, %v4857, 0
    %v4991 = vsel %vm53, %v4860, 0
    %v4994 = vsel %vm53, %v4863, 0
    %v4997 = vsel %vm53, %v4866, 0
    %v5000 = vsel %vm53, %v4869, 0
    %v5003 = vsel %vm53, %v4872, 0
    %v5006 = vsel %vm53, %v4875, 0
    %v5009 = vsel %vm53, %v4878, 0
    %5011 = vmatprep.subr.bf16.mxu0 0
    %5012 = vmatpush1.bf16.msra.mxu0 %v4951
    %5013 = vmatprep.subr.bf16.mxu0 0
    %5014 = vmatpush1.bf16.msra.mxu0 %v4952
    %5015 = vmatprep.subr.bf16.mxu0 0
    %5016 = vmatpush1.bf16.msra.mxu0 %v4953
    %5017 = vmatprep.subr.bf16.mxu0 0
    %5018 = vmatpush1.bf16.msra.mxu0 %v4954
    %5019 = vmatprep.subr.bf16.mxu0 0
    %5020 = vmatpush1.bf16.msra.mxu0 %v4955
    %5021 = vmatprep.subr.bf16.mxu0 0
    %5022 = vmatpush1.bf16.msra.mxu0 %v4956
    %5023 = vmatprep.subr.bf16.mxu0 0
    %5024 = vmatpush1.bf16.msra.mxu0 %v4957
    %5025 = vmatprep.subr.bf16.mxu0 0
    %5026 = vmatpush1.bf16.msra.mxu0 %v4958
    %5027 = vmatprep.subr.bf16.mxu0 0
    %5028 = vmatpush1.bf16.msra.mxu0 %v4959
    %5029 = vmatprep.subr.bf16.mxu0 0
    %5030 = vmatpush1.bf16.msra.mxu0 %v4960
    %5031 = vmatprep.subr.bf16.mxu0 0
    %5032 = vmatpush1.bf16.msra.mxu0 %v4961
    %5033 = vmatprep.subr.bf16.mxu0 0
    %5034 = vmatpush1.bf16.msra.mxu0 %v4962
    %5035 = vmatprep.subr.bf16.mxu0 0
    %5036 = vmatpush1.bf16.msra.mxu0 %v4963
    %5037 = vmatprep.subr.bf16.mxu0 0
    %5038 = vmatpush1.bf16.msra.mxu0 %v4964
    %5039 = vmatprep.subr.bf16.mxu0 0
    %5040 = vmatpush1.bf16.msra.mxu0 %v4965
    %5041 = vmatprep.subr.bf16.mxu0 0
    %5042 = vmatpush1.bf16.msra.mxu0 %v4966
    %5043 = vmatprep.mubr.bf16.mxu0 %v4856
    %5044 = vmatmul.mubr.bf16.gmra.mrb[0].mxu0 %v4855
    %v5045 = vpop.f32.mrb[0].mxu0
    %v5046 = vadd.f32 0.0, %v5045
    %v5047 = vpop.f32.mrb[0].mxu0
    %v5048 = vpop.f32.mrb[0].mxu0
    %v5049 = vadd.f32 0.0, %v5048
    %v5050 = vpop.f32.mrb[0].mxu0
    %5051 = vmatprep.mubr.bf16.mxu0 %v4859
    %5052 = vmatmul.mubr.bf16.gmra.mrb[0].mxu0 %v4858
    %v5053 = vpop.f32.mrb[0].mxu0
    %v5054 = vadd.f32 0.0, %v5053
    %v5055 = vpop.f32.mrb[0].mxu0
    %v5056 = vpop.f32.mrb[0].mxu0
    %v5057 = vadd.f32 0.0, %v5056
    %v5058 = vpop.f32.mrb[0].mxu0
    %5059 = vmatprep.mubr.bf16.mxu0 %v4862
    %5060 = vmatmul.mubr.bf16.gmra.mrb[0].mxu0 %v4861
    %v5061 = vpop.f32.mrb[0].mxu0
    %v5062 = vadd.f32 0.0, %v5061
    %v5063 = vpop.f32.mrb[0].mxu0
    %v5064 = vpop.f32.mrb[0].mxu0
    %v5065 = vadd.f32 0.0, %v5064
    %v5066 = vpop.f32.mrb[0].mxu0
    %5067 = vmatprep.mubr.bf16.mxu0 %v4865
    %5068 = vmatmul.mubr.bf16.gmra.mrb[0].mxu0 %v4864
    %v5069 = vpop.f32.mrb[0].mxu0
    %v5070 = vadd.f32 0.0, %v5069
    %v5071 = vpop.f32.mrb[0].mxu0
    %v5072 = vpop.f32.mrb[0].mxu0
    %v5073 = vadd.f32 0.0, %v5072
    %v5074 = vpop.f32.mrb[0].mxu0
    %5075 = vmatprep.mubr.bf16.mxu0 %v4868
    %5076 = vmatmul.mubr.bf16.gmra.mrb[0].mxu0 %v4867
    %v5077 = vpop.f32.mrb[0].mxu0
    %v5078 = vadd.f32 0.0, %v5077
    %v5079 = vpop.f32.mrb[0].mxu0
    %v5080 = vpop.f32.mrb[0].mxu0
    %v5081 = vadd.f32 0.0, %v5080
    %v5082 = vpop.f32.mrb[0].mxu0
    %5083 = vmatprep.mubr.bf16.mxu0 %v4871
    %5084 = vmatmul.mubr.bf16.gmra.mrb[0].mxu0 %v4870
    %v5085 = vpop.f32.mrb[0].mxu0
    %v5086 = vadd.f32 0.0, %v5085
    %v5087 = vpop.f32.mrb[0].mxu0
    %v5088 = vpop.f32.mrb[0].mxu0
    %v5089 = vadd.f32 0.0, %v5088
    %v5090 = vpop.f32.mrb[0].mxu0
    %5091 = vmatprep.mubr.bf16.mxu0 %v4874
    %5092 = vmatmul.mubr.bf16.gmra.mrb[0].mxu0 %v4873
    %v5093 = vpop.f32.mrb[0].mxu0
    %v5094 = vadd.f32 0.0, %v5093
    %v5095 = vpop.f32.mrb[0].mxu0
    %v5096 = vpop.f32.mrb[0].mxu0
    %v5097 = vadd.f32 0.0, %v5096
    %v5098 = vpop.f32.mrb[0].mxu0
    %5099 = vmatprep.mubr.bf16.mxu0 %v4877
    %5100 = vmatmul.mubr.bf16.gmra.mrb[0].mxu0 %v4876
    %v5101 = vpop.f32.mrb[0].mxu0
    %v5102 = vadd.f32 0.0, %v5101
    %v5103 = vpop.f32.mrb[0].mxu0
    %v5104 = vpop.f32.mrb[0].mxu0
    %v5105 = vadd.f32 0.0, %v5104
    %v5106 = vpop.f32.mrb[0].mxu0
    %5107 = vdwg.mxu0
    %5108 = vmatprep.subr.bf16.mxu0 0
    %5109 = vmatpush1.bf16.msra.mxu0 %v4967
    %5110 = vmatprep.subr.bf16.mxu0 0
    %5111 = vmatpush1.bf16.msra.mxu0 %v4968
    %5112 = vmatprep.subr.bf16.mxu0 0
    %5113 = vmatpush1.bf16.msra.mxu0 0
    %5114 = vmatprep.subr.bf16.mxu0 0
    %5115 = vmatpush1.bf16.msra.mxu0 0
    %5116 = vmatprep.subr.bf16.mxu0 0
    %5117 = vmatpush1.bf16.msra.mxu0 0
    %5118 = vmatprep.subr.bf16.mxu0 0
    %5119 = vmatpush1.bf16.msra.mxu0 0
    %5120 = vmatprep.subr.bf16.mxu0 0
    %5121 = vmatpush1.bf16.msra.mxu0 0
    %5122 = vmatprep.subr.bf16.mxu0 0
    %5123 = vmatpush1.bf16.msra.mxu0 0
    %5124 = vmatprep.subr.bf16.mxu0 0
    %5125 = vmatpush1.bf16.msra.mxu0 0
    %5126 = vmatprep.subr.bf16.mxu0 0
    %5127 = vmatpush1.bf16.msra.mxu0 0
    %5128 = vmatprep.subr.bf16.mxu0 0
    %5129 = vmatpush1.bf16.msra.mxu0 0
    %5130 = vmatprep.subr.bf16.mxu0 0
    %5131 = vmatpush1.bf16.msra.mxu0 0
    %5132 = vmatprep.subr.bf16.mxu0 0
    %5133 = vmatpush1.bf16.msra.mxu0 0
    %5134 = vmatprep.subr.bf16.mxu0 0
    %5135 = vmatpush1.bf16.msra.mxu0 0
    %5136 = vmatprep.subr.bf16.mxu0 0
    %5137 = vmatpush1.bf16.msra.mxu0 0
    %5138 = vmatprep.subr.bf16.mxu0 0
    %5139 = vmatpush1.bf16.msra.mxu0 0
    %5140 = vmatprep.mubr.bf16.mxu0 0
    %5141 = vmatmul.mubr.bf16.gmra.mrb[0].mxu0 %v4988
    %v5142 = vpop.f32.mrb[0].mxu0
    %v5143 = vadd.f32 %v5046, %v5142
    %v5144 = vpop.f32.mrb[0].mxu0
    %v5145 = vpop.f32.mrb[0].mxu0
    %v5146 = vadd.f32 %v5049, %v5145
    %v5147 = vpop.f32.mrb[0].mxu0
    %5148 = vmatprep.mubr.bf16.mxu0 0
    %5149 = vmatmul.mubr.bf16.gmra.mrb[0].mxu0 %v4991
    %v5150 = vpop.f32.mrb[0].mxu0
    %v5151 = vadd.f32 %v5054, %v5150
    %v5152 = vpop.f32.mrb[0].mxu0
    %v5153 = vpop.f32.mrb[0].mxu0
    %v5154 = vadd.f32 %v5057, %v5153
    %v5155 = vpop.f32.mrb[0].mxu0
    %5156 = vmatprep.mubr.bf16.mxu0 0
    %5157 = vmatmul.mubr.bf16.gmra.mrb[0].mxu0 %v4994
    %v5158 = vpop.f32.mrb[0].mxu0
    %v5159 = vadd.f32 %v5062, %v5158
    %v5160 = vpop.f32.mrb[0].mxu0
    %v5161 = vpop.f32.mrb[0].mxu0
    %v5162 = vadd.f32 %v5065, %v5161
    %v5163 = vpop.f32.mrb[0].mxu0
    %5164 = vmatprep.mubr.bf16.mxu0 0
    %5165 = vmatmul.mubr.bf16.gmra.mrb[0].mxu0 %v4997
    %v5166 = vpop.f32.mrb[0].mxu0
    %v5167 = vadd.f32 %v5070, %v5166
    %v5168 = vpop.f32.mrb[0].mxu0
    %v5169 = vpop.f32.mrb[0].mxu0
    %v5170 = vadd.f32 %v5073, %v5169
    %v5171 = vpop.f32.mrb[0].mxu0
    %5172 = vmatprep.mubr.bf16.mxu0 0
    %5173 = vmatmul.mubr.bf16.gmra.mrb[0].mxu0 %v5000
    %v5174 = vpop.f32.mrb[0].mxu0
    %v5175 = vadd.f32 %v5078, %v5174
    %v5176 = vpop.f32.mrb[0].mxu0
    %v5177 = vpop.f32.mrb[0].mxu0
    %v5178 = vadd.f32 %v5081, %v5177
    %v5179 = vpop.f32.mrb[0].mxu0
    %5180 = vmatprep.mubr.bf16.mxu0 0
    %5181 = vmatmul.mubr.bf16.gmra.mrb[0].mxu0 %v5003
    %v5182 = vpop.f32.mrb[0].mxu0
    %v5183 = vadd.f32 %v5086, %v5182
    %v5184 = vpop.f32.mrb[0].mxu0
    %v5185 = vpop.f32.mrb[0].mxu0
    %v5186 = vadd.f32 %v5089, %v5185
    %v5187 = vpop.f32.mrb[0].mxu0
    %5188 = vmatprep.mubr.bf16.mxu0 0
    %5189 = vmatmul.mubr.bf16.gmra.mrb[0].mxu0 %v5006
    %v5190 = vpop.f32.mrb[0].mxu0
    %v5191 = vadd.f32 %v5094, %v5190
    %v5192 = vpop.f32.mrb[0].mxu0
    %v5193 = vpop.f32.mrb[0].mxu0
    %v5194 = vadd.f32 %v5097, %v5193
    %v5195 = vpop.f32.mrb[0].mxu0
    %5196 = vmatprep.mubr.bf16.mxu0 0
    %5197 = vmatmul.mubr.bf16.gmra.mrb[0].mxu0 %v5009
    %v5198 = vpop.f32.mrb[0].mxu0
    %v5199 = vadd.f32 %v5102, %v5198
    %v5200 = vpop.f32.mrb[0].mxu0
    %v5201 = vpop.f32.mrb[0].mxu0
    %v5202 = vadd.f32 %v5105, %v5201
    %v5203 = vpop.f32.mrb[0].mxu0
    %5204 = vdwg.mxu0
    %v5205 = vsel %vm53, %v5143, 0.0
    %v5206 = vsel %vm53, %v5146, 0.0
    %v5207 = vadd.f32 %v5205, %v5206
    %v5208 = vsel %vm53, %v5151, 0.0
    %v5209 = vadd.f32 %v5207, %v5208
    %v5210 = vsel %vm53, %v5154, 0.0
    %v5211 = vadd.f32 %v5209, %v5210
    %v5212 = vsel %vm53, %v5159, 0.0
    %v5213 = vadd.f32 %v5211, %v5212
    %v5214 = vsel %vm53, %v5162, 0.0
    %v5215 = vadd.f32 %v5213, %v5214
    %v5216 = vsel %vm53, %v5167, 0.0
    %v5217 = vadd.f32 %v5215, %v5216
    %v5218 = vsel %vm53, %v5170, 0.0
    %v5219 = vadd.f32 %v5217, %v5218
    %v5220 = vsel %vm53, %v5175, 0.0
    %v5221 = vadd.f32 %v5219, %v5220
    %v5222 = vsel %vm53, %v5178, 0.0
    %v5223 = vadd.f32 %v5221, %v5222
    %v5224 = vsel %vm53, %v5183, 0.0
    %v5225 = vadd.f32 %v5223, %v5224
    %v5226 = vsel %vm53, %v5186, 0.0
    %v5227 = vadd.f32 %v5225, %v5226
    %v5228 = vsel %vm53, %v5191, 0.0
    %v5229 = vadd.f32 %v5227, %v5228
    %v5230 = vsel %vm53, %v5194, 0.0
    %v5231 = vadd.f32 %v5229, %v5230
    %v5232 = vsel %vm53, %v5199, 0.0
    %v5233 = vadd.f32 %v5231, %v5232
    %v5234 = vsel %vm53, %v5202, 0.0
    %v5235 = vadd.f32 %v5233, %v5234
    %v5236 = vrot.slane %v5235, 4
    %v5237 = vadd.f32 %v5235, %v5236
    %v5238 = vrot.slane %v5237, 2
    %v5239 = vadd.f32 %v5237, %v5238
    %v5240 = vrot.slane %v5239, 1
    %v5241 = vadd.f32 %v5239, %v5240
    %v5242 = vmul.f32 %v5241, 0.0078125
    %v5243 = vmul.f32 %v5143, %v5143
    %v5244 = vmul.f32 %v5146, %v5146
    %v5245 = vmul.f32 %v5151, %v5151
    %v5246 = vmul.f32 %v5154, %v5154
    %v5247 = vmul.f32 %v5159, %v5159
    %v5248 = vmul.f32 %v5162, %v5162
    %v5249 = vmul.f32 %v5167, %v5167
    %v5250 = vmul.f32 %v5170, %v5170
    %v5251 = vmul.f32 %v5175, %v5175
    %v5252 = vmul.f32 %v5178, %v5178
    %v5253 = vmul.f32 %v5183, %v5183
    %v5254 = vmul.f32 %v5186, %v5186
    %v5255 = vmul.f32 %v5191, %v5191
    %v5256 = vmul.f32 %v5194, %v5194
    %v5257 = vmul.f32 %v5199, %v5199
    %v5258 = vmul.f32 %v5202, %v5202
    %v5259 = vsel %vm53, %v5243, 0.0
    %v5260 = vsel %vm53, %v5244, 0.0
    %v5261 = vadd.f32 %v5259, %v5260
    %v5262 = vsel %vm53, %v5245, 0.0
    %v5263 = vadd.f32 %v5261, %v5262
    %v5264 = vsel %vm53, %v5246, 0.0
    %v5265 = vadd.f32 %v5263, %v5264
    %v5266 = vsel %vm53, %v5247, 0.0
    %v5267 = vadd.f32 %v5265, %v5266
    %v5268 = vsel %vm53, %v5248, 0.0
    %v5269 = vadd.f32 %v5267, %v5268
    %v5270 = vsel %vm53, %v5249, 0.0
    %v5271 = vadd.f32 %v5269, %v5270
    %v5272 = vsel %vm53, %v5250, 0.0
    %v5273 = vadd.f32 %v5271, %v5272
    %v5274 = vsel %vm53, %v5251, 0.0
    %v5275 = vadd.f32 %v5273, %v5274
    %v5276 = vsel %vm53, %v5252, 0.0
    %v5277 = vadd.f32 %v5275, %v5276
    %v5278 = vsel %vm53, %v5253, 0.0
    %v5279 = vadd.f32 %v5277, %v5278
    %v5280 = vsel %vm53, %v5254, 0.0
    %v5281 = vadd.f32 %v5279, %v5280
    %v5282 = vsel %vm53, %v5255, 0.0
    %v5283 = vadd.f32 %v5281, %v5282
    %v5284 = vsel %vm53, %v5256, 0.0
    %v5285 = vadd.f32 %v5283, %v5284
    %v5286 = vsel %vm53, %v5257, 0.0
    %v5287 = vadd.f32 %v5285, %v5286
    %v5288 = vsel %vm53, %v5258, 0.0
    %v5289 = vadd.f32 %v5287, %v5288
    %v5290 = vrot.slane %v5289, 4
    %v5291 = vadd.f32 %v5289, %v5290
    %v5292 = vrot.slane %v5291, 2
    %v5293 = vadd.f32 %v5291, %v5292
    %v5294 = vrot.slane %v5293, 1
    %v5295 = vadd.f32 %v5293, %v5294
    %v5296 = vmul.f32 %v5295, 0.0078125
    %v5297 = vmul.f32 %v5242, %v5242
    %v5298 = vsub.f32 %v5296, %v5297
    %v5299 = vadd.f32 %v5298, 1e-05
    %v5300 = vrsqrt.pop %v5299
    %v5301 = vmul.f32 %v3296, %v5300
    %v5302 = vmul.f32 %v5242, %v5301
    %v5304 = vrot.slane %v5302, 7
    %v5306 = vsub.f32 %v3296, %v5304
    %v5307 = vlaneseq
    %v5308 = vshrl.u32 %v5307, 7
    %v5309 = vsub.s32 0, %v5308
    %v5310 = vrot.slane %v5301, %v5309
    %v5311 = vmul.f32 %v5143, %v5310
    %v5312 = vmul.f32 %v5146, %v5310
    %v5313 = vmul.f32 %v5151, %v5310
    %v5314 = vmul.f32 %v5154, %v5310
    %v5315 = vmul.f32 %v5159, %v5310
    %v5316 = vmul.f32 %v5162, %v5310
    %v5317 = vmul.f32 %v5167, %v5310
    %v5318 = vmul.f32 %v5170, %v5310
    %v5319 = vmul.f32 %v5175, %v5310
    %v5320 = vmul.f32 %v5178, %v5310
    %v5321 = vmul.f32 %v5183, %v5310
    %v5322 = vmul.f32 %v5186, %v5310
    %v5323 = vmul.f32 %v5191, %v5310
    %v5324 = vmul.f32 %v5194, %v5310
    %v5325 = vmul.f32 %v5199, %v5310
    %v5326 = vmul.f32 %v5202, %v5310
    %v5327 = vlaneseq
    %v5328 = vshrl.u32 %v5327, 7
    %v5329 = vsub.s32 1, %v5328
    %v5330 = vrot.slane %v5306, %v5329
    %v5331 = vadd.f32 %v5311, %v5330
    %v5332 = vadd.f32 %v5312, %v5330
    %v5333 = vadd.f32 %v5313, %v5330
    %v5334 = vadd.f32 %v5314, %v5330
    %v5335 = vadd.f32 %v5315, %v5330
    %v5336 = vadd.f32 %v5316, %v5330
    %v5337 = vadd.f32 %v5317, %v5330
    %v5338 = vadd.f32 %v5318, %v5330
    %v5339 = vadd.f32 %v5319, %v5330
    %v5340 = vadd.f32 %v5320, %v5330
    %v5341 = vadd.f32 %v5321, %v5330
    %v5342 = vadd.f32 %v5322, %v5330
    %v5343 = vadd.f32 %v5323, %v5330
    %v5344 = vadd.f32 %v5324, %v5330
    %v5345 = vadd.f32 %v5325, %v5330
    %v5346 = vadd.f32 %v5326, %v5330
    %v5347 = vadd.f32 %v5331, %v3261
    %v5348 = vadd.f32 %v5332, %v3262
    %v5349 = vadd.f32 %v5333, %v3263
    %v5350 = vadd.f32 %v5334, %v3264
    %v5351 = vadd.f32 %v5335, %v3265
    %v5352 = vadd.f32 %v5336, %v3266
    %v5353 = vadd.f32 %v5337, %v3267
    %v5354 = vadd.f32 %v5338, %v3268
    %v5355 = vadd.f32 %v5339, %v3269
    %v5356 = vadd.f32 %v5340, %v3270
    %v5357 = vadd.f32 %v5341, %v3271
    %v5358 = vadd.f32 %v5342, %v3272
    %v5359 = vadd.f32 %v5343, %v3273
    %v5360 = vadd.f32 %v5344, %v3274
    %v5361 = vadd.f32 %v5345, %v3275
    %v5362 = vadd.f32 %v5346, %v3276
    %v5363 = vmax.f32 %v5347, 0.0
    %v5364 = vmax.f32 %v5348, 0.0
    %v5365 = vmax.f32 %v5349, 0.0
    %v5366 = vmax.f32 %v5350, 0.0
    %v5367 = vmax.f32 %v5351, 0.0
    %v5368 = vmax.f32 %v5352, 0.0
    %v5369 = vmax.f32 %v5353, 0.0
    %v5370 = vmax.f32 %v5354, 0.0
    %v5371 = vmax.f32 %v5355, 0.0
    %v5372 = vmax.f32 %v5356, 0.0
    %v5373 = vmax.f32 %v5357, 0.0
    %v5374 = vmax.f32 %v5358, 0.0
    %v5375 = vmax.f32 %v5359, 0.0
    %v5376 = vmax.f32 %v5360, 0.0
    %v5377 = vmax.f32 %v5361, 0.0
    %v5378 = vmax.f32 %v5362, 0.0
    %v5379 = vpack.c.bf16 %v5364, %v5363
    %v5380 = vpack.c.bf16 %v5366, %v5365
    %v5381 = vpack.c.bf16 %v5368, %v5367
    %v5382 = vpack.c.bf16 %v5370, %v5369
    %v5383 = vpack.c.bf16 %v5372, %v5371
    %v5384 = vpack.c.bf16 %v5374, %v5373
    %v5385 = vpack.c.bf16 %v5376, %v5375
    %v5386 = vpack.c.bf16 %v5378, %v5377
    %v5387 = vld [vmem:[%s13] sm:$0x3]
    %v5388 = vld [vmem:[%s6] sm:$0x7]
    %v5389 = vld [vmem:[%s5] sm:$0xf]
    %v5390 = vld [vmem:[%s5 + $0x4] sm:$0xf]
    %v5391 = vld [vmem:[%s5 + $0x8] sm:$0xf]
    %v5392 = vld [vmem:[%s5 + $0xc] sm:$0xf]
    %v5393 = vlaneseq
    %v5394 = vshrl.u32 %v5393, 7
    %v5395 = vsub.s32 0, %v5394
    %v5396 = vrot.slane %v5388, %v5395
    %v5401 = vunpack.c.l.b16 %v5389
    %v5402 = vunpack.c.l.b16 %v5390
    %v5403 = vunpack.c.l.b16 %v5391
    %v5404 = vunpack.c.l.b16 %v5392
    %v5405 = vpack.c.b16 %v5402, %v5401
    %v5406 = vpack.c.b16 %v5404, %v5403
    %v5410 = vsel %vm53, %v5379, 0
    %v5413 = vsel %vm53, %v5380, 0
    %v5416 = vsel %vm53, %v5381, 0
    %v5419 = vsel %vm53, %v5382, 0
    %v5422 = vsel %vm53, %v5383, 0
    %v5425 = vsel %vm53, %v5384, 0
    %v5428 = vsel %vm53, %v5385, 0
    %v5431 = vsel %vm53, %v5386, 0
    %5433 = vmatprep.subr.bf16.mxu0 0
    %5434 = vmatpush1.bf16.msra.mxu0 %v5405
    %5435 = vmatprep.subr.bf16.mxu0 0
    %5436 = vmatpush1.bf16.msra.mxu0 %v5406
    %5437 = vmatprep.subr.bf16.mxu0 0
    %5438 = vmatpush1.bf16.msra.mxu0 0
    %5439 = vmatprep.subr.bf16.mxu0 0
    %5440 = vmatpush1.bf16.msra.mxu0 0
    %5441 = vmatprep.subr.bf16.mxu0 0
    %5442 = vmatpush1.bf16.msra.mxu0 0
    %5443 = vmatprep.subr.bf16.mxu0 0
    %5444 = vmatpush1.bf16.msra.mxu0 0
    %5445 = vmatprep.subr.bf16.mxu0 0
    %5446 = vmatpush1.bf16.msra.mxu0 0
    %5447 = vmatprep.subr.bf16.mxu0 0
    %5448 = vmatpush1.bf16.msra.mxu0 0
    %5449 = vmatprep.subr.bf16.mxu0 0
    %5450 = vmatpush1.bf16.msra.mxu0 0
    %5451 = vmatprep.subr.bf16.mxu0 0
    %5452 = vmatpush1.bf16.msra.mxu0 0
    %5453 = vmatprep.subr.bf16.mxu0 0
    %5454 = vmatpush1.bf16.msra.mxu0 0
    %5455 = vmatprep.subr.bf16.mxu0 0
    %5456 = vmatpush1.bf16.msra.mxu0 0
    %5457 = vmatprep.subr.bf16.mxu0 0
    %5458 = vmatpush1.bf16.msra.mxu0 0
    %5459 = vmatprep.subr.bf16.mxu0 0
    %5460 = vmatpush1.bf16.msra.mxu0 0
    %5461 = vmatprep.subr.bf16.mxu0 0
    %5462 = vmatpush1.bf16.msra.mxu0 0
    %5463 = vmatprep.subr.bf16.mxu0 0
    %5464 = vmatpush1.bf16.msra.mxu0 0
    %5465 = vmatprep.mubr.bf16.mxu0 0
    %5466 = vmatmul.mubr.bf16.gmra.mrb[0].mxu0 %v5410
    %v5467 = vpop.f32.mrb[0].mxu0
    %v5468 = vadd.f32 %v5396, %v5467
    %v5469 = vpop.f32.mrb[0].mxu0
    %v5470 = vpop.f32.mrb[0].mxu0
    %v5471 = vadd.f32 %v5396, %v5470
    %v5472 = vpop.f32.mrb[0].mxu0
    %5473 = vmatprep.mubr.bf16.mxu0 0
    %5474 = vmatmul.mubr.bf16.gmra.mrb[0].mxu0 %v5413
    %v5475 = vpop.f32.mrb[0].mxu0
    %v5476 = vadd.f32 %v5396, %v5475
    %v5477 = vpop.f32.mrb[0].mxu0
    %v5478 = vpop.f32.mrb[0].mxu0
    %v5479 = vadd.f32 %v5396, %v5478
    %v5480 = vpop.f32.mrb[0].mxu0
    %5481 = vmatprep.mubr.bf16.mxu0 0
    %5482 = vmatmul.mubr.bf16.gmra.mrb[0].mxu0 %v5416
    %v5483 = vpop.f32.mrb[0].mxu0
    %v5484 = vadd.f32 %v5396, %v5483
    %v5485 = vpop.f32.mrb[0].mxu0
    %v5486 = vpop.f32.mrb[0].mxu0
    %v5487 = vadd.f32 %v5396, %v5486
    %v5488 = vpop.f32.mrb[0].mxu0
    %5489 = vmatprep.mubr.bf16.mxu0 0
    %5490 = vmatmul.mubr.bf16.gmra.mrb[0].mxu0 %v5419
    %v5491 = vpop.f32.mrb[0].mxu0
    %v5492 = vadd.f32 %v5396, %v5491
    %v5493 = vpop.f32.mrb[0].mxu0
    %v5494 = vpop.f32.mrb[0].mxu0
    %v5495 = vadd.f32 %v5396, %v5494
    %v5496 = vpop.f32.mrb[0].mxu0
    %5497 = vmatprep.mubr.bf16.mxu0 0
    %5498 = vmatmul.mubr.bf16.gmra.mrb[0].mxu0 %v5422
    %v5499 = vpop.f32.mrb[0].mxu0
    %v5500 = vadd.f32 %v5396, %v5499
    %v5501 = vpop.f32.mrb[0].mxu0
    %v5502 = vpop.f32.mrb[0].mxu0
    %v5503 = vadd.f32 %v5396, %v5502
    %v5504 = vpop.f32.mrb[0].mxu0
    %5505 = vmatprep.mubr.bf16.mxu0 0
    %5506 = vmatmul.mubr.bf16.gmra.mrb[0].mxu0 %v5425
    %v5507 = vpop.f32.mrb[0].mxu0
    %v5508 = vadd.f32 %v5396, %v5507
    %v5509 = vpop.f32.mrb[0].mxu0
    %v5510 = vpop.f32.mrb[0].mxu0
    %v5511 = vadd.f32 %v5396, %v5510
    %v5512 = vpop.f32.mrb[0].mxu0
    %5513 = vmatprep.mubr.bf16.mxu0 0
    %5514 = vmatmul.mubr.bf16.gmra.mrb[0].mxu0 %v5428
    %v5515 = vpop.f32.mrb[0].mxu0
    %v5516 = vadd.f32 %v5396, %v5515
    %v5517 = vpop.f32.mrb[0].mxu0
    %v5518 = vpop.f32.mrb[0].mxu0
    %v5519 = vadd.f32 %v5396, %v5518
    %v5520 = vpop.f32.mrb[0].mxu0
    %5521 = vmatprep.mubr.bf16.mxu0 0
    %5522 = vmatmul.mubr.bf16.gmra.mrb[0].mxu0 %v5431
    %v5523 = vpop.f32.mrb[0].mxu0
    %v5524 = vadd.f32 %v5396, %v5523
    %v5525 = vpop.f32.mrb[0].mxu0
    %v5526 = vpop.f32.mrb[0].mxu0
    %v5527 = vadd.f32 %v5396, %v5526
    %v5528 = vpop.f32.mrb[0].mxu0
    %5529 = vdwg.mxu0
    %vm5530 = vcmask 23552
    %v5531 = vsel %vm5530, %v5468, 0.0
    %v5532 = vsel %vm5530, %v5471, 0.0
    %v5533 = vadd.f32 %v5531, %v5532
    %v5534 = vsel %vm5530, %v5476, 0.0
    %v5535 = vadd.f32 %v5533, %v5534
    %v5536 = vsel %vm5530, %v5479, 0.0
    %v5537 = vadd.f32 %v5535, %v5536
    %v5538 = vsel %vm5530, %v5484, 0.0
    %v5539 = vadd.f32 %v5537, %v5538
    %v5540 = vsel %vm5530, %v5487, 0.0
    %v5541 = vadd.f32 %v5539, %v5540
    %v5542 = vsel %vm5530, %v5492, 0.0
    %v5543 = vadd.f32 %v5541, %v5542
    %v5544 = vsel %vm5530, %v5495, 0.0
    %v5545 = vadd.f32 %v5543, %v5544
    %v5546 = vsel %vm5530, %v5500, 0.0
    %v5547 = vadd.f32 %v5545, %v5546
    %v5548 = vsel %vm5530, %v5503, 0.0
    %v5549 = vadd.f32 %v5547, %v5548
    %v5550 = vsel %vm5530, %v5508, 0.0
    %v5551 = vadd.f32 %v5549, %v5550
    %v5552 = vsel %vm5530, %v5511, 0.0
    %v5553 = vadd.f32 %v5551, %v5552
    %v5554 = vsel %vm5530, %v5516, 0.0
    %v5555 = vadd.f32 %v5553, %v5554
    %v5556 = vsel %vm5530, %v5519, 0.0
    %v5557 = vadd.f32 %v5555, %v5556
    %v5558 = vsel %vm5530, %v5524, 0.0
    %v5559 = vadd.f32 %v5557, %v5558
    %v5560 = vsel %vm5530, %v5527, 0.0
    %v5561 = vadd.f32 %v5559, %v5560
    %v5562 = vrot.slane %v5561, 4
    %v5563 = vadd.f32 %v5561, %v5562
    %v5564 = vrot.slane %v5563, 2
    %v5565 = vadd.f32 %v5563, %v5564
    %v5566 = vrot.slane %v5565, 1
    %v5567 = vadd.f32 %v5565, %v5566
    %v5568 = vmul.f32 %v5567, 0.0078125
    %v5569 = vmul.f32 %v5468, %v5468
    %v5570 = vmul.f32 %v5471, %v5471
    %v5571 = vmul.f32 %v5476, %v5476
    %v5572 = vmul.f32 %v5479, %v5479
    %v5573 = vmul.f32 %v5484, %v5484
    %v5574 = vmul.f32 %v5487, %v5487
    %v5575 = vmul.f32 %v5492, %v5492
    %v5576 = vmul.f32 %v5495, %v5495
    %v5577 = vmul.f32 %v5500, %v5500
    %v5578 = vmul.f32 %v5503, %v5503
    %v5579 = vmul.f32 %v5508, %v5508
    %v5580 = vmul.f32 %v5511, %v5511
    %v5581 = vmul.f32 %v5516, %v5516
    %v5582 = vmul.f32 %v5519, %v5519
    %v5583 = vmul.f32 %v5524, %v5524
    %v5584 = vmul.f32 %v5527, %v5527
    %v5585 = vsel %vm5530, %v5569, 0.0
    %v5586 = vsel %vm5530, %v5570, 0.0
    %v5587 = vadd.f32 %v5585, %v5586
    %v5588 = vsel %vm5530, %v5571, 0.0
    %v5589 = vadd.f32 %v5587, %v5588
    %v5590 = vsel %vm5530, %v5572, 0.0
    %v5591 = vadd.f32 %v5589, %v5590
    %v5592 = vsel %vm5530, %v5573, 0.0
    %v5593 = vadd.f32 %v5591, %v5592
    %v5594 = vsel %vm5530, %v5574, 0.0
    %v5595 = vadd.f32 %v5593, %v5594
    %v5596 = vsel %vm5530, %v5575, 0.0
    %v5597 = vadd.f32 %v5595, %v5596
    %v5598 = vsel %vm5530, %v5576, 0.0
    %v5599 = vadd.f32 %v5597, %v5598
    %v5600 = vsel %vm5530, %v5577, 0.0
    %v5601 = vadd.f32 %v5599, %v5600
    %v5602 = vsel %vm5530, %v5578, 0.0
    %v5603 = vadd.f32 %v5601, %v5602
    %v5604 = vsel %vm5530, %v5579, 0.0
    %v5605 = vadd.f32 %v5603, %v5604
    %v5606 = vsel %vm5530, %v5580, 0.0
    %v5607 = vadd.f32 %v5605, %v5606
    %v5608 = vsel %vm5530, %v5581, 0.0
    %v5609 = vadd.f32 %v5607, %v5608
    %v5610 = vsel %vm5530, %v5582, 0.0
    %v5611 = vadd.f32 %v5609, %v5610
    %v5612 = vsel %vm5530, %v5583, 0.0
    %v5613 = vadd.f32 %v5611, %v5612
    %v5614 = vsel %vm5530, %v5584, 0.0
    %v5615 = vadd.f32 %v5613, %v5614
    %v5616 = vrot.slane %v5615, 4
    %v5617 = vadd.f32 %v5615, %v5616
    %v5618 = vrot.slane %v5617, 2
    %v5619 = vadd.f32 %v5617, %v5618
    %v5620 = vrot.slane %v5619, 1
    %v5621 = vadd.f32 %v5619, %v5620
    %v5622 = vmul.f32 %v5621, 0.0078125
    %v5623 = vmul.f32 %v5568, %v5568
    %v5624 = vsub.f32 %v5622, %v5623
    %v5625 = vadd.f32 %v5624, 1e-05
    %v5626 = vrsqrt.pop %v5625
    %v5627 = vmul.f32 %v5388, %v5626
    %v5628 = vmul.f32 %v5568, %v5627
    %v5630 = vrot.slane %v5628, 7
    %v5632 = vsub.f32 %v5388, %v5630
    %v5633 = vlaneseq
    %v5634 = vshrl.u32 %v5633, 7
    %v5635 = vsub.s32 1, %v5634
    %v5636 = vrot.slane %v5627, %v5635
    %v5637 = vmul.f32 %v5468, %v5636
    %v5638 = vmul.f32 %v5471, %v5636
    %v5639 = vmul.f32 %v5476, %v5636
    %v5640 = vmul.f32 %v5479, %v5636
    %v5641 = vmul.f32 %v5484, %v5636
    %v5642 = vmul.f32 %v5487, %v5636
    %v5643 = vmul.f32 %v5492, %v5636
    %v5644 = vmul.f32 %v5495, %v5636
    %v5645 = vmul.f32 %v5500, %v5636
    %v5646 = vmul.f32 %v5503, %v5636
    %v5647 = vmul.f32 %v5508, %v5636
    %v5648 = vmul.f32 %v5511, %v5636
    %v5649 = vmul.f32 %v5516, %v5636
    %v5650 = vmul.f32 %v5519, %v5636
    %v5651 = vmul.f32 %v5524, %v5636
    %v5652 = vmul.f32 %v5527, %v5636
    %v5653 = vlaneseq
    %v5654 = vshrl.u32 %v5653, 7
    %v5655 = vsub.s32 2, %v5654
    %v5656 = vrot.slane %v5632, %v5655
    %v5657 = vadd.f32 %v5637, %v5656
    %v5658 = vadd.f32 %v5638, %v5656
    %v5659 = vadd.f32 %v5639, %v5656
    %v5660 = vadd.f32 %v5640, %v5656
    %v5661 = vadd.f32 %v5641, %v5656
    %v5662 = vadd.f32 %v5642, %v5656
    %v5663 = vadd.f32 %v5643, %v5656
    %v5664 = vadd.f32 %v5644, %v5656
    %v5665 = vadd.f32 %v5645, %v5656
    %v5666 = vadd.f32 %v5646, %v5656
    %v5667 = vadd.f32 %v5647, %v5656
    %v5668 = vadd.f32 %v5648, %v5656
    %v5669 = vadd.f32 %v5649, %v5656
    %v5670 = vadd.f32 %v5650, %v5656
    %v5671 = vadd.f32 %v5651, %v5656
    %v5672 = vadd.f32 %v5652, %v5656
    %v5673 = vmax.f32 %v5657, 0.0
    %v5674 = vmax.f32 %v5658, 0.0
    %v5675 = vmax.f32 %v5659, 0.0
    %v5676 = vmax.f32 %v5660, 0.0
    %v5677 = vmax.f32 %v5661, 0.0
    %v5678 = vmax.f32 %v5662, 0.0
    %v5679 = vmax.f32 %v5663, 0.0
    %v5680 = vmax.f32 %v5664, 0.0
    %v5681 = vmax.f32 %v5665, 0.0
    %v5682 = vmax.f32 %v5666, 0.0
    %v5683 = vmax.f32 %v5667, 0.0
    %v5684 = vmax.f32 %v5668, 0.0
    %v5685 = vmax.f32 %v5669, 0.0
    %v5686 = vmax.f32 %v5670, 0.0
    %v5687 = vmax.f32 %v5671, 0.0
    %v5688 = vmax.f32 %v5672, 0.0
    %v5689 = vld [vmem:[%s7] sm:$0xff]
    %v5690 = vld [vmem:[%s7 + $0x8] sm:$0xff]
    %v5691 = vld [vmem:[%s7 + $0x10] sm:$0xff]
    %v5692 = vld [vmem:[%s7 + $0x18] sm:$0xff]
    %v5693 = vld [vmem:[%s7 + $0x20] sm:$0xff]
    %v5694 = vld [vmem:[%s7 + $0x28] sm:$0xff]
    %v5695 = vld [vmem:[%s7 + $0x30] sm:$0xff]
    %v5696 = vld [vmem:[%s7 + $0x38] sm:$0xff]
    %v5697 = vld [vmem:[%s7 + $0x40] sm:$0xff]
    %v5698 = vld [vmem:[%s7 + $0x48] sm:$0xff]
    %v5699 = vld [vmem:[%s7 + $0x50] sm:$0xff]
    %v5700 = vld [vmem:[%s7 + $0x58] sm:$0xff]
    %v5701 = vld [vmem:[%s7 + $0x60] sm:$0xff]
    %v5702 = vld [vmem:[%s7 + $0x68] sm:$0xff]
    %v5703 = vld [vmem:[%s7 + $0x70] sm:$0xff]
    %v5704 = vld [vmem:[%s7 + $0x78] sm:$0xff]
    %5706 = vset.pattern.permute.xlu0 0
    %5707 = vperm.xlu0 %5706, %v5673
    %v5708 = vpop.permute.xlu0 %5707
    %5711 = vset.pattern.permute.xlu0 0
    %5712 = vperm.xlu0 %5711, %v5674
    %v5713 = vpop.permute.xlu0 %5712
    %5716 = vset.pattern.permute.xlu0 0
    %5717 = vperm.xlu0 %5716, %v5675
    %v5718 = vpop.permute.xlu0 %5717
    %5721 = vset.pattern.permute.xlu0 0
    %5722 = vperm.xlu0 %5721, %v5676
    %v5723 = vpop.permute.xlu0 %5722
    %5726 = vset.pattern.permute.xlu0 0
    %5727 = vperm.xlu0 %5726, %v5677
    %v5728 = vpop.permute.xlu0 %5727
    %5731 = vset.pattern.permute.xlu0 0
    %5732 = vperm.xlu0 %5731, %v5678
    %v5733 = vpop.permute.xlu0 %5732
    %5736 = vset.pattern.permute.xlu0 0
    %5737 = vperm.xlu0 %5736, %v5679
    %v5738 = vpop.permute.xlu0 %5737
    %5741 = vset.pattern.permute.xlu0 0
    %5742 = vperm.xlu0 %5741, %v5680
    %v5743 = vpop.permute.xlu0 %5742
    %5746 = vset.pattern.permute.xlu0 0
    %5747 = vperm.xlu0 %5746, %v5681
    %v5748 = vpop.permute.xlu0 %5747
    %5751 = vset.pattern.permute.xlu0 0
    %5752 = vperm.xlu0 %5751, %v5682
    %v5753 = vpop.permute.xlu0 %5752
    %5756 = vset.pattern.permute.xlu0 0
    %5757 = vperm.xlu0 %5756, %v5683
    %v5758 = vpop.permute.xlu0 %5757
    %5761 = vset.pattern.permute.xlu0 0
    %5762 = vperm.xlu0 %5761, %v5684
    %v5763 = vpop.permute.xlu0 %5762
    %5766 = vset.pattern.permute.xlu0 0
    %5767 = vperm.xlu0 %5766, %v5685
    %v5768 = vpop.permute.xlu0 %5767
    %5771 = vset.pattern.permute.xlu0 0
    %5772 = vperm.xlu0 %5771, %v5686
    %v5773 = vpop.permute.xlu0 %5772
    %5776 = vset.pattern.permute.xlu0 0
    %5777 = vperm.xlu0 %5776, %v5687
    %v5778 = vpop.permute.xlu0 %5777
    %5781 = vset.pattern.permute.xlu0 0
    %5782 = vperm.xlu0 %5781, %v5688
    %v5783 = vpop.permute.xlu0 %5782
    %v5785 = vmul.f32 %v5708, %v5689
    %v5786 = vmul.f32 %v5713, %v5690
    %v5787 = vmul.f32 %v5718, %v5691
    %v5788 = vmul.f32 %v5723, %v5692
    %v5789 = vmul.f32 %v5728, %v5693
    %v5790 = vmul.f32 %v5733, %v5694
    %v5791 = vmul.f32 %v5738, %v5695
    %v5792 = vmul.f32 %v5743, %v5696
    %v5793 = vmul.f32 %v5748, %v5697
    %v5794 = vmul.f32 %v5753, %v5698
    %v5795 = vmul.f32 %v5758, %v5699
    %v5796 = vmul.f32 %v5763, %v5700
    %v5797 = vmul.f32 %v5768, %v5701
    %v5798 = vmul.f32 %v5773, %v5702
    %v5799 = vmul.f32 %v5778, %v5703
    %v5800 = vmul.f32 %v5783, %v5704
    %s5801 = scalar_lea.vmem %s7, 128
    %v5802 = vld [vmem:[%s5801] sm:$0xff]
    %v5803 = vld [vmem:[%s5801 + $0x8] sm:$0xff]
    %v5804 = vld [vmem:[%s5801 + $0x10] sm:$0xff]
    %v5805 = vld [vmem:[%s5801 + $0x18] sm:$0xff]
    %v5806 = vld [vmem:[%s5801 + $0x20] sm:$0xff]
    %v5807 = vld [vmem:[%s5801 + $0x28] sm:$0xff]
    %v5808 = vld [vmem:[%s5801 + $0x30] sm:$0xff]
    %v5809 = vld [vmem:[%s5801 + $0x38] sm:$0xff]
    %v5810 = vld [vmem:[%s5801 + $0x40] sm:$0xff]
    %v5811 = vld [vmem:[%s5801 + $0x48] sm:$0xff]
    %v5812 = vld [vmem:[%s5801 + $0x50] sm:$0xff]
    %v5813 = vld [vmem:[%s5801 + $0x58] sm:$0xff]
    %v5814 = vld [vmem:[%s5801 + $0x60] sm:$0xff]
    %v5815 = vld [vmem:[%s5801 + $0x68] sm:$0xff]
    %v5816 = vld [vmem:[%s5801 + $0x70] sm:$0xff]
    %v5817 = vld [vmem:[%s5801 + $0x78] sm:$0xff]
    %5818 = vset.pattern.permute.xlu0 1
    %5819 = vperm.xlu0 %5818, %v5673
    %v5820 = vpop.permute.xlu0 %5819
    %5822 = vset.pattern.permute.xlu0 1
    %5823 = vperm.xlu0 %5822, %v5674
    %v5824 = vpop.permute.xlu0 %5823
    %5826 = vset.pattern.permute.xlu0 1
    %5827 = vperm.xlu0 %5826, %v5675
    %v5828 = vpop.permute.xlu0 %5827
    %5830 = vset.pattern.permute.xlu0 1
    %5831 = vperm.xlu0 %5830, %v5676
    %v5832 = vpop.permute.xlu0 %5831
    %5834 = vset.pattern.permute.xlu0 1
    %5835 = vperm.xlu0 %5834, %v5677
    %v5836 = vpop.permute.xlu0 %5835
    %5838 = vset.pattern.permute.xlu0 1
    %5839 = vperm.xlu0 %5838, %v5678
    %v5840 = vpop.permute.xlu0 %5839
    %5842 = vset.pattern.permute.xlu0 1
    %5843 = vperm.xlu0 %5842, %v5679
    %v5844 = vpop.permute.xlu0 %5843
    %5846 = vset.pattern.permute.xlu0 1
    %5847 = vperm.xlu0 %5846, %v5680
    %v5848 = vpop.permute.xlu0 %5847
    %5850 = vset.pattern.permute.xlu0 1
    %5851 = vperm.xlu0 %5850, %v5681
    %v5852 = vpop.permute.xlu0 %5851
    %5854 = vset.pattern.permute.xlu0 1
    %5855 = vperm.xlu0 %5854, %v5682
    %v5856 = vpop.permute.xlu0 %5855
    %5858 = vset.pattern.permute.xlu0 1
    %5859 = vperm.xlu0 %5858, %v5683
    %v5860 = vpop.permute.xlu0 %5859
    %5862 = vset.pattern.permute.xlu0 1
    %5863 = vperm.xlu0 %5862, %v5684
    %v5864 = vpop.permute.xlu0 %5863
    %5866 = vset.pattern.permute.xlu0 1
    %5867 = vperm.xlu0 %5866, %v5685
    %v5868 = vpop.permute.xlu0 %5867
    %5870 = vset.pattern.permute.xlu0 1
    %5871 = vperm.xlu0 %5870, %v5686
    %v5872 = vpop.permute.xlu0 %5871
    %5874 = vset.pattern.permute.xlu0 1
    %5875 = vperm.xlu0 %5874, %v5687
    %v5876 = vpop.permute.xlu0 %5875
    %5878 = vset.pattern.permute.xlu0 1
    %5879 = vperm.xlu0 %5878, %v5688
    %v5880 = vpop.permute.xlu0 %5879
    %v5882 = vmul.f32 %v5820, %v5802
    %v5883 = vmul.f32 %v5824, %v5803
    %v5884 = vmul.f32 %v5828, %v5804
    %v5885 = vmul.f32 %v5832, %v5805
    %v5886 = vmul.f32 %v5836, %v5806
    %v5887 = vmul.f32 %v5840, %v5807
    %v5888 = vmul.f32 %v5844, %v5808
    %v5889 = vmul.f32 %v5848, %v5809
    %v5890 = vmul.f32 %v5852, %v5810
    %v5891 = vmul.f32 %v5856, %v5811
    %v5892 = vmul.f32 %v5860, %v5812
    %v5893 = vmul.f32 %v5864, %v5813
    %v5894 = vmul.f32 %v5868, %v5814
    %v5895 = vmul.f32 %v5872, %v5815
    %v5896 = vmul.f32 %v5876, %v5816
    %v5897 = vmul.f32 %v5880, %v5817
    %v5898 = vadd.f32 %v5785, %v5882
    %v5899 = vadd.f32 %v5786, %v5883
    %v5900 = vadd.f32 %v5787, %v5884
    %v5901 = vadd.f32 %v5788, %v5885
    %v5902 = vadd.f32 %v5789, %v5886
    %v5903 = vadd.f32 %v5790, %v5887
    %v5904 = vadd.f32 %v5791, %v5888
    %v5905 = vadd.f32 %v5792, %v5889
    %v5906 = vadd.f32 %v5793, %v5890
    %v5907 = vadd.f32 %v5794, %v5891
    %v5908 = vadd.f32 %v5795, %v5892
    %v5909 = vadd.f32 %v5796, %v5893
    %v5910 = vadd.f32 %v5797, %v5894
    %v5911 = vadd.f32 %v5798, %v5895
    %v5912 = vadd.f32 %v5799, %v5896
    %v5913 = vadd.f32 %v5800, %v5897
    %v5914 = vld [vmem:[%s8] sm:$0x1]
    %v5916 = vlaneseq
    %v5917 = vshrl.u32 %v5916, 7
    %v5918 = vsub.s32 0, %v5917
    %v5919 = vrot.slane %v5914, %v5918
    %5921 = vmatprep.subr.mxu0 0.0
    %5922 = vmatpush1.msra.mxu0 %v5898
    %5923 = vmatprep.subr.mxu0 0.0
    %5924 = vmatpush1.msra.mxu0 %v5899
    %5925 = vmatprep.subr.mxu0 0.0
    %5926 = vmatpush1.msra.mxu0 %v5900
    %5927 = vmatprep.subr.mxu0 0.0
    %5928 = vmatpush1.msra.mxu0 %v5901
    %5929 = vmatprep.subr.mxu0 0.0
    %5930 = vmatpush1.msra.mxu0 %v5902
    %5931 = vmatprep.subr.mxu0 0.0
    %5932 = vmatpush1.msra.mxu0 %v5903
    %5933 = vmatprep.subr.mxu0 0.0
    %5934 = vmatpush1.msra.mxu0 %v5904
    %5935 = vmatprep.subr.mxu0 0.0
    %5936 = vmatpush1.msra.mxu0 %v5905
    %5937 = vmatprep.subr.mxu0 0.0
    %5938 = vmatpush1.msra.mxu0 %v5906
    %5939 = vmatprep.subr.mxu0 0.0
    %5940 = vmatpush1.msra.mxu0 %v5907
    %5941 = vmatprep.subr.mxu0 0.0
    %5942 = vmatpush1.msra.mxu0 %v5908
    %5943 = vmatprep.subr.mxu0 0.0
    %5944 = vmatpush1.msra.mxu0 %v5909
    %5945 = vmatprep.subr.mxu0 0.0
    %5946 = vmatpush1.msra.mxu0 %v5910
    %5947 = vmatprep.subr.mxu0 0.0
    %5948 = vmatpush1.msra.mxu0 %v5911
    %5949 = vmatprep.subr.mxu0 0.0
    %5950 = vmatpush1.msra.mxu0 %v5912
    %5951 = vmatprep.subr.mxu0 0.0
    %5952 = vmatpush1.msra.mxu0 %v5913
    %5953 = vmatprep.subr.mxu0 0.0
    %5954 = vmatpush1.msra.mxu0 0.0
    %5955 = vmatprep.subr.mxu0 0.0
    %5956 = vmatpush1.msra.mxu0 0.0
    %5957 = vmatprep.subr.mxu0 0.0
    %5958 = vmatpush1.msra.mxu0 0.0
    %5959 = vmatprep.subr.mxu0 0.0
    %5960 = vmatpush1.msra.mxu0 0.0
    %5961 = vmatprep.subr.mxu0 0.0
    %5962 = vmatpush1.msra.mxu0 0.0
    %5963 = vmatprep.subr.mxu0 0.0
    %5964 = vmatpush1.msra.mxu0 0.0
    %5965 = vmatprep.subr.mxu0 0.0
    %5966 = vmatpush1.msra.mxu0 0.0
    %5967 = vmatprep.subr.mxu0 0.0
    %5968 = vmatpush1.msra.mxu0 0.0
    %5969 = vmatprep.subr.mxu0 0.0
    %5970 = vmatpush1.msra.mxu0 0.0
    %5971 = vmatprep.subr.mxu0 0.0
    %5972 = vmatpush1.msra.mxu0 0.0
    %5973 = vmatprep.subr.mxu0 0.0
    %5974 = vmatpush1.msra.mxu0 0.0
    %5975 = vmatprep.subr.mxu0 0.0
    %5976 = vmatpush1.msra.mxu0 0.0
    %5977 = vmatprep.subr.mxu0 0.0
    %5978 = vmatpush1.msra.mxu0 0.0
    %5979 = vmatprep.subr.mxu0 0.0
    %5980 = vmatpush1.msra.mxu0 0.0
    %5981 = vmatprep.subr.mxu0 0.0
    %5982 = vmatpush1.msra.mxu0 0.0
    %5983 = vmatprep.subr.mxu0 0.0
    %5984 = vmatpush1.msra.mxu0 0.0
    %5985 = vmatprep.mubr.f32.mxu0 0.0
    %5986 = vmatmul.mubr.f32.gmra.mrb[0].mxu0 %v5387
    %v5987 = vpop.f32.mrb[0].mxu0
    %v5988 = vadd.f32 %v5919, %v5987
    %v5989 = vpop.f32.mrb[0].mxu0
    %5990 = vdwg.mxu0
    %vm5991 = vcmask 525312
    %5992 = vst.msk [vmem:[#allocation5] sm:$0x3] %vm5991, %v5988
    %v5993 = vld [vmem:[%s9] sm:$0xff]
    %v5994 = vld [vmem:[%s9 + $0x8] sm:$0xff]
    %v5995 = vld [vmem:[%s9 + $0x10] sm:$0xff]
    %v5996 = vld [vmem:[%s9 + $0x18] sm:$0xff]
    %v5997 = vld [vmem:[%s9 + $0x20] sm:$0xff]
    %v5998 = vld [vmem:[%s9 + $0x28] sm:$0xff]
    %v5999 = vld [vmem:[%s9 + $0x30] sm:$0xff]
    %v6000 = vld [vmem:[%s9 + $0x38] sm:$0xff]
    %v6001 = vld [vmem:[%s9 + $0x40] sm:$0xff]
    %v6002 = vld [vmem:[%s9 + $0x48] sm:$0xff]
    %v6003 = vld [vmem:[%s9 + $0x50] sm:$0xff]
    %v6004 = vld [vmem:[%s9 + $0x58] sm:$0xff]
    %v6005 = vld [vmem:[%s9 + $0x60] sm:$0xff]
    %v6006 = vld [vmem:[%s9 + $0x68] sm:$0xff]
    %v6007 = vld [vmem:[%s9 + $0x70] sm:$0xff]
    %v6008 = vld [vmem:[%s9 + $0x78] sm:$0xff]
    %v6009 = vld [vmem:[%s9 + $0x80] sm:$0xff]
    %v6010 = vld [vmem:[%s9 + $0x88] sm:$0xff]
    %v6011 = vld [vmem:[%s9 + $0x90] sm:$0xff]
    %v6012 = vld [vmem:[%s9 + $0x98] sm:$0xff]
    %v6013 = vld [vmem:[%s9 + $0xa0] sm:$0xff]
    %v6014 = vld [vmem:[%s9 + $0xa8] sm:$0xff]
    %v6015 = vld [vmem:[%s9 + $0xb0] sm:$0xff]
    %v6016 = vld [vmem:[%s9 + $0xb8] sm:$0xff]
    %v6017 = vld [vmem:[%s9 + $0xc0] sm:$0xff]
    %v6018 = vld [vmem:[%s9 + $0xc8] sm:$0xff]
    %v6019 = vld [vmem:[%s9 + $0xd0] sm:$0xff]
    %v6020 = vld [vmem:[%s9 + $0xd8] sm:$0xff]
    %v6021 = vld [vmem:[%s9 + $0xe0] sm:$0xff]
    %v6022 = vld [vmem:[%s9 + $0xe8] sm:$0xff]
    %v6023 = vld [vmem:[%s9 + $0xf0] sm:$0xff]
    %v6024 = vld [vmem:[%s9 + $0xf8] sm:$0xff]
    %6025 = vset.pattern.permute.xlu0 2
    %6026 = vperm.xlu0 %6025, %v5673
    %v6027 = vpop.permute.xlu0 %6026
    %6029 = vset.pattern.permute.xlu0 2
    %6030 = vperm.xlu0 %6029, %v5674
    %v6031 = vpop.permute.xlu0 %6030
    %6033 = vset.pattern.permute.xlu0 2
    %6034 = vperm.xlu0 %6033, %v5675
    %v6035 = vpop.permute.xlu0 %6034
    %6037 = vset.pattern.permute.xlu0 2
    %6038 = vperm.xlu0 %6037, %v5676
    %v6039 = vpop.permute.xlu0 %6038
    %6041 = vset.pattern.permute.xlu0 2
    %6042 = vperm.xlu0 %6041, %v5677
    %v6043 = vpop.permute.xlu0 %6042
    %6045 = vset.pattern.permute.xlu0 2
    %6046 = vperm.xlu0 %6045, %v5678
    %v6047 = vpop.permute.xlu0 %6046
    %6049 = vset.pattern.permute.xlu0 2
    %6050 = vperm.xlu0 %6049, %v5679
    %v6051 = vpop.permute.xlu0 %6050
    %6053 = vset.pattern.permute.xlu0 2
    %6054 = vperm.xlu0 %6053, %v5680
    %v6055 = vpop.permute.xlu0 %6054
    %6057 = vset.pattern.permute.xlu0 2
    %6058 = vperm.xlu0 %6057, %v5681
    %v6059 = vpop.permute.xlu0 %6058
    %6061 = vset.pattern.permute.xlu0 2
    %6062 = vperm.xlu0 %6061, %v5682
    %v6063 = vpop.permute.xlu0 %6062
    %6065 = vset.pattern.permute.xlu0 2
    %6066 = vperm.xlu0 %6065, %v5683
    %v6067 = vpop.permute.xlu0 %6066
    %6069 = vset.pattern.permute.xlu0 2
    %6070 = vperm.xlu0 %6069, %v5684
    %v6071 = vpop.permute.xlu0 %6070
    %6073 = vset.pattern.permute.xlu0 2
    %6074 = vperm.xlu0 %6073, %v5685
    %v6075 = vpop.permute.xlu0 %6074
    %6077 = vset.pattern.permute.xlu0 2
    %6078 = vperm.xlu0 %6077, %v5686
    %v6079 = vpop.permute.xlu0 %6078
    %6081 = vset.pattern.permute.xlu0 2
    %6082 = vperm.xlu0 %6081, %v5687
    %v6083 = vpop.permute.xlu0 %6082
    %6085 = vset.pattern.permute.xlu0 2
    %6086 = vperm.xlu0 %6085, %v5688
    %v6087 = vpop.permute.xlu0 %6086
    %v6089 = vmul.f32 %v6027, %v5993
    %v6090 = vmul.f32 %v6027, %v5994
    %v6091 = vmul.f32 %v6031, %v5995
    %v6092 = vmul.f32 %v6031, %v5996
    %v6093 = vmul.f32 %v6035, %v5997
    %v6094 = vmul.f32 %v6035, %v5998
    %v6095 = vmul.f32 %v6039, %v5999
    %v6096 = vmul.f32 %v6039, %v6000
    %v6097 = vmul.f32 %v6043, %v6001
    %v6098 = vmul.f32 %v6043, %v6002
    %v6099 = vmul.f32 %v6047, %v6003
    %v6100 = vmul.f32 %v6047, %v6004
    %v6101 = vmul.f32 %v6051, %v6005
    %v6102 = vmul.f32 %v6051, %v6006
    %v6103 = vmul.f32 %v6055, %v6007
    %v6104 = vmul.f32 %v6055, %v6008
    %v6105 = vmul.f32 %v6059, %v6009
    %v6106 = vmul.f32 %v6059, %v6010
    %v6107 = vmul.f32 %v6063, %v6011
    %v6108 = vmul.f32 %v6063, %v6012
    %v6109 = vmul.f32 %v6067, %v6013
    %v6110 = vmul.f32 %v6067, %v6014
    %v6111 = vmul.f32 %v6071, %v6015
    %v6112 = vmul.f32 %v6071, %v6016
    %v6113 = vmul.f32 %v6075, %v6017
    %v6114 = vmul.f32 %v6075, %v6018
    %v6115 = vmul.f32 %v6079, %v6019
    %v6116 = vmul.f32 %v6079, %v6020
    %v6117 = vmul.f32 %v6083, %v6021
    %v6118 = vmul.f32 %v6083, %v6022
    %v6119 = vmul.f32 %v6087, %v6023
    %v6120 = vmul.f32 %v6087, %v6024
    %v6121 = vld [vmem:[%s10] sm:$0x3]
    %v6123 = vlaneseq
    %v6124 = vshrl.u32 %v6123, 7
    %v6125 = vsub.s32 0, %v6124
    %v6126 = vrot.slane %v6121, %v6125
    %v6127 = vlaneseq
    %v6128 = vshrl.u32 %v6127, 7
    %v6129 = vsub.s32 1, %v6128
    %v6130 = vrot.slane %v6121, %v6129
    %6133 = vmatprep.subr.mxu0 %v6090
    %6134 = vmatpush1.msra.mxu0 %v6089
    %6135 = vmatprep.subr.mxu0 %v6092
    %6136 = vmatpush1.msra.mxu0 %v6091
    %6137 = vmatprep.subr.mxu0 %v6094
    %6138 = vmatpush1.msra.mxu0 %v6093
    %6139 = vmatprep.subr.mxu0 %v6096
    %6140 = vmatpush1.msra.mxu0 %v6095
    %6141 = vmatprep.subr.mxu0 %v6098
    %6142 = vmatpush1.msra.mxu0 %v6097
    %6143 = vmatprep.subr.mxu0 %v6100
    %6144 = vmatpush1.msra.mxu0 %v6099
    %6145 = vmatprep.subr.mxu0 %v6102
    %6146 = vmatpush1.msra.mxu0 %v6101
    %6147 = vmatprep.subr.mxu0 %v6104
    %6148 = vmatpush1.msra.mxu0 %v6103
    %6149 = vmatprep.subr.mxu0 %v6106
    %6150 = vmatpush1.msra.mxu0 %v6105
    %6151 = vmatprep.subr.mxu0 %v6108
    %6152 = vmatpush1.msra.mxu0 %v6107
    %6153 = vmatprep.subr.mxu0 %v6110
    %6154 = vmatpush1.msra.mxu0 %v6109
    %6155 = vmatprep.subr.mxu0 %v6112
    %6156 = vmatpush1.msra.mxu0 %v6111
    %6157 = vmatprep.subr.mxu0 %v6114
    %6158 = vmatpush1.msra.mxu0 %v6113
    %6159 = vmatprep.subr.mxu0 %v6116
    %6160 = vmatpush1.msra.mxu0 %v6115
    %6161 = vmatprep.subr.mxu0 %v6118
    %6162 = vmatpush1.msra.mxu0 %v6117
    %6163 = vmatprep.subr.mxu0 %v6120
    %6164 = vmatpush1.msra.mxu0 %v6119
    %6165 = vmatprep.subr.mxu0 0.0
    %6166 = vmatpush1.msra.mxu0 0.0
    %6167 = vmatprep.subr.mxu0 0.0
    %6168 = vmatpush1.msra.mxu0 0.0
    %6169 = vmatprep.subr.mxu0 0.0
    %6170 = vmatpush1.msra.mxu0 0.0
    %6171 = vmatprep.subr.mxu0 0.0
    %6172 = vmatpush1.msra.mxu0 0.0
    %6173 = vmatprep.subr.mxu0 0.0
    %6174 = vmatpush1.msra.mxu0 0.0
    %6175 = vmatprep.subr.mxu0 0.0
    %6176 = vmatpush1.msra.mxu0 0.0
    %6177 = vmatprep.subr.mxu0 0.0
    %6178 = vmatpush1.msra.mxu0 0.0
    %6179 = vmatprep.subr.mxu0 0.0
    %6180 = vmatpush1.msra.mxu0 0.0
    %6181 = vmatprep.subr.mxu0 0.0
    %6182 = vmatpush1.msra.mxu0 0.0
    %6183 = vmatprep.subr.mxu0 0.0
    %6184 = vmatpush1.msra.mxu0 0.0
    %6185 = vmatprep.subr.mxu0 0.0
    %6186 = vmatpush1.msra.mxu0 0.0
    %6187 = vmatprep.subr.mxu0 0.0
    %6188 = vmatpush1.msra.mxu0 0.0
    %6189 = vmatprep.subr.mxu0 0.0
    %6190 = vmatpush1.msra.mxu0 0.0
    %6191 = vmatprep.subr.mxu0 0.0
    %6192 = vmatpush1.msra.mxu0 0.0
    %6193 = vmatprep.subr.mxu0 0.0
    %6194 = vmatpush1.msra.mxu0 0.0
    %6195 = vmatprep.subr.mxu0 0.0
    %6196 = vmatpush1.msra.mxu0 0.0
    %6197 = vmatprep.mubr.f32.mxu0 0.0
    %6198 = vmatmul.mubr.f32.gmra.mrb[0].mxu0 %v5387
    %v6199 = vpop.f32.mrb[0].mxu0
    %v6200 = vadd.f32 %v6126, %v6199
    %v6201 = vpop.f32.mrb[0].mxu0
    %v6202 = vadd.f32 %v6130, %v6201
    %6203 = vdwg.mxu0
    %v6204 = vmax.f32 %v6200, 0.0
    %v6205 = vmax.f32 %v6202, 0.0
    %v6206 = vpack.c.bf16 %v6204, %v6204
    %v6207 = vpack.c.bf16 %v6205, %v6205
    %v6208 = vld [vmem:[%s11] sm:$0xf]
    %v6209 = vld [vmem:[%s11 + $0x4] sm:$0xf]
    %v6210 = vld [vmem:[%s11 + $0x8] sm:$0xf]
    %v6211 = vld [vmem:[%s11 + $0xc] sm:$0xf]
    %v6212 = vld [vmem:[%s11 + $0x10] sm:$0xf]
    %v6213 = vld [vmem:[%s11 + $0x14] sm:$0xf]
    %v6214 = vld [vmem:[%s11 + $0x18] sm:$0xf]
    %v6215 = vld [vmem:[%s11 + $0x1c] sm:$0xf]
    %v6216 = vld [vmem:[%s11 + $0x20] sm:$0xf]
    %v6217 = vld [vmem:[%s11 + $0x24] sm:$0xf]
    %v6218 = vld [vmem:[%s11 + $0x28] sm:$0xf]
    %v6219 = vld [vmem:[%s11 + $0x2c] sm:$0xf]
    %v6220 = vld [vmem:[%s11 + $0x30] sm:$0xf]
    %v6221 = vld [vmem:[%s11 + $0x34] sm:$0xf]
    %v6222 = vld [vmem:[%s11 + $0x38] sm:$0xf]
    %v6223 = vld [vmem:[%s11 + $0x3c] sm:$0xf]
    %v6224 = vld [vmem:[%s11 + $0x40] sm:$0xf]
    %v6225 = vld [vmem:[%s11 + $0x44] sm:$0xf]
    %v6226 = vld [vmem:[%s11 + $0x48] sm:$0xf]
    %v6227 = vld [vmem:[%s11 + $0x4c] sm:$0xf]
    %v6228 = vld [vmem:[%s11 + $0x50] sm:$0xf]
    %v6229 = vld [vmem:[%s11 + $0x54] sm:$0xf]
    %v6230 = vld [vmem:[%s11 + $0x58] sm:$0xf]
    %v6231 = vld [vmem:[%s11 + $0x5c] sm:$0xf]
    %v6232 = vld [vmem:[%s11 + $0x60] sm:$0xf]
    %v6233 = vld [vmem:[%s11 + $0x64] sm:$0xf]
    %v6234 = vld [vmem:[%s11 + $0x68] sm:$0xf]
    %v6235 = vld [vmem:[%s11 + $0x6c] sm:$0xf]
    %v6236 = vld [vmem:[%s11 + $0x70] sm:$0xf]
    %v6237 = vld [vmem:[%s11 + $0x74] sm:$0xf]
    %v6238 = vld [vmem:[%s11 + $0x78] sm:$0xf]
    %v6239 = vld [vmem:[%s11 + $0x7c] sm:$0xf]
    %v6240 = vld [vmem:[#allocation4] sm:$0x1]
    %v6242 = vlaneseq
    %v6243 = vshrl.u32 %v6242, 7
    %v6244 = vsub.s32 0, %v6243
    %v6245 = vrot.slane %v6240, %v6244
    %v6279 = vunpack.c.l.b16 %v6208
    %v6280 = vunpack.c.l.b16 %v6209
    %v6281 = vunpack.c.l.b16 %v6210
    %v6282 = vunpack.c.l.b16 %v6211
    %v6283 = vunpack.c.l.b16 %v6212
    %v6284 = vunpack.c.l.b16 %v6213
    %v6285 = vunpack.c.l.b16 %v6214
    %v6286 = vunpack.c.l.b16 %v6215
    %v6287 = vunpack.c.l.b16 %v6216
    %v6288 = vunpack.c.l.b16 %v6217
    %v6289 = vunpack.c.l.b16 %v6218
    %v6290 = vunpack.c.l.b16 %v6219
    %v6291 = vunpack.c.l.b16 %v6220
    %v6292 = vunpack.c.l.b16 %v6221
    %v6293 = vunpack.c.l.b16 %v6222
    %v6294 = vunpack.c.l.b16 %v6223
    %v6295 = vunpack.c.l.b16 %v6224
    %v6296 = vunpack.c.l.b16 %v6225
    %v6297 = vunpack.c.l.b16 %v6226
    %v6298 = vunpack.c.l.b16 %v6227
    %v6299 = vunpack.c.l.b16 %v6228
    %v6300 = vunpack.c.l.b16 %v6229
    %v6301 = vunpack.c.l.b16 %v6230
    %v6302 = vunpack.c.l.b16 %v6231
    %v6303 = vunpack.c.l.b16 %v6232
    %v6304 = vunpack.c.l.b16 %v6233
    %v6305 = vunpack.c.l.b16 %v6234
    %v6306 = vunpack.c.l.b16 %v6235
    %v6307 = vunpack.c.l.b16 %v6236
    %v6308 = vunpack.c.l.b16 %v6237
    %v6309 = vunpack.c.l.b16 %v6238
    %v6310 = vunpack.c.l.b16 %v6239
    %v6311 = vpack.c.b16 %v6280, %v6279
    %v6312 = vpack.c.b16 %v6282, %v6281
    %v6313 = vpack.c.b16 %v6284, %v6283
    %v6314 = vpack.c.b16 %v6286, %v6285
    %v6315 = vpack.c.b16 %v6288, %v6287
    %v6316 = vpack.c.b16 %v6290, %v6289
    %v6317 = vpack.c.b16 %v6292, %v6291
    %v6318 = vpack.c.b16 %v6294, %v6293
    %v6319 = vpack.c.b16 %v6296, %v6295
    %v6320 = vpack.c.b16 %v6298, %v6297
    %v6321 = vpack.c.b16 %v6300, %v6299
    %v6322 = vpack.c.b16 %v6302, %v6301
    %v6323 = vpack.c.b16 %v6304, %v6303
    %v6324 = vpack.c.b16 %v6306, %v6305
    %v6325 = vpack.c.b16 %v6308, %v6307
    %v6326 = vpack.c.b16 %v6310, %v6309
    %6343 = vmatprep.subr.bf16.mxu0 0
    %6344 = vmatpush1.bf16.msra.mxu0 %v6311
    %6345 = vmatprep.subr.bf16.mxu0 0
    %6346 = vmatpush1.bf16.msra.mxu0 %v6312
    %6347 = vmatprep.subr.bf16.mxu0 0
    %6348 = vmatpush1.bf16.msra.mxu0 %v6313
    %6349 = vmatprep.subr.bf16.mxu0 0
    %6350 = vmatpush1.bf16.msra.mxu0 %v6314
    %6351 = vmatprep.subr.bf16.mxu0 0
    %6352 = vmatpush1.bf16.msra.mxu0 %v6315
    %6353 = vmatprep.subr.bf16.mxu0 0
    %6354 = vmatpush1.bf16.msra.mxu0 %v6316
    %6355 = vmatprep.subr.bf16.mxu0 0
    %6356 = vmatpush1.bf16.msra.mxu0 %v6317
    %6357 = vmatprep.subr.bf16.mxu0 0
    %6358 = vmatpush1.bf16.msra.mxu0 %v6318
    %6359 = vmatprep.subr.bf16.mxu0 0
    %6360 = vmatpush1.bf16.msra.mxu0 %v6319
    %6361 = vmatprep.subr.bf16.mxu0 0
    %6362 = vmatpush1.bf16.msra.mxu0 %v6320
    %6363 = vmatprep.subr.bf16.mxu0 0
    %6364 = vmatpush1.bf16.msra.mxu0 %v6321
    %6365 = vmatprep.subr.bf16.mxu0 0
    %6366 = vmatpush1.bf16.msra.mxu0 %v6322
    %6367 = vmatprep.subr.bf16.mxu0 0
    %6368 = vmatpush1.bf16.msra.mxu0 %v6323
    %6369 = vmatprep.subr.bf16.mxu0 0
    %6370 = vmatpush1.bf16.msra.mxu0 %v6324
    %6371 = vmatprep.subr.bf16.mxu0 0
    %6372 = vmatpush1.bf16.msra.mxu0 %v6325
    %6373 = vmatprep.subr.bf16.mxu0 0
    %6374 = vmatpush1.bf16.msra.mxu0 %v6326
    %6375 = vmatprep.mubr.bf16.mxu0 %v6207
    %6376 = vmatmul.mubr.bf16.gmra.mrb[0].mxu0 %v6206
    %v6377 = vpop.f32.mrb[0].mxu0
    %v6378 = vadd.f32 %v6245, %v6377
    %v6379 = vpop.f32.mrb[0].mxu0
    %v6380 = vpop.f32.mrb[0].mxu0
    %v6381 = vpop.f32.mrb[0].mxu0
    %6382 = vdwg.mxu0
    %v6383 = vtanh.pop %v6378
    %vm6384 = vcmask 1024
    %6385 = vst.msk [vmem:[%s15] sm:$0x3] %vm6384, %v6383
    // Predicated region
    $region58: #{alphago_net_forward.1} parent=1 // pred_check
      _
    $region59: #{alphago_net_forward.1} parent=1 // pred_check_branch
      %6387 = sbr.rel (0) target = $region61
    $region60: #{alphago_net_forward.1} parent=1 // pred_region
      %s6389 = ssub.s32 32, 32
      %6390 = vsyncadd [#allocation6], %s6389
      %s6392 = sshll.u32 [#allocation5], 4
      %s6393 = int_to_ptr.vmem [resolvable:$true] %s6392
      %6395 = dma.vmem_to_hbm [thread:$0]  %s6393, 32, %s14, [#allocation6]
    $region61: #{alphago_net_forward.1} parent=1 // pred_fallthru
      _
    // Predicated region
    $region62: #{alphago_net_forward.1} parent=1 // pred_check
      _
    $region63: #{alphago_net_forward.1} parent=1 // pred_check_branch
      %6397 = sbr.rel (0) target = $region65
    $region64: #{alphago_net_forward.1} parent=1 // pred_region
      _
    $region65: #{alphago_net_forward.1} parent=1 // pred_fallthru
      _
    // Predicated region
    $region66: #{alphago_net_forward.1} parent=1 // pred_check
      _
    $region67: #{alphago_net_forward.1} parent=1 // pred_check_branch
      %6399 = sbr.rel (0) target = $region69
    $region68: #{alphago_net_forward.1} parent=1 // pred_region
      %6400 = dma.done [#allocation6], 32
    $region69: #{alphago_net_forward.1} parent=1 // pred_fallthru
      _
    // Predicated region
    $region70: #{alphago_net_forward.1} parent=1 // pred_check
      _
    $region71: #{alphago_net_forward.1} parent=1 // pred_check_branch
      %6402 = sbr.rel (0) target = $region73
    $region72: #{alphago_net_forward.1} parent=1 // pred_region
      _
    $region73: #{alphago_net_forward.1} parent=1 // pred_fallthru
      _
    %6403 = vsyncpa [#allocation6], 1

</llo_original>
